<compile_context>
chip_gen: v7x
topology: tpu7x:2x2x1
jax: 0.10.0
libtpu: 0.0.40
codegen_flags: <defaults>
</compile_context>

<pallas_src>
import functools
import math

import jax
import jax.numpy as jnp
from jax.experimental import pallas as pl
from jax.experimental.pallas import tpu as pltpu


# ------------------------------ constants -----------------------------------
C_FEAT, SPATIAL = 512, 7          # resnet34 final feature map: (B, 512, 7, 7)
FC_DIM = 512
N_CLASSES = 7770
ARC_S, ARC_M = 30.0, 0.3
GEM_P, GEM_EPS = 3.0, 1e-6        # GeM Parameter p treated as the constant 3.0
BN_EPS = 1e-5

# Class padding / tiling: 7770 -> 7936 (= 62*128), split into two 3968-wide
# tiles (3.9 MiB bf16 each; double-buffered ~7.8 MiB fits every chip's scoped
# VMEM default; even grid length keeps both v7x TensorCores busy).
N_PAD = 7936
ARC_TN = 3968
assert N_PAD % ARC_TN == 0 and ARC_TN % 128 == 0 and (N_PAD // ARC_TN) % 2 == 0


# ------------- fused GeM -> fc -> BN -> L2-norm -> ArcMarginProduct ----------
def _fused_kernel(x_ref, fcw_ref, fcb_ref, g_ref, be_ref, w_ref, lbl_ref,
                  o_ref, *, tn, s, cos_m, sin_m, th, mm, p, eps, bn_eps):
    j = pl.program_id(0)

    # ---- GeM pooling over the spatial (lane) axis; p == 3 -> VPU multiplies.
    # x: (B, C, HW) with C on sublanes, HW on lanes.
    x = jnp.maximum(x_ref[...], eps)                      # clamp(min=eps)
    pooled_p = jnp.mean(x * x * x, axis=-1)               # (B, C), > 0
    pooled = jnp.exp(jnp.log(pooled_p) * (1.0 / p))       # cube root on (B,C) only

    # dropout(p=0.0) is the identity.

    # ---- fc: bf16 operands, f32 accumulate (MXU native path).
    h = jnp.dot(pooled.astype(jnp.bfloat16), fcw_ref[...],
                preferred_element_type=jnp.float32) + fcb_ref[...]

    # ---- BatchNorm1d, training-mode batch statistics (biased variance).
    # TODO(synk): eval-mode parity needs running_mean / running_var.
    mu = jnp.mean(h, axis=0, keepdims=True)
    var = jnp.mean(jnp.square(h - mu), axis=0, keepdims=True)
    y = (h - mu) * jax.lax.rsqrt(var + bn_eps) * g_ref[...] + be_ref[...]

    # ---- ArcMarginProduct (weight columns pre-normalized bf16 at init).
    nrm = jnp.maximum(jnp.sqrt(jnp.sum(y * y, axis=1, keepdims=True)), 1e-12)
    xn = (y / nrm).astype(jnp.bfloat16)                   # F.normalize(input)

    cosine = jnp.dot(xn, w_ref[...], preferred_element_type=jnp.float32)
    # clamp before sqrt: |cosine| can exceed 1 by rounding -> NaN otherwise.
    sine = jnp.sqrt(jnp.clip(1.0 - cosine * cosine, 0.0, 1.0))
    phi = cosine * cos_m - sine * sin_m
    phi = jnp.where(cosine > th, phi, cosine - mm)        # easy_margin=False
    col = j * tn + jax.lax.broadcasted_iota(jnp.int32, cosine.shape, 1)
    one_hot = (col == lbl_ref[...]).astype(jnp.float32)   # ls_eps = 0.0
    o_ref[...] = (one_hot * phi + (1.0 - one_hot) * cosine) * s


def pallas_arcface_forward(x_chw, fc_wT, fc_b, gamma, beta, arc_wT, label, *,
                           n_classes=N_CLASSES, s=ARC_S, m=ARC_M, tn=ARC_TN):
    """x_chw: (B, C, HW) f32; fc_wT: (C, FC_DIM) bf16; arc_wT: (FC_DIM, N_PAD) bf16."""
    B = x_chw.shape[0]
    Np = arc_wT.shape[1]
    hw = x_chw.shape[2]
    lbl = label.astype(jnp.int32).reshape(B, 1)
    kern = functools.partial(
        _fused_kernel, tn=tn, s=s,
        cos_m=math.cos(m), sin_m=math.sin(m),
        th=math.cos(math.pi - m), mm=math.sin(math.pi - m) * m,
        p=GEM_P, eps=GEM_EPS, bn_eps=BN_EPS)
    out = pl.pallas_call(
        kern,
        out_shape=jax.ShapeDtypeStruct((B, Np), jnp.float32),
        grid_spec=pltpu.PrefetchScalarGridSpec(
            num_scalar_prefetch=0,
            grid=(Np // tn,),                                  # 2 parallel N-tiles
            in_specs=[
                pl.BlockSpec((B, C_FEAT, hw), lambda j: (0, 0, 0)),
                pl.BlockSpec((C_FEAT, FC_DIM), lambda j: (0, 0)),
                pl.BlockSpec((1, FC_DIM), lambda j: (0, 0)),
                pl.BlockSpec((1, FC_DIM), lambda j: (0, 0)),
                pl.BlockSpec((1, FC_DIM), lambda j: (0, 0)),
                pl.BlockSpec((FC_DIM, tn), lambda j: (0, j)),  # dominant HBM stream
                pl.BlockSpec((B, 1), lambda j: (0, 0)),
            ],
            out_specs=pl.BlockSpec((B, tn), lambda j: (0, j)),
        ),
        compiler_params=pltpu.CompilerParams(
            dimension_semantics=("parallel",)),
    )(x_chw, fc_wT, fc_b, gamma, beta, arc_wT, lbl)
    return out[:, :n_classes]


# --------------------------- parameters / forward ----------------------------
def init_params(key):
    k_fc, k_arc = jax.random.split(key, 2)

    # fc: xavier_normal weight, zero bias (per _init_params)
    std = math.sqrt(2.0 / (FC_DIM + C_FEAT))
    fc_w = std * jax.random.normal(k_fc, (FC_DIM, C_FEAT), jnp.float32)  # (out, in)
    fc_b = jnp.zeros((FC_DIM,), jnp.float32)

    # ArcMargin weight: xavier_uniform, (out_features, in_features)
    lim = math.sqrt(6.0 / (N_CLASSES + FC_DIM))
    arc_w = jax.random.uniform(k_arc, (N_CLASSES, FC_DIM), jnp.float32, -lim, lim)

    # ---- one-time re-layout (no per-forward transpose / pad / normalize) ----
    # F.normalize(weight, dim=1) is weight-only -> folded here in f32, then the
    # weight is transposed to (D, N), padded to N_PAD and cast to bf16.
    w_rows_n = arc_w / jnp.maximum(
        jnp.sqrt(jnp.sum(arc_w * arc_w, axis=1, keepdims=True)), 1e-12)
    arc_wT = jnp.pad(w_rows_n.T, ((0, 0), (0, N_PAD - N_CLASSES))).astype(jnp.bfloat16)

    return {
        "fc_wT": fc_w.T.astype(jnp.bfloat16),          # (C, FC_DIM) bf16
        "fc_b": fc_b.reshape(1, FC_DIM),
        "bn_gamma": jnp.ones((1, FC_DIM), jnp.float32),
        "bn_beta": jnp.zeros((1, FC_DIM), jnp.float32),
        "arc_wT": arc_wT,                              # (FC_DIM, N_PAD) bf16
    }


def forward(params, x_feat, label):
    """x_feat: (B, 512, 7, 7) feature map from the (stubbed) resnet34 backbone.

    Returns ArcFace logits of shape (B, N_CLASSES).
    """
    # TODO(synk): the reference extract_features snippet omits self.pooling,
    # but fc(in_features=512) requires pooled (B, 512) features; GeM pooling is
    # applied here as the module intends.
    B, C, H, W = x_feat.shape
    # Contiguous (free) reshape; the spatial reduction happens over the lane
    # axis inside the kernel, so no XLA transpose / extra HBM round trip.
    x_chw = x_feat.reshape(B, C, H * W)
    return pallas_arcface_forward(
        x_chw, params["fc_wT"], params["fc_b"],
        params["bn_gamma"], params["bn_beta"],
        params["arc_wT"], label)                       # (B, 7770)


if __name__ == "__main__":
    key = jax.random.PRNGKey(0)
    k_params, k_x, k_lbl = jax.random.split(key, 3)
    params = init_params(k_params)

    B = 2
    x_feat = jax.random.normal(k_x, (B, C_FEAT, SPATIAL, SPATIAL), jnp.float32)
    label = jax.random.randint(k_lbl, (B,), 0, N_CLASSES, dtype=jnp.int32)

    logits = jax.jit(forward)(params, x_feat, label)
    jax.block_until_ready(logits)

    assert logits.shape == (B, N_CLASSES)
    assert bool(jnp.all(jnp.isfinite(logits)))
    print("KERNEL_OK")
</pallas_src>

<mosaic_0001>
module attributes {stable_mosaic.version = 11 : i64} {
  func.func @_fused_kernel(%arg0: i32, %arg1: memref<2x512x49xf32, #tpu.memory_space<vmem>>, %arg2: memref<512x512xbf16, #tpu.memory_space<vmem>>, %arg3: memref<1x512xf32, #tpu.memory_space<vmem>>, %arg4: memref<1x512xf32, #tpu.memory_space<vmem>>, %arg5: memref<1x512xf32, #tpu.memory_space<vmem>>, %arg6: memref<512x3968xbf16, #tpu.memory_space<vmem>>, %arg7: memref<2x1xi32, #tpu.memory_space<vmem>>, %arg8: memref<2x3968xf32, #tpu.memory_space<vmem>>) attributes {dimension_semantics = [#tpu.dimension_semantics<parallel>], iteration_bounds = array<i64: 2>, scalar_prefetch = 0 : i64, scratch_operands = 0 : i64, tpu.core_type = #tpu.core_type<tc>, window_params = [{pipeline_mode = #tpu.pipeline_mode<synchronous>, transform_indices = @transform_0, window_bounds = array<i64: 2, 512, 49>}, {pipeline_mode = #tpu.pipeline_mode<synchronous>, transform_indices = @transform_1, window_bounds = array<i64: 512, 512>}, {pipeline_mode = #tpu.pipeline_mode<synchronous>, transform_indices = @transform_2, window_bounds = array<i64: 1, 512>}, {pipeline_mode = #tpu.pipeline_mode<synchronous>, transform_indices = @transform_3, window_bounds = array<i64: 1, 512>}, {pipeline_mode = #tpu.pipeline_mode<synchronous>, transform_indices = @transform_4, window_bounds = array<i64: 1, 512>}, {transform_indices = @transform_5, window_bounds = array<i64: 512, 3968>}, {pipeline_mode = #tpu.pipeline_mode<synchronous>, transform_indices = @transform_6, window_bounds = array<i64: 2, 1>}, {transform_indices = @transform_7, window_bounds = array<i64: 2, 3968>}]} {
    %c0 = arith.constant 0 : index
    %c0_0 = arith.constant 0 : index
    %c0_1 = arith.constant 0 : index
    %0 = vector.load %arg1[%c0, %c0_0, %c0_1] : memref<2x512x49xf32, #tpu.memory_space<vmem>>, vector<2x512x49xf32>
    %cst = arith.constant 9.99999997E-7 : f32
    %1 = vector.broadcast %cst : f32 to vector<2x512x49xf32>
    %2 = arith.maximumf %0, %1 : vector<2x512x49xf32>
    %3 = arith.mulf %2, %2 : vector<2x512x49xf32>
    %4 = arith.mulf %3, %2 : vector<2x512x49xf32>
    %cst_2 = arith.constant dense<0.000000e+00> : vector<2x512xf32>
    %5 = vector.multi_reduction <add>, %4, %cst_2 [2] : vector<2x512x49xf32> to vector<2x512xf32>
    %cst_3 = arith.constant 4.900000e+01 : f32
    %6 = vector.broadcast %cst_3 : f32 to vector<2x512xf32>
    %7 = arith.divf %5, %6 : vector<2x512xf32>
    %8 = math.log %7 : vector<2x512xf32>
    %cst_4 = arith.constant 0.333333343 : f32
    %9 = vector.broadcast %cst_4 : f32 to vector<2x512xf32>
    %10 = arith.mulf %8, %9 : vector<2x512xf32>
    %11 = math.exp %10 : vector<2x512xf32>
    %12 = arith.truncf %11 : vector<2x512xf32> to vector<2x512xbf16>
    %c0_5 = arith.constant 0 : index
    %c0_6 = arith.constant 0 : index
    %13 = vector.load %arg2[%c0_5, %c0_6] : memref<512x512xbf16, #tpu.memory_space<vmem>>, vector<512x512xbf16>
    %cst_7 = arith.constant dense<0.000000e+00> : vector<2x512xf32>
    %14 = tpu.matmul %12, %13, %cst_7 {dimension_numbers = #tpu.dot_dimension_numbers<[1], [0], [0], [1], [0, 0, 1, 1], [], []>} : vector<2x512xbf16>, vector<512x512xbf16>, vector<2x512xf32> -> vector<2x512xf32>
    %c0_8 = arith.constant 0 : index
    %c0_9 = arith.constant 0 : index
    %15 = vector.load %arg3[%c0_8, %c0_9] : memref<1x512xf32, #tpu.memory_space<vmem>>, vector<1x512xf32>
    %16 = vector.broadcast %15 : vector<1x512xf32> to vector<2x512xf32>
    %17 = arith.addf %14, %16 : vector<2x512xf32>
    %cst_10 = arith.constant dense<0.000000e+00> : vector<512xf32>
    %18 = vector.multi_reduction <add>, %17, %cst_10 [0] : vector<2x512xf32> to vector<512xf32>
    %19 = vector.shape_cast %18 : vector<512xf32> to vector<1x512xf32>
    %cst_11 = arith.constant 2.000000e+00 : f32
    %20 = vector.broadcast %cst_11 : f32 to vector<1x512xf32>
    %21 = arith.divf %19, %20 : vector<1x512xf32>
    %22 = vector.broadcast %21 : vector<1x512xf32> to vector<2x512xf32>
    %23 = arith.subf %17, %22 : vector<2x512xf32>
    %24 = arith.mulf %23, %23 : vector<2x512xf32>
    %cst_12 = arith.constant dense<0.000000e+00> : vector<512xf32>
    %25 = vector.multi_reduction <add>, %24, %cst_12 [0] : vector<2x512xf32> to vector<512xf32>
    %26 = vector.shape_cast %25 : vector<512xf32> to vector<1x512xf32>
    %cst_13 = arith.constant 2.000000e+00 : f32
    %27 = vector.broadcast %cst_13 : f32 to vector<1x512xf32>
    %28 = arith.divf %26, %27 : vector<1x512xf32>
    %29 = vector.broadcast %21 : vector<1x512xf32> to vector<2x512xf32>
    %30 = arith.subf %17, %29 : vector<2x512xf32>
    %cst_14 = arith.constant 9.99999974E-6 : f32
    %31 = vector.broadcast %cst_14 : f32 to vector<1x512xf32>
    %32 = arith.addf %28, %31 : vector<1x512xf32>
    %33 = math.rsqrt %32 : vector<1x512xf32>
    %34 = vector.broadcast %33 : vector<1x512xf32> to vector<2x512xf32>
    %35 = arith.mulf %30, %34 : vector<2x512xf32>
    %c0_15 = arith.constant 0 : index
    %c0_16 = arith.constant 0 : index
    %36 = vector.load %arg4[%c0_15, %c0_16] : memref<1x512xf32, #tpu.memory_space<vmem>>, vector<1x512xf32>
    %37 = vector.broadcast %36 : vector<1x512xf32> to vector<2x512xf32>
    %38 = arith.mulf %35, %37 : vector<2x512xf32>
    %c0_17 = arith.constant 0 : index
    %c0_18 = arith.constant 0 : index
    %39 = vector.load %arg5[%c0_17, %c0_18] : memref<1x512xf32, #tpu.memory_space<vmem>>, vector<1x512xf32>
    %40 = vector.broadcast %39 : vector<1x512xf32> to vector<2x512xf32>
    %41 = arith.addf %38, %40 : vector<2x512xf32>
    %42 = arith.mulf %41, %41 : vector<2x512xf32>
    %cst_19 = arith.constant dense<0.000000e+00> : vector<2xf32>
    %43 = vector.multi_reduction <add>, %42, %cst_19 [1] : vector<2x512xf32> to vector<2xf32>
    %44 = vector.shape_cast %43 : vector<2xf32> to vector<2x1xf32>
    %45 = math.sqrt %44 : vector<2x1xf32>
    %cst_20 = arith.constant 9.99999996E-13 : f32
    %46 = vector.broadcast %cst_20 : f32 to vector<2x1xf32>
    %47 = arith.maximumf %45, %46 : vector<2x1xf32>
    %48 = vector.broadcast %47 : vector<2x1xf32> to vector<2x512xf32>
    %49 = arith.divf %41, %48 : vector<2x512xf32>
    %50 = arith.truncf %49 : vector<2x512xf32> to vector<2x512xbf16>
    %c0_21 = arith.constant 0 : index
    %c0_22 = arith.constant 0 : index
    %51 = vector.load %arg6[%c0_21, %c0_22] : memref<512x3968xbf16, #tpu.memory_space<vmem>>, vector<512x3968xbf16>
    %cst_23 = arith.constant dense<0.000000e+00> : vector<2x3968xf32>
    %52 = tpu.matmul %50, %51, %cst_23 {dimension_numbers = #tpu.dot_dimension_numbers<[1], [0], [0], [1], [0, 0, 1, 1], [], []>} : vector<2x512xbf16>, vector<512x3968xbf16>, vector<2x3968xf32> -> vector<2x3968xf32>
    %53 = arith.mulf %52, %52 : vector<2x3968xf32>
    %cst_24 = arith.constant 1.000000e+00 : f32
    %54 = vector.broadcast %cst_24 : f32 to vector<2x3968xf32>
    %55 = arith.subf %54, %53 : vector<2x3968xf32>
    %cst_25 = arith.constant 0.000000e+00 : f32
    %cst_26 = arith.constant 1.000000e+00 : f32
    %56 = vector.broadcast %cst_25 : f32 to vector<2x3968xf32>
    %57 = arith.maximumf %56, %55 : vector<2x3968xf32>
    %58 = vector.broadcast %cst_26 : f32 to vector<2x3968xf32>
    %59 = arith.minimumf %58, %57 : vector<2x3968xf32>
    %60 = math.sqrt %59 : vector<2x3968xf32>
    %cst_27 = arith.constant 0.955336511 : f32
    %61 = vector.broadcast %cst_27 : f32 to vector<2x3968xf32>
    %62 = arith.mulf %52, %61 : vector<2x3968xf32>
    %cst_28 = arith.constant 0.295520216 : f32
    %63 = vector.broadcast %cst_28 : f32 to vector<2x3968xf32>
    %64 = arith.mulf %60, %63 : vector<2x3968xf32>
    %65 = arith.subf %62, %64 : vector<2x3968xf32>
    %cst_29 = arith.constant -0.955336511 : f32
    %66 = vector.broadcast %cst_29 : f32 to vector<2x3968xf32>
    %67 = arith.cmpf ogt, %52, %66 : vector<2x3968xf32>
    %cst_30 = arith.constant 0.0886560603 : f32
    %68 = vector.broadcast %cst_30 : f32 to vector<2x3968xf32>
    %69 = arith.subf %52, %68 : vector<2x3968xf32>
    %70 = arith.select %67, %65, %69 : vector<2x3968xi1>, vector<2x3968xf32>
    %c3968_i32 = arith.constant 3968 : i32
    %71 = arith.muli %arg0, %c3968_i32 : i32
    %72 = tpu.iota {dimensions = array<i32: 1>} : vector<2x3968xi32>
    %73 = vector.broadcast %71 : i32 to vector<2x3968xi32>
    %74 = arith.addi %73, %72 : vector<2x3968xi32>
    %c0_31 = arith.constant 0 : index
    %c0_32 = arith.constant 0 : index
    %75 = vector.load %arg7[%c0_31, %c0_32] : memref<2x1xi32, #tpu.memory_space<vmem>>, vector<2x1xi32>
    %76 = vector.broadcast %75 : vector<2x1xi32> to vector<2x3968xi32>
    %77 = arith.cmpi eq, %74, %76 : vector<2x3968xi32>
    %78 = arith.extui %77 : vector<2x3968xi1> to vector<2x3968xi32>
    %79 = arith.sitofp %78 : vector<2x3968xi32> to vector<2x3968xf32>
    %80 = arith.mulf %79, %70 : vector<2x3968xf32>
    %cst_33 = arith.constant 1.000000e+00 : f32
    %81 = vector.broadcast %cst_33 : f32 to vector<2x3968xf32>
    %82 = arith.subf %81, %79 : vector<2x3968xf32>
    %83 = arith.mulf %82, %52 : vector<2x3968xf32>
    %84 = arith.addf %80, %83 : vector<2x3968xf32>
    %cst_34 = arith.constant 3.000000e+01 : f32
    %85 = vector.broadcast %cst_34 : f32 to vector<2x3968xf32>
    %86 = arith.mulf %84, %85 : vector<2x3968xf32>
    %c0_35 = arith.constant 0 : index
    %c0_36 = arith.constant 0 : index
    %87 = vector.load %arg8[%c0_35, %c0_36] : memref<2x3968xf32, #tpu.memory_space<vmem>>, vector<2x3968xf32>
    tpu.vector_store %arg8[%c0_35, %c0_36], %86 {strides = array<i32>} : memref<2x3968xf32, #tpu.memory_space<vmem>>, vector<2x3968xf32>,
    return
  }
  func.func @transform_0(%arg0: i32) -> (i32, i32, i32) {
    %c0_i32 = arith.constant 0 : i32
    %c0_i32_0 = arith.constant 0 : i32
    %c0_i32_1 = arith.constant 0 : i32
    %c0_i32_2 = arith.constant 0 : i32
    return %c0_i32, %c0_i32_0, %c0_i32_1 : i32, i32, i32
  }
  func.func @transform_1(%arg0: i32) -> (i32, i32) {
    %c0_i32 = arith.constant 0 : i32
    %c0_i32_0 = arith.constant 0 : i32
    %c0_i32_1 = arith.constant 0 : i32
    return %c0_i32, %c0_i32_0 : i32, i32
  }
  func.func @transform_2(%arg0: i32) -> (i32, i32) {
    %c0_i32 = arith.constant 0 : i32
    %c0_i32_0 = arith.constant 0 : i32
    %c0_i32_1 = arith.constant 0 : i32
    return %c0_i32, %c0_i32_0 : i32, i32
  }
  func.func @transform_3(%arg0: i32) -> (i32, i32) {
    %c0_i32 = arith.constant 0 : i32
    %c0_i32_0 = arith.constant 0 : i32
    %c0_i32_1 = arith.constant 0 : i32
    return %c0_i32, %c0_i32_0 : i32, i32
  }
  func.func @transform_4(%arg0: i32) -> (i32, i32) {
    %c0_i32 = arith.constant 0 : i32
    %c0_i32_0 = arith.constant 0 : i32
    %c0_i32_1 = arith.constant 0 : i32
    return %c0_i32, %c0_i32_0 : i32, i32
  }
  func.func @transform_5(%arg0: i32) -> (i32, i32) {
    %c0_i32 = arith.constant 0 : i32
    %c0_i32_0 = arith.constant 0 : i32
    return %c0_i32, %arg0 : i32, i32
  }
  func.func @transform_6(%arg0: i32) -> (i32, i32) {
    %c0_i32 = arith.constant 0 : i32
    %c0_i32_0 = arith.constant 0 : i32
    %c0_i32_1 = arith.constant 0 : i32
    return %c0_i32, %c0_i32_0 : i32, i32
  }
  func.func @transform_7(%arg0: i32) -> (i32, i32) {
    %c0_i32 = arith.constant 0 : i32
    %c0_i32_0 = arith.constant 0 : i32
    return %c0_i32, %arg0 : i32, i32
  }
}

</mosaic_0001>

<llo_original>
// kernel: forward.1
$region0: #{forward.1}
  #allocation0 [shape = 'u32[]', space=smem, size = 0x4, offset = 0x4, fixed_abs, tag = 'smem constant byte address 0x4 - core index']
  #allocation1 [shape = 'u32[144,128]{1,0:T(1,128)}', space=vmem, size = 0x12000, scoped, tag = 'internal scratch']
  %s0 = inlined_call_operand.vmem [shape: f32[2,512,49], index: 0, kind: input, shape index: {}]
  %s1 = inlined_call_operand.hbm [shape: bf16[512,512], index: 1, kind: input, shape index: {}]
  %s2 = inlined_call_operand.hbm [shape: f32[1,512], index: 2, kind: input, shape index: {}]
  %s3 = inlined_call_operand.hbm [shape: f32[1,512], index: 3, kind: input, shape index: {}]
  %s4 = inlined_call_operand.hbm [shape: f32[1,512], index: 4, kind: input, shape index: {}]
  %s5 = inlined_call_operand.hbm [shape: bf16[512,7936], index: 5, kind: input, shape index: {}]
  %s6 = inlined_call_operand.vmem [shape: s32[2,1], index: 6, kind: input, shape index: {}]
  %s7 = inlined_call_operand.vmem [shape: f32[2,7936], index: 7, kind: output, shape index: {}]
  %s8 = sld [smem:[#allocation0]]
  $region81: #{forward.1} parent=0
    _
  %s10 = ssub.s32 1, %s8
  %s11 = scalar_select 0, %s10, %s8
  $region1: #{forward.1} parent=0
    #allocation2 [shape = 'u8[524288]{0}', space=vmem, size = 0x80000, scoped, tag = 'input window, operand 1, single buffered']
    #allocation3 [shape = 's32[2]{0}', space=sflag, size = 0x8, scoped, tag = 'scoped memory for forward.1']
    #allocation4 [shape = 'u8[2048]{0}', space=vmem, size = 0x800, scoped, tag = 'input window, operand 2, single buffered']
    #allocation5 [shape = 's32[1]{0}', space=sflag, size = 0x4, scoped, tag = 'scoped memory for forward.1']
    #allocation6 [shape = 'u8[2048]{0}', space=vmem, size = 0x800, scoped, tag = 'input window, operand 3, single buffered']
    #allocation7 [shape = 'u8[2048]{0}', space=vmem, size = 0x800, scoped, tag = 'input window, operand 4, single buffered']
    #allocation8 [shape = 's32[1]{0}', space=sflag, size = 0x4, scoped, tag = 'scoped memory for forward.1']
    #allocation9 [shape = 'u8[8126464]{0}', space=vmem, size = 0x7c0000, scoped, tag = 'input window, operand 5']
    %12 = vsyncpa [#allocation3], 0
    %13 = vsyncpa [#allocation5], 0
    %14 = vsyncpa [#allocation8], 0
    loop: start=0, step=1, limit=4
    $region2: #{forward.1} parent=1 // loop_pre_header
      _
    $region3: #{forward.1} parent=1 // loop_header
      %s16 = sphi 0, %s20
      %p17 = scmp.ge.s32.totalorder %s16, 4
      %s24 = sphi 0, %s24
      %s26 = sphi 0, %s24
      %s27 = sphi 0, %s26
      %s41 = sphi 0, %s27
      %s45 = sphi 0, %s45
      %s47 = sphi 0, %s45
      %s48 = sphi 0, %s47
      %s62 = sphi 0, %s48
      %s66 = sphi 0, %s66
      %s68 = sphi 0, %s66
      %s69 = sphi 0, %s68
      %s83 = sphi 0, %s69
      %s87 = sphi 0, %s87
      %s89 = sphi 0, %s87
      %s90 = sphi 0, %s89
      %s104 = sphi 0, %s90
      %s108 = sphi 0, %s108
      %s110 = sphi 0, %s108
      %s111 = sphi 0, %s110
      %s125 = sphi 0, %s111
      %s131 = sphi 0, %s133
      %s134 = sphi 0, %s131
      %s135 = sphi 0, %s134
      %s151 = sphi 0, %s135
      %s155 = sphi 0, %s155
      %s157 = sphi 0, %s155
      %s158 = sphi 0, %s157
      %s172 = sphi 0, %s158
      %s178 = sphi 0, %s180
      %s181 = sphi 0, %s178
      %s182 = sphi 0, %s181
      %s198 = sphi 0, %s182
    $region4: #{forward.1} parent=1 // loop_header_branch
      %19 = sbr.rel (%p17) target = $region8
    $region5: #{forward.1} parent=1 // loop_body
      %s21 = ssub.s32 %s16, 1
      %s22 = ssub.s32 %s16, 2
      %s23 = sadd.s32 %s16, 1
      %s25 = sadd.s32 %s24, 1
      %p28 = scmp.eq.s32.totalorder %s16, 1
      %p29 = scmp.ne.s32.totalorder %s24, %s26
      %p30 = scmp.eq.s32.totalorder %s16, 0
      %p31 = por %p29, %p30
      %p32 = scmp.ne.s32.totalorder %s24, %s26
      %p33 = scmp.eq.s32.totalorder %s21, 1
      %p34 = por %p32, %p33
      %p35 = scmp.ne.s32.totalorder %s26, %s27
      %p36 = scmp.eq.s32.totalorder %s21, 0
      %p37 = por %p35, %p36
      %p38 = scmp.ne.s32.totalorder %s26, %s27
      %p39 = scmp.eq.s32.totalorder %s22, 1
      %p40 = por %p38, %p39
      %p42 = scmp.ne.s32.totalorder %s27, %s41
      %p43 = scmp.eq.s32.totalorder %s22, 0
      %p44 = por %p42, %p43
      %s46 = sadd.s32 %s45, 1
      %p49 = scmp.eq.s32.totalorder %s16, 1
      %p50 = scmp.ne.s32.totalorder %s45, %s47
      %p51 = scmp.eq.s32.totalorder %s16, 0
      %p52 = por %p50, %p51
      %p53 = scmp.ne.s32.totalorder %s45, %s47
      %p54 = scmp.eq.s32.totalorder %s21, 1
      %p55 = por %p53, %p54
      %p56 = scmp.ne.s32.totalorder %s47, %s48
      %p57 = scmp.eq.s32.totalorder %s21, 0
      %p58 = por %p56, %p57
      %p59 = scmp.ne.s32.totalorder %s47, %s48
      %p60 = scmp.eq.s32.totalorder %s22, 1
      %p61 = por %p59, %p60
      %p63 = scmp.ne.s32.totalorder %s48, %s62
      %p64 = scmp.eq.s32.totalorder %s22, 0
      %p65 = por %p63, %p64
      %s67 = sadd.s32 %s66, 1
      %p70 = scmp.eq.s32.totalorder %s16, 1
      %p71 = scmp.ne.s32.totalorder %s66, %s68
      %p72 = scmp.eq.s32.totalorder %s16, 0
      %p73 = por %p71, %p72
      %p74 = scmp.ne.s32.totalorder %s66, %s68
      %p75 = scmp.eq.s32.totalorder %s21, 1
      %p76 = por %p74, %p75
      %p77 = scmp.ne.s32.totalorder %s68, %s69
      %p78 = scmp.eq.s32.totalorder %s21, 0
      %p79 = por %p77, %p78
      %p80 = scmp.ne.s32.totalorder %s68, %s69
      %p81 = scmp.eq.s32.totalorder %s22, 1
      %p82 = por %p80, %p81
      %p84 = scmp.ne.s32.totalorder %s69, %s83
      %p85 = scmp.eq.s32.totalorder %s22, 0
      %p86 = por %p84, %p85
      %s88 = sadd.s32 %s87, 1
      %p91 = scmp.eq.s32.totalorder %s16, 1
      %p92 = scmp.ne.s32.totalorder %s87, %s89
      %p93 = scmp.eq.s32.totalorder %s16, 0
      %p94 = por %p92, %p93
      %p95 = scmp.ne.s32.totalorder %s87, %s89
      %p96 = scmp.eq.s32.totalorder %s21, 1
      %p97 = por %p95, %p96
      %p98 = scmp.ne.s32.totalorder %s89, %s90
      %p99 = scmp.eq.s32.totalorder %s21, 0
      %p100 = por %p98, %p99
      %p101 = scmp.ne.s32.totalorder %s89, %s90
      %p102 = scmp.eq.s32.totalorder %s22, 1
      %p103 = por %p101, %p102
      %p105 = scmp.ne.s32.totalorder %s90, %s104
      %p106 = scmp.eq.s32.totalorder %s22, 0
      %p107 = por %p105, %p106
      %s109 = sadd.s32 %s108, 1
      %p112 = scmp.eq.s32.totalorder %s16, 1
      %p113 = scmp.ne.s32.totalorder %s108, %s110
      %p114 = scmp.eq.s32.totalorder %s16, 0
      %p115 = por %p113, %p114
      %p116 = scmp.ne.s32.totalorder %s108, %s110
      %p117 = scmp.eq.s32.totalorder %s21, 1
      %p118 = por %p116, %p117
      %p119 = scmp.ne.s32.totalorder %s110, %s111
      %p120 = scmp.eq.s32.totalorder %s21, 0
      %p121 = por %p119, %p120
      %p122 = scmp.ne.s32.totalorder %s110, %s111
      %p123 = scmp.eq.s32.totalorder %s22, 1
      %p124 = por %p122, %p123
      %p126 = scmp.ne.s32.totalorder %s111, %s125
      %p127 = scmp.eq.s32.totalorder %s22, 0
      %p128 = por %p126, %p127
      %s129 = ssub.s32 %s16, %s23
      %p130 = scmp.eq.s32.totalorder %s129, 0
      %s132 = sadd.s32 %s131, 1
      %s133 = scalar_select %p130, %s131, %s132
      %p136 = pneg %p130
      %p137 = scmp.eq.s32.totalorder %s16, 1
      %p138 = por %p136, %p137
      %p139 = scmp.ne.s32.totalorder %s131, %s134
      %p140 = scmp.eq.s32.totalorder %s16, 0
      %p141 = por %p139, %p140
      %p142 = scmp.ne.s32.totalorder %s131, %s134
      %p143 = scmp.eq.s32.totalorder %s21, 1
      %p144 = por %p142, %p143
      %p145 = scmp.ne.s32.totalorder %s134, %s135
      %p146 = scmp.eq.s32.totalorder %s21, 0
      %p147 = por %p145, %p146
      %p148 = scmp.ne.s32.totalorder %s134, %s135
      %p149 = scmp.eq.s32.totalorder %s22, 1
      %p150 = por %p148, %p149
      %p152 = scmp.ne.s32.totalorder %s135, %s151
      %p153 = scmp.eq.s32.totalorder %s22, 0
      %p154 = por %p152, %p153
      %s156 = sadd.s32 %s155, 1
      %p159 = scmp.eq.s32.totalorder %s16, 1
      %p160 = scmp.ne.s32.totalorder %s155, %s157
      %p161 = scmp.eq.s32.totalorder %s16, 0
      %p162 = por %p160, %p161
      %p163 = scmp.ne.s32.totalorder %s155, %s157
      %p164 = scmp.eq.s32.totalorder %s21, 1
      %p165 = por %p163, %p164
      %p166 = scmp.ne.s32.totalorder %s157, %s158
      %p167 = scmp.eq.s32.totalorder %s21, 0
      %p168 = por %p166, %p167
      %p169 = scmp.ne.s32.totalorder %s157, %s158
      %p170 = scmp.eq.s32.totalorder %s22, 1
      %p171 = por %p169, %p170
      %p173 = scmp.ne.s32.totalorder %s158, %s172
      %p174 = scmp.eq.s32.totalorder %s22, 0
      %p175 = por %p173, %p174
      %s176 = ssub.s32 %s16, %s23
      %p177 = scmp.eq.s32.totalorder %s176, 0
      %s179 = sadd.s32 %s178, 1
      %s180 = scalar_select %p177, %s178, %s179
      %p183 = pneg %p177
      %p184 = scmp.eq.s32.totalorder %s16, 1
      %p185 = por %p183, %p184
      %p186 = scmp.ne.s32.totalorder %s178, %s181
      %p187 = scmp.eq.s32.totalorder %s16, 0
      %p188 = por %p186, %p187
      %p189 = scmp.ne.s32.totalorder %s178, %s181
      %p190 = scmp.eq.s32.totalorder %s21, 1
      %p191 = por %p189, %p190
      %p192 = scmp.ne.s32.totalorder %s181, %s182
      %p193 = scmp.eq.s32.totalorder %s21, 0
      %p194 = por %p192, %p193
      %p195 = scmp.ne.s32.totalorder %s181, %s182
      %p196 = scmp.eq.s32.totalorder %s22, 1
      %p197 = por %p195, %p196
      %p199 = scmp.ne.s32.totalorder %s182, %s198
      %p200 = scmp.eq.s32.totalorder %s22, 0
      %p201 = por %p199, %p200
      %p202 = scmp.le.s32.totalorder 1, %s16
      %p203 = scmp.lt.s32.totalorder %s16, 3
      %p204 = pnand %p202, %p203
      %p205 = pneg %p204
      // Predicated region
      $region9: #{forward.1} parent=5 // pred_check
        _
      $region10: #{forward.1} parent=5 // pred_check_branch
        %207 = sbr.rel (%p204) target = $region12
      $region11: #{forward.1} parent=5 // pred_region
        %s208 = ssub.s32 %s16, 1
        // Predicated region
        $region13: #{forward.1} parent=11 // pred_check
          %p209 = pneg %p37
        $region14: #{forward.1} parent=11 // pred_check_branch
          %211 = sbr.rel (%p209) target = $region16
        $region15: #{forward.1} parent=11 // pred_region
          _
        $region16: #{forward.1} parent=11 // pred_fallthru
          _
        // Predicated region
        $region17: #{forward.1} parent=11 // pred_check
          %p212 = pneg %p58
        $region18: #{forward.1} parent=11 // pred_check_branch
          %214 = sbr.rel (%p212) target = $region20
        $region19: #{forward.1} parent=11 // pred_region
          %s216 = ssub.s32 16384, 16384
          %217 = vsyncadd [#allocation3], %s216
          %s218 = sshll.u32 [#allocation2], 4
          %s219 = int_to_ptr.vmem [resolvable:$true] %s218
          %224 = dma.hbm_to_vmem [thread:$0]  %s1, 16384, %s219, [#allocation3], 256, 256, 16
        $region20: #{forward.1} parent=11 // pred_fallthru
          _
        // Predicated region
        $region21: #{forward.1} parent=11 // pred_check
          %p225 = pneg %p79
        $region22: #{forward.1} parent=11 // pred_check_branch
          %227 = sbr.rel (%p225) target = $region24
        $region23: #{forward.1} parent=11 // pred_region
          %s229 = ssub.s32 64, 64
          %230 = vsyncadd [#allocation5], %s229
          %s232 = sshll.u32 [#allocation4], 4
          %s233 = int_to_ptr.vmem [resolvable:$true] %s232
          %235 = dma.hbm_to_vmem [thread:$0]  %s2, 64, %s233, [#allocation5]
        $region24: #{forward.1} parent=11 // pred_fallthru
          _
        // Predicated region
        $region25: #{forward.1} parent=11 // pred_check
          %p236 = pneg %p100
        $region26: #{forward.1} parent=11 // pred_check_branch
          %238 = sbr.rel (%p236) target = $region28
        $region27: #{forward.1} parent=11 // pred_region
          %s240 = ssub.s32 64, 64
          %241 = vsyncadd [#allocation5], %s240
          %s243 = sshll.u32 [#allocation6], 4
          %s244 = int_to_ptr.vmem [resolvable:$true] %s243
          %246 = dma.hbm_to_vmem [thread:$0]  %s3, 64, %s244, [#allocation5]
        $region28: #{forward.1} parent=11 // pred_fallthru
          _
        // Predicated region
        $region29: #{forward.1} parent=11 // pred_check
          %p247 = pneg %p121
        $region30: #{forward.1} parent=11 // pred_check_branch
          %249 = sbr.rel (%p247) target = $region32
        $region31: #{forward.1} parent=11 // pred_region
          %s251 = ssub.s32 64, 64
          %252 = vsyncadd [#allocation8], %s251
          %s254 = sshll.u32 [#allocation7], 4
          %s255 = int_to_ptr.vmem [resolvable:$true] %s254
          %257 = dma.hbm_to_vmem [thread:$0]  %s4, 64, %s255, [#allocation8]
        $region32: #{forward.1} parent=11 // pred_fallthru
          _
        // Predicated region
        $region33: #{forward.1} parent=11 // pred_check
          %p258 = pneg %p168
        $region34: #{forward.1} parent=11 // pred_check_branch
          %260 = sbr.rel (%p258) target = $region36
        $region35: #{forward.1} parent=11 // pred_region
          _
        $region36: #{forward.1} parent=11 // pred_fallthru
          _
      $region12: #{forward.1} parent=5 // pred_fallthru
        _
      %p261 = scmp.lt.s32.totalorder %s16, 2
      // Predicated region
      $region37: #{forward.1} parent=5 // pred_check
        %p262 = pneg %p261
      $region38: #{forward.1} parent=5 // pred_check_branch
        %264 = sbr.rel (%p262) target = $region40
      $region39: #{forward.1} parent=5 // pred_region
        // Predicated region
        $region41: #{forward.1} parent=39 // pred_check
          %p265 = pneg %p141
        $region42: #{forward.1} parent=39 // pred_check_branch
          %267 = sbr.rel (%p265) target = $region44
        $region43: #{forward.1} parent=39 // pred_region
          %s268 = sand.u32 %s16, 1
          %s269 = scalar_lea.sflag [#allocation3], %s268
          %s270 = sand.u32 %s131, 1
          %s271 = smul.addr %s270, 7936
          %s272 = scalar_lea.vmem [#allocation9], %s271
          %s273 = smul.u32 31, %s16
          %s275 = ssub.s32 126976, 126976
          %276 = vsyncadd %s269, %s275
          %s277 = smul.addr %s273, 64
          %s278 = scalar_lea.hbm %s5, %s277
          %s279 = sshll.u32 %s272, 4
          %s280 = int_to_ptr.vmem [resolvable:$true] %s279
          %285 = dma.hbm_to_vmem [thread:$0]  %s278, 126976, %s280, %s269, 3968, 1984, 124
        $region44: #{forward.1} parent=39 // pred_fallthru
          _
      $region40: #{forward.1} parent=5 // pred_fallthru
        _
      %p286 = scmp.le.s32.totalorder 1, %s16
      %p287 = scmp.lt.s32.totalorder %s16, 3
      %p288 = pnand %p286, %p287
      %p289 = pneg %p288
      // Predicated region
      $region45: #{forward.1} parent=5 // pred_check
        _
      $region46: #{forward.1} parent=5 // pred_check_branch
        %291 = sbr.rel (%p288) target = $region48
      $region47: #{forward.1} parent=5 // pred_region
        %s292 = ssub.s32 %s16, 1
        // Predicated region
        $region49: #{forward.1} parent=47 // pred_check
          %p293 = pneg %p58
        $region50: #{forward.1} parent=47 // pred_check_branch
          %295 = sbr.rel (%p293) target = $region52
        $region51: #{forward.1} parent=47 // pred_region
          %296 = dma.done [#allocation3], 16384
        $region52: #{forward.1} parent=47 // pred_fallthru
          _
        // Predicated region
        $region53: #{forward.1} parent=47 // pred_check
          %p297 = pneg %p79
        $region54: #{forward.1} parent=47 // pred_check_branch
          %299 = sbr.rel (%p297) target = $region56
        $region55: #{forward.1} parent=47 // pred_region
          %300 = dma.done [#allocation5], 64
        $region56: #{forward.1} parent=47 // pred_fallthru
          _
        // Predicated region
        $region57: #{forward.1} parent=47 // pred_check
          %p301 = pneg %p100
        $region58: #{forward.1} parent=47 // pred_check_branch
          %303 = sbr.rel (%p301) target = $region60
        $region59: #{forward.1} parent=47 // pred_region
          %304 = dma.done [#allocation5], 64
        $region60: #{forward.1} parent=47 // pred_fallthru
          _
        // Predicated region
        $region61: #{forward.1} parent=47 // pred_check
          %p305 = pneg %p121
        $region62: #{forward.1} parent=47 // pred_check_branch
          %307 = sbr.rel (%p305) target = $region64
        $region63: #{forward.1} parent=47 // pred_region
          %308 = dma.done [#allocation8], 64
        $region64: #{forward.1} parent=47 // pred_fallthru
          _
        %s309 = sand.u32 %s21, 1
        %s310 = scalar_lea.sflag [#allocation3], %s309
        %s311 = sand.u32 %s134, 1
        %s312 = smul.addr %s311, 7936
        %s313 = scalar_lea.vmem [#allocation9], %s312
        // Predicated region
        $region65: #{forward.1} parent=47 // pred_check
          %p314 = pneg %p147
        $region66: #{forward.1} parent=47 // pred_check_branch
          %316 = sbr.rel (%p314) target = $region68
        $region67: #{forward.1} parent=47 // pred_region
          %317 = dma.done %s310, 126976
        $region68: #{forward.1} parent=47 // pred_fallthru
          _
        %p318 = pneg %p37
        %p319 = pneg %p34
        %p320 = pneg %p58
        %p321 = pneg %p55
        %p322 = pneg %p79
        %p323 = pneg %p76
        %p324 = pneg %p100
        %p325 = pneg %p97
        %p326 = pneg %p121
        %p327 = pneg %p118
        %s328 = sand.u32 %s21, 1
        %s329 = scalar_lea.sflag [#allocation3], %s328
        %s330 = sand.u32 %s134, 1
        %s331 = smul.addr %s330, 7936
        %s332 = scalar_lea.vmem [#allocation9], %s331
        %p333 = pneg %p147
        %p334 = pneg %p144
        %p335 = pneg %p168
        %p336 = pneg %p165
        %p337 = pneg %p194
        %p338 = pneg %p191
        %s339 = smul.u32 31, %s21
        %p340 = scmp.lt.s32.totalorder %s339, 61
        %s341 = scalar_select %p340, %s339, 61
        %s342 = smul.addr %s341, 2
        %s343 = scalar_lea.vmem %s7, %s342
        %s344 = smul.u32 31, %s21
        %s345 = smul.u32 31, %s21
        %p346 = scmp.lt.s32.totalorder %s345, 61
        %s347 = scalar_select %p346, %s345, 61
        %s348 = smul.addr %s347, 2
        %s349 = scalar_lea.vmem %s7, %s348
        %s350 = smul.u32 31, %s21
        %v352 = vld [vmem:[%s0] sm:$0xff]
        %v353 = vld [vmem:[%s0 + $0x8] sm:$0xff]
        %v354 = vld [vmem:[%s0 + $0x10] sm:$0xff]
        %v355 = vld [vmem:[%s0 + $0x18] sm:$0xff]
        %v356 = vld [vmem:[%s0 + $0x20] sm:$0xff]
        %v357 = vld [vmem:[%s0 + $0x28] sm:$0xff]
        %v358 = vld [vmem:[%s0 + $0x30] sm:$0xff]
        %v359 = vld [vmem:[%s0 + $0x38] sm:$0xff]
        %v360 = vld [vmem:[%s0 + $0x40] sm:$0xff]
        %v361 = vld [vmem:[%s0 + $0x48] sm:$0xff]
        %v362 = vld [vmem:[%s0 + $0x50] sm:$0xff]
        %v363 = vld [vmem:[%s0 + $0x58] sm:$0xff]
        %v364 = vld [vmem:[%s0 + $0x60] sm:$0xff]
        %v365 = vld [vmem:[%s0 + $0x68] sm:$0xff]
        %v366 = vld [vmem:[%s0 + $0x70] sm:$0xff]
        %v367 = vld [vmem:[%s0 + $0x78] sm:$0xff]
        %v368 = vld [vmem:[%s0 + $0x80] sm:$0xff]
        %v369 = vld [vmem:[%s0 + $0x88] sm:$0xff]
        %v370 = vld [vmem:[%s0 + $0x90] sm:$0xff]
        %v371 = vld [vmem:[%s0 + $0x98] sm:$0xff]
        %v372 = vld [vmem:[%s0 + $0xa0] sm:$0xff]
        %v373 = vld [vmem:[%s0 + $0xa8] sm:$0xff]
        %v374 = vld [vmem:[%s0 + $0xb0] sm:$0xff]
        %v375 = vld [vmem:[%s0 + $0xb8] sm:$0xff]
        %v376 = vld [vmem:[%s0 + $0xc0] sm:$0xff]
        %v377 = vld [vmem:[%s0 + $0xc8] sm:$0xff]
        %v378 = vld [vmem:[%s0 + $0xd0] sm:$0xff]
        %v379 = vld [vmem:[%s0 + $0xd8] sm:$0xff]
        %v380 = vld [vmem:[%s0 + $0xe0] sm:$0xff]
        %v381 = vld [vmem:[%s0 + $0xe8] sm:$0xff]
        %v382 = vld [vmem:[%s0 + $0xf0] sm:$0xff]
        %v383 = vld [vmem:[%s0 + $0xf8] sm:$0xff]
        %v384 = vld [vmem:[%s0 + $0x100] sm:$0xff]
        %v385 = vld [vmem:[%s0 + $0x108] sm:$0xff]
        %v386 = vld [vmem:[%s0 + $0x110] sm:$0xff]
        %v387 = vld [vmem:[%s0 + $0x118] sm:$0xff]
        %v388 = vld [vmem:[%s0 + $0x120] sm:$0xff]
        %v389 = vld [vmem:[%s0 + $0x128] sm:$0xff]
        %v390 = vld [vmem:[%s0 + $0x130] sm:$0xff]
        %v391 = vld [vmem:[%s0 + $0x138] sm:$0xff]
        %v392 = vld [vmem:[%s0 + $0x140] sm:$0xff]
        %v393 = vld [vmem:[%s0 + $0x148] sm:$0xff]
        %v394 = vld [vmem:[%s0 + $0x150] sm:$0xff]
        %v395 = vld [vmem:[%s0 + $0x158] sm:$0xff]
        %v396 = vld [vmem:[%s0 + $0x160] sm:$0xff]
        %v397 = vld [vmem:[%s0 + $0x168] sm:$0xff]
        %v398 = vld [vmem:[%s0 + $0x170] sm:$0xff]
        %v399 = vld [vmem:[%s0 + $0x178] sm:$0xff]
        %v400 = vld [vmem:[%s0 + $0x180] sm:$0xff]
        %v401 = vld [vmem:[%s0 + $0x188] sm:$0xff]
        %v402 = vld [vmem:[%s0 + $0x190] sm:$0xff]
        %v403 = vld [vmem:[%s0 + $0x198] sm:$0xff]
        %v404 = vld [vmem:[%s0 + $0x1a0] sm:$0xff]
        %v405 = vld [vmem:[%s0 + $0x1a8] sm:$0xff]
        %v406 = vld [vmem:[%s0 + $0x1b0] sm:$0xff]
        %v407 = vld [vmem:[%s0 + $0x1b8] sm:$0xff]
        %v408 = vld [vmem:[%s0 + $0x1c0] sm:$0xff]
        %v409 = vld [vmem:[%s0 + $0x1c8] sm:$0xff]
        %v410 = vld [vmem:[%s0 + $0x1d0] sm:$0xff]
        %v411 = vld [vmem:[%s0 + $0x1d8] sm:$0xff]
        %v412 = vld [vmem:[%s0 + $0x1e0] sm:$0xff]
        %v413 = vld [vmem:[%s0 + $0x1e8] sm:$0xff]
        %v414 = vld [vmem:[%s0 + $0x1f0] sm:$0xff]
        %v415 = vld [vmem:[%s0 + $0x1f8] sm:$0xff]
        %v416 = vld [vmem:[%s0 + $0x200] sm:$0xff]
        %v417 = vld [vmem:[%s0 + $0x208] sm:$0xff]
        %v418 = vld [vmem:[%s0 + $0x210] sm:$0xff]
        %v419 = vld [vmem:[%s0 + $0x218] sm:$0xff]
        %v420 = vld [vmem:[%s0 + $0x220] sm:$0xff]
        %v421 = vld [vmem:[%s0 + $0x228] sm:$0xff]
        %v422 = vld [vmem:[%s0 + $0x230] sm:$0xff]
        %v423 = vld [vmem:[%s0 + $0x238] sm:$0xff]
        %v424 = vld [vmem:[%s0 + $0x240] sm:$0xff]
        %v425 = vld [vmem:[%s0 + $0x248] sm:$0xff]
        %v426 = vld [vmem:[%s0 + $0x250] sm:$0xff]
        %v427 = vld [vmem:[%s0 + $0x258] sm:$0xff]
        %v428 = vld [vmem:[%s0 + $0x260] sm:$0xff]
        %v429 = vld [vmem:[%s0 + $0x268] sm:$0xff]
        %v430 = vld [vmem:[%s0 + $0x270] sm:$0xff]
        %v431 = vld [vmem:[%s0 + $0x278] sm:$0xff]
        %v432 = vld [vmem:[%s0 + $0x280] sm:$0xff]
        %v433 = vld [vmem:[%s0 + $0x288] sm:$0xff]
        %v434 = vld [vmem:[%s0 + $0x290] sm:$0xff]
        %v435 = vld [vmem:[%s0 + $0x298] sm:$0xff]
        %v436 = vld [vmem:[%s0 + $0x2a0] sm:$0xff]
        %v437 = vld [vmem:[%s0 + $0x2a8] sm:$0xff]
        %v438 = vld [vmem:[%s0 + $0x2b0] sm:$0xff]
        %v439 = vld [vmem:[%s0 + $0x2b8] sm:$0xff]
        %v440 = vld [vmem:[%s0 + $0x2c0] sm:$0xff]
        %v441 = vld [vmem:[%s0 + $0x2c8] sm:$0xff]
        %v442 = vld [vmem:[%s0 + $0x2d0] sm:$0xff]
        %v443 = vld [vmem:[%s0 + $0x2d8] sm:$0xff]
        %v444 = vld [vmem:[%s0 + $0x2e0] sm:$0xff]
        %v445 = vld [vmem:[%s0 + $0x2e8] sm:$0xff]
        %v446 = vld [vmem:[%s0 + $0x2f0] sm:$0xff]
        %v447 = vld [vmem:[%s0 + $0x2f8] sm:$0xff]
        %v448 = vld [vmem:[%s0 + $0x300] sm:$0xff]
        %v449 = vld [vmem:[%s0 + $0x308] sm:$0xff]
        %v450 = vld [vmem:[%s0 + $0x310] sm:$0xff]
        %v451 = vld [vmem:[%s0 + $0x318] sm:$0xff]
        %v452 = vld [vmem:[%s0 + $0x320] sm:$0xff]
        %v453 = vld [vmem:[%s0 + $0x328] sm:$0xff]
        %v454 = vld [vmem:[%s0 + $0x330] sm:$0xff]
        %v455 = vld [vmem:[%s0 + $0x338] sm:$0xff]
        %v456 = vld [vmem:[%s0 + $0x340] sm:$0xff]
        %v457 = vld [vmem:[%s0 + $0x348] sm:$0xff]
        %v458 = vld [vmem:[%s0 + $0x350] sm:$0xff]
        %v459 = vld [vmem:[%s0 + $0x358] sm:$0xff]
        %v460 = vld [vmem:[%s0 + $0x360] sm:$0xff]
        %v461 = vld [vmem:[%s0 + $0x368] sm:$0xff]
        %v462 = vld [vmem:[%s0 + $0x370] sm:$0xff]
        %v463 = vld [vmem:[%s0 + $0x378] sm:$0xff]
        %v464 = vld [vmem:[%s0 + $0x380] sm:$0xff]
        %v465 = vld [vmem:[%s0 + $0x388] sm:$0xff]
        %v466 = vld [vmem:[%s0 + $0x390] sm:$0xff]
        %v467 = vld [vmem:[%s0 + $0x398] sm:$0xff]
        %v468 = vld [vmem:[%s0 + $0x3a0] sm:$0xff]
        %v469 = vld [vmem:[%s0 + $0x3a8] sm:$0xff]
        %v470 = vld [vmem:[%s0 + $0x3b0] sm:$0xff]
        %v471 = vld [vmem:[%s0 + $0x3b8] sm:$0xff]
        %v472 = vld [vmem:[%s0 + $0x3c0] sm:$0xff]
        %v473 = vld [vmem:[%s0 + $0x3c8] sm:$0xff]
        %v474 = vld [vmem:[%s0 + $0x3d0] sm:$0xff]
        %v475 = vld [vmem:[%s0 + $0x3d8] sm:$0xff]
        %v476 = vld [vmem:[%s0 + $0x3e0] sm:$0xff]
        %v477 = vld [vmem:[%s0 + $0x3e8] sm:$0xff]
        %v478 = vld [vmem:[%s0 + $0x3f0] sm:$0xff]
        %v479 = vld [vmem:[%s0 + $0x3f8] sm:$0xff]
        %v480 = vmax.f32 %v352, 1e-06
        %v481 = vmax.f32 %v353, 1e-06
        %v482 = vmax.f32 %v354, 1e-06
        %v483 = vmax.f32 %v355, 1e-06
        %v484 = vmax.f32 %v356, 1e-06
        %v485 = vmax.f32 %v357, 1e-06
        %v486 = vmax.f32 %v358, 1e-06
        %v487 = vmax.f32 %v359, 1e-06
        %v488 = vmax.f32 %v360, 1e-06
        %v489 = vmax.f32 %v361, 1e-06
        %v490 = vmax.f32 %v362, 1e-06
        %v491 = vmax.f32 %v363, 1e-06
        %v492 = vmax.f32 %v364, 1e-06
        %v493 = vmax.f32 %v365, 1e-06
        %v494 = vmax.f32 %v366, 1e-06
        %v495 = vmax.f32 %v367, 1e-06
        %v496 = vmax.f32 %v368, 1e-06
        %v497 = vmax.f32 %v369, 1e-06
        %v498 = vmax.f32 %v370, 1e-06
        %v499 = vmax.f32 %v371, 1e-06
        %v500 = vmax.f32 %v372, 1e-06
        %v501 = vmax.f32 %v373, 1e-06
        %v502 = vmax.f32 %v374, 1e-06
        %v503 = vmax.f32 %v375, 1e-06
        %v504 = vmax.f32 %v376, 1e-06
        %v505 = vmax.f32 %v377, 1e-06
        %v506 = vmax.f32 %v378, 1e-06
        %v507 = vmax.f32 %v379, 1e-06
        %v508 = vmax.f32 %v380, 1e-06
        %v509 = vmax.f32 %v381, 1e-06
        %v510 = vmax.f32 %v382, 1e-06
        %v511 = vmax.f32 %v383, 1e-06
        %v512 = vmax.f32 %v384, 1e-06
        %v513 = vmax.f32 %v385, 1e-06
        %v514 = vmax.f32 %v386, 1e-06
        %v515 = vmax.f32 %v387, 1e-06
        %v516 = vmax.f32 %v388, 1e-06
        %v517 = vmax.f32 %v389, 1e-06
        %v518 = vmax.f32 %v390, 1e-06
        %v519 = vmax.f32 %v391, 1e-06
        %v520 = vmax.f32 %v392, 1e-06
        %v521 = vmax.f32 %v393, 1e-06
        %v522 = vmax.f32 %v394, 1e-06
        %v523 = vmax.f32 %v395, 1e-06
        %v524 = vmax.f32 %v396, 1e-06
        %v525 = vmax.f32 %v397, 1e-06
        %v526 = vmax.f32 %v398, 1e-06
        %v527 = vmax.f32 %v399, 1e-06
        %v528 = vmax.f32 %v400, 1e-06
        %v529 = vmax.f32 %v401, 1e-06
        %v530 = vmax.f32 %v402, 1e-06
        %v531 = vmax.f32 %v403, 1e-06
        %v532 = vmax.f32 %v404, 1e-06
        %v533 = vmax.f32 %v405, 1e-06
        %v534 = vmax.f32 %v406, 1e-06
        %v535 = vmax.f32 %v407, 1e-06
        %v536 = vmax.f32 %v408, 1e-06
        %v537 = vmax.f32 %v409, 1e-06
        %v538 = vmax.f32 %v410, 1e-06
        %v539 = vmax.f32 %v411, 1e-06
        %v540 = vmax.f32 %v412, 1e-06
        %v541 = vmax.f32 %v413, 1e-06
        %v542 = vmax.f32 %v414, 1e-06
        %v543 = vmax.f32 %v415, 1e-06
        %v544 = vmax.f32 %v416, 1e-06
        %v545 = vmax.f32 %v417, 1e-06
        %v546 = vmax.f32 %v418, 1e-06
        %v547 = vmax.f32 %v419, 1e-06
        %v548 = vmax.f32 %v420, 1e-06
        %v549 = vmax.f32 %v421, 1e-06
        %v550 = vmax.f32 %v422, 1e-06
        %v551 = vmax.f32 %v423, 1e-06
        %v552 = vmax.f32 %v424, 1e-06
        %v553 = vmax.f32 %v425, 1e-06
        %v554 = vmax.f32 %v426, 1e-06
        %v555 = vmax.f32 %v427, 1e-06
        %v556 = vmax.f32 %v428, 1e-06
        %v557 = vmax.f32 %v429, 1e-06
        %v558 = vmax.f32 %v430, 1e-06
        %v559 = vmax.f32 %v431, 1e-06
        %v560 = vmax.f32 %v432, 1e-06
        %v561 = vmax.f32 %v433, 1e-06
        %v562 = vmax.f32 %v434, 1e-06
        %v563 = vmax.f32 %v435, 1e-06
        %v564 = vmax.f32 %v436, 1e-06
        %v565 = vmax.f32 %v437, 1e-06
        %v566 = vmax.f32 %v438, 1e-06
        %v567 = vmax.f32 %v439, 1e-06
        %v568 = vmax.f32 %v440, 1e-06
        %v569 = vmax.f32 %v441, 1e-06
        %v570 = vmax.f32 %v442, 1e-06
        %v571 = vmax.f32 %v443, 1e-06
        %v572 = vmax.f32 %v444, 1e-06
        %v573 = vmax.f32 %v445, 1e-06
        %v574 = vmax.f32 %v446, 1e-06
        %v575 = vmax.f32 %v447, 1e-06
        %v576 = vmax.f32 %v448, 1e-06
        %v577 = vmax.f32 %v449, 1e-06
        %v578 = vmax.f32 %v450, 1e-06
        %v579 = vmax.f32 %v451, 1e-06
        %v580 = vmax.f32 %v452, 1e-06
        %v581 = vmax.f32 %v453, 1e-06
        %v582 = vmax.f32 %v454, 1e-06
        %v583 = vmax.f32 %v455, 1e-06
        %v584 = vmax.f32 %v456, 1e-06
        %v585 = vmax.f32 %v457, 1e-06
        %v586 = vmax.f32 %v458, 1e-06
        %v587 = vmax.f32 %v459, 1e-06
        %v588 = vmax.f32 %v460, 1e-06
        %v589 = vmax.f32 %v461, 1e-06
        %v590 = vmax.f32 %v462, 1e-06
        %v591 = vmax.f32 %v463, 1e-06
        %v592 = vmax.f32 %v464, 1e-06
        %v593 = vmax.f32 %v465, 1e-06
        %v594 = vmax.f32 %v466, 1e-06
        %v595 = vmax.f32 %v467, 1e-06
        %v596 = vmax.f32 %v468, 1e-06
        %v597 = vmax.f32 %v469, 1e-06
        %v598 = vmax.f32 %v470, 1e-06
        %v599 = vmax.f32 %v471, 1e-06
        %v600 = vmax.f32 %v472, 1e-06
        %v601 = vmax.f32 %v473, 1e-06
        %v602 = vmax.f32 %v474, 1e-06
        %v603 = vmax.f32 %v475, 1e-06
        %v604 = vmax.f32 %v476, 1e-06
        %v605 = vmax.f32 %v477, 1e-06
        %v606 = vmax.f32 %v478, 1e-06
        %v607 = vmax.f32 %v479, 1e-06
        %v608 = vmul.f32 %v480, %v480
        %v609 = vmul.f32 %v481, %v481
        %v610 = vmul.f32 %v482, %v482
        %v611 = vmul.f32 %v483, %v483
        %v612 = vmul.f32 %v484, %v484
        %v613 = vmul.f32 %v485, %v485
        %v614 = vmul.f32 %v486, %v486
        %v615 = vmul.f32 %v487, %v487
        %v616 = vmul.f32 %v488, %v488
        %v617 = vmul.f32 %v489, %v489
        %v618 = vmul.f32 %v490, %v490
        %v619 = vmul.f32 %v491, %v491
        %v620 = vmul.f32 %v492, %v492
        %v621 = vmul.f32 %v493, %v493
        %v622 = vmul.f32 %v494, %v494
        %v623 = vmul.f32 %v495, %v495
        %v624 = vmul.f32 %v496, %v496
        %v625 = vmul.f32 %v497, %v497
        %v626 = vmul.f32 %v498, %v498
        %v627 = vmul.f32 %v499, %v499
        %v628 = vmul.f32 %v500, %v500
        %v629 = vmul.f32 %v501, %v501
        %v630 = vmul.f32 %v502, %v502
        %v631 = vmul.f32 %v503, %v503
        %v632 = vmul.f32 %v504, %v504
        %v633 = vmul.f32 %v505, %v505
        %v634 = vmul.f32 %v506, %v506
        %v635 = vmul.f32 %v507, %v507
        %v636 = vmul.f32 %v508, %v508
        %v637 = vmul.f32 %v509, %v509
        %v638 = vmul.f32 %v510, %v510
        %v639 = vmul.f32 %v511, %v511
        %v640 = vmul.f32 %v512, %v512
        %v641 = vmul.f32 %v513, %v513
        %v642 = vmul.f32 %v514, %v514
        %v643 = vmul.f32 %v515, %v515
        %v644 = vmul.f32 %v516, %v516
        %v645 = vmul.f32 %v517, %v517
        %v646 = vmul.f32 %v518, %v518
        %v647 = vmul.f32 %v519, %v519
        %v648 = vmul.f32 %v520, %v520
        %v649 = vmul.f32 %v521, %v521
        %v650 = vmul.f32 %v522, %v522
        %v651 = vmul.f32 %v523, %v523
        %v652 = vmul.f32 %v524, %v524
        %v653 = vmul.f32 %v525, %v525
        %v654 = vmul.f32 %v526, %v526
        %v655 = vmul.f32 %v527, %v527
        %v656 = vmul.f32 %v528, %v528
        %v657 = vmul.f32 %v529, %v529
        %v658 = vmul.f32 %v530, %v530
        %v659 = vmul.f32 %v531, %v531
        %v660 = vmul.f32 %v532, %v532
        %v661 = vmul.f32 %v533, %v533
        %v662 = vmul.f32 %v534, %v534
        %v663 = vmul.f32 %v535, %v535
        %v664 = vmul.f32 %v536, %v536
        %v665 = vmul.f32 %v537, %v537
        %v666 = vmul.f32 %v538, %v538
        %v667 = vmul.f32 %v539, %v539
        %v668 = vmul.f32 %v540, %v540
        %v669 = vmul.f32 %v541, %v541
        %v670 = vmul.f32 %v542, %v542
        %v671 = vmul.f32 %v543, %v543
        %v672 = vmul.f32 %v544, %v544
        %v673 = vmul.f32 %v545, %v545
        %v674 = vmul.f32 %v546, %v546
        %v675 = vmul.f32 %v547, %v547
        %v676 = vmul.f32 %v548, %v548
        %v677 = vmul.f32 %v549, %v549
        %v678 = vmul.f32 %v550, %v550
        %v679 = vmul.f32 %v551, %v551
        %v680 = vmul.f32 %v552, %v552
        %v681 = vmul.f32 %v553, %v553
        %v682 = vmul.f32 %v554, %v554
        %v683 = vmul.f32 %v555, %v555
        %v684 = vmul.f32 %v556, %v556
        %v685 = vmul.f32 %v557, %v557
        %v686 = vmul.f32 %v558, %v558
        %v687 = vmul.f32 %v559, %v559
        %v688 = vmul.f32 %v560, %v560
        %v689 = vmul.f32 %v561, %v561
        %v690 = vmul.f32 %v562, %v562
        %v691 = vmul.f32 %v563, %v563
        %v692 = vmul.f32 %v564, %v564
        %v693 = vmul.f32 %v565, %v565
        %v694 = vmul.f32 %v566, %v566
        %v695 = vmul.f32 %v567, %v567
        %v696 = vmul.f32 %v568, %v568
        %v697 = vmul.f32 %v569, %v569
        %v698 = vmul.f32 %v570, %v570
        %v699 = vmul.f32 %v571, %v571
        %v700 = vmul.f32 %v572, %v572
        %v701 = vmul.f32 %v573, %v573
        %v702 = vmul.f32 %v574, %v574
        %v703 = vmul.f32 %v575, %v575
        %v704 = vmul.f32 %v576, %v576
        %v705 = vmul.f32 %v577, %v577
        %v706 = vmul.f32 %v578, %v578
        %v707 = vmul.f32 %v579, %v579
        %v708 = vmul.f32 %v580, %v580
        %v709 = vmul.f32 %v581, %v581
        %v710 = vmul.f32 %v582, %v582
        %v711 = vmul.f32 %v583, %v583
        %v712 = vmul.f32 %v584, %v584
        %v713 = vmul.f32 %v585, %v585
        %v714 = vmul.f32 %v586, %v586
        %v715 = vmul.f32 %v587, %v587
        %v716 = vmul.f32 %v588, %v588
        %v717 = vmul.f32 %v589, %v589
        %v718 = vmul.f32 %v590, %v590
        %v719 = vmul.f32 %v591, %v591
        %v720 = vmul.f32 %v592, %v592
        %v721 = vmul.f32 %v593, %v593
        %v722 = vmul.f32 %v594, %v594
        %v723 = vmul.f32 %v595, %v595
        %v724 = vmul.f32 %v596, %v596
        %v725 = vmul.f32 %v597, %v597
        %v726 = vmul.f32 %v598, %v598
        %v727 = vmul.f32 %v599, %v599
        %v728 = vmul.f32 %v600, %v600
        %v729 = vmul.f32 %v601, %v601
        %v730 = vmul.f32 %v602, %v602
        %v731 = vmul.f32 %v603, %v603
        %v732 = vmul.f32 %v604, %v604
        %v733 = vmul.f32 %v605, %v605
        %v734 = vmul.f32 %v606, %v606
        %v735 = vmul.f32 %v607, %v607
        %v736 = vmul.f32 %v608, %v480
        %v737 = vmul.f32 %v609, %v481
        %v738 = vmul.f32 %v610, %v482
        %v739 = vmul.f32 %v611, %v483
        %v740 = vmul.f32 %v612, %v484
        %v741 = vmul.f32 %v613, %v485
        %v742 = vmul.f32 %v614, %v486
        %v743 = vmul.f32 %v615, %v487
        %v744 = vmul.f32 %v616, %v488
        %v745 = vmul.f32 %v617, %v489
        %v746 = vmul.f32 %v618, %v490
        %v747 = vmul.f32 %v619, %v491
        %v748 = vmul.f32 %v620, %v492
        %v749 = vmul.f32 %v621, %v493
        %v750 = vmul.f32 %v622, %v494
        %v751 = vmul.f32 %v623, %v495
        %v752 = vmul.f32 %v624, %v496
        %v753 = vmul.f32 %v625, %v497
        %v754 = vmul.f32 %v626, %v498
        %v755 = vmul.f32 %v627, %v499
        %v756 = vmul.f32 %v628, %v500
        %v757 = vmul.f32 %v629, %v501
        %v758 = vmul.f32 %v630, %v502
        %v759 = vmul.f32 %v631, %v503
        %v760 = vmul.f32 %v632, %v504
        %v761 = vmul.f32 %v633, %v505
        %v762 = vmul.f32 %v634, %v506
        %v763 = vmul.f32 %v635, %v507
        %v764 = vmul.f32 %v636, %v508
        %v765 = vmul.f32 %v637, %v509
        %v766 = vmul.f32 %v638, %v510
        %v767 = vmul.f32 %v639, %v511
        %v768 = vmul.f32 %v640, %v512
        %v769 = vmul.f32 %v641, %v513
        %v770 = vmul.f32 %v642, %v514
        %v771 = vmul.f32 %v643, %v515
        %v772 = vmul.f32 %v644, %v516
        %v773 = vmul.f32 %v645, %v517
        %v774 = vmul.f32 %v646, %v518
        %v775 = vmul.f32 %v647, %v519
        %v776 = vmul.f32 %v648, %v520
        %v777 = vmul.f32 %v649, %v521
        %v778 = vmul.f32 %v650, %v522
        %v779 = vmul.f32 %v651, %v523
        %v780 = vmul.f32 %v652, %v524
        %v781 = vmul.f32 %v653, %v525
        %v782 = vmul.f32 %v654, %v526
        %v783 = vmul.f32 %v655, %v527
        %v784 = vmul.f32 %v656, %v528
        %v785 = vmul.f32 %v657, %v529
        %v786 = vmul.f32 %v658, %v530
        %v787 = vmul.f32 %v659, %v531
        %v788 = vmul.f32 %v660, %v532
        %v789 = vmul.f32 %v661, %v533
        %v790 = vmul.f32 %v662, %v534
        %v791 = vmul.f32 %v663, %v535
        %v792 = vmul.f32 %v664, %v536
        %v793 = vmul.f32 %v665, %v537
        %v794 = vmul.f32 %v666, %v538
        %v795 = vmul.f32 %v667, %v539
        %v796 = vmul.f32 %v668, %v540
        %v797 = vmul.f32 %v669, %v541
        %v798 = vmul.f32 %v670, %v542
        %v799 = vmul.f32 %v671, %v543
        %v800 = vmul.f32 %v672, %v544
        %v801 = vmul.f32 %v673, %v545
        %v802 = vmul.f32 %v674, %v546
        %v803 = vmul.f32 %v675, %v547
        %v804 = vmul.f32 %v676, %v548
        %v805 = vmul.f32 %v677, %v549
        %v806 = vmul.f32 %v678, %v550
        %v807 = vmul.f32 %v679, %v551
        %v808 = vmul.f32 %v680, %v552
        %v809 = vmul.f32 %v681, %v553
        %v810 = vmul.f32 %v682, %v554
        %v811 = vmul.f32 %v683, %v555
        %v812 = vmul.f32 %v684, %v556
        %v813 = vmul.f32 %v685, %v557
        %v814 = vmul.f32 %v686, %v558
        %v815 = vmul.f32 %v687, %v559
        %v816 = vmul.f32 %v688, %v560
        %v817 = vmul.f32 %v689, %v561
        %v818 = vmul.f32 %v690, %v562
        %v819 = vmul.f32 %v691, %v563
        %v820 = vmul.f32 %v692, %v564
        %v821 = vmul.f32 %v693, %v565
        %v822 = vmul.f32 %v694, %v566
        %v823 = vmul.f32 %v695, %v567
        %v824 = vmul.f32 %v696, %v568
        %v825 = vmul.f32 %v697, %v569
        %v826 = vmul.f32 %v698, %v570
        %v827 = vmul.f32 %v699, %v571
        %v828 = vmul.f32 %v700, %v572
        %v829 = vmul.f32 %v701, %v573
        %v830 = vmul.f32 %v702, %v574
        %v831 = vmul.f32 %v703, %v575
        %v832 = vmul.f32 %v704, %v576
        %v833 = vmul.f32 %v705, %v577
        %v834 = vmul.f32 %v706, %v578
        %v835 = vmul.f32 %v707, %v579
        %v836 = vmul.f32 %v708, %v580
        %v837 = vmul.f32 %v709, %v581
        %v838 = vmul.f32 %v710, %v582
        %v839 = vmul.f32 %v711, %v583
        %v840 = vmul.f32 %v712, %v584
        %v841 = vmul.f32 %v713, %v585
        %v842 = vmul.f32 %v714, %v586
        %v843 = vmul.f32 %v715, %v587
        %v844 = vmul.f32 %v716, %v588
        %v845 = vmul.f32 %v717, %v589
        %v846 = vmul.f32 %v718, %v590
        %v847 = vmul.f32 %v719, %v591
        %v848 = vmul.f32 %v720, %v592
        %v849 = vmul.f32 %v721, %v593
        %v850 = vmul.f32 %v722, %v594
        %v851 = vmul.f32 %v723, %v595
        %v852 = vmul.f32 %v724, %v596
        %v853 = vmul.f32 %v725, %v597
        %v854 = vmul.f32 %v726, %v598
        %v855 = vmul.f32 %v727, %v599
        %v856 = vmul.f32 %v728, %v600
        %v857 = vmul.f32 %v729, %v601
        %v858 = vmul.f32 %v730, %v602
        %v859 = vmul.f32 %v731, %v603
        %v860 = vmul.f32 %v732, %v604
        %v861 = vmul.f32 %v733, %v605
        %v862 = vmul.f32 %v734, %v606
        %v863 = vmul.f32 %v735, %v607
        %vm864 = vcmask 400384
        %v865 = vsel %vm864, %v736, 0.0
        %866 = vadd.xlane.f32.xlu0 %v865
        %v867 = vpop.xlane.xlu0 %866
        %v868 = vsel %vm864, %v737, 0.0
        %869 = vadd.xlane.f32.xlu0 %v868
        %v870 = vpop.xlane.xlu0 %869
        %v871 = vsel %vm864, %v738, 0.0
        %872 = vadd.xlane.f32.xlu0 %v871
        %v873 = vpop.xlane.xlu0 %872
        %v874 = vsel %vm864, %v739, 0.0
        %875 = vadd.xlane.f32.xlu0 %v874
        %v876 = vpop.xlane.xlu0 %875
        %v877 = vsel %vm864, %v740, 0.0
        %878 = vadd.xlane.f32.xlu0 %v877
        %v879 = vpop.xlane.xlu0 %878
        %v880 = vsel %vm864, %v741, 0.0
        %881 = vadd.xlane.f32.xlu0 %v880
        %v882 = vpop.xlane.xlu0 %881
        %v883 = vsel %vm864, %v742, 0.0
        %884 = vadd.xlane.f32.xlu0 %v883
        %v885 = vpop.xlane.xlu0 %884
        %v886 = vsel %vm864, %v743, 0.0
        %887 = vadd.xlane.f32.xlu0 %v886
        %v888 = vpop.xlane.xlu0 %887
        %v889 = vsel %vm864, %v744, 0.0
        %890 = vadd.xlane.f32.xlu0 %v889
        %v891 = vpop.xlane.xlu0 %890
        %v892 = vsel %vm864, %v745, 0.0
        %893 = vadd.xlane.f32.xlu0 %v892
        %v894 = vpop.xlane.xlu0 %893
        %v895 = vsel %vm864, %v746, 0.0
        %896 = vadd.xlane.f32.xlu0 %v895
        %v897 = vpop.xlane.xlu0 %896
        %v898 = vsel %vm864, %v747, 0.0
        %899 = vadd.xlane.f32.xlu0 %v898
        %v900 = vpop.xlane.xlu0 %899
        %v901 = vsel %vm864, %v748, 0.0
        %902 = vadd.xlane.f32.xlu0 %v901
        %v903 = vpop.xlane.xlu0 %902
        %v904 = vsel %vm864, %v749, 0.0
        %905 = vadd.xlane.f32.xlu0 %v904
        %v906 = vpop.xlane.xlu0 %905
        %v907 = vsel %vm864, %v750, 0.0
        %908 = vadd.xlane.f32.xlu0 %v907
        %v909 = vpop.xlane.xlu0 %908
        %v910 = vsel %vm864, %v751, 0.0
        %911 = vadd.xlane.f32.xlu0 %v910
        %v912 = vpop.xlane.xlu0 %911
        %v913 = vsel %vm864, %v752, 0.0
        %914 = vadd.xlane.f32.xlu0 %v913
        %v915 = vpop.xlane.xlu0 %914
        %v916 = vsel %vm864, %v753, 0.0
        %917 = vadd.xlane.f32.xlu0 %v916
        %v918 = vpop.xlane.xlu0 %917
        %v919 = vsel %vm864, %v754, 0.0
        %920 = vadd.xlane.f32.xlu0 %v919
        %v921 = vpop.xlane.xlu0 %920
        %v922 = vsel %vm864, %v755, 0.0
        %923 = vadd.xlane.f32.xlu0 %v922
        %v924 = vpop.xlane.xlu0 %923
        %v925 = vsel %vm864, %v756, 0.0
        %926 = vadd.xlane.f32.xlu0 %v925
        %v927 = vpop.xlane.xlu0 %926
        %v928 = vsel %vm864, %v757, 0.0
        %929 = vadd.xlane.f32.xlu0 %v928
        %v930 = vpop.xlane.xlu0 %929
        %v931 = vsel %vm864, %v758, 0.0
        %932 = vadd.xlane.f32.xlu0 %v931
        %v933 = vpop.xlane.xlu0 %932
        %v934 = vsel %vm864, %v759, 0.0
        %935 = vadd.xlane.f32.xlu0 %v934
        %v936 = vpop.xlane.xlu0 %935
        %v937 = vsel %vm864, %v760, 0.0
        %938 = vadd.xlane.f32.xlu0 %v937
        %v939 = vpop.xlane.xlu0 %938
        %v940 = vsel %vm864, %v761, 0.0
        %941 = vadd.xlane.f32.xlu0 %v940
        %v942 = vpop.xlane.xlu0 %941
        %v943 = vsel %vm864, %v762, 0.0
        %944 = vadd.xlane.f32.xlu0 %v943
        %v945 = vpop.xlane.xlu0 %944
        %v946 = vsel %vm864, %v763, 0.0
        %947 = vadd.xlane.f32.xlu0 %v946
        %v948 = vpop.xlane.xlu0 %947
        %v949 = vsel %vm864, %v764, 0.0
        %950 = vadd.xlane.f32.xlu0 %v949
        %v951 = vpop.xlane.xlu0 %950
        %v952 = vsel %vm864, %v765, 0.0
        %953 = vadd.xlane.f32.xlu0 %v952
        %v954 = vpop.xlane.xlu0 %953
        %v955 = vsel %vm864, %v766, 0.0
        %956 = vadd.xlane.f32.xlu0 %v955
        %v957 = vpop.xlane.xlu0 %956
        %v958 = vsel %vm864, %v767, 0.0
        %959 = vadd.xlane.f32.xlu0 %v958
        %v960 = vpop.xlane.xlu0 %959
        %v961 = vsel %vm864, %v768, 0.0
        %962 = vadd.xlane.f32.xlu0 %v961
        %v963 = vpop.xlane.xlu0 %962
        %v964 = vsel %vm864, %v769, 0.0
        %965 = vadd.xlane.f32.xlu0 %v964
        %v966 = vpop.xlane.xlu0 %965
        %v967 = vsel %vm864, %v770, 0.0
        %968 = vadd.xlane.f32.xlu0 %v967
        %v969 = vpop.xlane.xlu0 %968
        %v970 = vsel %vm864, %v771, 0.0
        %971 = vadd.xlane.f32.xlu0 %v970
        %v972 = vpop.xlane.xlu0 %971
        %v973 = vsel %vm864, %v772, 0.0
        %974 = vadd.xlane.f32.xlu0 %v973
        %v975 = vpop.xlane.xlu0 %974
        %v976 = vsel %vm864, %v773, 0.0
        %977 = vadd.xlane.f32.xlu0 %v976
        %v978 = vpop.xlane.xlu0 %977
        %v979 = vsel %vm864, %v774, 0.0
        %980 = vadd.xlane.f32.xlu0 %v979
        %v981 = vpop.xlane.xlu0 %980
        %v982 = vsel %vm864, %v775, 0.0
        %983 = vadd.xlane.f32.xlu0 %v982
        %v984 = vpop.xlane.xlu0 %983
        %v985 = vsel %vm864, %v776, 0.0
        %986 = vadd.xlane.f32.xlu0 %v985
        %v987 = vpop.xlane.xlu0 %986
        %v988 = vsel %vm864, %v777, 0.0
        %989 = vadd.xlane.f32.xlu0 %v988
        %v990 = vpop.xlane.xlu0 %989
        %v991 = vsel %vm864, %v778, 0.0
        %992 = vadd.xlane.f32.xlu0 %v991
        %v993 = vpop.xlane.xlu0 %992
        %v994 = vsel %vm864, %v779, 0.0
        %995 = vadd.xlane.f32.xlu0 %v994
        %v996 = vpop.xlane.xlu0 %995
        %v997 = vsel %vm864, %v780, 0.0
        %998 = vadd.xlane.f32.xlu0 %v997
        %v999 = vpop.xlane.xlu0 %998
        %v1000 = vsel %vm864, %v781, 0.0
        %1001 = vadd.xlane.f32.xlu0 %v1000
        %v1002 = vpop.xlane.xlu0 %1001
        %v1003 = vsel %vm864, %v782, 0.0
        %1004 = vadd.xlane.f32.xlu0 %v1003
        %v1005 = vpop.xlane.xlu0 %1004
        %v1006 = vsel %vm864, %v783, 0.0
        %1007 = vadd.xlane.f32.xlu0 %v1006
        %v1008 = vpop.xlane.xlu0 %1007
        %v1009 = vsel %vm864, %v784, 0.0
        %1010 = vadd.xlane.f32.xlu0 %v1009
        %v1011 = vpop.xlane.xlu0 %1010
        %v1012 = vsel %vm864, %v785, 0.0
        %1013 = vadd.xlane.f32.xlu0 %v1012
        %v1014 = vpop.xlane.xlu0 %1013
        %v1015 = vsel %vm864, %v786, 0.0
        %1016 = vadd.xlane.f32.xlu0 %v1015
        %v1017 = vpop.xlane.xlu0 %1016
        %v1018 = vsel %vm864, %v787, 0.0
        %1019 = vadd.xlane.f32.xlu0 %v1018
        %v1020 = vpop.xlane.xlu0 %1019
        %v1021 = vsel %vm864, %v788, 0.0
        %1022 = vadd.xlane.f32.xlu0 %v1021
        %v1023 = vpop.xlane.xlu0 %1022
        %v1024 = vsel %vm864, %v789, 0.0
        %1025 = vadd.xlane.f32.xlu0 %v1024
        %v1026 = vpop.xlane.xlu0 %1025
        %v1027 = vsel %vm864, %v790, 0.0
        %1028 = vadd.xlane.f32.xlu0 %v1027
        %v1029 = vpop.xlane.xlu0 %1028
        %v1030 = vsel %vm864, %v791, 0.0
        %1031 = vadd.xlane.f32.xlu0 %v1030
        %v1032 = vpop.xlane.xlu0 %1031
        %v1033 = vsel %vm864, %v792, 0.0
        %1034 = vadd.xlane.f32.xlu0 %v1033
        %v1035 = vpop.xlane.xlu0 %1034
        %v1036 = vsel %vm864, %v793, 0.0
        %1037 = vadd.xlane.f32.xlu0 %v1036
        %v1038 = vpop.xlane.xlu0 %1037
        %v1039 = vsel %vm864, %v794, 0.0
        %1040 = vadd.xlane.f32.xlu0 %v1039
        %v1041 = vpop.xlane.xlu0 %1040
        %v1042 = vsel %vm864, %v795, 0.0
        %1043 = vadd.xlane.f32.xlu0 %v1042
        %v1044 = vpop.xlane.xlu0 %1043
        %v1045 = vsel %vm864, %v796, 0.0
        %1046 = vadd.xlane.f32.xlu0 %v1045
        %v1047 = vpop.xlane.xlu0 %1046
        %v1048 = vsel %vm864, %v797, 0.0
        %1049 = vadd.xlane.f32.xlu0 %v1048
        %v1050 = vpop.xlane.xlu0 %1049
        %v1051 = vsel %vm864, %v798, 0.0
        %1052 = vadd.xlane.f32.xlu0 %v1051
        %v1053 = vpop.xlane.xlu0 %1052
        %v1054 = vsel %vm864, %v799, 0.0
        %1055 = vadd.xlane.f32.xlu0 %v1054
        %v1056 = vpop.xlane.xlu0 %1055
        %v1057 = vsel %vm864, %v800, 0.0
        %1058 = vadd.xlane.f32.xlu0 %v1057
        %v1059 = vpop.xlane.xlu0 %1058
        %v1060 = vsel %vm864, %v801, 0.0
        %1061 = vadd.xlane.f32.xlu0 %v1060
        %v1062 = vpop.xlane.xlu0 %1061
        %v1063 = vsel %vm864, %v802, 0.0
        %1064 = vadd.xlane.f32.xlu0 %v1063
        %v1065 = vpop.xlane.xlu0 %1064
        %v1066 = vsel %vm864, %v803, 0.0
        %1067 = vadd.xlane.f32.xlu0 %v1066
        %v1068 = vpop.xlane.xlu0 %1067
        %v1069 = vsel %vm864, %v804, 0.0
        %1070 = vadd.xlane.f32.xlu0 %v1069
        %v1071 = vpop.xlane.xlu0 %1070
        %v1072 = vsel %vm864, %v805, 0.0
        %1073 = vadd.xlane.f32.xlu0 %v1072
        %v1074 = vpop.xlane.xlu0 %1073
        %v1075 = vsel %vm864, %v806, 0.0
        %1076 = vadd.xlane.f32.xlu0 %v1075
        %v1077 = vpop.xlane.xlu0 %1076
        %v1078 = vsel %vm864, %v807, 0.0
        %1079 = vadd.xlane.f32.xlu0 %v1078
        %v1080 = vpop.xlane.xlu0 %1079
        %v1081 = vsel %vm864, %v808, 0.0
        %1082 = vadd.xlane.f32.xlu0 %v1081
        %v1083 = vpop.xlane.xlu0 %1082
        %v1084 = vsel %vm864, %v809, 0.0
        %1085 = vadd.xlane.f32.xlu0 %v1084
        %v1086 = vpop.xlane.xlu0 %1085
        %v1087 = vsel %vm864, %v810, 0.0
        %1088 = vadd.xlane.f32.xlu0 %v1087
        %v1089 = vpop.xlane.xlu0 %1088
        %v1090 = vsel %vm864, %v811, 0.0
        %1091 = vadd.xlane.f32.xlu0 %v1090
        %v1092 = vpop.xlane.xlu0 %1091
        %v1093 = vsel %vm864, %v812, 0.0
        %1094 = vadd.xlane.f32.xlu0 %v1093
        %v1095 = vpop.xlane.xlu0 %1094
        %v1096 = vsel %vm864, %v813, 0.0
        %1097 = vadd.xlane.f32.xlu0 %v1096
        %v1098 = vpop.xlane.xlu0 %1097
        %v1099 = vsel %vm864, %v814, 0.0
        %1100 = vadd.xlane.f32.xlu0 %v1099
        %v1101 = vpop.xlane.xlu0 %1100
        %v1102 = vsel %vm864, %v815, 0.0
        %1103 = vadd.xlane.f32.xlu0 %v1102
        %v1104 = vpop.xlane.xlu0 %1103
        %v1105 = vsel %vm864, %v816, 0.0
        %1106 = vadd.xlane.f32.xlu0 %v1105
        %v1107 = vpop.xlane.xlu0 %1106
        %v1108 = vsel %vm864, %v817, 0.0
        %1109 = vadd.xlane.f32.xlu0 %v1108
        %v1110 = vpop.xlane.xlu0 %1109
        %v1111 = vsel %vm864, %v818, 0.0
        %1112 = vadd.xlane.f32.xlu0 %v1111
        %v1113 = vpop.xlane.xlu0 %1112
        %v1114 = vsel %vm864, %v819, 0.0
        %1115 = vadd.xlane.f32.xlu0 %v1114
        %v1116 = vpop.xlane.xlu0 %1115
        %v1117 = vsel %vm864, %v820, 0.0
        %1118 = vadd.xlane.f32.xlu0 %v1117
        %v1119 = vpop.xlane.xlu0 %1118
        %v1120 = vsel %vm864, %v821, 0.0
        %1121 = vadd.xlane.f32.xlu0 %v1120
        %v1122 = vpop.xlane.xlu0 %1121
        %v1123 = vsel %vm864, %v822, 0.0
        %1124 = vadd.xlane.f32.xlu0 %v1123
        %v1125 = vpop.xlane.xlu0 %1124
        %v1126 = vsel %vm864, %v823, 0.0
        %1127 = vadd.xlane.f32.xlu0 %v1126
        %v1128 = vpop.xlane.xlu0 %1127
        %v1129 = vsel %vm864, %v824, 0.0
        %1130 = vadd.xlane.f32.xlu0 %v1129
        %v1131 = vpop.xlane.xlu0 %1130
        %v1132 = vsel %vm864, %v825, 0.0
        %1133 = vadd.xlane.f32.xlu0 %v1132
        %v1134 = vpop.xlane.xlu0 %1133
        %v1135 = vsel %vm864, %v826, 0.0
        %1136 = vadd.xlane.f32.xlu0 %v1135
        %v1137 = vpop.xlane.xlu0 %1136
        %v1138 = vsel %vm864, %v827, 0.0
        %1139 = vadd.xlane.f32.xlu0 %v1138
        %v1140 = vpop.xlane.xlu0 %1139
        %v1141 = vsel %vm864, %v828, 0.0
        %1142 = vadd.xlane.f32.xlu0 %v1141
        %v1143 = vpop.xlane.xlu0 %1142
        %v1144 = vsel %vm864, %v829, 0.0
        %1145 = vadd.xlane.f32.xlu0 %v1144
        %v1146 = vpop.xlane.xlu0 %1145
        %v1147 = vsel %vm864, %v830, 0.0
        %1148 = vadd.xlane.f32.xlu0 %v1147
        %v1149 = vpop.xlane.xlu0 %1148
        %v1150 = vsel %vm864, %v831, 0.0
        %1151 = vadd.xlane.f32.xlu0 %v1150
        %v1152 = vpop.xlane.xlu0 %1151
        %v1153 = vsel %vm864, %v832, 0.0
        %1154 = vadd.xlane.f32.xlu0 %v1153
        %v1155 = vpop.xlane.xlu0 %1154
        %v1156 = vsel %vm864, %v833, 0.0
        %1157 = vadd.xlane.f32.xlu0 %v1156
        %v1158 = vpop.xlane.xlu0 %1157
        %v1159 = vsel %vm864, %v834, 0.0
        %1160 = vadd.xlane.f32.xlu0 %v1159
        %v1161 = vpop.xlane.xlu0 %1160
        %v1162 = vsel %vm864, %v835, 0.0
        %1163 = vadd.xlane.f32.xlu0 %v1162
        %v1164 = vpop.xlane.xlu0 %1163
        %v1165 = vsel %vm864, %v836, 0.0
        %1166 = vadd.xlane.f32.xlu0 %v1165
        %v1167 = vpop.xlane.xlu0 %1166
        %v1168 = vsel %vm864, %v837, 0.0
        %1169 = vadd.xlane.f32.xlu0 %v1168
        %v1170 = vpop.xlane.xlu0 %1169
        %v1171 = vsel %vm864, %v838, 0.0
        %1172 = vadd.xlane.f32.xlu0 %v1171
        %v1173 = vpop.xlane.xlu0 %1172
        %v1174 = vsel %vm864, %v839, 0.0
        %1175 = vadd.xlane.f32.xlu0 %v1174
        %v1176 = vpop.xlane.xlu0 %1175
        %v1177 = vsel %vm864, %v840, 0.0
        %1178 = vadd.xlane.f32.xlu0 %v1177
        %v1179 = vpop.xlane.xlu0 %1178
        %v1180 = vsel %vm864, %v841, 0.0
        %1181 = vadd.xlane.f32.xlu0 %v1180
        %v1182 = vpop.xlane.xlu0 %1181
        %v1183 = vsel %vm864, %v842, 0.0
        %1184 = vadd.xlane.f32.xlu0 %v1183
        %v1185 = vpop.xlane.xlu0 %1184
        %v1186 = vsel %vm864, %v843, 0.0
        %1187 = vadd.xlane.f32.xlu0 %v1186
        %v1188 = vpop.xlane.xlu0 %1187
        %v1189 = vsel %vm864, %v844, 0.0
        %1190 = vadd.xlane.f32.xlu0 %v1189
        %v1191 = vpop.xlane.xlu0 %1190
        %v1192 = vsel %vm864, %v845, 0.0
        %1193 = vadd.xlane.f32.xlu0 %v1192
        %v1194 = vpop.xlane.xlu0 %1193
        %v1195 = vsel %vm864, %v846, 0.0
        %1196 = vadd.xlane.f32.xlu0 %v1195
        %v1197 = vpop.xlane.xlu0 %1196
        %v1198 = vsel %vm864, %v847, 0.0
        %1199 = vadd.xlane.f32.xlu0 %v1198
        %v1200 = vpop.xlane.xlu0 %1199
        %v1201 = vsel %vm864, %v848, 0.0
        %1202 = vadd.xlane.f32.xlu0 %v1201
        %v1203 = vpop.xlane.xlu0 %1202
        %v1204 = vsel %vm864, %v849, 0.0
        %1205 = vadd.xlane.f32.xlu0 %v1204
        %v1206 = vpop.xlane.xlu0 %1205
        %v1207 = vsel %vm864, %v850, 0.0
        %1208 = vadd.xlane.f32.xlu0 %v1207
        %v1209 = vpop.xlane.xlu0 %1208
        %v1210 = vsel %vm864, %v851, 0.0
        %1211 = vadd.xlane.f32.xlu0 %v1210
        %v1212 = vpop.xlane.xlu0 %1211
        %v1213 = vsel %vm864, %v852, 0.0
        %1214 = vadd.xlane.f32.xlu0 %v1213
        %v1215 = vpop.xlane.xlu0 %1214
        %v1216 = vsel %vm864, %v853, 0.0
        %1217 = vadd.xlane.f32.xlu0 %v1216
        %v1218 = vpop.xlane.xlu0 %1217
        %v1219 = vsel %vm864, %v854, 0.0
        %1220 = vadd.xlane.f32.xlu0 %v1219
        %v1221 = vpop.xlane.xlu0 %1220
        %v1222 = vsel %vm864, %v855, 0.0
        %1223 = vadd.xlane.f32.xlu0 %v1222
        %v1224 = vpop.xlane.xlu0 %1223
        %v1225 = vsel %vm864, %v856, 0.0
        %1226 = vadd.xlane.f32.xlu0 %v1225
        %v1227 = vpop.xlane.xlu0 %1226
        %v1228 = vsel %vm864, %v857, 0.0
        %1229 = vadd.xlane.f32.xlu0 %v1228
        %v1230 = vpop.xlane.xlu0 %1229
        %v1231 = vsel %vm864, %v858, 0.0
        %1232 = vadd.xlane.f32.xlu0 %v1231
        %v1233 = vpop.xlane.xlu0 %1232
        %v1234 = vsel %vm864, %v859, 0.0
        %1235 = vadd.xlane.f32.xlu0 %v1234
        %v1236 = vpop.xlane.xlu0 %1235
        %v1237 = vsel %vm864, %v860, 0.0
        %1238 = vadd.xlane.f32.xlu0 %v1237
        %v1239 = vpop.xlane.xlu0 %1238
        %v1240 = vsel %vm864, %v861, 0.0
        %1241 = vadd.xlane.f32.xlu0 %v1240
        %v1242 = vpop.xlane.xlu0 %1241
        %v1243 = vsel %vm864, %v862, 0.0
        %1244 = vadd.xlane.f32.xlu0 %v1243
        %v1245 = vpop.xlane.xlu0 %1244
        %v1246 = vsel %vm864, %v863, 0.0
        %1247 = vadd.xlane.f32.xlu0 %v1246
        %v1248 = vpop.xlane.xlu0 %1247
        %v1249 = vrcp.pop 49.0
        %v1250 = vmul.f32 %v867, %v1249
        %v1251 = vmul.f32 %v870, %v1249
        %v1252 = vmul.f32 %v873, %v1249
        %v1253 = vmul.f32 %v876, %v1249
        %v1254 = vmul.f32 %v879, %v1249
        %v1255 = vmul.f32 %v882, %v1249
        %v1256 = vmul.f32 %v885, %v1249
        %v1257 = vmul.f32 %v888, %v1249
        %v1258 = vmul.f32 %v891, %v1249
        %v1259 = vmul.f32 %v894, %v1249
        %v1260 = vmul.f32 %v897, %v1249
        %v1261 = vmul.f32 %v900, %v1249
        %v1262 = vmul.f32 %v903, %v1249
        %v1263 = vmul.f32 %v906, %v1249
        %v1264 = vmul.f32 %v909, %v1249
        %v1265 = vmul.f32 %v912, %v1249
        %v1266 = vmul.f32 %v915, %v1249
        %v1267 = vmul.f32 %v918, %v1249
        %v1268 = vmul.f32 %v921, %v1249
        %v1269 = vmul.f32 %v924, %v1249
        %v1270 = vmul.f32 %v927, %v1249
        %v1271 = vmul.f32 %v930, %v1249
        %v1272 = vmul.f32 %v933, %v1249
        %v1273 = vmul.f32 %v936, %v1249
        %v1274 = vmul.f32 %v939, %v1249
        %v1275 = vmul.f32 %v942, %v1249
        %v1276 = vmul.f32 %v945, %v1249
        %v1277 = vmul.f32 %v948, %v1249
        %v1278 = vmul.f32 %v951, %v1249
        %v1279 = vmul.f32 %v954, %v1249
        %v1280 = vmul.f32 %v957, %v1249
        %v1281 = vmul.f32 %v960, %v1249
        %v1282 = vmul.f32 %v963, %v1249
        %v1283 = vmul.f32 %v966, %v1249
        %v1284 = vmul.f32 %v969, %v1249
        %v1285 = vmul.f32 %v972, %v1249
        %v1286 = vmul.f32 %v975, %v1249
        %v1287 = vmul.f32 %v978, %v1249
        %v1288 = vmul.f32 %v981, %v1249
        %v1289 = vmul.f32 %v984, %v1249
        %v1290 = vmul.f32 %v987, %v1249
        %v1291 = vmul.f32 %v990, %v1249
        %v1292 = vmul.f32 %v993, %v1249
        %v1293 = vmul.f32 %v996, %v1249
        %v1294 = vmul.f32 %v999, %v1249
        %v1295 = vmul.f32 %v1002, %v1249
        %v1296 = vmul.f32 %v1005, %v1249
        %v1297 = vmul.f32 %v1008, %v1249
        %v1298 = vmul.f32 %v1011, %v1249
        %v1299 = vmul.f32 %v1014, %v1249
        %v1300 = vmul.f32 %v1017, %v1249
        %v1301 = vmul.f32 %v1020, %v1249
        %v1302 = vmul.f32 %v1023, %v1249
        %v1303 = vmul.f32 %v1026, %v1249
        %v1304 = vmul.f32 %v1029, %v1249
        %v1305 = vmul.f32 %v1032, %v1249
        %v1306 = vmul.f32 %v1035, %v1249
        %v1307 = vmul.f32 %v1038, %v1249
        %v1308 = vmul.f32 %v1041, %v1249
        %v1309 = vmul.f32 %v1044, %v1249
        %v1310 = vmul.f32 %v1047, %v1249
        %v1311 = vmul.f32 %v1050, %v1249
        %v1312 = vmul.f32 %v1053, %v1249
        %v1313 = vmul.f32 %v1056, %v1249
        %v1314 = vmul.f32 %v1059, %v1249
        %v1315 = vmul.f32 %v1062, %v1249
        %v1316 = vmul.f32 %v1065, %v1249
        %v1317 = vmul.f32 %v1068, %v1249
        %v1318 = vmul.f32 %v1071, %v1249
        %v1319 = vmul.f32 %v1074, %v1249
        %v1320 = vmul.f32 %v1077, %v1249
        %v1321 = vmul.f32 %v1080, %v1249
        %v1322 = vmul.f32 %v1083, %v1249
        %v1323 = vmul.f32 %v1086, %v1249
        %v1324 = vmul.f32 %v1089, %v1249
        %v1325 = vmul.f32 %v1092, %v1249
        %v1326 = vmul.f32 %v1095, %v1249
        %v1327 = vmul.f32 %v1098, %v1249
        %v1328 = vmul.f32 %v1101, %v1249
        %v1329 = vmul.f32 %v1104, %v1249
        %v1330 = vmul.f32 %v1107, %v1249
        %v1331 = vmul.f32 %v1110, %v1249
        %v1332 = vmul.f32 %v1113, %v1249
        %v1333 = vmul.f32 %v1116, %v1249
        %v1334 = vmul.f32 %v1119, %v1249
        %v1335 = vmul.f32 %v1122, %v1249
        %v1336 = vmul.f32 %v1125, %v1249
        %v1337 = vmul.f32 %v1128, %v1249
        %v1338 = vmul.f32 %v1131, %v1249
        %v1339 = vmul.f32 %v1134, %v1249
        %v1340 = vmul.f32 %v1137, %v1249
        %v1341 = vmul.f32 %v1140, %v1249
        %v1342 = vmul.f32 %v1143, %v1249
        %v1343 = vmul.f32 %v1146, %v1249
        %v1344 = vmul.f32 %v1149, %v1249
        %v1345 = vmul.f32 %v1152, %v1249
        %v1346 = vmul.f32 %v1155, %v1249
        %v1347 = vmul.f32 %v1158, %v1249
        %v1348 = vmul.f32 %v1161, %v1249
        %v1349 = vmul.f32 %v1164, %v1249
        %v1350 = vmul.f32 %v1167, %v1249
        %v1351 = vmul.f32 %v1170, %v1249
        %v1352 = vmul.f32 %v1173, %v1249
        %v1353 = vmul.f32 %v1176, %v1249
        %v1354 = vmul.f32 %v1179, %v1249
        %v1355 = vmul.f32 %v1182, %v1249
        %v1356 = vmul.f32 %v1185, %v1249
        %v1357 = vmul.f32 %v1188, %v1249
        %v1358 = vmul.f32 %v1191, %v1249
        %v1359 = vmul.f32 %v1194, %v1249
        %v1360 = vmul.f32 %v1197, %v1249
        %v1361 = vmul.f32 %v1200, %v1249
        %v1362 = vmul.f32 %v1203, %v1249
        %v1363 = vmul.f32 %v1206, %v1249
        %v1364 = vmul.f32 %v1209, %v1249
        %v1365 = vmul.f32 %v1212, %v1249
        %v1366 = vmul.f32 %v1215, %v1249
        %v1367 = vmul.f32 %v1218, %v1249
        %v1368 = vmul.f32 %v1221, %v1249
        %v1369 = vmul.f32 %v1224, %v1249
        %v1370 = vmul.f32 %v1227, %v1249
        %v1371 = vmul.f32 %v1230, %v1249
        %v1372 = vmul.f32 %v1233, %v1249
        %v1373 = vmul.f32 %v1236, %v1249
        %v1374 = vmul.f32 %v1239, %v1249
        %v1375 = vmul.f32 %v1242, %v1249
        %v1376 = vmul.f32 %v1245, %v1249
        %v1377 = vmul.f32 %v1248, %v1249
        %v1378 = vlog2.pop %v1250
        %v1379 = vmul.f32 %v1378, 0.6931472
        %v1380 = vlog2.pop %v1251
        %v1381 = vmul.f32 %v1380, 0.6931472
        %v1382 = vlog2.pop %v1252
        %v1383 = vmul.f32 %v1382, 0.6931472
        %v1384 = vlog2.pop %v1253
        %v1385 = vmul.f32 %v1384, 0.6931472
        %v1386 = vlog2.pop %v1254
        %v1387 = vmul.f32 %v1386, 0.6931472
        %v1388 = vlog2.pop %v1255
        %v1389 = vmul.f32 %v1388, 0.6931472
        %v1390 = vlog2.pop %v1256
        %v1391 = vmul.f32 %v1390, 0.6931472
        %v1392 = vlog2.pop %v1257
        %v1393 = vmul.f32 %v1392, 0.6931472
        %v1394 = vlog2.pop %v1258
        %v1395 = vmul.f32 %v1394, 0.6931472
        %v1396 = vlog2.pop %v1259
        %v1397 = vmul.f32 %v1396, 0.6931472
        %v1398 = vlog2.pop %v1260
        %v1399 = vmul.f32 %v1398, 0.6931472
        %v1400 = vlog2.pop %v1261
        %v1401 = vmul.f32 %v1400, 0.6931472
        %v1402 = vlog2.pop %v1262
        %v1403 = vmul.f32 %v1402, 0.6931472
        %v1404 = vlog2.pop %v1263
        %v1405 = vmul.f32 %v1404, 0.6931472
        %v1406 = vlog2.pop %v1264
        %v1407 = vmul.f32 %v1406, 0.6931472
        %v1408 = vlog2.pop %v1265
        %v1409 = vmul.f32 %v1408, 0.6931472
        %v1410 = vlog2.pop %v1266
        %v1411 = vmul.f32 %v1410, 0.6931472
        %v1412 = vlog2.pop %v1267
        %v1413 = vmul.f32 %v1412, 0.6931472
        %v1414 = vlog2.pop %v1268
        %v1415 = vmul.f32 %v1414, 0.6931472
        %v1416 = vlog2.pop %v1269
        %v1417 = vmul.f32 %v1416, 0.6931472
        %v1418 = vlog2.pop %v1270
        %v1419 = vmul.f32 %v1418, 0.6931472
        %v1420 = vlog2.pop %v1271
        %v1421 = vmul.f32 %v1420, 0.6931472
        %v1422 = vlog2.pop %v1272
        %v1423 = vmul.f32 %v1422, 0.6931472
        %v1424 = vlog2.pop %v1273
        %v1425 = vmul.f32 %v1424, 0.6931472
        %v1426 = vlog2.pop %v1274
        %v1427 = vmul.f32 %v1426, 0.6931472
        %v1428 = vlog2.pop %v1275
        %v1429 = vmul.f32 %v1428, 0.6931472
        %v1430 = vlog2.pop %v1276
        %v1431 = vmul.f32 %v1430, 0.6931472
        %v1432 = vlog2.pop %v1277
        %v1433 = vmul.f32 %v1432, 0.6931472
        %v1434 = vlog2.pop %v1278
        %v1435 = vmul.f32 %v1434, 0.6931472
        %v1436 = vlog2.pop %v1279
        %v1437 = vmul.f32 %v1436, 0.6931472
        %v1438 = vlog2.pop %v1280
        %v1439 = vmul.f32 %v1438, 0.6931472
        %v1440 = vlog2.pop %v1281
        %v1441 = vmul.f32 %v1440, 0.6931472
        %v1442 = vlog2.pop %v1282
        %v1443 = vmul.f32 %v1442, 0.6931472
        %v1444 = vlog2.pop %v1283
        %v1445 = vmul.f32 %v1444, 0.6931472
        %v1446 = vlog2.pop %v1284
        %v1447 = vmul.f32 %v1446, 0.6931472
        %v1448 = vlog2.pop %v1285
        %v1449 = vmul.f32 %v1448, 0.6931472
        %v1450 = vlog2.pop %v1286
        %v1451 = vmul.f32 %v1450, 0.6931472
        %v1452 = vlog2.pop %v1287
        %v1453 = vmul.f32 %v1452, 0.6931472
        %v1454 = vlog2.pop %v1288
        %v1455 = vmul.f32 %v1454, 0.6931472
        %v1456 = vlog2.pop %v1289
        %v1457 = vmul.f32 %v1456, 0.6931472
        %v1458 = vlog2.pop %v1290
        %v1459 = vmul.f32 %v1458, 0.6931472
        %v1460 = vlog2.pop %v1291
        %v1461 = vmul.f32 %v1460, 0.6931472
        %v1462 = vlog2.pop %v1292
        %v1463 = vmul.f32 %v1462, 0.6931472
        %v1464 = vlog2.pop %v1293
        %v1465 = vmul.f32 %v1464, 0.6931472
        %v1466 = vlog2.pop %v1294
        %v1467 = vmul.f32 %v1466, 0.6931472
        %v1468 = vlog2.pop %v1295
        %v1469 = vmul.f32 %v1468, 0.6931472
        %v1470 = vlog2.pop %v1296
        %v1471 = vmul.f32 %v1470, 0.6931472
        %v1472 = vlog2.pop %v1297
        %v1473 = vmul.f32 %v1472, 0.6931472
        %v1474 = vlog2.pop %v1298
        %v1475 = vmul.f32 %v1474, 0.6931472
        %v1476 = vlog2.pop %v1299
        %v1477 = vmul.f32 %v1476, 0.6931472
        %v1478 = vlog2.pop %v1300
        %v1479 = vmul.f32 %v1478, 0.6931472
        %v1480 = vlog2.pop %v1301
        %v1481 = vmul.f32 %v1480, 0.6931472
        %v1482 = vlog2.pop %v1302
        %v1483 = vmul.f32 %v1482, 0.6931472
        %v1484 = vlog2.pop %v1303
        %v1485 = vmul.f32 %v1484, 0.6931472
        %v1486 = vlog2.pop %v1304
        %v1487 = vmul.f32 %v1486, 0.6931472
        %v1488 = vlog2.pop %v1305
        %v1489 = vmul.f32 %v1488, 0.6931472
        %v1490 = vlog2.pop %v1306
        %v1491 = vmul.f32 %v1490, 0.6931472
        %v1492 = vlog2.pop %v1307
        %v1493 = vmul.f32 %v1492, 0.6931472
        %v1494 = vlog2.pop %v1308
        %v1495 = vmul.f32 %v1494, 0.6931472
        %v1496 = vlog2.pop %v1309
        %v1497 = vmul.f32 %v1496, 0.6931472
        %v1498 = vlog2.pop %v1310
        %v1499 = vmul.f32 %v1498, 0.6931472
        %v1500 = vlog2.pop %v1311
        %v1501 = vmul.f32 %v1500, 0.6931472
        %v1502 = vlog2.pop %v1312
        %v1503 = vmul.f32 %v1502, 0.6931472
        %v1504 = vlog2.pop %v1313
        %v1505 = vmul.f32 %v1504, 0.6931472
        %v1506 = vlog2.pop %v1314
        %v1507 = vmul.f32 %v1506, 0.6931472
        %v1508 = vlog2.pop %v1315
        %v1509 = vmul.f32 %v1508, 0.6931472
        %v1510 = vlog2.pop %v1316
        %v1511 = vmul.f32 %v1510, 0.6931472
        %v1512 = vlog2.pop %v1317
        %v1513 = vmul.f32 %v1512, 0.6931472
        %v1514 = vlog2.pop %v1318
        %v1515 = vmul.f32 %v1514, 0.6931472
        %v1516 = vlog2.pop %v1319
        %v1517 = vmul.f32 %v1516, 0.6931472
        %v1518 = vlog2.pop %v1320
        %v1519 = vmul.f32 %v1518, 0.6931472
        %v1520 = vlog2.pop %v1321
        %v1521 = vmul.f32 %v1520, 0.6931472
        %v1522 = vlog2.pop %v1322
        %v1523 = vmul.f32 %v1522, 0.6931472
        %v1524 = vlog2.pop %v1323
        %v1525 = vmul.f32 %v1524, 0.6931472
        %v1526 = vlog2.pop %v1324
        %v1527 = vmul.f32 %v1526, 0.6931472
        %v1528 = vlog2.pop %v1325
        %v1529 = vmul.f32 %v1528, 0.6931472
        %v1530 = vlog2.pop %v1326
        %v1531 = vmul.f32 %v1530, 0.6931472
        %v1532 = vlog2.pop %v1327
        %v1533 = vmul.f32 %v1532, 0.6931472
        %v1534 = vlog2.pop %v1328
        %v1535 = vmul.f32 %v1534, 0.6931472
        %v1536 = vlog2.pop %v1329
        %v1537 = vmul.f32 %v1536, 0.6931472
        %v1538 = vlog2.pop %v1330
        %v1539 = vmul.f32 %v1538, 0.6931472
        %v1540 = vlog2.pop %v1331
        %v1541 = vmul.f32 %v1540, 0.6931472
        %v1542 = vlog2.pop %v1332
        %v1543 = vmul.f32 %v1542, 0.6931472
        %v1544 = vlog2.pop %v1333
        %v1545 = vmul.f32 %v1544, 0.6931472
        %v1546 = vlog2.pop %v1334
        %v1547 = vmul.f32 %v1546, 0.6931472
        %v1548 = vlog2.pop %v1335
        %v1549 = vmul.f32 %v1548, 0.6931472
        %v1550 = vlog2.pop %v1336
        %v1551 = vmul.f32 %v1550, 0.6931472
        %v1552 = vlog2.pop %v1337
        %v1553 = vmul.f32 %v1552, 0.6931472
        %v1554 = vlog2.pop %v1338
        %v1555 = vmul.f32 %v1554, 0.6931472
        %v1556 = vlog2.pop %v1339
        %v1557 = vmul.f32 %v1556, 0.6931472
        %v1558 = vlog2.pop %v1340
        %v1559 = vmul.f32 %v1558, 0.6931472
        %v1560 = vlog2.pop %v1341
        %v1561 = vmul.f32 %v1560, 0.6931472
        %v1562 = vlog2.pop %v1342
        %v1563 = vmul.f32 %v1562, 0.6931472
        %v1564 = vlog2.pop %v1343
        %v1565 = vmul.f32 %v1564, 0.6931472
        %v1566 = vlog2.pop %v1344
        %v1567 = vmul.f32 %v1566, 0.6931472
        %v1568 = vlog2.pop %v1345
        %v1569 = vmul.f32 %v1568, 0.6931472
        %v1570 = vlog2.pop %v1346
        %v1571 = vmul.f32 %v1570, 0.6931472
        %v1572 = vlog2.pop %v1347
        %v1573 = vmul.f32 %v1572, 0.6931472
        %v1574 = vlog2.pop %v1348
        %v1575 = vmul.f32 %v1574, 0.6931472
        %v1576 = vlog2.pop %v1349
        %v1577 = vmul.f32 %v1576, 0.6931472
        %v1578 = vlog2.pop %v1350
        %v1579 = vmul.f32 %v1578, 0.6931472
        %v1580 = vlog2.pop %v1351
        %v1581 = vmul.f32 %v1580, 0.6931472
        %v1582 = vlog2.pop %v1352
        %v1583 = vmul.f32 %v1582, 0.6931472
        %v1584 = vlog2.pop %v1353
        %v1585 = vmul.f32 %v1584, 0.6931472
        %v1586 = vlog2.pop %v1354
        %v1587 = vmul.f32 %v1586, 0.6931472
        %v1588 = vlog2.pop %v1355
        %v1589 = vmul.f32 %v1588, 0.6931472
        %v1590 = vlog2.pop %v1356
        %v1591 = vmul.f32 %v1590, 0.6931472
        %v1592 = vlog2.pop %v1357
        %v1593 = vmul.f32 %v1592, 0.6931472
        %v1594 = vlog2.pop %v1358
        %v1595 = vmul.f32 %v1594, 0.6931472
        %v1596 = vlog2.pop %v1359
        %v1597 = vmul.f32 %v1596, 0.6931472
        %v1598 = vlog2.pop %v1360
        %v1599 = vmul.f32 %v1598, 0.6931472
        %v1600 = vlog2.pop %v1361
        %v1601 = vmul.f32 %v1600, 0.6931472
        %v1602 = vlog2.pop %v1362
        %v1603 = vmul.f32 %v1602, 0.6931472
        %v1604 = vlog2.pop %v1363
        %v1605 = vmul.f32 %v1604, 0.6931472
        %v1606 = vlog2.pop %v1364
        %v1607 = vmul.f32 %v1606, 0.6931472
        %v1608 = vlog2.pop %v1365
        %v1609 = vmul.f32 %v1608, 0.6931472
        %v1610 = vlog2.pop %v1366
        %v1611 = vmul.f32 %v1610, 0.6931472
        %v1612 = vlog2.pop %v1367
        %v1613 = vmul.f32 %v1612, 0.6931472
        %v1614 = vlog2.pop %v1368
        %v1615 = vmul.f32 %v1614, 0.6931472
        %v1616 = vlog2.pop %v1369
        %v1617 = vmul.f32 %v1616, 0.6931472
        %v1618 = vlog2.pop %v1370
        %v1619 = vmul.f32 %v1618, 0.6931472
        %v1620 = vlog2.pop %v1371
        %v1621 = vmul.f32 %v1620, 0.6931472
        %v1622 = vlog2.pop %v1372
        %v1623 = vmul.f32 %v1622, 0.6931472
        %v1624 = vlog2.pop %v1373
        %v1625 = vmul.f32 %v1624, 0.6931472
        %v1626 = vlog2.pop %v1374
        %v1627 = vmul.f32 %v1626, 0.6931472
        %v1628 = vlog2.pop %v1375
        %v1629 = vmul.f32 %v1628, 0.6931472
        %v1630 = vlog2.pop %v1376
        %v1631 = vmul.f32 %v1630, 0.6931472
        %v1632 = vlog2.pop %v1377
        %v1633 = vmul.f32 %v1632, 0.6931472
        %v1634 = vmul.f32 %v1379, 0.33333334
        %v1635 = vmul.f32 %v1381, 0.33333334
        %v1636 = vmul.f32 %v1383, 0.33333334
        %v1637 = vmul.f32 %v1385, 0.33333334
        %v1638 = vmul.f32 %v1387, 0.33333334
        %v1639 = vmul.f32 %v1389, 0.33333334
        %v1640 = vmul.f32 %v1391, 0.33333334
        %v1641 = vmul.f32 %v1393, 0.33333334
        %v1642 = vmul.f32 %v1395, 0.33333334
        %v1643 = vmul.f32 %v1397, 0.33333334
        %v1644 = vmul.f32 %v1399, 0.33333334
        %v1645 = vmul.f32 %v1401, 0.33333334
        %v1646 = vmul.f32 %v1403, 0.33333334
        %v1647 = vmul.f32 %v1405, 0.33333334
        %v1648 = vmul.f32 %v1407, 0.33333334
        %v1649 = vmul.f32 %v1409, 0.33333334
        %v1650 = vmul.f32 %v1411, 0.33333334
        %v1651 = vmul.f32 %v1413, 0.33333334
        %v1652 = vmul.f32 %v1415, 0.33333334
        %v1653 = vmul.f32 %v1417, 0.33333334
        %v1654 = vmul.f32 %v1419, 0.33333334
        %v1655 = vmul.f32 %v1421, 0.33333334
        %v1656 = vmul.f32 %v1423, 0.33333334
        %v1657 = vmul.f32 %v1425, 0.33333334
        %v1658 = vmul.f32 %v1427, 0.33333334
        %v1659 = vmul.f32 %v1429, 0.33333334
        %v1660 = vmul.f32 %v1431, 0.33333334
        %v1661 = vmul.f32 %v1433, 0.33333334
        %v1662 = vmul.f32 %v1435, 0.33333334
        %v1663 = vmul.f32 %v1437, 0.33333334
        %v1664 = vmul.f32 %v1439, 0.33333334
        %v1665 = vmul.f32 %v1441, 0.33333334
        %v1666 = vmul.f32 %v1443, 0.33333334
        %v1667 = vmul.f32 %v1445, 0.33333334
        %v1668 = vmul.f32 %v1447, 0.33333334
        %v1669 = vmul.f32 %v1449, 0.33333334
        %v1670 = vmul.f32 %v1451, 0.33333334
        %v1671 = vmul.f32 %v1453, 0.33333334
        %v1672 = vmul.f32 %v1455, 0.33333334
        %v1673 = vmul.f32 %v1457, 0.33333334
        %v1674 = vmul.f32 %v1459, 0.33333334
        %v1675 = vmul.f32 %v1461, 0.33333334
        %v1676 = vmul.f32 %v1463, 0.33333334
        %v1677 = vmul.f32 %v1465, 0.33333334
        %v1678 = vmul.f32 %v1467, 0.33333334
        %v1679 = vmul.f32 %v1469, 0.33333334
        %v1680 = vmul.f32 %v1471, 0.33333334
        %v1681 = vmul.f32 %v1473, 0.33333334
        %v1682 = vmul.f32 %v1475, 0.33333334
        %v1683 = vmul.f32 %v1477, 0.33333334
        %v1684 = vmul.f32 %v1479, 0.33333334
        %v1685 = vmul.f32 %v1481, 0.33333334
        %v1686 = vmul.f32 %v1483, 0.33333334
        %v1687 = vmul.f32 %v1485, 0.33333334
        %v1688 = vmul.f32 %v1487, 0.33333334
        %v1689 = vmul.f32 %v1489, 0.33333334
        %v1690 = vmul.f32 %v1491, 0.33333334
        %v1691 = vmul.f32 %v1493, 0.33333334
        %v1692 = vmul.f32 %v1495, 0.33333334
        %v1693 = vmul.f32 %v1497, 0.33333334
        %v1694 = vmul.f32 %v1499, 0.33333334
        %v1695 = vmul.f32 %v1501, 0.33333334
        %v1696 = vmul.f32 %v1503, 0.33333334
        %v1697 = vmul.f32 %v1505, 0.33333334
        %v1698 = vmul.f32 %v1507, 0.33333334
        %v1699 = vmul.f32 %v1509, 0.33333334
        %v1700 = vmul.f32 %v1511, 0.33333334
        %v1701 = vmul.f32 %v1513, 0.33333334
        %v1702 = vmul.f32 %v1515, 0.33333334
        %v1703 = vmul.f32 %v1517, 0.33333334
        %v1704 = vmul.f32 %v1519, 0.33333334
        %v1705 = vmul.f32 %v1521, 0.33333334
        %v1706 = vmul.f32 %v1523, 0.33333334
        %v1707 = vmul.f32 %v1525, 0.33333334
        %v1708 = vmul.f32 %v1527, 0.33333334
        %v1709 = vmul.f32 %v1529, 0.33333334
        %v1710 = vmul.f32 %v1531, 0.33333334
        %v1711 = vmul.f32 %v1533, 0.33333334
        %v1712 = vmul.f32 %v1535, 0.33333334
        %v1713 = vmul.f32 %v1537, 0.33333334
        %v1714 = vmul.f32 %v1539, 0.33333334
        %v1715 = vmul.f32 %v1541, 0.33333334
        %v1716 = vmul.f32 %v1543, 0.33333334
        %v1717 = vmul.f32 %v1545, 0.33333334
        %v1718 = vmul.f32 %v1547, 0.33333334
        %v1719 = vmul.f32 %v1549, 0.33333334
        %v1720 = vmul.f32 %v1551, 0.33333334
        %v1721 = vmul.f32 %v1553, 0.33333334
        %v1722 = vmul.f32 %v1555, 0.33333334
        %v1723 = vmul.f32 %v1557, 0.33333334
        %v1724 = vmul.f32 %v1559, 0.33333334
        %v1725 = vmul.f32 %v1561, 0.33333334
        %v1726 = vmul.f32 %v1563, 0.33333334
        %v1727 = vmul.f32 %v1565, 0.33333334
        %v1728 = vmul.f32 %v1567, 0.33333334
        %v1729 = vmul.f32 %v1569, 0.33333334
        %v1730 = vmul.f32 %v1571, 0.33333334
        %v1731 = vmul.f32 %v1573, 0.33333334
        %v1732 = vmul.f32 %v1575, 0.33333334
        %v1733 = vmul.f32 %v1577, 0.33333334
        %v1734 = vmul.f32 %v1579, 0.33333334
        %v1735 = vmul.f32 %v1581, 0.33333334
        %v1736 = vmul.f32 %v1583, 0.33333334
        %v1737 = vmul.f32 %v1585, 0.33333334
        %v1738 = vmul.f32 %v1587, 0.33333334
        %v1739 = vmul.f32 %v1589, 0.33333334
        %v1740 = vmul.f32 %v1591, 0.33333334
        %v1741 = vmul.f32 %v1593, 0.33333334
        %v1742 = vmul.f32 %v1595, 0.33333334
        %v1743 = vmul.f32 %v1597, 0.33333334
        %v1744 = vmul.f32 %v1599, 0.33333334
        %v1745 = vmul.f32 %v1601, 0.33333334
        %v1746 = vmul.f32 %v1603, 0.33333334
        %v1747 = vmul.f32 %v1605, 0.33333334
        %v1748 = vmul.f32 %v1607, 0.33333334
        %v1749 = vmul.f32 %v1609, 0.33333334
        %v1750 = vmul.f32 %v1611, 0.33333334
        %v1751 = vmul.f32 %v1613, 0.33333334
        %v1752 = vmul.f32 %v1615, 0.33333334
        %v1753 = vmul.f32 %v1617, 0.33333334
        %v1754 = vmul.f32 %v1619, 0.33333334
        %v1755 = vmul.f32 %v1621, 0.33333334
        %v1756 = vmul.f32 %v1623, 0.33333334
        %v1757 = vmul.f32 %v1625, 0.33333334
        %v1758 = vmul.f32 %v1627, 0.33333334
        %v1759 = vmul.f32 %v1629, 0.33333334
        %v1760 = vmul.f32 %v1631, 0.33333334
        %v1761 = vmul.f32 %v1633, 0.33333334
        %v1762 = vmul.f32 %v1634, 1.442695
        %v1763 = vpow.pop %v1762
        %v1764 = vmul.f32 %v1635, 1.442695
        %v1765 = vpow.pop %v1764
        %v1766 = vmul.f32 %v1636, 1.442695
        %v1767 = vpow.pop %v1766
        %v1768 = vmul.f32 %v1637, 1.442695
        %v1769 = vpow.pop %v1768
        %v1770 = vmul.f32 %v1638, 1.442695
        %v1771 = vpow.pop %v1770
        %v1772 = vmul.f32 %v1639, 1.442695
        %v1773 = vpow.pop %v1772
        %v1774 = vmul.f32 %v1640, 1.442695
        %v1775 = vpow.pop %v1774
        %v1776 = vmul.f32 %v1641, 1.442695
        %v1777 = vpow.pop %v1776
        %v1778 = vmul.f32 %v1642, 1.442695
        %v1779 = vpow.pop %v1778
        %v1780 = vmul.f32 %v1643, 1.442695
        %v1781 = vpow.pop %v1780
        %v1782 = vmul.f32 %v1644, 1.442695
        %v1783 = vpow.pop %v1782
        %v1784 = vmul.f32 %v1645, 1.442695
        %v1785 = vpow.pop %v1784
        %v1786 = vmul.f32 %v1646, 1.442695
        %v1787 = vpow.pop %v1786
        %v1788 = vmul.f32 %v1647, 1.442695
        %v1789 = vpow.pop %v1788
        %v1790 = vmul.f32 %v1648, 1.442695
        %v1791 = vpow.pop %v1790
        %v1792 = vmul.f32 %v1649, 1.442695
        %v1793 = vpow.pop %v1792
        %v1794 = vmul.f32 %v1650, 1.442695
        %v1795 = vpow.pop %v1794
        %v1796 = vmul.f32 %v1651, 1.442695
        %v1797 = vpow.pop %v1796
        %v1798 = vmul.f32 %v1652, 1.442695
        %v1799 = vpow.pop %v1798
        %v1800 = vmul.f32 %v1653, 1.442695
        %v1801 = vpow.pop %v1800
        %v1802 = vmul.f32 %v1654, 1.442695
        %v1803 = vpow.pop %v1802
        %v1804 = vmul.f32 %v1655, 1.442695
        %v1805 = vpow.pop %v1804
        %v1806 = vmul.f32 %v1656, 1.442695
        %v1807 = vpow.pop %v1806
        %v1808 = vmul.f32 %v1657, 1.442695
        %v1809 = vpow.pop %v1808
        %v1810 = vmul.f32 %v1658, 1.442695
        %v1811 = vpow.pop %v1810
        %v1812 = vmul.f32 %v1659, 1.442695
        %v1813 = vpow.pop %v1812
        %v1814 = vmul.f32 %v1660, 1.442695
        %v1815 = vpow.pop %v1814
        %v1816 = vmul.f32 %v1661, 1.442695
        %v1817 = vpow.pop %v1816
        %v1818 = vmul.f32 %v1662, 1.442695
        %v1819 = vpow.pop %v1818
        %v1820 = vmul.f32 %v1663, 1.442695
        %v1821 = vpow.pop %v1820
        %v1822 = vmul.f32 %v1664, 1.442695
        %v1823 = vpow.pop %v1822
        %v1824 = vmul.f32 %v1665, 1.442695
        %v1825 = vpow.pop %v1824
        %v1826 = vmul.f32 %v1666, 1.442695
        %v1827 = vpow.pop %v1826
        %v1828 = vmul.f32 %v1667, 1.442695
        %v1829 = vpow.pop %v1828
        %v1830 = vmul.f32 %v1668, 1.442695
        %v1831 = vpow.pop %v1830
        %v1832 = vmul.f32 %v1669, 1.442695
        %v1833 = vpow.pop %v1832
        %v1834 = vmul.f32 %v1670, 1.442695
        %v1835 = vpow.pop %v1834
        %v1836 = vmul.f32 %v1671, 1.442695
        %v1837 = vpow.pop %v1836
        %v1838 = vmul.f32 %v1672, 1.442695
        %v1839 = vpow.pop %v1838
        %v1840 = vmul.f32 %v1673, 1.442695
        %v1841 = vpow.pop %v1840
        %v1842 = vmul.f32 %v1674, 1.442695
        %v1843 = vpow.pop %v1842
        %v1844 = vmul.f32 %v1675, 1.442695
        %v1845 = vpow.pop %v1844
        %v1846 = vmul.f32 %v1676, 1.442695
        %v1847 = vpow.pop %v1846
        %v1848 = vmul.f32 %v1677, 1.442695
        %v1849 = vpow.pop %v1848
        %v1850 = vmul.f32 %v1678, 1.442695
        %v1851 = vpow.pop %v1850
        %v1852 = vmul.f32 %v1679, 1.442695
        %v1853 = vpow.pop %v1852
        %v1854 = vmul.f32 %v1680, 1.442695
        %v1855 = vpow.pop %v1854
        %v1856 = vmul.f32 %v1681, 1.442695
        %v1857 = vpow.pop %v1856
        %v1858 = vmul.f32 %v1682, 1.442695
        %v1859 = vpow.pop %v1858
        %v1860 = vmul.f32 %v1683, 1.442695
        %v1861 = vpow.pop %v1860
        %v1862 = vmul.f32 %v1684, 1.442695
        %v1863 = vpow.pop %v1862
        %v1864 = vmul.f32 %v1685, 1.442695
        %v1865 = vpow.pop %v1864
        %v1866 = vmul.f32 %v1686, 1.442695
        %v1867 = vpow.pop %v1866
        %v1868 = vmul.f32 %v1687, 1.442695
        %v1869 = vpow.pop %v1868
        %v1870 = vmul.f32 %v1688, 1.442695
        %v1871 = vpow.pop %v1870
        %v1872 = vmul.f32 %v1689, 1.442695
        %v1873 = vpow.pop %v1872
        %v1874 = vmul.f32 %v1690, 1.442695
        %v1875 = vpow.pop %v1874
        %v1876 = vmul.f32 %v1691, 1.442695
        %v1877 = vpow.pop %v1876
        %v1878 = vmul.f32 %v1692, 1.442695
        %v1879 = vpow.pop %v1878
        %v1880 = vmul.f32 %v1693, 1.442695
        %v1881 = vpow.pop %v1880
        %v1882 = vmul.f32 %v1694, 1.442695
        %v1883 = vpow.pop %v1882
        %v1884 = vmul.f32 %v1695, 1.442695
        %v1885 = vpow.pop %v1884
        %v1886 = vmul.f32 %v1696, 1.442695
        %v1887 = vpow.pop %v1886
        %v1888 = vmul.f32 %v1697, 1.442695
        %v1889 = vpow.pop %v1888
        %v1890 = vmul.f32 %v1698, 1.442695
        %v1891 = vpow.pop %v1890
        %v1892 = vmul.f32 %v1699, 1.442695
        %v1893 = vpow.pop %v1892
        %v1894 = vmul.f32 %v1700, 1.442695
        %v1895 = vpow.pop %v1894
        %v1896 = vmul.f32 %v1701, 1.442695
        %v1897 = vpow.pop %v1896
        %v1898 = vmul.f32 %v1702, 1.442695
        %v1899 = vpow.pop %v1898
        %v1900 = vmul.f32 %v1703, 1.442695
        %v1901 = vpow.pop %v1900
        %v1902 = vmul.f32 %v1704, 1.442695
        %v1903 = vpow.pop %v1902
        %v1904 = vmul.f32 %v1705, 1.442695
        %v1905 = vpow.pop %v1904
        %v1906 = vmul.f32 %v1706, 1.442695
        %v1907 = vpow.pop %v1906
        %v1908 = vmul.f32 %v1707, 1.442695
        %v1909 = vpow.pop %v1908
        %v1910 = vmul.f32 %v1708, 1.442695
        %v1911 = vpow.pop %v1910
        %v1912 = vmul.f32 %v1709, 1.442695
        %v1913 = vpow.pop %v1912
        %v1914 = vmul.f32 %v1710, 1.442695
        %v1915 = vpow.pop %v1914
        %v1916 = vmul.f32 %v1711, 1.442695
        %v1917 = vpow.pop %v1916
        %v1918 = vmul.f32 %v1712, 1.442695
        %v1919 = vpow.pop %v1918
        %v1920 = vmul.f32 %v1713, 1.442695
        %v1921 = vpow.pop %v1920
        %v1922 = vmul.f32 %v1714, 1.442695
        %v1923 = vpow.pop %v1922
        %v1924 = vmul.f32 %v1715, 1.442695
        %v1925 = vpow.pop %v1924
        %v1926 = vmul.f32 %v1716, 1.442695
        %v1927 = vpow.pop %v1926
        %v1928 = vmul.f32 %v1717, 1.442695
        %v1929 = vpow.pop %v1928
        %v1930 = vmul.f32 %v1718, 1.442695
        %v1931 = vpow.pop %v1930
        %v1932 = vmul.f32 %v1719, 1.442695
        %v1933 = vpow.pop %v1932
        %v1934 = vmul.f32 %v1720, 1.442695
        %v1935 = vpow.pop %v1934
        %v1936 = vmul.f32 %v1721, 1.442695
        %v1937 = vpow.pop %v1936
        %v1938 = vmul.f32 %v1722, 1.442695
        %v1939 = vpow.pop %v1938
        %v1940 = vmul.f32 %v1723, 1.442695
        %v1941 = vpow.pop %v1940
        %v1942 = vmul.f32 %v1724, 1.442695
        %v1943 = vpow.pop %v1942
        %v1944 = vmul.f32 %v1725, 1.442695
        %v1945 = vpow.pop %v1944
        %v1946 = vmul.f32 %v1726, 1.442695
        %v1947 = vpow.pop %v1946
        %v1948 = vmul.f32 %v1727, 1.442695
        %v1949 = vpow.pop %v1948
        %v1950 = vmul.f32 %v1728, 1.442695
        %v1951 = vpow.pop %v1950
        %v1952 = vmul.f32 %v1729, 1.442695
        %v1953 = vpow.pop %v1952
        %v1954 = vmul.f32 %v1730, 1.442695
        %v1955 = vpow.pop %v1954
        %v1956 = vmul.f32 %v1731, 1.442695
        %v1957 = vpow.pop %v1956
        %v1958 = vmul.f32 %v1732, 1.442695
        %v1959 = vpow.pop %v1958
        %v1960 = vmul.f32 %v1733, 1.442695
        %v1961 = vpow.pop %v1960
        %v1962 = vmul.f32 %v1734, 1.442695
        %v1963 = vpow.pop %v1962
        %v1964 = vmul.f32 %v1735, 1.442695
        %v1965 = vpow.pop %v1964
        %v1966 = vmul.f32 %v1736, 1.442695
        %v1967 = vpow.pop %v1966
        %v1968 = vmul.f32 %v1737, 1.442695
        %v1969 = vpow.pop %v1968
        %v1970 = vmul.f32 %v1738, 1.442695
        %v1971 = vpow.pop %v1970
        %v1972 = vmul.f32 %v1739, 1.442695
        %v1973 = vpow.pop %v1972
        %v1974 = vmul.f32 %v1740, 1.442695
        %v1975 = vpow.pop %v1974
        %v1976 = vmul.f32 %v1741, 1.442695
        %v1977 = vpow.pop %v1976
        %v1978 = vmul.f32 %v1742, 1.442695
        %v1979 = vpow.pop %v1978
        %v1980 = vmul.f32 %v1743, 1.442695
        %v1981 = vpow.pop %v1980
        %v1982 = vmul.f32 %v1744, 1.442695
        %v1983 = vpow.pop %v1982
        %v1984 = vmul.f32 %v1745, 1.442695
        %v1985 = vpow.pop %v1984
        %v1986 = vmul.f32 %v1746, 1.442695
        %v1987 = vpow.pop %v1986
        %v1988 = vmul.f32 %v1747, 1.442695
        %v1989 = vpow.pop %v1988
        %v1990 = vmul.f32 %v1748, 1.442695
        %v1991 = vpow.pop %v1990
        %v1992 = vmul.f32 %v1749, 1.442695
        %v1993 = vpow.pop %v1992
        %v1994 = vmul.f32 %v1750, 1.442695
        %v1995 = vpow.pop %v1994
        %v1996 = vmul.f32 %v1751, 1.442695
        %v1997 = vpow.pop %v1996
        %v1998 = vmul.f32 %v1752, 1.442695
        %v1999 = vpow.pop %v1998
        %v2000 = vmul.f32 %v1753, 1.442695
        %v2001 = vpow.pop %v2000
        %v2002 = vmul.f32 %v1754, 1.442695
        %v2003 = vpow.pop %v2002
        %v2004 = vmul.f32 %v1755, 1.442695
        %v2005 = vpow.pop %v2004
        %v2006 = vmul.f32 %v1756, 1.442695
        %v2007 = vpow.pop %v2006
        %v2008 = vmul.f32 %v1757, 1.442695
        %v2009 = vpow.pop %v2008
        %v2010 = vmul.f32 %v1758, 1.442695
        %v2011 = vpow.pop %v2010
        %v2012 = vmul.f32 %v1759, 1.442695
        %v2013 = vpow.pop %v2012
        %v2014 = vmul.f32 %v1760, 1.442695
        %v2015 = vpow.pop %v2014
        %v2016 = vmul.f32 %v1761, 1.442695
        %v2017 = vpow.pop %v2016
        %v2018 = vpack.c.bf16 %v1765, %v1763
        %v2019 = vpack.c.bf16 %v1769, %v1767
        %v2020 = vpack.c.bf16 %v1773, %v1771
        %v2021 = vpack.c.bf16 %v1777, %v1775
        %v2022 = vpack.c.bf16 %v1781, %v1779
        %v2023 = vpack.c.bf16 %v1785, %v1783
        %v2024 = vpack.c.bf16 %v1789, %v1787
        %v2025 = vpack.c.bf16 %v1793, %v1791
        %v2026 = vpack.c.bf16 %v1797, %v1795
        %v2027 = vpack.c.bf16 %v1801, %v1799
        %v2028 = vpack.c.bf16 %v1805, %v1803
        %v2029 = vpack.c.bf16 %v1809, %v1807
        %v2030 = vpack.c.bf16 %v1813, %v1811
        %v2031 = vpack.c.bf16 %v1817, %v1815
        %v2032 = vpack.c.bf16 %v1821, %v1819
        %v2033 = vpack.c.bf16 %v1825, %v1823
        %v2034 = vpack.c.bf16 %v1829, %v1827
        %v2035 = vpack.c.bf16 %v1833, %v1831
        %v2036 = vpack.c.bf16 %v1837, %v1835
        %v2037 = vpack.c.bf16 %v1841, %v1839
        %v2038 = vpack.c.bf16 %v1845, %v1843
        %v2039 = vpack.c.bf16 %v1849, %v1847
        %v2040 = vpack.c.bf16 %v1853, %v1851
        %v2041 = vpack.c.bf16 %v1857, %v1855
        %v2042 = vpack.c.bf16 %v1861, %v1859
        %v2043 = vpack.c.bf16 %v1865, %v1863
        %v2044 = vpack.c.bf16 %v1869, %v1867
        %v2045 = vpack.c.bf16 %v1873, %v1871
        %v2046 = vpack.c.bf16 %v1877, %v1875
        %v2047 = vpack.c.bf16 %v1881, %v1879
        %v2048 = vpack.c.bf16 %v1885, %v1883
        %v2049 = vpack.c.bf16 %v1889, %v1887
        %v2050 = vpack.c.bf16 %v1893, %v1891
        %v2051 = vpack.c.bf16 %v1897, %v1895
        %v2052 = vpack.c.bf16 %v1901, %v1899
        %v2053 = vpack.c.bf16 %v1905, %v1903
        %v2054 = vpack.c.bf16 %v1909, %v1907
        %v2055 = vpack.c.bf16 %v1913, %v1911
        %v2056 = vpack.c.bf16 %v1917, %v1915
        %v2057 = vpack.c.bf16 %v1921, %v1919
        %v2058 = vpack.c.bf16 %v1925, %v1923
        %v2059 = vpack.c.bf16 %v1929, %v1927
        %v2060 = vpack.c.bf16 %v1933, %v1931
        %v2061 = vpack.c.bf16 %v1937, %v1935
        %v2062 = vpack.c.bf16 %v1941, %v1939
        %v2063 = vpack.c.bf16 %v1945, %v1943
        %v2064 = vpack.c.bf16 %v1949, %v1947
        %v2065 = vpack.c.bf16 %v1953, %v1951
        %v2066 = vpack.c.bf16 %v1957, %v1955
        %v2067 = vpack.c.bf16 %v1961, %v1959
        %v2068 = vpack.c.bf16 %v1965, %v1963
        %v2069 = vpack.c.bf16 %v1969, %v1967
        %v2070 = vpack.c.bf16 %v1973, %v1971
        %v2071 = vpack.c.bf16 %v1977, %v1975
        %v2072 = vpack.c.bf16 %v1981, %v1979
        %v2073 = vpack.c.bf16 %v1985, %v1983
        %v2074 = vpack.c.bf16 %v1989, %v1987
        %v2075 = vpack.c.bf16 %v1993, %v1991
        %v2076 = vpack.c.bf16 %v1997, %v1995
        %v2077 = vpack.c.bf16 %v2001, %v1999
        %v2078 = vpack.c.bf16 %v2005, %v2003
        %v2079 = vpack.c.bf16 %v2009, %v2007
        %v2080 = vpack.c.bf16 %v2013, %v2011
        %v2081 = vpack.c.bf16 %v2017, %v2015
        %v2082 = vld [vmem:[#allocation2] sm:$0xff]
        %v2083 = vld [vmem:[#allocation2 + $0x8] sm:$0xff]
        %v2084 = vld [vmem:[#allocation2 + $0x10] sm:$0xff]
        %v2085 = vld [vmem:[#allocation2 + $0x18] sm:$0xff]
        %v2086 = vld [vmem:[#allocation2 + $0x20] sm:$0xff]
        %v2087 = vld [vmem:[#allocation2 + $0x28] sm:$0xff]
        %v2088 = vld [vmem:[#allocation2 + $0x30] sm:$0xff]
        %v2089 = vld [vmem:[#allocation2 + $0x38] sm:$0xff]
        %v2090 = vld [vmem:[#allocation2 + $0x40] sm:$0xff]
        %v2091 = vld [vmem:[#allocation2 + $0x48] sm:$0xff]
        %v2092 = vld [vmem:[#allocation2 + $0x50] sm:$0xff]
        %v2093 = vld [vmem:[#allocation2 + $0x58] sm:$0xff]
        %v2094 = vld [vmem:[#allocation2 + $0x60] sm:$0xff]
        %v2095 = vld [vmem:[#allocation2 + $0x68] sm:$0xff]
        %v2096 = vld [vmem:[#allocation2 + $0x70] sm:$0xff]
        %v2097 = vld [vmem:[#allocation2 + $0x78] sm:$0xff]
        %v2098 = vld [vmem:[#allocation2 + $0x80] sm:$0xff]
        %v2099 = vld [vmem:[#allocation2 + $0x88] sm:$0xff]
        %v2100 = vld [vmem:[#allocation2 + $0x90] sm:$0xff]
        %v2101 = vld [vmem:[#allocation2 + $0x98] sm:$0xff]
        %v2102 = vld [vmem:[#allocation2 + $0xa0] sm:$0xff]
        %v2103 = vld [vmem:[#allocation2 + $0xa8] sm:$0xff]
        %v2104 = vld [vmem:[#allocation2 + $0xb0] sm:$0xff]
        %v2105 = vld [vmem:[#allocation2 + $0xb8] sm:$0xff]
        %v2106 = vld [vmem:[#allocation2 + $0xc0] sm:$0xff]
        %v2107 = vld [vmem:[#allocation2 + $0xc8] sm:$0xff]
        %v2108 = vld [vmem:[#allocation2 + $0xd0] sm:$0xff]
        %v2109 = vld [vmem:[#allocation2 + $0xd8] sm:$0xff]
        %v2110 = vld [vmem:[#allocation2 + $0xe0] sm:$0xff]
        %v2111 = vld [vmem:[#allocation2 + $0xe8] sm:$0xff]
        %v2112 = vld [vmem:[#allocation2 + $0xf0] sm:$0xff]
        %v2113 = vld [vmem:[#allocation2 + $0xf8] sm:$0xff]
        %v2114 = vld [vmem:[#allocation2 + $0x100] sm:$0xff]
        %v2115 = vld [vmem:[#allocation2 + $0x108] sm:$0xff]
        %v2116 = vld [vmem:[#allocation2 + $0x110] sm:$0xff]
        %v2117 = vld [vmem:[#allocation2 + $0x118] sm:$0xff]
        %v2118 = vld [vmem:[#allocation2 + $0x120] sm:$0xff]
        %v2119 = vld [vmem:[#allocation2 + $0x128] sm:$0xff]
        %v2120 = vld [vmem:[#allocation2 + $0x130] sm:$0xff]
        %v2121 = vld [vmem:[#allocation2 + $0x138] sm:$0xff]
        %v2122 = vld [vmem:[#allocation2 + $0x140] sm:$0xff]
        %v2123 = vld [vmem:[#allocation2 + $0x148] sm:$0xff]
        %v2124 = vld [vmem:[#allocation2 + $0x150] sm:$0xff]
        %v2125 = vld [vmem:[#allocation2 + $0x158] sm:$0xff]
        %v2126 = vld [vmem:[#allocation2 + $0x160] sm:$0xff]
        %v2127 = vld [vmem:[#allocation2 + $0x168] sm:$0xff]
        %v2128 = vld [vmem:[#allocation2 + $0x170] sm:$0xff]
        %v2129 = vld [vmem:[#allocation2 + $0x178] sm:$0xff]
        %v2130 = vld [vmem:[#allocation2 + $0x180] sm:$0xff]
        %v2131 = vld [vmem:[#allocation2 + $0x188] sm:$0xff]
        %v2132 = vld [vmem:[#allocation2 + $0x190] sm:$0xff]
        %v2133 = vld [vmem:[#allocation2 + $0x198] sm:$0xff]
        %v2134 = vld [vmem:[#allocation2 + $0x1a0] sm:$0xff]
        %v2135 = vld [vmem:[#allocation2 + $0x1a8] sm:$0xff]
        %v2136 = vld [vmem:[#allocation2 + $0x1b0] sm:$0xff]
        %v2137 = vld [vmem:[#allocation2 + $0x1b8] sm:$0xff]
        %v2138 = vld [vmem:[#allocation2 + $0x1c0] sm:$0xff]
        %v2139 = vld [vmem:[#allocation2 + $0x1c8] sm:$0xff]
        %v2140 = vld [vmem:[#allocation2 + $0x1d0] sm:$0xff]
        %v2141 = vld [vmem:[#allocation2 + $0x1d8] sm:$0xff]
        %v2142 = vld [vmem:[#allocation2 + $0x1e0] sm:$0xff]
        %v2143 = vld [vmem:[#allocation2 + $0x1e8] sm:$0xff]
        %v2144 = vld [vmem:[#allocation2 + $0x1f0] sm:$0xff]
        %v2145 = vld [vmem:[#allocation2 + $0x1f8] sm:$0xff]
        %v2146 = vld [vmem:[#allocation2 + $0x200] sm:$0xff]
        %v2147 = vld [vmem:[#allocation2 + $0x208] sm:$0xff]
        %v2148 = vld [vmem:[#allocation2 + $0x210] sm:$0xff]
        %v2149 = vld [vmem:[#allocation2 + $0x218] sm:$0xff]
        %v2150 = vld [vmem:[#allocation2 + $0x220] sm:$0xff]
        %v2151 = vld [vmem:[#allocation2 + $0x228] sm:$0xff]
        %v2152 = vld [vmem:[#allocation2 + $0x230] sm:$0xff]
        %v2153 = vld [vmem:[#allocation2 + $0x238] sm:$0xff]
        %v2154 = vld [vmem:[#allocation2 + $0x240] sm:$0xff]
        %v2155 = vld [vmem:[#allocation2 + $0x248] sm:$0xff]
        %v2156 = vld [vmem:[#allocation2 + $0x250] sm:$0xff]
        %v2157 = vld [vmem:[#allocation2 + $0x258] sm:$0xff]
        %v2158 = vld [vmem:[#allocation2 + $0x260] sm:$0xff]
        %v2159 = vld [vmem:[#allocation2 + $0x268] sm:$0xff]
        %v2160 = vld [vmem:[#allocation2 + $0x270] sm:$0xff]
        %v2161 = vld [vmem:[#allocation2 + $0x278] sm:$0xff]
        %v2162 = vld [vmem:[#allocation2 + $0x280] sm:$0xff]
        %v2163 = vld [vmem:[#allocation2 + $0x288] sm:$0xff]
        %v2164 = vld [vmem:[#allocation2 + $0x290] sm:$0xff]
        %v2165 = vld [vmem:[#allocation2 + $0x298] sm:$0xff]
        %v2166 = vld [vmem:[#allocation2 + $0x2a0] sm:$0xff]
        %v2167 = vld [vmem:[#allocation2 + $0x2a8] sm:$0xff]
        %v2168 = vld [vmem:[#allocation2 + $0x2b0] sm:$0xff]
        %v2169 = vld [vmem:[#allocation2 + $0x2b8] sm:$0xff]
        %v2170 = vld [vmem:[#allocation2 + $0x2c0] sm:$0xff]
        %v2171 = vld [vmem:[#allocation2 + $0x2c8] sm:$0xff]
        %v2172 = vld [vmem:[#allocation2 + $0x2d0] sm:$0xff]
        %v2173 = vld [vmem:[#allocation2 + $0x2d8] sm:$0xff]
        %v2174 = vld [vmem:[#allocation2 + $0x2e0] sm:$0xff]
        %v2175 = vld [vmem:[#allocation2 + $0x2e8] sm:$0xff]
        %v2176 = vld [vmem:[#allocation2 + $0x2f0] sm:$0xff]
        %v2177 = vld [vmem:[#allocation2 + $0x2f8] sm:$0xff]
        %v2178 = vld [vmem:[#allocation2 + $0x300] sm:$0xff]
        %v2179 = vld [vmem:[#allocation2 + $0x308] sm:$0xff]
        %v2180 = vld [vmem:[#allocation2 + $0x310] sm:$0xff]
        %v2181 = vld [vmem:[#allocation2 + $0x318] sm:$0xff]
        %v2182 = vld [vmem:[#allocation2 + $0x320] sm:$0xff]
        %v2183 = vld [vmem:[#allocation2 + $0x328] sm:$0xff]
        %v2184 = vld [vmem:[#allocation2 + $0x330] sm:$0xff]
        %v2185 = vld [vmem:[#allocation2 + $0x338] sm:$0xff]
        %v2186 = vld [vmem:[#allocation2 + $0x340] sm:$0xff]
        %v2187 = vld [vmem:[#allocation2 + $0x348] sm:$0xff]
        %v2188 = vld [vmem:[#allocation2 + $0x350] sm:$0xff]
        %v2189 = vld [vmem:[#allocation2 + $0x358] sm:$0xff]
        %v2190 = vld [vmem:[#allocation2 + $0x360] sm:$0xff]
        %v2191 = vld [vmem:[#allocation2 + $0x368] sm:$0xff]
        %v2192 = vld [vmem:[#allocation2 + $0x370] sm:$0xff]
        %v2193 = vld [vmem:[#allocation2 + $0x378] sm:$0xff]
        %v2194 = vld [vmem:[#allocation2 + $0x380] sm:$0xff]
        %v2195 = vld [vmem:[#allocation2 + $0x388] sm:$0xff]
        %v2196 = vld [vmem:[#allocation2 + $0x390] sm:$0xff]
        %v2197 = vld [vmem:[#allocation2 + $0x398] sm:$0xff]
        %v2198 = vld [vmem:[#allocation2 + $0x3a0] sm:$0xff]
        %v2199 = vld [vmem:[#allocation2 + $0x3a8] sm:$0xff]
        %v2200 = vld [vmem:[#allocation2 + $0x3b0] sm:$0xff]
        %v2201 = vld [vmem:[#allocation2 + $0x3b8] sm:$0xff]
        %v2202 = vld [vmem:[#allocation2 + $0x3c0] sm:$0xff]
        %v2203 = vld [vmem:[#allocation2 + $0x3c8] sm:$0xff]
        %v2204 = vld [vmem:[#allocation2 + $0x3d0] sm:$0xff]
        %v2205 = vld [vmem:[#allocation2 + $0x3d8] sm:$0xff]
        %v2206 = vld [vmem:[#allocation2 + $0x3e0] sm:$0xff]
        %v2207 = vld [vmem:[#allocation2 + $0x3e8] sm:$0xff]
        %v2208 = vld [vmem:[#allocation2 + $0x3f0] sm:$0xff]
        %v2209 = vld [vmem:[#allocation2 + $0x3f8] sm:$0xff]
        %v2210 = vld [vmem:[#allocation4] sm:$0xf]
        %v2212 = vlaneseq
        %v2213 = vshrl.u32 %v2212, 7
        %v2214 = vsub.s32 0, %v2213
        %v2215 = vrot.slane %v2210, %v2214
        %v2216 = vlaneseq
        %v2217 = vshrl.u32 %v2216, 7
        %v2218 = vsub.s32 1, %v2217
        %v2219 = vrot.slane %v2210, %v2218
        %v2220 = vlaneseq
        %v2221 = vshrl.u32 %v2220, 7
        %v2222 = vsub.s32 2, %v2221
        %v2223 = vrot.slane %v2210, %v2222
        %v2224 = vlaneseq
        %v2225 = vshrl.u32 %v2224, 7
        %v2226 = vsub.s32 3, %v2225
        %v2227 = vrot.slane %v2210, %v2226
        %v2296 = vunpack.c.l.b16 %v2018
        %v2297 = vunpack.c.h.b16 %v2018
        %v2298 = vunpack.c.l.b16 %v2019
        %v2299 = vunpack.c.h.b16 %v2019
        %v2300 = vunpack.c.l.b16 %v2020
        %v2301 = vunpack.c.h.b16 %v2020
        %v2302 = vunpack.c.l.b16 %v2021
        %v2303 = vunpack.c.h.b16 %v2021
        %v2304 = vunpack.c.l.b16 %v2022
        %v2305 = vunpack.c.h.b16 %v2022
        %v2306 = vunpack.c.l.b16 %v2023
        %v2307 = vunpack.c.h.b16 %v2023
        %v2308 = vunpack.c.l.b16 %v2024
        %v2309 = vunpack.c.h.b16 %v2024
        %v2310 = vunpack.c.l.b16 %v2025
        %v2311 = vunpack.c.h.b16 %v2025
        %v2312 = vunpack.c.l.b16 %v2026
        %v2313 = vunpack.c.h.b16 %v2026
        %v2314 = vunpack.c.l.b16 %v2027
        %v2315 = vunpack.c.h.b16 %v2027
        %v2316 = vunpack.c.l.b16 %v2028
        %v2317 = vunpack.c.h.b16 %v2028
        %v2318 = vunpack.c.l.b16 %v2029
        %v2319 = vunpack.c.h.b16 %v2029
        %v2320 = vunpack.c.l.b16 %v2030
        %v2321 = vunpack.c.h.b16 %v2030
        %v2322 = vunpack.c.l.b16 %v2031
        %v2323 = vunpack.c.h.b16 %v2031
        %v2324 = vunpack.c.l.b16 %v2032
        %v2325 = vunpack.c.h.b16 %v2032
        %v2326 = vunpack.c.l.b16 %v2033
        %v2327 = vunpack.c.h.b16 %v2033
        %v2328 = vunpack.c.l.b16 %v2034
        %v2329 = vunpack.c.h.b16 %v2034
        %v2330 = vunpack.c.l.b16 %v2035
        %v2331 = vunpack.c.h.b16 %v2035
        %v2332 = vunpack.c.l.b16 %v2036
        %v2333 = vunpack.c.h.b16 %v2036
        %v2334 = vunpack.c.l.b16 %v2037
        %v2335 = vunpack.c.h.b16 %v2037
        %v2336 = vunpack.c.l.b16 %v2038
        %v2337 = vunpack.c.h.b16 %v2038
        %v2338 = vunpack.c.l.b16 %v2039
        %v2339 = vunpack.c.h.b16 %v2039
        %v2340 = vunpack.c.l.b16 %v2040
        %v2341 = vunpack.c.h.b16 %v2040
        %v2342 = vunpack.c.l.b16 %v2041
        %v2343 = vunpack.c.h.b16 %v2041
        %v2344 = vunpack.c.l.b16 %v2042
        %v2345 = vunpack.c.h.b16 %v2042
        %v2346 = vunpack.c.l.b16 %v2043
        %v2347 = vunpack.c.h.b16 %v2043
        %v2348 = vunpack.c.l.b16 %v2044
        %v2349 = vunpack.c.h.b16 %v2044
        %v2350 = vunpack.c.l.b16 %v2045
        %v2351 = vunpack.c.h.b16 %v2045
        %v2352 = vunpack.c.l.b16 %v2046
        %v2353 = vunpack.c.h.b16 %v2046
        %v2354 = vunpack.c.l.b16 %v2047
        %v2355 = vunpack.c.h.b16 %v2047
        %v2356 = vunpack.c.l.b16 %v2048
        %v2357 = vunpack.c.h.b16 %v2048
        %v2358 = vunpack.c.l.b16 %v2049
        %v2359 = vunpack.c.h.b16 %v2049
        %v2360 = vunpack.c.l.b16 %v2050
        %v2361 = vunpack.c.h.b16 %v2050
        %v2362 = vunpack.c.l.b16 %v2051
        %v2363 = vunpack.c.h.b16 %v2051
        %v2364 = vunpack.c.l.b16 %v2052
        %v2365 = vunpack.c.h.b16 %v2052
        %v2366 = vunpack.c.l.b16 %v2053
        %v2367 = vunpack.c.h.b16 %v2053
        %v2368 = vunpack.c.l.b16 %v2054
        %v2369 = vunpack.c.h.b16 %v2054
        %v2370 = vunpack.c.l.b16 %v2055
        %v2371 = vunpack.c.h.b16 %v2055
        %v2372 = vunpack.c.l.b16 %v2056
        %v2373 = vunpack.c.h.b16 %v2056
        %v2374 = vunpack.c.l.b16 %v2057
        %v2375 = vunpack.c.h.b16 %v2057
        %v2376 = vunpack.c.l.b16 %v2058
        %v2377 = vunpack.c.h.b16 %v2058
        %v2378 = vunpack.c.l.b16 %v2059
        %v2379 = vunpack.c.h.b16 %v2059
        %v2380 = vunpack.c.l.b16 %v2060
        %v2381 = vunpack.c.h.b16 %v2060
        %v2382 = vunpack.c.l.b16 %v2061
        %v2383 = vunpack.c.h.b16 %v2061
        %v2384 = vunpack.c.l.b16 %v2062
        %v2385 = vunpack.c.h.b16 %v2062
        %v2386 = vunpack.c.l.b16 %v2063
        %v2387 = vunpack.c.h.b16 %v2063
        %v2388 = vunpack.c.l.b16 %v2064
        %v2389 = vunpack.c.h.b16 %v2064
        %v2390 = vunpack.c.l.b16 %v2065
        %v2391 = vunpack.c.h.b16 %v2065
        %v2392 = vunpack.c.l.b16 %v2066
        %v2393 = vunpack.c.h.b16 %v2066
        %v2394 = vunpack.c.l.b16 %v2067
        %v2395 = vunpack.c.h.b16 %v2067
        %v2396 = vunpack.c.l.b16 %v2068
        %v2397 = vunpack.c.h.b16 %v2068
        %v2398 = vunpack.c.l.b16 %v2069
        %v2399 = vunpack.c.h.b16 %v2069
        %v2400 = vunpack.c.l.b16 %v2070
        %v2401 = vunpack.c.h.b16 %v2070
        %v2402 = vunpack.c.l.b16 %v2071
        %v2403 = vunpack.c.h.b16 %v2071
        %v2404 = vunpack.c.l.b16 %v2072
        %v2405 = vunpack.c.h.b16 %v2072
        %v2406 = vunpack.c.l.b16 %v2073
        %v2407 = vunpack.c.h.b16 %v2073
        %v2408 = vunpack.c.l.b16 %v2074
        %v2409 = vunpack.c.h.b16 %v2074
        %v2410 = vunpack.c.l.b16 %v2075
        %v2411 = vunpack.c.h.b16 %v2075
        %v2412 = vunpack.c.l.b16 %v2076
        %v2413 = vunpack.c.h.b16 %v2076
        %v2414 = vunpack.c.l.b16 %v2077
        %v2415 = vunpack.c.h.b16 %v2077
        %v2416 = vunpack.c.l.b16 %v2078
        %v2417 = vunpack.c.h.b16 %v2078
        %v2418 = vunpack.c.l.b16 %v2079
        %v2419 = vunpack.c.h.b16 %v2079
        %v2420 = vunpack.c.l.b16 %v2080
        %v2421 = vunpack.c.h.b16 %v2080
        %v2422 = vunpack.c.l.b16 %v2081
        %v2423 = vunpack.c.h.b16 %v2081
        %v2424 = vlaneseq
        %v2425 = vand.u32 %v2424, 127
        %v2426 = vlaneseq
        %v2427 = vshrl.u32 %v2426, 7
        %v2428 = vsub.s32 %v2425, %v2427
        %v2429 = vrot.slane %v2296, %v2428
        %v2430 = vadd.s32 %v2425, 4294967288
        %v2431 = vlaneseq
        %v2432 = vshrl.u32 %v2431, 7
        %v2433 = vsub.s32 %v2430, %v2432
        %v2434 = vrot.slane %v2297, %v2433
        %vm2435 = vcmask 130112
        %v2436 = vsel %vm2435, %v2434, %v2429
        %v2437 = vadd.s32 %v2425, 4294967280
        %v2438 = vlaneseq
        %v2439 = vshrl.u32 %v2438, 7
        %v2440 = vsub.s32 %v2437, %v2439
        %v2441 = vrot.slane %v2298, %v2440
        %vm2442 = vcmask 195712
        %v2443 = vsel %vm2442, %v2441, %v2436
        %v2444 = vadd.s32 %v2425, 4294967272
        %v2445 = vlaneseq
        %v2446 = vshrl.u32 %v2445, 7
        %v2447 = vsub.s32 %v2444, %v2446
        %v2448 = vrot.slane %v2299, %v2447
        %vm2449 = vcmask 261312
        %v2450 = vsel %vm2449, %v2448, %v2443
        %v2451 = vadd.s32 %v2425, 4294967264
        %v2452 = vlaneseq
        %v2453 = vshrl.u32 %v2452, 7
        %v2454 = vsub.s32 %v2451, %v2453
        %v2455 = vrot.slane %v2300, %v2454
        %vm2456 = vcmask 326912
        %v2457 = vsel %vm2456, %v2455, %v2450
        %v2458 = vadd.s32 %v2425, 4294967256
        %v2459 = vlaneseq
        %v2460 = vshrl.u32 %v2459, 7
        %v2461 = vsub.s32 %v2458, %v2460
        %v2462 = vrot.slane %v2301, %v2461
        %vm2463 = vcmask 392512
        %v2464 = vsel %vm2463, %v2462, %v2457
        %v2465 = vadd.s32 %v2425, 4294967248
        %v2466 = vlaneseq
        %v2467 = vshrl.u32 %v2466, 7
        %v2468 = vsub.s32 %v2465, %v2467
        %v2469 = vrot.slane %v2302, %v2468
        %vm2470 = vcmask 458112
        %v2471 = vsel %vm2470, %v2469, %v2464
        %v2472 = vadd.s32 %v2425, 4294967240
        %v2473 = vlaneseq
        %v2474 = vshrl.u32 %v2473, 7
        %v2475 = vsub.s32 %v2472, %v2474
        %v2476 = vrot.slane %v2303, %v2475
        %vm2477 = vcmask 523712
        %v2478 = vsel %vm2477, %v2476, %v2471
        %v2479 = vadd.s32 %v2425, 4294967232
        %v2480 = vlaneseq
        %v2481 = vshrl.u32 %v2480, 7
        %v2482 = vsub.s32 %v2479, %v2481
        %v2483 = vrot.slane %v2304, %v2482
        %vm2484 = vcmask 589312
        %v2485 = vsel %vm2484, %v2483, %v2478
        %v2486 = vadd.s32 %v2425, 4294967224
        %v2487 = vlaneseq
        %v2488 = vshrl.u32 %v2487, 7
        %v2489 = vsub.s32 %v2486, %v2488
        %v2490 = vrot.slane %v2305, %v2489
        %vm2491 = vcmask 654912
        %v2492 = vsel %vm2491, %v2490, %v2485
        %v2493 = vadd.s32 %v2425, 4294967216
        %v2494 = vlaneseq
        %v2495 = vshrl.u32 %v2494, 7
        %v2496 = vsub.s32 %v2493, %v2495
        %v2497 = vrot.slane %v2306, %v2496
        %vm2498 = vcmask 720512
        %v2499 = vsel %vm2498, %v2497, %v2492
        %v2500 = vadd.s32 %v2425, 4294967208
        %v2501 = vlaneseq
        %v2502 = vshrl.u32 %v2501, 7
        %v2503 = vsub.s32 %v2500, %v2502
        %v2504 = vrot.slane %v2307, %v2503
        %vm2505 = vcmask 786112
        %v2506 = vsel %vm2505, %v2504, %v2499
        %v2507 = vadd.s32 %v2425, 4294967200
        %v2508 = vlaneseq
        %v2509 = vshrl.u32 %v2508, 7
        %v2510 = vsub.s32 %v2507, %v2509
        %v2511 = vrot.slane %v2308, %v2510
        %vm2512 = vcmask 851712
        %v2513 = vsel %vm2512, %v2511, %v2506
        %v2514 = vadd.s32 %v2425, 4294967192
        %v2515 = vlaneseq
        %v2516 = vshrl.u32 %v2515, 7
        %v2517 = vsub.s32 %v2514, %v2516
        %v2518 = vrot.slane %v2309, %v2517
        %vm2519 = vcmask 917312
        %v2520 = vsel %vm2519, %v2518, %v2513
        %v2521 = vadd.s32 %v2425, 4294967184
        %v2522 = vlaneseq
        %v2523 = vshrl.u32 %v2522, 7
        %v2524 = vsub.s32 %v2521, %v2523
        %v2525 = vrot.slane %v2310, %v2524
        %vm2526 = vcmask 982912
        %v2527 = vsel %vm2526, %v2525, %v2520
        %v2528 = vadd.s32 %v2425, 4294967176
        %v2529 = vlaneseq
        %v2530 = vshrl.u32 %v2529, 7
        %v2531 = vsub.s32 %v2528, %v2530
        %v2532 = vrot.slane %v2311, %v2531
        %vm2533 = vcmask 1048512
        %v2534 = vsel %vm2533, %v2532, %v2527
        %v2535 = vlaneseq
        %v2536 = vshrl.u32 %v2535, 7
        %v2537 = vsub.s32 %v2425, %v2536
        %v2538 = vrot.slane %v2312, %v2537
        %v2539 = vlaneseq
        %v2540 = vshrl.u32 %v2539, 7
        %v2541 = vsub.s32 %v2430, %v2540
        %v2542 = vrot.slane %v2313, %v2541
        %v2543 = vsel %vm2435, %v2542, %v2538
        %v2544 = vlaneseq
        %v2545 = vshrl.u32 %v2544, 7
        %v2546 = vsub.s32 %v2437, %v2545
        %v2547 = vrot.slane %v2314, %v2546
        %v2548 = vsel %vm2442, %v2547, %v2543
        %v2549 = vlaneseq
        %v2550 = vshrl.u32 %v2549, 7
        %v2551 = vsub.s32 %v2444, %v2550
        %v2552 = vrot.slane %v2315, %v2551
        %v2553 = vsel %vm2449, %v2552, %v2548
        %v2554 = vlaneseq
        %v2555 = vshrl.u32 %v2554, 7
        %v2556 = vsub.s32 %v2451, %v2555
        %v2557 = vrot.slane %v2316, %v2556
        %v2558 = vsel %vm2456, %v2557, %v2553
        %v2559 = vlaneseq
        %v2560 = vshrl.u32 %v2559, 7
        %v2561 = vsub.s32 %v2458, %v2560
        %v2562 = vrot.slane %v2317, %v2561
        %v2563 = vsel %vm2463, %v2562, %v2558
        %v2564 = vlaneseq
        %v2565 = vshrl.u32 %v2564, 7
        %v2566 = vsub.s32 %v2465, %v2565
        %v2567 = vrot.slane %v2318, %v2566
        %v2568 = vsel %vm2470, %v2567, %v2563
        %v2569 = vlaneseq
        %v2570 = vshrl.u32 %v2569, 7
        %v2571 = vsub.s32 %v2472, %v2570
        %v2572 = vrot.slane %v2319, %v2571
        %v2573 = vsel %vm2477, %v2572, %v2568
        %v2574 = vlaneseq
        %v2575 = vshrl.u32 %v2574, 7
        %v2576 = vsub.s32 %v2479, %v2575
        %v2577 = vrot.slane %v2320, %v2576
        %v2578 = vsel %vm2484, %v2577, %v2573
        %v2579 = vlaneseq
        %v2580 = vshrl.u32 %v2579, 7
        %v2581 = vsub.s32 %v2486, %v2580
        %v2582 = vrot.slane %v2321, %v2581
        %v2583 = vsel %vm2491, %v2582, %v2578
        %v2584 = vlaneseq
        %v2585 = vshrl.u32 %v2584, 7
        %v2586 = vsub.s32 %v2493, %v2585
        %v2587 = vrot.slane %v2322, %v2586
        %v2588 = vsel %vm2498, %v2587, %v2583
        %v2589 = vlaneseq
        %v2590 = vshrl.u32 %v2589, 7
        %v2591 = vsub.s32 %v2500, %v2590
        %v2592 = vrot.slane %v2323, %v2591
        %v2593 = vsel %vm2505, %v2592, %v2588
        %v2594 = vlaneseq
        %v2595 = vshrl.u32 %v2594, 7
        %v2596 = vsub.s32 %v2507, %v2595
        %v2597 = vrot.slane %v2324, %v2596
        %v2598 = vsel %vm2512, %v2597, %v2593
        %v2599 = vlaneseq
        %v2600 = vshrl.u32 %v2599, 7
        %v2601 = vsub.s32 %v2514, %v2600
        %v2602 = vrot.slane %v2325, %v2601
        %v2603 = vsel %vm2519, %v2602, %v2598
        %v2604 = vlaneseq
        %v2605 = vshrl.u32 %v2604, 7
        %v2606 = vsub.s32 %v2521, %v2605
        %v2607 = vrot.slane %v2326, %v2606
        %v2608 = vsel %vm2526, %v2607, %v2603
        %v2609 = vlaneseq
        %v2610 = vshrl.u32 %v2609, 7
        %v2611 = vsub.s32 %v2528, %v2610
        %v2612 = vrot.slane %v2327, %v2611
        %v2613 = vsel %vm2533, %v2612, %v2608
        %v2614 = vlaneseq
        %v2615 = vshrl.u32 %v2614, 7
        %v2616 = vsub.s32 %v2425, %v2615
        %v2617 = vrot.slane %v2328, %v2616
        %v2618 = vlaneseq
        %v2619 = vshrl.u32 %v2618, 7
        %v2620 = vsub.s32 %v2430, %v2619
        %v2621 = vrot.slane %v2329, %v2620
        %v2622 = vsel %vm2435, %v2621, %v2617
        %v2623 = vlaneseq
        %v2624 = vshrl.u32 %v2623, 7
        %v2625 = vsub.s32 %v2437, %v2624
        %v2626 = vrot.slane %v2330, %v2625
        %v2627 = vsel %vm2442, %v2626, %v2622
        %v2628 = vlaneseq
        %v2629 = vshrl.u32 %v2628, 7
        %v2630 = vsub.s32 %v2444, %v2629
        %v2631 = vrot.slane %v2331, %v2630
        %v2632 = vsel %vm2449, %v2631, %v2627
        %v2633 = vlaneseq
        %v2634 = vshrl.u32 %v2633, 7
        %v2635 = vsub.s32 %v2451, %v2634
        %v2636 = vrot.slane %v2332, %v2635
        %v2637 = vsel %vm2456, %v2636, %v2632
        %v2638 = vlaneseq
        %v2639 = vshrl.u32 %v2638, 7
        %v2640 = vsub.s32 %v2458, %v2639
        %v2641 = vrot.slane %v2333, %v2640
        %v2642 = vsel %vm2463, %v2641, %v2637
        %v2643 = vlaneseq
        %v2644 = vshrl.u32 %v2643, 7
        %v2645 = vsub.s32 %v2465, %v2644
        %v2646 = vrot.slane %v2334, %v2645
        %v2647 = vsel %vm2470, %v2646, %v2642
        %v2648 = vlaneseq
        %v2649 = vshrl.u32 %v2648, 7
        %v2650 = vsub.s32 %v2472, %v2649
        %v2651 = vrot.slane %v2335, %v2650
        %v2652 = vsel %vm2477, %v2651, %v2647
        %v2653 = vlaneseq
        %v2654 = vshrl.u32 %v2653, 7
        %v2655 = vsub.s32 %v2479, %v2654
        %v2656 = vrot.slane %v2336, %v2655
        %v2657 = vsel %vm2484, %v2656, %v2652
        %v2658 = vlaneseq
        %v2659 = vshrl.u32 %v2658, 7
        %v2660 = vsub.s32 %v2486, %v2659
        %v2661 = vrot.slane %v2337, %v2660
        %v2662 = vsel %vm2491, %v2661, %v2657
        %v2663 = vlaneseq
        %v2664 = vshrl.u32 %v2663, 7
        %v2665 = vsub.s32 %v2493, %v2664
        %v2666 = vrot.slane %v2338, %v2665
        %v2667 = vsel %vm2498, %v2666, %v2662
        %v2668 = vlaneseq
        %v2669 = vshrl.u32 %v2668, 7
        %v2670 = vsub.s32 %v2500, %v2669
        %v2671 = vrot.slane %v2339, %v2670
        %v2672 = vsel %vm2505, %v2671, %v2667
        %v2673 = vlaneseq
        %v2674 = vshrl.u32 %v2673, 7
        %v2675 = vsub.s32 %v2507, %v2674
        %v2676 = vrot.slane %v2340, %v2675
        %v2677 = vsel %vm2512, %v2676, %v2672
        %v2678 = vlaneseq
        %v2679 = vshrl.u32 %v2678, 7
        %v2680 = vsub.s32 %v2514, %v2679
        %v2681 = vrot.slane %v2341, %v2680
        %v2682 = vsel %vm2519, %v2681, %v2677
        %v2683 = vlaneseq
        %v2684 = vshrl.u32 %v2683, 7
        %v2685 = vsub.s32 %v2521, %v2684
        %v2686 = vrot.slane %v2342, %v2685
        %v2687 = vsel %vm2526, %v2686, %v2682
        %v2688 = vlaneseq
        %v2689 = vshrl.u32 %v2688, 7
        %v2690 = vsub.s32 %v2528, %v2689
        %v2691 = vrot.slane %v2343, %v2690
        %v2692 = vsel %vm2533, %v2691, %v2687
        %v2693 = vlaneseq
        %v2694 = vshrl.u32 %v2693, 7
        %v2695 = vsub.s32 %v2425, %v2694
        %v2696 = vrot.slane %v2344, %v2695
        %v2697 = vlaneseq
        %v2698 = vshrl.u32 %v2697, 7
        %v2699 = vsub.s32 %v2430, %v2698
        %v2700 = vrot.slane %v2345, %v2699
        %v2701 = vsel %vm2435, %v2700, %v2696
        %v2702 = vlaneseq
        %v2703 = vshrl.u32 %v2702, 7
        %v2704 = vsub.s32 %v2437, %v2703
        %v2705 = vrot.slane %v2346, %v2704
        %v2706 = vsel %vm2442, %v2705, %v2701
        %v2707 = vlaneseq
        %v2708 = vshrl.u32 %v2707, 7
        %v2709 = vsub.s32 %v2444, %v2708
        %v2710 = vrot.slane %v2347, %v2709
        %v2711 = vsel %vm2449, %v2710, %v2706
        %v2712 = vlaneseq
        %v2713 = vshrl.u32 %v2712, 7
        %v2714 = vsub.s32 %v2451, %v2713
        %v2715 = vrot.slane %v2348, %v2714
        %v2716 = vsel %vm2456, %v2715, %v2711
        %v2717 = vlaneseq
        %v2718 = vshrl.u32 %v2717, 7
        %v2719 = vsub.s32 %v2458, %v2718
        %v2720 = vrot.slane %v2349, %v2719
        %v2721 = vsel %vm2463, %v2720, %v2716
        %v2722 = vlaneseq
        %v2723 = vshrl.u32 %v2722, 7
        %v2724 = vsub.s32 %v2465, %v2723
        %v2725 = vrot.slane %v2350, %v2724
        %v2726 = vsel %vm2470, %v2725, %v2721
        %v2727 = vlaneseq
        %v2728 = vshrl.u32 %v2727, 7
        %v2729 = vsub.s32 %v2472, %v2728
        %v2730 = vrot.slane %v2351, %v2729
        %v2731 = vsel %vm2477, %v2730, %v2726
        %v2732 = vlaneseq
        %v2733 = vshrl.u32 %v2732, 7
        %v2734 = vsub.s32 %v2479, %v2733
        %v2735 = vrot.slane %v2352, %v2734
        %v2736 = vsel %vm2484, %v2735, %v2731
        %v2737 = vlaneseq
        %v2738 = vshrl.u32 %v2737, 7
        %v2739 = vsub.s32 %v2486, %v2738
        %v2740 = vrot.slane %v2353, %v2739
        %v2741 = vsel %vm2491, %v2740, %v2736
        %v2742 = vlaneseq
        %v2743 = vshrl.u32 %v2742, 7
        %v2744 = vsub.s32 %v2493, %v2743
        %v2745 = vrot.slane %v2354, %v2744
        %v2746 = vsel %vm2498, %v2745, %v2741
        %v2747 = vlaneseq
        %v2748 = vshrl.u32 %v2747, 7
        %v2749 = vsub.s32 %v2500, %v2748
        %v2750 = vrot.slane %v2355, %v2749
        %v2751 = vsel %vm2505, %v2750, %v2746
        %v2752 = vlaneseq
        %v2753 = vshrl.u32 %v2752, 7
        %v2754 = vsub.s32 %v2507, %v2753
        %v2755 = vrot.slane %v2356, %v2754
        %v2756 = vsel %vm2512, %v2755, %v2751
        %v2757 = vlaneseq
        %v2758 = vshrl.u32 %v2757, 7
        %v2759 = vsub.s32 %v2514, %v2758
        %v2760 = vrot.slane %v2357, %v2759
        %v2761 = vsel %vm2519, %v2760, %v2756
        %v2762 = vlaneseq
        %v2763 = vshrl.u32 %v2762, 7
        %v2764 = vsub.s32 %v2521, %v2763
        %v2765 = vrot.slane %v2358, %v2764
        %v2766 = vsel %vm2526, %v2765, %v2761
        %v2767 = vlaneseq
        %v2768 = vshrl.u32 %v2767, 7
        %v2769 = vsub.s32 %v2528, %v2768
        %v2770 = vrot.slane %v2359, %v2769
        %v2771 = vsel %vm2533, %v2770, %v2766
        %v2772 = vlaneseq
        %v2773 = vshrl.u32 %v2772, 7
        %v2774 = vsub.s32 %v2425, %v2773
        %v2775 = vrot.slane %v2360, %v2774
        %v2776 = vlaneseq
        %v2777 = vshrl.u32 %v2776, 7
        %v2778 = vsub.s32 %v2430, %v2777
        %v2779 = vrot.slane %v2361, %v2778
        %v2780 = vsel %vm2435, %v2779, %v2775
        %v2781 = vlaneseq
        %v2782 = vshrl.u32 %v2781, 7
        %v2783 = vsub.s32 %v2437, %v2782
        %v2784 = vrot.slane %v2362, %v2783
        %v2785 = vsel %vm2442, %v2784, %v2780
        %v2786 = vlaneseq
        %v2787 = vshrl.u32 %v2786, 7
        %v2788 = vsub.s32 %v2444, %v2787
        %v2789 = vrot.slane %v2363, %v2788
        %v2790 = vsel %vm2449, %v2789, %v2785
        %v2791 = vlaneseq
        %v2792 = vshrl.u32 %v2791, 7
        %v2793 = vsub.s32 %v2451, %v2792
        %v2794 = vrot.slane %v2364, %v2793
        %v2795 = vsel %vm2456, %v2794, %v2790
        %v2796 = vlaneseq
        %v2797 = vshrl.u32 %v2796, 7
        %v2798 = vsub.s32 %v2458, %v2797
        %v2799 = vrot.slane %v2365, %v2798
        %v2800 = vsel %vm2463, %v2799, %v2795
        %v2801 = vlaneseq
        %v2802 = vshrl.u32 %v2801, 7
        %v2803 = vsub.s32 %v2465, %v2802
        %v2804 = vrot.slane %v2366, %v2803
        %v2805 = vsel %vm2470, %v2804, %v2800
        %v2806 = vlaneseq
        %v2807 = vshrl.u32 %v2806, 7
        %v2808 = vsub.s32 %v2472, %v2807
        %v2809 = vrot.slane %v2367, %v2808
        %v2810 = vsel %vm2477, %v2809, %v2805
        %v2811 = vlaneseq
        %v2812 = vshrl.u32 %v2811, 7
        %v2813 = vsub.s32 %v2479, %v2812
        %v2814 = vrot.slane %v2368, %v2813
        %v2815 = vsel %vm2484, %v2814, %v2810
        %v2816 = vlaneseq
        %v2817 = vshrl.u32 %v2816, 7
        %v2818 = vsub.s32 %v2486, %v2817
        %v2819 = vrot.slane %v2369, %v2818
        %v2820 = vsel %vm2491, %v2819, %v2815
        %v2821 = vlaneseq
        %v2822 = vshrl.u32 %v2821, 7
        %v2823 = vsub.s32 %v2493, %v2822
        %v2824 = vrot.slane %v2370, %v2823
        %v2825 = vsel %vm2498, %v2824, %v2820
        %v2826 = vlaneseq
        %v2827 = vshrl.u32 %v2826, 7
        %v2828 = vsub.s32 %v2500, %v2827
        %v2829 = vrot.slane %v2371, %v2828
        %v2830 = vsel %vm2505, %v2829, %v2825
        %v2831 = vlaneseq
        %v2832 = vshrl.u32 %v2831, 7
        %v2833 = vsub.s32 %v2507, %v2832
        %v2834 = vrot.slane %v2372, %v2833
        %v2835 = vsel %vm2512, %v2834, %v2830
        %v2836 = vlaneseq
        %v2837 = vshrl.u32 %v2836, 7
        %v2838 = vsub.s32 %v2514, %v2837
        %v2839 = vrot.slane %v2373, %v2838
        %v2840 = vsel %vm2519, %v2839, %v2835
        %v2841 = vlaneseq
        %v2842 = vshrl.u32 %v2841, 7
        %v2843 = vsub.s32 %v2521, %v2842
        %v2844 = vrot.slane %v2374, %v2843
        %v2845 = vsel %vm2526, %v2844, %v2840
        %v2846 = vlaneseq
        %v2847 = vshrl.u32 %v2846, 7
        %v2848 = vsub.s32 %v2528, %v2847
        %v2849 = vrot.slane %v2375, %v2848
        %v2850 = vsel %vm2533, %v2849, %v2845
        %v2851 = vlaneseq
        %v2852 = vshrl.u32 %v2851, 7
        %v2853 = vsub.s32 %v2425, %v2852
        %v2854 = vrot.slane %v2376, %v2853
        %v2855 = vlaneseq
        %v2856 = vshrl.u32 %v2855, 7
        %v2857 = vsub.s32 %v2430, %v2856
        %v2858 = vrot.slane %v2377, %v2857
        %v2859 = vsel %vm2435, %v2858, %v2854
        %v2860 = vlaneseq
        %v2861 = vshrl.u32 %v2860, 7
        %v2862 = vsub.s32 %v2437, %v2861
        %v2863 = vrot.slane %v2378, %v2862
        %v2864 = vsel %vm2442, %v2863, %v2859
        %v2865 = vlaneseq
        %v2866 = vshrl.u32 %v2865, 7
        %v2867 = vsub.s32 %v2444, %v2866
        %v2868 = vrot.slane %v2379, %v2867
        %v2869 = vsel %vm2449, %v2868, %v2864
        %v2870 = vlaneseq
        %v2871 = vshrl.u32 %v2870, 7
        %v2872 = vsub.s32 %v2451, %v2871
        %v2873 = vrot.slane %v2380, %v2872
        %v2874 = vsel %vm2456, %v2873, %v2869
        %v2875 = vlaneseq
        %v2876 = vshrl.u32 %v2875, 7
        %v2877 = vsub.s32 %v2458, %v2876
        %v2878 = vrot.slane %v2381, %v2877
        %v2879 = vsel %vm2463, %v2878, %v2874
        %v2880 = vlaneseq
        %v2881 = vshrl.u32 %v2880, 7
        %v2882 = vsub.s32 %v2465, %v2881
        %v2883 = vrot.slane %v2382, %v2882
        %v2884 = vsel %vm2470, %v2883, %v2879
        %v2885 = vlaneseq
        %v2886 = vshrl.u32 %v2885, 7
        %v2887 = vsub.s32 %v2472, %v2886
        %v2888 = vrot.slane %v2383, %v2887
        %v2889 = vsel %vm2477, %v2888, %v2884
        %v2890 = vlaneseq
        %v2891 = vshrl.u32 %v2890, 7
        %v2892 = vsub.s32 %v2479, %v2891
        %v2893 = vrot.slane %v2384, %v2892
        %v2894 = vsel %vm2484, %v2893, %v2889
        %v2895 = vlaneseq
        %v2896 = vshrl.u32 %v2895, 7
        %v2897 = vsub.s32 %v2486, %v2896
        %v2898 = vrot.slane %v2385, %v2897
        %v2899 = vsel %vm2491, %v2898, %v2894
        %v2900 = vlaneseq
        %v2901 = vshrl.u32 %v2900, 7
        %v2902 = vsub.s32 %v2493, %v2901
        %v2903 = vrot.slane %v2386, %v2902
        %v2904 = vsel %vm2498, %v2903, %v2899
        %v2905 = vlaneseq
        %v2906 = vshrl.u32 %v2905, 7
        %v2907 = vsub.s32 %v2500, %v2906
        %v2908 = vrot.slane %v2387, %v2907
        %v2909 = vsel %vm2505, %v2908, %v2904
        %v2910 = vlaneseq
        %v2911 = vshrl.u32 %v2910, 7
        %v2912 = vsub.s32 %v2507, %v2911
        %v2913 = vrot.slane %v2388, %v2912
        %v2914 = vsel %vm2512, %v2913, %v2909
        %v2915 = vlaneseq
        %v2916 = vshrl.u32 %v2915, 7
        %v2917 = vsub.s32 %v2514, %v2916
        %v2918 = vrot.slane %v2389, %v2917
        %v2919 = vsel %vm2519, %v2918, %v2914
        %v2920 = vlaneseq
        %v2921 = vshrl.u32 %v2920, 7
        %v2922 = vsub.s32 %v2521, %v2921
        %v2923 = vrot.slane %v2390, %v2922
        %v2924 = vsel %vm2526, %v2923, %v2919
        %v2925 = vlaneseq
        %v2926 = vshrl.u32 %v2925, 7
        %v2927 = vsub.s32 %v2528, %v2926
        %v2928 = vrot.slane %v2391, %v2927
        %v2929 = vsel %vm2533, %v2928, %v2924
        %v2930 = vlaneseq
        %v2931 = vshrl.u32 %v2930, 7
        %v2932 = vsub.s32 %v2425, %v2931
        %v2933 = vrot.slane %v2392, %v2932
        %v2934 = vlaneseq
        %v2935 = vshrl.u32 %v2934, 7
        %v2936 = vsub.s32 %v2430, %v2935
        %v2937 = vrot.slane %v2393, %v2936
        %v2938 = vsel %vm2435, %v2937, %v2933
        %v2939 = vlaneseq
        %v2940 = vshrl.u32 %v2939, 7
        %v2941 = vsub.s32 %v2437, %v2940
        %v2942 = vrot.slane %v2394, %v2941
        %v2943 = vsel %vm2442, %v2942, %v2938
        %v2944 = vlaneseq
        %v2945 = vshrl.u32 %v2944, 7
        %v2946 = vsub.s32 %v2444, %v2945
        %v2947 = vrot.slane %v2395, %v2946
        %v2948 = vsel %vm2449, %v2947, %v2943
        %v2949 = vlaneseq
        %v2950 = vshrl.u32 %v2949, 7
        %v2951 = vsub.s32 %v2451, %v2950
        %v2952 = vrot.slane %v2396, %v2951
        %v2953 = vsel %vm2456, %v2952, %v2948
        %v2954 = vlaneseq
        %v2955 = vshrl.u32 %v2954, 7
        %v2956 = vsub.s32 %v2458, %v2955
        %v2957 = vrot.slane %v2397, %v2956
        %v2958 = vsel %vm2463, %v2957, %v2953
        %v2959 = vlaneseq
        %v2960 = vshrl.u32 %v2959, 7
        %v2961 = vsub.s32 %v2465, %v2960
        %v2962 = vrot.slane %v2398, %v2961
        %v2963 = vsel %vm2470, %v2962, %v2958
        %v2964 = vlaneseq
        %v2965 = vshrl.u32 %v2964, 7
        %v2966 = vsub.s32 %v2472, %v2965
        %v2967 = vrot.slane %v2399, %v2966
        %v2968 = vsel %vm2477, %v2967, %v2963
        %v2969 = vlaneseq
        %v2970 = vshrl.u32 %v2969, 7
        %v2971 = vsub.s32 %v2479, %v2970
        %v2972 = vrot.slane %v2400, %v2971
        %v2973 = vsel %vm2484, %v2972, %v2968
        %v2974 = vlaneseq
        %v2975 = vshrl.u32 %v2974, 7
        %v2976 = vsub.s32 %v2486, %v2975
        %v2977 = vrot.slane %v2401, %v2976
        %v2978 = vsel %vm2491, %v2977, %v2973
        %v2979 = vlaneseq
        %v2980 = vshrl.u32 %v2979, 7
        %v2981 = vsub.s32 %v2493, %v2980
        %v2982 = vrot.slane %v2402, %v2981
        %v2983 = vsel %vm2498, %v2982, %v2978
        %v2984 = vlaneseq
        %v2985 = vshrl.u32 %v2984, 7
        %v2986 = vsub.s32 %v2500, %v2985
        %v2987 = vrot.slane %v2403, %v2986
        %v2988 = vsel %vm2505, %v2987, %v2983
        %v2989 = vlaneseq
        %v2990 = vshrl.u32 %v2989, 7
        %v2991 = vsub.s32 %v2507, %v2990
        %v2992 = vrot.slane %v2404, %v2991
        %v2993 = vsel %vm2512, %v2992, %v2988
        %v2994 = vlaneseq
        %v2995 = vshrl.u32 %v2994, 7
        %v2996 = vsub.s32 %v2514, %v2995
        %v2997 = vrot.slane %v2405, %v2996
        %v2998 = vsel %vm2519, %v2997, %v2993
        %v2999 = vlaneseq
        %v3000 = vshrl.u32 %v2999, 7
        %v3001 = vsub.s32 %v2521, %v3000
        %v3002 = vrot.slane %v2406, %v3001
        %v3003 = vsel %vm2526, %v3002, %v2998
        %v3004 = vlaneseq
        %v3005 = vshrl.u32 %v3004, 7
        %v3006 = vsub.s32 %v2528, %v3005
        %v3007 = vrot.slane %v2407, %v3006
        %v3008 = vsel %vm2533, %v3007, %v3003
        %v3009 = vlaneseq
        %v3010 = vshrl.u32 %v3009, 7
        %v3011 = vsub.s32 %v2425, %v3010
        %v3012 = vrot.slane %v2408, %v3011
        %v3013 = vlaneseq
        %v3014 = vshrl.u32 %v3013, 7
        %v3015 = vsub.s32 %v2430, %v3014
        %v3016 = vrot.slane %v2409, %v3015
        %v3017 = vsel %vm2435, %v3016, %v3012
        %v3018 = vlaneseq
        %v3019 = vshrl.u32 %v3018, 7
        %v3020 = vsub.s32 %v2437, %v3019
        %v3021 = vrot.slane %v2410, %v3020
        %v3022 = vsel %vm2442, %v3021, %v3017
        %v3023 = vlaneseq
        %v3024 = vshrl.u32 %v3023, 7
        %v3025 = vsub.s32 %v2444, %v3024
        %v3026 = vrot.slane %v2411, %v3025
        %v3027 = vsel %vm2449, %v3026, %v3022
        %v3028 = vlaneseq
        %v3029 = vshrl.u32 %v3028, 7
        %v3030 = vsub.s32 %v2451, %v3029
        %v3031 = vrot.slane %v2412, %v3030
        %v3032 = vsel %vm2456, %v3031, %v3027
        %v3033 = vlaneseq
        %v3034 = vshrl.u32 %v3033, 7
        %v3035 = vsub.s32 %v2458, %v3034
        %v3036 = vrot.slane %v2413, %v3035
        %v3037 = vsel %vm2463, %v3036, %v3032
        %v3038 = vlaneseq
        %v3039 = vshrl.u32 %v3038, 7
        %v3040 = vsub.s32 %v2465, %v3039
        %v3041 = vrot.slane %v2414, %v3040
        %v3042 = vsel %vm2470, %v3041, %v3037
        %v3043 = vlaneseq
        %v3044 = vshrl.u32 %v3043, 7
        %v3045 = vsub.s32 %v2472, %v3044
        %v3046 = vrot.slane %v2415, %v3045
        %v3047 = vsel %vm2477, %v3046, %v3042
        %v3048 = vlaneseq
        %v3049 = vshrl.u32 %v3048, 7
        %v3050 = vsub.s32 %v2479, %v3049
        %v3051 = vrot.slane %v2416, %v3050
        %v3052 = vsel %vm2484, %v3051, %v3047
        %v3053 = vlaneseq
        %v3054 = vshrl.u32 %v3053, 7
        %v3055 = vsub.s32 %v2486, %v3054
        %v3056 = vrot.slane %v2417, %v3055
        %v3057 = vsel %vm2491, %v3056, %v3052
        %v3058 = vlaneseq
        %v3059 = vshrl.u32 %v3058, 7
        %v3060 = vsub.s32 %v2493, %v3059
        %v3061 = vrot.slane %v2418, %v3060
        %v3062 = vsel %vm2498, %v3061, %v3057
        %v3063 = vlaneseq
        %v3064 = vshrl.u32 %v3063, 7
        %v3065 = vsub.s32 %v2500, %v3064
        %v3066 = vrot.slane %v2419, %v3065
        %v3067 = vsel %vm2505, %v3066, %v3062
        %v3068 = vlaneseq
        %v3069 = vshrl.u32 %v3068, 7
        %v3070 = vsub.s32 %v2507, %v3069
        %v3071 = vrot.slane %v2420, %v3070
        %v3072 = vsel %vm2512, %v3071, %v3067
        %v3073 = vlaneseq
        %v3074 = vshrl.u32 %v3073, 7
        %v3075 = vsub.s32 %v2514, %v3074
        %v3076 = vrot.slane %v2421, %v3075
        %v3077 = vsel %vm2519, %v3076, %v3072
        %v3078 = vlaneseq
        %v3079 = vshrl.u32 %v3078, 7
        %v3080 = vsub.s32 %v2521, %v3079
        %v3081 = vrot.slane %v2422, %v3080
        %v3082 = vsel %vm2526, %v3081, %v3077
        %v3083 = vlaneseq
        %v3084 = vshrl.u32 %v3083, 7
        %v3085 = vsub.s32 %v2528, %v3084
        %v3086 = vrot.slane %v2423, %v3085
        %v3087 = vsel %vm2533, %v3086, %v3082
        %vm3088 = vcmask 1041409
        %v3089 = vsel %vm3088, %v2850, %v2534
        %v3090 = vsel %vm3088, %v2929, %v2613
        %v3091 = vsel %vm3088, %v3008, %v2692
        %v3092 = vsel %vm3088, %v3087, %v2771
        %v3093 = vpack.c.b16 %v3089, %v3089
        %v3094 = vpack.c.b16 %v3090, %v3090
        %v3095 = vpack.c.b16 %v3091, %v3091
        %v3096 = vpack.c.b16 %v3092, %v3092
        %v3229 = vunpack.c.l.b16 %v2082
        %v3230 = vunpack.c.h.b16 %v2082
        %v3231 = vunpack.c.l.b16 %v2083
        %v3232 = vunpack.c.h.b16 %v2083
        %v3233 = vunpack.c.l.b16 %v2084
        %v3234 = vunpack.c.h.b16 %v2084
        %v3235 = vunpack.c.l.b16 %v2085
        %v3236 = vunpack.c.h.b16 %v2085
        %v3237 = vunpack.c.l.b16 %v2086
        %v3238 = vunpack.c.h.b16 %v2086
        %v3239 = vunpack.c.l.b16 %v2087
        %v3240 = vunpack.c.h.b16 %v2087
        %v3241 = vunpack.c.l.b16 %v2088
        %v3242 = vunpack.c.h.b16 %v2088
        %v3243 = vunpack.c.l.b16 %v2089
        %v3244 = vunpack.c.h.b16 %v2089
        %v3245 = vunpack.c.l.b16 %v2090
        %v3246 = vunpack.c.h.b16 %v2090
        %v3247 = vunpack.c.l.b16 %v2091
        %v3248 = vunpack.c.h.b16 %v2091
        %v3249 = vunpack.c.l.b16 %v2092
        %v3250 = vunpack.c.h.b16 %v2092
        %v3251 = vunpack.c.l.b16 %v2093
        %v3252 = vunpack.c.h.b16 %v2093
        %v3253 = vunpack.c.l.b16 %v2094
        %v3254 = vunpack.c.h.b16 %v2094
        %v3255 = vunpack.c.l.b16 %v2095
        %v3256 = vunpack.c.h.b16 %v2095
        %v3257 = vunpack.c.l.b16 %v2096
        %v3258 = vunpack.c.h.b16 %v2096
        %v3259 = vunpack.c.l.b16 %v2097
        %v3260 = vunpack.c.h.b16 %v2097
        %v3261 = vunpack.c.l.b16 %v2098
        %v3262 = vunpack.c.h.b16 %v2098
        %v3263 = vunpack.c.l.b16 %v2099
        %v3264 = vunpack.c.h.b16 %v2099
        %v3265 = vunpack.c.l.b16 %v2100
        %v3266 = vunpack.c.h.b16 %v2100
        %v3267 = vunpack.c.l.b16 %v2101
        %v3268 = vunpack.c.h.b16 %v2101
        %v3269 = vunpack.c.l.b16 %v2102
        %v3270 = vunpack.c.h.b16 %v2102
        %v3271 = vunpack.c.l.b16 %v2103
        %v3272 = vunpack.c.h.b16 %v2103
        %v3273 = vunpack.c.l.b16 %v2104
        %v3274 = vunpack.c.h.b16 %v2104
        %v3275 = vunpack.c.l.b16 %v2105
        %v3276 = vunpack.c.h.b16 %v2105
        %v3277 = vunpack.c.l.b16 %v2106
        %v3278 = vunpack.c.h.b16 %v2106
        %v3279 = vunpack.c.l.b16 %v2107
        %v3280 = vunpack.c.h.b16 %v2107
        %v3281 = vunpack.c.l.b16 %v2108
        %v3282 = vunpack.c.h.b16 %v2108
        %v3283 = vunpack.c.l.b16 %v2109
        %v3284 = vunpack.c.h.b16 %v2109
        %v3285 = vunpack.c.l.b16 %v2110
        %v3286 = vunpack.c.h.b16 %v2110
        %v3287 = vunpack.c.l.b16 %v2111
        %v3288 = vunpack.c.h.b16 %v2111
        %v3289 = vunpack.c.l.b16 %v2112
        %v3290 = vunpack.c.h.b16 %v2112
        %v3291 = vunpack.c.l.b16 %v2113
        %v3292 = vunpack.c.h.b16 %v2113
        %v3293 = vunpack.c.l.b16 %v2114
        %v3294 = vunpack.c.h.b16 %v2114
        %v3295 = vunpack.c.l.b16 %v2115
        %v3296 = vunpack.c.h.b16 %v2115
        %v3297 = vunpack.c.l.b16 %v2116
        %v3298 = vunpack.c.h.b16 %v2116
        %v3299 = vunpack.c.l.b16 %v2117
        %v3300 = vunpack.c.h.b16 %v2117
        %v3301 = vunpack.c.l.b16 %v2118
        %v3302 = vunpack.c.h.b16 %v2118
        %v3303 = vunpack.c.l.b16 %v2119
        %v3304 = vunpack.c.h.b16 %v2119
        %v3305 = vunpack.c.l.b16 %v2120
        %v3306 = vunpack.c.h.b16 %v2120
        %v3307 = vunpack.c.l.b16 %v2121
        %v3308 = vunpack.c.h.b16 %v2121
        %v3309 = vunpack.c.l.b16 %v2122
        %v3310 = vunpack.c.h.b16 %v2122
        %v3311 = vunpack.c.l.b16 %v2123
        %v3312 = vunpack.c.h.b16 %v2123
        %v3313 = vunpack.c.l.b16 %v2124
        %v3314 = vunpack.c.h.b16 %v2124
        %v3315 = vunpack.c.l.b16 %v2125
        %v3316 = vunpack.c.h.b16 %v2125
        %v3317 = vunpack.c.l.b16 %v2126
        %v3318 = vunpack.c.h.b16 %v2126
        %v3319 = vunpack.c.l.b16 %v2127
        %v3320 = vunpack.c.h.b16 %v2127
        %v3321 = vunpack.c.l.b16 %v2128
        %v3322 = vunpack.c.h.b16 %v2128
        %v3323 = vunpack.c.l.b16 %v2129
        %v3324 = vunpack.c.h.b16 %v2129
        %v3325 = vunpack.c.l.b16 %v2130
        %v3326 = vunpack.c.h.b16 %v2130
        %v3327 = vunpack.c.l.b16 %v2131
        %v3328 = vunpack.c.h.b16 %v2131
        %v3329 = vunpack.c.l.b16 %v2132
        %v3330 = vunpack.c.h.b16 %v2132
        %v3331 = vunpack.c.l.b16 %v2133
        %v3332 = vunpack.c.h.b16 %v2133
        %v3333 = vunpack.c.l.b16 %v2134
        %v3334 = vunpack.c.h.b16 %v2134
        %v3335 = vunpack.c.l.b16 %v2135
        %v3336 = vunpack.c.h.b16 %v2135
        %v3337 = vunpack.c.l.b16 %v2136
        %v3338 = vunpack.c.h.b16 %v2136
        %v3339 = vunpack.c.l.b16 %v2137
        %v3340 = vunpack.c.h.b16 %v2137
        %v3341 = vunpack.c.l.b16 %v2138
        %v3342 = vunpack.c.h.b16 %v2138
        %v3343 = vunpack.c.l.b16 %v2139
        %v3344 = vunpack.c.h.b16 %v2139
        %v3345 = vunpack.c.l.b16 %v2140
        %v3346 = vunpack.c.h.b16 %v2140
        %v3347 = vunpack.c.l.b16 %v2141
        %v3348 = vunpack.c.h.b16 %v2141
        %v3349 = vunpack.c.l.b16 %v2142
        %v3350 = vunpack.c.h.b16 %v2142
        %v3351 = vunpack.c.l.b16 %v2143
        %v3352 = vunpack.c.h.b16 %v2143
        %v3353 = vunpack.c.l.b16 %v2144
        %v3354 = vunpack.c.h.b16 %v2144
        %v3355 = vunpack.c.l.b16 %v2145
        %v3356 = vunpack.c.h.b16 %v2145
        %v3357 = vunpack.c.l.b16 %v2146
        %v3358 = vunpack.c.h.b16 %v2146
        %v3359 = vunpack.c.l.b16 %v2147
        %v3360 = vunpack.c.h.b16 %v2147
        %v3361 = vunpack.c.l.b16 %v2148
        %v3362 = vunpack.c.h.b16 %v2148
        %v3363 = vunpack.c.l.b16 %v2149
        %v3364 = vunpack.c.h.b16 %v2149
        %v3365 = vunpack.c.l.b16 %v2150
        %v3366 = vunpack.c.h.b16 %v2150
        %v3367 = vunpack.c.l.b16 %v2151
        %v3368 = vunpack.c.h.b16 %v2151
        %v3369 = vunpack.c.l.b16 %v2152
        %v3370 = vunpack.c.h.b16 %v2152
        %v3371 = vunpack.c.l.b16 %v2153
        %v3372 = vunpack.c.h.b16 %v2153
        %v3373 = vunpack.c.l.b16 %v2154
        %v3374 = vunpack.c.h.b16 %v2154
        %v3375 = vunpack.c.l.b16 %v2155
        %v3376 = vunpack.c.h.b16 %v2155
        %v3377 = vunpack.c.l.b16 %v2156
        %v3378 = vunpack.c.h.b16 %v2156
        %v3379 = vunpack.c.l.b16 %v2157
        %v3380 = vunpack.c.h.b16 %v2157
        %v3381 = vunpack.c.l.b16 %v2158
        %v3382 = vunpack.c.h.b16 %v2158
        %v3383 = vunpack.c.l.b16 %v2159
        %v3384 = vunpack.c.h.b16 %v2159
        %v3385 = vunpack.c.l.b16 %v2160
        %v3386 = vunpack.c.h.b16 %v2160
        %v3387 = vunpack.c.l.b16 %v2161
        %v3388 = vunpack.c.h.b16 %v2161
        %v3389 = vunpack.c.l.b16 %v2162
        %v3390 = vunpack.c.h.b16 %v2162
        %v3391 = vunpack.c.l.b16 %v2163
        %v3392 = vunpack.c.h.b16 %v2163
        %v3393 = vunpack.c.l.b16 %v2164
        %v3394 = vunpack.c.h.b16 %v2164
        %v3395 = vunpack.c.l.b16 %v2165
        %v3396 = vunpack.c.h.b16 %v2165
        %v3397 = vunpack.c.l.b16 %v2166
        %v3398 = vunpack.c.h.b16 %v2166
        %v3399 = vunpack.c.l.b16 %v2167
        %v3400 = vunpack.c.h.b16 %v2167
        %v3401 = vunpack.c.l.b16 %v2168
        %v3402 = vunpack.c.h.b16 %v2168
        %v3403 = vunpack.c.l.b16 %v2169
        %v3404 = vunpack.c.h.b16 %v2169
        %v3405 = vunpack.c.l.b16 %v2170
        %v3406 = vunpack.c.h.b16 %v2170
        %v3407 = vunpack.c.l.b16 %v2171
        %v3408 = vunpack.c.h.b16 %v2171
        %v3409 = vunpack.c.l.b16 %v2172
        %v3410 = vunpack.c.h.b16 %v2172
        %v3411 = vunpack.c.l.b16 %v2173
        %v3412 = vunpack.c.h.b16 %v2173
        %v3413 = vunpack.c.l.b16 %v2174
        %v3414 = vunpack.c.h.b16 %v2174
        %v3415 = vunpack.c.l.b16 %v2175
        %v3416 = vunpack.c.h.b16 %v2175
        %v3417 = vunpack.c.l.b16 %v2176
        %v3418 = vunpack.c.h.b16 %v2176
        %v3419 = vunpack.c.l.b16 %v2177
        %v3420 = vunpack.c.h.b16 %v2177
        %v3421 = vunpack.c.l.b16 %v2178
        %v3422 = vunpack.c.h.b16 %v2178
        %v3423 = vunpack.c.l.b16 %v2179
        %v3424 = vunpack.c.h.b16 %v2179
        %v3425 = vunpack.c.l.b16 %v2180
        %v3426 = vunpack.c.h.b16 %v2180
        %v3427 = vunpack.c.l.b16 %v2181
        %v3428 = vunpack.c.h.b16 %v2181
        %v3429 = vunpack.c.l.b16 %v2182
        %v3430 = vunpack.c.h.b16 %v2182
        %v3431 = vunpack.c.l.b16 %v2183
        %v3432 = vunpack.c.h.b16 %v2183
        %v3433 = vunpack.c.l.b16 %v2184
        %v3434 = vunpack.c.h.b16 %v2184
        %v3435 = vunpack.c.l.b16 %v2185
        %v3436 = vunpack.c.h.b16 %v2185
        %v3437 = vunpack.c.l.b16 %v2186
        %v3438 = vunpack.c.h.b16 %v2186
        %v3439 = vunpack.c.l.b16 %v2187
        %v3440 = vunpack.c.h.b16 %v2187
        %v3441 = vunpack.c.l.b16 %v2188
        %v3442 = vunpack.c.h.b16 %v2188
        %v3443 = vunpack.c.l.b16 %v2189
        %v3444 = vunpack.c.h.b16 %v2189
        %v3445 = vunpack.c.l.b16 %v2190
        %v3446 = vunpack.c.h.b16 %v2190
        %v3447 = vunpack.c.l.b16 %v2191
        %v3448 = vunpack.c.h.b16 %v2191
        %v3449 = vunpack.c.l.b16 %v2192
        %v3450 = vunpack.c.h.b16 %v2192
        %v3451 = vunpack.c.l.b16 %v2193
        %v3452 = vunpack.c.h.b16 %v2193
        %v3453 = vunpack.c.l.b16 %v2194
        %v3454 = vunpack.c.h.b16 %v2194
        %v3455 = vunpack.c.l.b16 %v2195
        %v3456 = vunpack.c.h.b16 %v2195
        %v3457 = vunpack.c.l.b16 %v2196
        %v3458 = vunpack.c.h.b16 %v2196
        %v3459 = vunpack.c.l.b16 %v2197
        %v3460 = vunpack.c.h.b16 %v2197
        %v3461 = vunpack.c.l.b16 %v2198
        %v3462 = vunpack.c.h.b16 %v2198
        %v3463 = vunpack.c.l.b16 %v2199
        %v3464 = vunpack.c.h.b16 %v2199
        %v3465 = vunpack.c.l.b16 %v2200
        %v3466 = vunpack.c.h.b16 %v2200
        %v3467 = vunpack.c.l.b16 %v2201
        %v3468 = vunpack.c.h.b16 %v2201
        %v3469 = vunpack.c.l.b16 %v2202
        %v3470 = vunpack.c.h.b16 %v2202
        %v3471 = vunpack.c.l.b16 %v2203
        %v3472 = vunpack.c.h.b16 %v2203
        %v3473 = vunpack.c.l.b16 %v2204
        %v3474 = vunpack.c.h.b16 %v2204
        %v3475 = vunpack.c.l.b16 %v2205
        %v3476 = vunpack.c.h.b16 %v2205
        %v3477 = vunpack.c.l.b16 %v2206
        %v3478 = vunpack.c.h.b16 %v2206
        %v3479 = vunpack.c.l.b16 %v2207
        %v3480 = vunpack.c.h.b16 %v2207
        %v3481 = vunpack.c.l.b16 %v2208
        %v3482 = vunpack.c.h.b16 %v2208
        %v3483 = vunpack.c.l.b16 %v2209
        %v3484 = vunpack.c.h.b16 %v2209
        %v3485 = vpack.c.b16 %v3233, %v3229
        %v3486 = vpack.c.b16 %v3234, %v3230
        %v3487 = vpack.c.b16 %v3235, %v3231
        %v3488 = vpack.c.b16 %v3236, %v3232
        %v3489 = vpack.c.b16 %v3241, %v3237
        %v3490 = vpack.c.b16 %v3242, %v3238
        %v3491 = vpack.c.b16 %v3243, %v3239
        %v3492 = vpack.c.b16 %v3244, %v3240
        %v3493 = vpack.c.b16 %v3249, %v3245
        %v3494 = vpack.c.b16 %v3250, %v3246
        %v3495 = vpack.c.b16 %v3251, %v3247
        %v3496 = vpack.c.b16 %v3252, %v3248
        %v3497 = vpack.c.b16 %v3257, %v3253
        %v3498 = vpack.c.b16 %v3258, %v3254
        %v3499 = vpack.c.b16 %v3259, %v3255
        %v3500 = vpack.c.b16 %v3260, %v3256
        %v3501 = vpack.c.b16 %v3265, %v3261
        %v3502 = vpack.c.b16 %v3266, %v3262
        %v3503 = vpack.c.b16 %v3267, %v3263
        %v3504 = vpack.c.b16 %v3268, %v3264
        %v3505 = vpack.c.b16 %v3273, %v3269
        %v3506 = vpack.c.b16 %v3274, %v3270
        %v3507 = vpack.c.b16 %v3275, %v3271
        %v3508 = vpack.c.b16 %v3276, %v3272
        %v3509 = vpack.c.b16 %v3281, %v3277
        %v3510 = vpack.c.b16 %v3282, %v3278
        %v3511 = vpack.c.b16 %v3283, %v3279
        %v3512 = vpack.c.b16 %v3284, %v3280
        %v3513 = vpack.c.b16 %v3289, %v3285
        %v3514 = vpack.c.b16 %v3290, %v3286
        %v3515 = vpack.c.b16 %v3291, %v3287
        %v3516 = vpack.c.b16 %v3292, %v3288
        %v3517 = vpack.c.b16 %v3297, %v3293
        %v3518 = vpack.c.b16 %v3298, %v3294
        %v3519 = vpack.c.b16 %v3299, %v3295
        %v3520 = vpack.c.b16 %v3300, %v3296
        %v3521 = vpack.c.b16 %v3305, %v3301
        %v3522 = vpack.c.b16 %v3306, %v3302
        %v3523 = vpack.c.b16 %v3307, %v3303
        %v3524 = vpack.c.b16 %v3308, %v3304
        %v3525 = vpack.c.b16 %v3313, %v3309
        %v3526 = vpack.c.b16 %v3314, %v3310
        %v3527 = vpack.c.b16 %v3315, %v3311
        %v3528 = vpack.c.b16 %v3316, %v3312
        %v3529 = vpack.c.b16 %v3321, %v3317
        %v3530 = vpack.c.b16 %v3322, %v3318
        %v3531 = vpack.c.b16 %v3323, %v3319
        %v3532 = vpack.c.b16 %v3324, %v3320
        %v3533 = vpack.c.b16 %v3329, %v3325
        %v3534 = vpack.c.b16 %v3330, %v3326
        %v3535 = vpack.c.b16 %v3331, %v3327
        %v3536 = vpack.c.b16 %v3332, %v3328
        %v3537 = vpack.c.b16 %v3337, %v3333
        %v3538 = vpack.c.b16 %v3338, %v3334
        %v3539 = vpack.c.b16 %v3339, %v3335
        %v3540 = vpack.c.b16 %v3340, %v3336
        %v3541 = vpack.c.b16 %v3345, %v3341
        %v3542 = vpack.c.b16 %v3346, %v3342
        %v3543 = vpack.c.b16 %v3347, %v3343
        %v3544 = vpack.c.b16 %v3348, %v3344
        %v3545 = vpack.c.b16 %v3353, %v3349
        %v3546 = vpack.c.b16 %v3354, %v3350
        %v3547 = vpack.c.b16 %v3355, %v3351
        %v3548 = vpack.c.b16 %v3356, %v3352
        %v3549 = vpack.c.b16 %v3361, %v3357
        %v3550 = vpack.c.b16 %v3362, %v3358
        %v3551 = vpack.c.b16 %v3363, %v3359
        %v3552 = vpack.c.b16 %v3364, %v3360
        %v3553 = vpack.c.b16 %v3369, %v3365
        %v3554 = vpack.c.b16 %v3370, %v3366
        %v3555 = vpack.c.b16 %v3371, %v3367
        %v3556 = vpack.c.b16 %v3372, %v3368
        %v3557 = vpack.c.b16 %v3377, %v3373
        %v3558 = vpack.c.b16 %v3378, %v3374
        %v3559 = vpack.c.b16 %v3379, %v3375
        %v3560 = vpack.c.b16 %v3380, %v3376
        %v3561 = vpack.c.b16 %v3385, %v3381
        %v3562 = vpack.c.b16 %v3386, %v3382
        %v3563 = vpack.c.b16 %v3387, %v3383
        %v3564 = vpack.c.b16 %v3388, %v3384
        %v3565 = vpack.c.b16 %v3393, %v3389
        %v3566 = vpack.c.b16 %v3394, %v3390
        %v3567 = vpack.c.b16 %v3395, %v3391
        %v3568 = vpack.c.b16 %v3396, %v3392
        %v3569 = vpack.c.b16 %v3401, %v3397
        %v3570 = vpack.c.b16 %v3402, %v3398
        %v3571 = vpack.c.b16 %v3403, %v3399
        %v3572 = vpack.c.b16 %v3404, %v3400
        %v3573 = vpack.c.b16 %v3409, %v3405
        %v3574 = vpack.c.b16 %v3410, %v3406
        %v3575 = vpack.c.b16 %v3411, %v3407
        %v3576 = vpack.c.b16 %v3412, %v3408
        %v3577 = vpack.c.b16 %v3417, %v3413
        %v3578 = vpack.c.b16 %v3418, %v3414
        %v3579 = vpack.c.b16 %v3419, %v3415
        %v3580 = vpack.c.b16 %v3420, %v3416
        %v3581 = vpack.c.b16 %v3425, %v3421
        %v3582 = vpack.c.b16 %v3426, %v3422
        %v3583 = vpack.c.b16 %v3427, %v3423
        %v3584 = vpack.c.b16 %v3428, %v3424
        %v3585 = vpack.c.b16 %v3433, %v3429
        %v3586 = vpack.c.b16 %v3434, %v3430
        %v3587 = vpack.c.b16 %v3435, %v3431
        %v3588 = vpack.c.b16 %v3436, %v3432
        %v3589 = vpack.c.b16 %v3441, %v3437
        %v3590 = vpack.c.b16 %v3442, %v3438
        %v3591 = vpack.c.b16 %v3443, %v3439
        %v3592 = vpack.c.b16 %v3444, %v3440
        %v3593 = vpack.c.b16 %v3449, %v3445
        %v3594 = vpack.c.b16 %v3450, %v3446
        %v3595 = vpack.c.b16 %v3451, %v3447
        %v3596 = vpack.c.b16 %v3452, %v3448
        %v3597 = vpack.c.b16 %v3457, %v3453
        %v3598 = vpack.c.b16 %v3458, %v3454
        %v3599 = vpack.c.b16 %v3459, %v3455
        %v3600 = vpack.c.b16 %v3460, %v3456
        %v3601 = vpack.c.b16 %v3465, %v3461
        %v3602 = vpack.c.b16 %v3466, %v3462
        %v3603 = vpack.c.b16 %v3467, %v3463
        %v3604 = vpack.c.b16 %v3468, %v3464
        %v3605 = vpack.c.b16 %v3473, %v3469
        %v3606 = vpack.c.b16 %v3474, %v3470
        %v3607 = vpack.c.b16 %v3475, %v3471
        %v3608 = vpack.c.b16 %v3476, %v3472
        %v3609 = vpack.c.b16 %v3481, %v3477
        %v3610 = vpack.c.b16 %v3482, %v3478
        %v3611 = vpack.c.b16 %v3483, %v3479
        %v3612 = vpack.c.b16 %v3484, %v3480
        %3741 = vmatprep.subr.bf16.mxu0 %v3486
        %3742 = vmatpush1.bf16.msra.mxu0 %v3485
        %3743 = vmatprep.subr.bf16.mxu0 %v3490
        %3744 = vmatpush1.bf16.msra.mxu0 %v3489
        %3745 = vmatprep.subr.bf16.mxu0 %v3494
        %3746 = vmatpush1.bf16.msra.mxu0 %v3493
        %3747 = vmatprep.subr.bf16.mxu0 %v3498
        %3748 = vmatpush1.bf16.msra.mxu0 %v3497
        %3749 = vmatprep.subr.bf16.mxu0 %v3502
        %3750 = vmatpush1.bf16.msra.mxu0 %v3501
        %3751 = vmatprep.subr.bf16.mxu0 %v3506
        %3752 = vmatpush1.bf16.msra.mxu0 %v3505
        %3753 = vmatprep.subr.bf16.mxu0 %v3510
        %3754 = vmatpush1.bf16.msra.mxu0 %v3509
        %3755 = vmatprep.subr.bf16.mxu0 %v3514
        %3756 = vmatpush1.bf16.msra.mxu0 %v3513
        %3757 = vmatprep.subr.bf16.mxu0 %v3518
        %3758 = vmatpush1.bf16.msra.mxu0 %v3517
        %3759 = vmatprep.subr.bf16.mxu0 %v3522
        %3760 = vmatpush1.bf16.msra.mxu0 %v3521
        %3761 = vmatprep.subr.bf16.mxu0 %v3526
        %3762 = vmatpush1.bf16.msra.mxu0 %v3525
        %3763 = vmatprep.subr.bf16.mxu0 %v3530
        %3764 = vmatpush1.bf16.msra.mxu0 %v3529
        %3765 = vmatprep.subr.bf16.mxu0 %v3534
        %3766 = vmatpush1.bf16.msra.mxu0 %v3533
        %3767 = vmatprep.subr.bf16.mxu0 %v3538
        %3768 = vmatpush1.bf16.msra.mxu0 %v3537
        %3769 = vmatprep.subr.bf16.mxu0 %v3542
        %3770 = vmatpush1.bf16.msra.mxu0 %v3541
        %3771 = vmatprep.subr.bf16.mxu0 %v3546
        %3772 = vmatpush1.bf16.msra.mxu0 %v3545
        %3773 = vmatprep.mubr.bf16.mxu0 %v3094
        %3774 = vmatmul.mubr.bf16.gmra.mrb[0].mxu0 %v3093
        %v3775 = vpop.f32.mrb[0].mxu0
        %v3776 = vadd.f32 %v2215, %v3775
        %v3777 = vpop.f32.mrb[0].mxu0
        %v3778 = vadd.f32 %v2219, %v3777
        %v3779 = vpop.f32.mrb[0].mxu0
        %v3780 = vpop.f32.mrb[0].mxu0
        %3781 = vdwg.mxu0
        %3782 = vmatprep.subr.bf16.mxu0 %v3550
        %3783 = vmatpush1.bf16.msra.mxu0 %v3549
        %3784 = vmatprep.subr.bf16.mxu0 %v3554
        %3785 = vmatpush1.bf16.msra.mxu0 %v3553
        %3786 = vmatprep.subr.bf16.mxu0 %v3558
        %3787 = vmatpush1.bf16.msra.mxu0 %v3557
        %3788 = vmatprep.subr.bf16.mxu0 %v3562
        %3789 = vmatpush1.bf16.msra.mxu0 %v3561
        %3790 = vmatprep.subr.bf16.mxu0 %v3566
        %3791 = vmatpush1.bf16.msra.mxu0 %v3565
        %3792 = vmatprep.subr.bf16.mxu0 %v3570
        %3793 = vmatpush1.bf16.msra.mxu0 %v3569
        %3794 = vmatprep.subr.bf16.mxu0 %v3574
        %3795 = vmatpush1.bf16.msra.mxu0 %v3573
        %3796 = vmatprep.subr.bf16.mxu0 %v3578
        %3797 = vmatpush1.bf16.msra.mxu0 %v3577
        %3798 = vmatprep.subr.bf16.mxu0 %v3582
        %3799 = vmatpush1.bf16.msra.mxu0 %v3581
        %3800 = vmatprep.subr.bf16.mxu0 %v3586
        %3801 = vmatpush1.bf16.msra.mxu0 %v3585
        %3802 = vmatprep.subr.bf16.mxu0 %v3590
        %3803 = vmatpush1.bf16.msra.mxu0 %v3589
        %3804 = vmatprep.subr.bf16.mxu0 %v3594
        %3805 = vmatpush1.bf16.msra.mxu0 %v3593
        %3806 = vmatprep.subr.bf16.mxu0 %v3598
        %3807 = vmatpush1.bf16.msra.mxu0 %v3597
        %3808 = vmatprep.subr.bf16.mxu0 %v3602
        %3809 = vmatpush1.bf16.msra.mxu0 %v3601
        %3810 = vmatprep.subr.bf16.mxu0 %v3606
        %3811 = vmatpush1.bf16.msra.mxu0 %v3605
        %3812 = vmatprep.subr.bf16.mxu0 %v3610
        %3813 = vmatpush1.bf16.msra.mxu0 %v3609
        %3814 = vmatprep.mubr.bf16.mxu0 %v3096
        %3815 = vmatmul.mubr.bf16.gmra.mrb[0].mxu0 %v3095
        %v3816 = vpop.f32.mrb[0].mxu0
        %v3817 = vadd.f32 %v3776, %v3816
        %v3818 = vpop.f32.mrb[0].mxu0
        %v3819 = vadd.f32 %v3778, %v3818
        %v3820 = vpop.f32.mrb[0].mxu0
        %v3821 = vpop.f32.mrb[0].mxu0
        %3822 = vdwg.mxu0
        %3823 = vmatprep.subr.bf16.mxu0 %v3488
        %3824 = vmatpush1.bf16.msra.mxu0 %v3487
        %3825 = vmatprep.subr.bf16.mxu0 %v3492
        %3826 = vmatpush1.bf16.msra.mxu0 %v3491
        %3827 = vmatprep.subr.bf16.mxu0 %v3496
        %3828 = vmatpush1.bf16.msra.mxu0 %v3495
        %3829 = vmatprep.subr.bf16.mxu0 %v3500
        %3830 = vmatpush1.bf16.msra.mxu0 %v3499
        %3831 = vmatprep.subr.bf16.mxu0 %v3504
        %3832 = vmatpush1.bf16.msra.mxu0 %v3503
        %3833 = vmatprep.subr.bf16.mxu0 %v3508
        %3834 = vmatpush1.bf16.msra.mxu0 %v3507
        %3835 = vmatprep.subr.bf16.mxu0 %v3512
        %3836 = vmatpush1.bf16.msra.mxu0 %v3511
        %3837 = vmatprep.subr.bf16.mxu0 %v3516
        %3838 = vmatpush1.bf16.msra.mxu0 %v3515
        %3839 = vmatprep.subr.bf16.mxu0 %v3520
        %3840 = vmatpush1.bf16.msra.mxu0 %v3519
        %3841 = vmatprep.subr.bf16.mxu0 %v3524
        %3842 = vmatpush1.bf16.msra.mxu0 %v3523
        %3843 = vmatprep.subr.bf16.mxu0 %v3528
        %3844 = vmatpush1.bf16.msra.mxu0 %v3527
        %3845 = vmatprep.subr.bf16.mxu0 %v3532
        %3846 = vmatpush1.bf16.msra.mxu0 %v3531
        %3847 = vmatprep.subr.bf16.mxu0 %v3536
        %3848 = vmatpush1.bf16.msra.mxu0 %v3535
        %3849 = vmatprep.subr.bf16.mxu0 %v3540
        %3850 = vmatpush1.bf16.msra.mxu0 %v3539
        %3851 = vmatprep.subr.bf16.mxu0 %v3544
        %3852 = vmatpush1.bf16.msra.mxu0 %v3543
        %3853 = vmatprep.subr.bf16.mxu0 %v3548
        %3854 = vmatpush1.bf16.msra.mxu0 %v3547
        %3855 = vmatprep.mubr.bf16.mxu0 %v3094
        %3856 = vmatmul.mubr.bf16.gmra.mrb[0].mxu0 %v3093
        %v3857 = vpop.f32.mrb[0].mxu0
        %v3858 = vadd.f32 %v2223, %v3857
        %v3859 = vpop.f32.mrb[0].mxu0
        %v3860 = vadd.f32 %v2227, %v3859
        %v3861 = vpop.f32.mrb[0].mxu0
        %v3862 = vpop.f32.mrb[0].mxu0
        %3863 = vdwg.mxu0
        %3864 = vmatprep.subr.bf16.mxu0 %v3552
        %3865 = vmatpush1.bf16.msra.mxu0 %v3551
        %3866 = vmatprep.subr.bf16.mxu0 %v3556
        %3867 = vmatpush1.bf16.msra.mxu0 %v3555
        %3868 = vmatprep.subr.bf16.mxu0 %v3560
        %3869 = vmatpush1.bf16.msra.mxu0 %v3559
        %3870 = vmatprep.subr.bf16.mxu0 %v3564
        %3871 = vmatpush1.bf16.msra.mxu0 %v3563
        %3872 = vmatprep.subr.bf16.mxu0 %v3568
        %3873 = vmatpush1.bf16.msra.mxu0 %v3567
        %3874 = vmatprep.subr.bf16.mxu0 %v3572
        %3875 = vmatpush1.bf16.msra.mxu0 %v3571
        %3876 = vmatprep.subr.bf16.mxu0 %v3576
        %3877 = vmatpush1.bf16.msra.mxu0 %v3575
        %3878 = vmatprep.subr.bf16.mxu0 %v3580
        %3879 = vmatpush1.bf16.msra.mxu0 %v3579
        %3880 = vmatprep.subr.bf16.mxu0 %v3584
        %3881 = vmatpush1.bf16.msra.mxu0 %v3583
        %3882 = vmatprep.subr.bf16.mxu0 %v3588
        %3883 = vmatpush1.bf16.msra.mxu0 %v3587
        %3884 = vmatprep.subr.bf16.mxu0 %v3592
        %3885 = vmatpush1.bf16.msra.mxu0 %v3591
        %3886 = vmatprep.subr.bf16.mxu0 %v3596
        %3887 = vmatpush1.bf16.msra.mxu0 %v3595
        %3888 = vmatprep.subr.bf16.mxu0 %v3600
        %3889 = vmatpush1.bf16.msra.mxu0 %v3599
        %3890 = vmatprep.subr.bf16.mxu0 %v3604
        %3891 = vmatpush1.bf16.msra.mxu0 %v3603
        %3892 = vmatprep.subr.bf16.mxu0 %v3608
        %3893 = vmatpush1.bf16.msra.mxu0 %v3607
        %3894 = vmatprep.subr.bf16.mxu0 %v3612
        %3895 = vmatpush1.bf16.msra.mxu0 %v3611
        %3896 = vmatprep.mubr.bf16.mxu0 %v3096
        %3897 = vmatmul.mubr.bf16.gmra.mrb[0].mxu0 %v3095
        %v3898 = vpop.f32.mrb[0].mxu0
        %v3899 = vadd.f32 %v3858, %v3898
        %v3900 = vpop.f32.mrb[0].mxu0
        %v3901 = vadd.f32 %v3860, %v3900
        %v3902 = vpop.f32.mrb[0].mxu0
        %v3903 = vpop.f32.mrb[0].mxu0
        %3904 = vdwg.mxu0
        %vm3905 = vcmask 1041408
        %v3906 = vsel %vm3905, %v3817, 0.0
        %v3907 = vrot.slane %v3906, 4
        %v3908 = vadd.f32 %v3906, %v3907
        %v3909 = vrot.slane %v3908, 2
        %v3910 = vadd.f32 %v3908, %v3909
        %v3911 = vrot.slane %v3910, 1
        %v3912 = vadd.f32 %v3910, %v3911
        %v3913 = vsel %vm3905, %v3819, 0.0
        %v3914 = vrot.slane %v3913, 4
        %v3915 = vadd.f32 %v3913, %v3914
        %v3916 = vrot.slane %v3915, 2
        %v3917 = vadd.f32 %v3915, %v3916
        %v3918 = vrot.slane %v3917, 1
        %v3919 = vadd.f32 %v3917, %v3918
        %v3920 = vsel %vm3905, %v3899, 0.0
        %v3921 = vrot.slane %v3920, 4
        %v3922 = vadd.f32 %v3920, %v3921
        %v3923 = vrot.slane %v3922, 2
        %v3924 = vadd.f32 %v3922, %v3923
        %v3925 = vrot.slane %v3924, 1
        %v3926 = vadd.f32 %v3924, %v3925
        %v3927 = vsel %vm3905, %v3901, 0.0
        %v3928 = vrot.slane %v3927, 4
        %v3929 = vadd.f32 %v3927, %v3928
        %v3930 = vrot.slane %v3929, 2
        %v3931 = vadd.f32 %v3929, %v3930
        %v3932 = vrot.slane %v3931, 1
        %v3933 = vadd.f32 %v3931, %v3932
        %v3934 = vrcp.pop 2.0
        %v3935 = vmul.f32 %v3912, %v3934
        %v3936 = vmul.f32 %v3919, %v3934
        %v3937 = vmul.f32 %v3926, %v3934
        %v3938 = vmul.f32 %v3933, %v3934
        %v3939 = vsub.f32 %v3817, %v3935
        %v3940 = vsub.f32 %v3819, %v3936
        %v3941 = vsub.f32 %v3899, %v3937
        %v3942 = vsub.f32 %v3901, %v3938
        %v3943 = vmul.f32 %v3939, %v3939
        %v3944 = vmul.f32 %v3940, %v3940
        %v3945 = vmul.f32 %v3941, %v3941
        %v3946 = vmul.f32 %v3942, %v3942
        %v3947 = vsel %vm3905, %v3943, 0.0
        %v3948 = vrot.slane %v3947, 4
        %v3949 = vadd.f32 %v3947, %v3948
        %v3950 = vrot.slane %v3949, 2
        %v3951 = vadd.f32 %v3949, %v3950
        %v3952 = vrot.slane %v3951, 1
        %v3953 = vadd.f32 %v3951, %v3952
        %v3954 = vsel %vm3905, %v3944, 0.0
        %v3955 = vrot.slane %v3954, 4
        %v3956 = vadd.f32 %v3954, %v3955
        %v3957 = vrot.slane %v3956, 2
        %v3958 = vadd.f32 %v3956, %v3957
        %v3959 = vrot.slane %v3958, 1
        %v3960 = vadd.f32 %v3958, %v3959
        %v3961 = vsel %vm3905, %v3945, 0.0
        %v3962 = vrot.slane %v3961, 4
        %v3963 = vadd.f32 %v3961, %v3962
        %v3964 = vrot.slane %v3963, 2
        %v3965 = vadd.f32 %v3963, %v3964
        %v3966 = vrot.slane %v3965, 1
        %v3967 = vadd.f32 %v3965, %v3966
        %v3968 = vsel %vm3905, %v3946, 0.0
        %v3969 = vrot.slane %v3968, 4
        %v3970 = vadd.f32 %v3968, %v3969
        %v3971 = vrot.slane %v3970, 2
        %v3972 = vadd.f32 %v3970, %v3971
        %v3973 = vrot.slane %v3972, 1
        %v3974 = vadd.f32 %v3972, %v3973
        %v3975 = vmul.f32 %v3953, %v3934
        %v3976 = vmul.f32 %v3960, %v3934
        %v3977 = vmul.f32 %v3967, %v3934
        %v3978 = vmul.f32 %v3974, %v3934
        %v3979 = vadd.f32 %v3975, 1e-05
        %v3980 = vadd.f32 %v3976, 1e-05
        %v3981 = vadd.f32 %v3977, 1e-05
        %v3982 = vadd.f32 %v3978, 1e-05
        %v3983 = vrsqrt.pop %v3979
        %v3984 = vrsqrt.pop %v3980
        %v3985 = vrsqrt.pop %v3981
        %v3986 = vrsqrt.pop %v3982
        %v3987 = vmul.f32 %v3939, %v3983
        %v3988 = vmul.f32 %v3940, %v3984
        %v3989 = vmul.f32 %v3941, %v3985
        %v3990 = vmul.f32 %v3942, %v3986
        %v3991 = vld [vmem:[#allocation6] sm:$0xf]
        %v3993 = vlaneseq
        %v3994 = vshrl.u32 %v3993, 7
        %v3995 = vsub.s32 0, %v3994
        %v3996 = vrot.slane %v3991, %v3995
        %v3997 = vlaneseq
        %v3998 = vshrl.u32 %v3997, 7
        %v3999 = vsub.s32 1, %v3998
        %v4000 = vrot.slane %v3991, %v3999
        %v4001 = vlaneseq
        %v4002 = vshrl.u32 %v4001, 7
        %v4003 = vsub.s32 2, %v4002
        %v4004 = vrot.slane %v3991, %v4003
        %v4005 = vlaneseq
        %v4006 = vshrl.u32 %v4005, 7
        %v4007 = vsub.s32 3, %v4006
        %v4008 = vrot.slane %v3991, %v4007
        %v4013 = vmul.f32 %v3987, %v3996
        %v4014 = vmul.f32 %v3988, %v4000
        %v4015 = vmul.f32 %v3989, %v4004
        %v4016 = vmul.f32 %v3990, %v4008
        %v4017 = vld [vmem:[#allocation7] sm:$0xf]
        %v4019 = vlaneseq
        %v4020 = vshrl.u32 %v4019, 7
        %v4021 = vsub.s32 0, %v4020
        %v4022 = vrot.slane %v4017, %v4021
        %v4023 = vlaneseq
        %v4024 = vshrl.u32 %v4023, 7
        %v4025 = vsub.s32 1, %v4024
        %v4026 = vrot.slane %v4017, %v4025
        %v4027 = vlaneseq
        %v4028 = vshrl.u32 %v4027, 7
        %v4029 = vsub.s32 2, %v4028
        %v4030 = vrot.slane %v4017, %v4029
        %v4031 = vlaneseq
        %v4032 = vshrl.u32 %v4031, 7
        %v4033 = vsub.s32 3, %v4032
        %v4034 = vrot.slane %v4017, %v4033
        %v4039 = vadd.f32 %v4013, %v4022
        %v4040 = vadd.f32 %v4014, %v4026
        %v4041 = vadd.f32 %v4015, %v4030
        %v4042 = vadd.f32 %v4016, %v4034
        %v4043 = vmul.f32 %v4039, %v4039
        %v4044 = vmul.f32 %v4040, %v4040
        %v4045 = vmul.f32 %v4041, %v4041
        %v4046 = vmul.f32 %v4042, %v4042
        %v4047 = vsel %vm3905, %v4043, 0.0
        %v4048 = vsel %vm3905, %v4044, 0.0
        %v4049 = vadd.f32 %v4047, %v4048
        %v4050 = vsel %vm3905, %v4045, 0.0
        %v4051 = vadd.f32 %v4049, %v4050
        %v4052 = vsel %vm3905, %v4046, 0.0
        %v4053 = vadd.f32 %v4051, %v4052
        %4054 = vadd.xlane.f32.xlu0 %v4053
        %v4055 = vpop.xlane.xlu0 %4054
        %v4056 = vrsqrt.pop %v4055
        %v4057 = vmul.f32 %v4055, %v4056
        %vm4058 = vcmp.eq.f32.partialorder %v4055, inf
        %v4059 = vsel %vm4058, %v4055, %v4057
        %vm4060 = vcmp.eq.f32.partialorder %v4055, 0.0
        %v4061 = vand.u32 %v4055, 2147483648
        %v4062 = vsel %vm4060, %v4061, %v4059
        %v4063 = vmax.f32 %v4062, 1e-12
        %v4064 = vrcp.pop %v4063
        %v4065 = vmul.f32 %v4039, %v4064
        %v4066 = vmul.f32 %v4040, %v4064
        %v4067 = vmul.f32 %v4041, %v4064
        %v4068 = vmul.f32 %v4042, %v4064
        %v4069 = vpack.c.bf16 %v4065, %v4065
        %v4070 = vpack.c.bf16 %v4066, %v4066
        %v4071 = vpack.c.bf16 %v4067, %v4067
        %v4072 = vpack.c.bf16 %v4068, %v4068
        %v4073 = vld [vmem:[%s313] sm:$0xff]
        %v4074 = vld [vmem:[%s313 + $0x8] sm:$0xff]
        %v4075 = vld [vmem:[%s313 + $0x10] sm:$0xff]
        %v4076 = vld [vmem:[%s313 + $0x18] sm:$0xff]
        %v4077 = vld [vmem:[%s313 + $0x20] sm:$0xff]
        %v4078 = vld [vmem:[%s313 + $0x28] sm:$0xff]
        %v4079 = vld [vmem:[%s313 + $0x30] sm:$0xff]
        %v4080 = vld [vmem:[%s313 + $0x38] sm:$0xff]
        %v4081 = vld [vmem:[%s313 + $0x40] sm:$0xff]
        %v4082 = vld [vmem:[%s313 + $0x48] sm:$0xff]
        %v4083 = vld [vmem:[%s313 + $0x50] sm:$0xff]
        %v4084 = vld [vmem:[%s313 + $0x58] sm:$0xff]
        %v4085 = vld [vmem:[%s313 + $0x60] sm:$0xff]
        %v4086 = vld [vmem:[%s313 + $0x68] sm:$0xff]
        %v4087 = vld [vmem:[%s313 + $0x70] sm:$0xff]
        %v4088 = vld [vmem:[%s313 + $0x78] sm:$0xf]
        %v4089 = vld [vmem:[%s313 + $0x7c] sm:$0xff]
        %v4090 = vld [vmem:[%s313 + $0x84] sm:$0xff]
        %v4091 = vld [vmem:[%s313 + $0x8c] sm:$0xff]
        %v4092 = vld [vmem:[%s313 + $0x94] sm:$0xff]
        %v4093 = vld [vmem:[%s313 + $0x9c] sm:$0xff]
        %v4094 = vld [vmem:[%s313 + $0xa4] sm:$0xff]
        %v4095 = vld [vmem:[%s313 + $0xac] sm:$0xff]
        %v4096 = vld [vmem:[%s313 + $0xb4] sm:$0xff]
        %v4097 = vld [vmem:[%s313 + $0xbc] sm:$0xff]
        %v4098 = vld [vmem:[%s313 + $0xc4] sm:$0xff]
        %v4099 = vld [vmem:[%s313 + $0xcc] sm:$0xff]
        %v4100 = vld [vmem:[%s313 + $0xd4] sm:$0xff]
        %v4101 = vld [vmem:[%s313 + $0xdc] sm:$0xff]
        %v4102 = vld [vmem:[%s313 + $0xe4] sm:$0xff]
        %v4103 = vld [vmem:[%s313 + $0xec] sm:$0xff]
        %v4104 = vld [vmem:[%s313 + $0xf4] sm:$0xf]
        %v4105 = vld [vmem:[%s313 + $0xf8] sm:$0xff]
        %v4106 = vld [vmem:[%s313 + $0x100] sm:$0xff]
        %v4107 = vld [vmem:[%s313 + $0x108] sm:$0xff]
        %v4108 = vld [vmem:[%s313 + $0x110] sm:$0xff]
        %v4109 = vld [vmem:[%s313 + $0x118] sm:$0xff]
        %v4110 = vld [vmem:[%s313 + $0x120] sm:$0xff]
        %v4111 = vld [vmem:[%s313 + $0x128] sm:$0xff]
        %v4112 = vld [vmem:[%s313 + $0x130] sm:$0xff]
        %v4113 = vld [vmem:[%s313 + $0x138] sm:$0xff]
        %v4114 = vld [vmem:[%s313 + $0x140] sm:$0xff]
        %v4115 = vld [vmem:[%s313 + $0x148] sm:$0xff]
        %v4116 = vld [vmem:[%s313 + $0x150] sm:$0xff]
        %v4117 = vld [vmem:[%s313 + $0x158] sm:$0xff]
        %v4118 = vld [vmem:[%s313 + $0x160] sm:$0xff]
        %v4119 = vld [vmem:[%s313 + $0x168] sm:$0xff]
        %v4120 = vld [vmem:[%s313 + $0x170] sm:$0xf]
        %v4121 = vld [vmem:[%s313 + $0x174] sm:$0xff]
        %v4122 = vld [vmem:[%s313 + $0x17c] sm:$0xff]
        %v4123 = vld [vmem:[%s313 + $0x184] sm:$0xff]
        %v4124 = vld [vmem:[%s313 + $0x18c] sm:$0xff]
        %v4125 = vld [vmem:[%s313 + $0x194] sm:$0xff]
        %v4126 = vld [vmem:[%s313 + $0x19c] sm:$0xff]
        %v4127 = vld [vmem:[%s313 + $0x1a4] sm:$0xff]
        %v4128 = vld [vmem:[%s313 + $0x1ac] sm:$0xff]
        %v4129 = vld [vmem:[%s313 + $0x1b4] sm:$0xff]
        %v4130 = vld [vmem:[%s313 + $0x1bc] sm:$0xff]
        %v4131 = vld [vmem:[%s313 + $0x1c4] sm:$0xff]
        %v4132 = vld [vmem:[%s313 + $0x1cc] sm:$0xff]
        %v4133 = vld [vmem:[%s313 + $0x1d4] sm:$0xff]
        %v4134 = vld [vmem:[%s313 + $0x1dc] sm:$0xff]
        %v4135 = vld [vmem:[%s313 + $0x1e4] sm:$0xff]
        %v4136 = vld [vmem:[%s313 + $0x1ec] sm:$0xf]
        %v4137 = vld [vmem:[%s313 + $0x1f0] sm:$0xff]
        %v4138 = vld [vmem:[%s313 + $0x1f8] sm:$0xff]
        %v4139 = vld [vmem:[%s313 + $0x200] sm:$0xff]
        %v4140 = vld [vmem:[%s313 + $0x208] sm:$0xff]
        %v4141 = vld [vmem:[%s313 + $0x210] sm:$0xff]
        %v4142 = vld [vmem:[%s313 + $0x218] sm:$0xff]
        %v4143 = vld [vmem:[%s313 + $0x220] sm:$0xff]
        %v4144 = vld [vmem:[%s313 + $0x228] sm:$0xff]
        %v4145 = vld [vmem:[%s313 + $0x230] sm:$0xff]
        %v4146 = vld [vmem:[%s313 + $0x238] sm:$0xff]
        %v4147 = vld [vmem:[%s313 + $0x240] sm:$0xff]
        %v4148 = vld [vmem:[%s313 + $0x248] sm:$0xff]
        %v4149 = vld [vmem:[%s313 + $0x250] sm:$0xff]
        %v4150 = vld [vmem:[%s313 + $0x258] sm:$0xff]
        %v4151 = vld [vmem:[%s313 + $0x260] sm:$0xff]
        %v4152 = vld [vmem:[%s313 + $0x268] sm:$0xf]
        %v4153 = vld [vmem:[%s313 + $0x26c] sm:$0xff]
        %v4154 = vld [vmem:[%s313 + $0x274] sm:$0xff]
        %v4155 = vld [vmem:[%s313 + $0x27c] sm:$0xff]
        %v4156 = vld [vmem:[%s313 + $0x284] sm:$0xff]
        %v4157 = vld [vmem:[%s313 + $0x28c] sm:$0xff]
        %v4158 = vld [vmem:[%s313 + $0x294] sm:$0xff]
        %v4159 = vld [vmem:[%s313 + $0x29c] sm:$0xff]
        %v4160 = vld [vmem:[%s313 + $0x2a4] sm:$0xff]
        %v4161 = vld [vmem:[%s313 + $0x2ac] sm:$0xff]
        %v4162 = vld [vmem:[%s313 + $0x2b4] sm:$0xff]
        %v4163 = vld [vmem:[%s313 + $0x2bc] sm:$0xff]
        %v4164 = vld [vmem:[%s313 + $0x2c4] sm:$0xff]
        %v4165 = vld [vmem:[%s313 + $0x2cc] sm:$0xff]
        %v4166 = vld [vmem:[%s313 + $0x2d4] sm:$0xff]
        %v4167 = vld [vmem:[%s313 + $0x2dc] sm:$0xff]
        %v4168 = vld [vmem:[%s313 + $0x2e4] sm:$0xf]
        %v4169 = vld [vmem:[%s313 + $0x2e8] sm:$0xff]
        %v4170 = vld [vmem:[%s313 + $0x2f0] sm:$0xff]
        %v4171 = vld [vmem:[%s313 + $0x2f8] sm:$0xff]
        %v4172 = vld [vmem:[%s313 + $0x300] sm:$0xff]
        %v4173 = vld [vmem:[%s313 + $0x308] sm:$0xff]
        %v4174 = vld [vmem:[%s313 + $0x310] sm:$0xff]
        %v4175 = vld [vmem:[%s313 + $0x318] sm:$0xff]
        %v4176 = vld [vmem:[%s313 + $0x320] sm:$0xff]
        %v4177 = vld [vmem:[%s313 + $0x328] sm:$0xff]
        %v4178 = vld [vmem:[%s313 + $0x330] sm:$0xff]
        %v4179 = vld [vmem:[%s313 + $0x338] sm:$0xff]
        %v4180 = vld [vmem:[%s313 + $0x340] sm:$0xff]
        %v4181 = vld [vmem:[%s313 + $0x348] sm:$0xff]
        %v4182 = vld [vmem:[%s313 + $0x350] sm:$0xff]
        %v4183 = vld [vmem:[%s313 + $0x358] sm:$0xff]
        %v4184 = vld [vmem:[%s313 + $0x360] sm:$0xf]
        %v4185 = vld [vmem:[%s313 + $0x364] sm:$0xff]
        %v4186 = vld [vmem:[%s313 + $0x36c] sm:$0xff]
        %v4187 = vld [vmem:[%s313 + $0x374] sm:$0xff]
        %v4188 = vld [vmem:[%s313 + $0x37c] sm:$0xff]
        %v4189 = vld [vmem:[%s313 + $0x384] sm:$0xff]
        %v4190 = vld [vmem:[%s313 + $0x38c] sm:$0xff]
        %v4191 = vld [vmem:[%s313 + $0x394] sm:$0xff]
        %v4192 = vld [vmem:[%s313 + $0x39c] sm:$0xff]
        %v4193 = vld [vmem:[%s313 + $0x3a4] sm:$0xff]
        %v4194 = vld [vmem:[%s313 + $0x3ac] sm:$0xff]
        %v4195 = vld [vmem:[%s313 + $0x3b4] sm:$0xff]
        %v4196 = vld [vmem:[%s313 + $0x3bc] sm:$0xff]
        %v4197 = vld [vmem:[%s313 + $0x3c4] sm:$0xff]
        %v4198 = vld [vmem:[%s313 + $0x3cc] sm:$0xff]
        %v4199 = vld [vmem:[%s313 + $0x3d4] sm:$0xff]
        %v4200 = vld [vmem:[%s313 + $0x3dc] sm:$0xf]
        %v4201 = vld [vmem:[%s313 + $0x3e0] sm:$0xff]
        %v4202 = vld [vmem:[%s313 + $0x3e8] sm:$0xff]
        %v4203 = vld [vmem:[%s313 + $0x3f0] sm:$0xff]
        %v4204 = vld [vmem:[%s313 + $0x3f8] sm:$0xff]
        %v4205 = vld [vmem:[%s313 + $0x400] sm:$0xff]
        %v4206 = vld [vmem:[%s313 + $0x408] sm:$0xff]
        %v4207 = vld [vmem:[%s313 + $0x410] sm:$0xff]
        %v4208 = vld [vmem:[%s313 + $0x418] sm:$0xff]
        %v4209 = vld [vmem:[%s313 + $0x420] sm:$0xff]
        %v4210 = vld [vmem:[%s313 + $0x428] sm:$0xff]
        %v4211 = vld [vmem:[%s313 + $0x430] sm:$0xff]
        %v4212 = vld [vmem:[%s313 + $0x438] sm:$0xff]
        %v4213 = vld [vmem:[%s313 + $0x440] sm:$0xff]
        %v4214 = vld [vmem:[%s313 + $0x448] sm:$0xff]
        %v4215 = vld [vmem:[%s313 + $0x450] sm:$0xff]
        %v4216 = vld [vmem:[%s313 + $0x458] sm:$0xf]
        %v4217 = vld [vmem:[%s313 + $0x45c] sm:$0xff]
        %v4218 = vld [vmem:[%s313 + $0x464] sm:$0xff]
        %v4219 = vld [vmem:[%s313 + $0x46c] sm:$0xff]
        %v4220 = vld [vmem:[%s313 + $0x474] sm:$0xff]
        %v4221 = vld [vmem:[%s313 + $0x47c] sm:$0xff]
        %v4222 = vld [vmem:[%s313 + $0x484] sm:$0xff]
        %v4223 = vld [vmem:[%s313 + $0x48c] sm:$0xff]
        %v4224 = vld [vmem:[%s313 + $0x494] sm:$0xff]
        %v4225 = vld [vmem:[%s313 + $0x49c] sm:$0xff]
        %v4226 = vld [vmem:[%s313 + $0x4a4] sm:$0xff]
        %v4227 = vld [vmem:[%s313 + $0x4ac] sm:$0xff]
        %v4228 = vld [vmem:[%s313 + $0x4b4] sm:$0xff]
        %v4229 = vld [vmem:[%s313 + $0x4bc] sm:$0xff]
        %v4230 = vld [vmem:[%s313 + $0x4c4] sm:$0xff]
        %v4231 = vld [vmem:[%s313 + $0x4cc] sm:$0xff]
        %v4232 = vld [vmem:[%s313 + $0x4d4] sm:$0xf]
        %v4233 = vld [vmem:[%s313 + $0x4d8] sm:$0xff]
        %v4234 = vld [vmem:[%s313 + $0x4e0] sm:$0xff]
        %v4235 = vld [vmem:[%s313 + $0x4e8] sm:$0xff]
        %v4236 = vld [vmem:[%s313 + $0x4f0] sm:$0xff]
        %v4237 = vld [vmem:[%s313 + $0x4f8] sm:$0xff]
        %v4238 = vld [vmem:[%s313 + $0x500] sm:$0xff]
        %v4239 = vld [vmem:[%s313 + $0x508] sm:$0xff]
        %v4240 = vld [vmem:[%s313 + $0x510] sm:$0xff]
        %v4241 = vld [vmem:[%s313 + $0x518] sm:$0xff]
        %v4242 = vld [vmem:[%s313 + $0x520] sm:$0xff]
        %v4243 = vld [vmem:[%s313 + $0x528] sm:$0xff]
        %v4244 = vld [vmem:[%s313 + $0x530] sm:$0xff]
        %v4245 = vld [vmem:[%s313 + $0x538] sm:$0xff]
        %v4246 = vld [vmem:[%s313 + $0x540] sm:$0xff]
        %v4247 = vld [vmem:[%s313 + $0x548] sm:$0xff]
        %v4248 = vld [vmem:[%s313 + $0x550] sm:$0xf]
        %v4249 = vld [vmem:[%s313 + $0x554] sm:$0xff]
        %v4250 = vld [vmem:[%s313 + $0x55c] sm:$0xff]
        %v4251 = vld [vmem:[%s313 + $0x564] sm:$0xff]
        %v4252 = vld [vmem:[%s313 + $0x56c] sm:$0xff]
        %v4253 = vld [vmem:[%s313 + $0x574] sm:$0xff]
        %v4254 = vld [vmem:[%s313 + $0x57c] sm:$0xff]
        %v4255 = vld [vmem:[%s313 + $0x584] sm:$0xff]
        %v4256 = vld [vmem:[%s313 + $0x58c] sm:$0xff]
        %v4257 = vld [vmem:[%s313 + $0x594] sm:$0xff]
        %v4258 = vld [vmem:[%s313 + $0x59c] sm:$0xff]
        %v4259 = vld [vmem:[%s313 + $0x5a4] sm:$0xff]
        %v4260 = vld [vmem:[%s313 + $0x5ac] sm:$0xff]
        %v4261 = vld [vmem:[%s313 + $0x5b4] sm:$0xff]
        %v4262 = vld [vmem:[%s313 + $0x5bc] sm:$0xff]
        %v4263 = vld [vmem:[%s313 + $0x5c4] sm:$0xff]
        %v4264 = vld [vmem:[%s313 + $0x5cc] sm:$0xf]
        %v4265 = vld [vmem:[%s313 + $0x5d0] sm:$0xff]
        %v4266 = vld [vmem:[%s313 + $0x5d8] sm:$0xff]
        %v4267 = vld [vmem:[%s313 + $0x5e0] sm:$0xff]
        %v4268 = vld [vmem:[%s313 + $0x5e8] sm:$0xff]
        %v4269 = vld [vmem:[%s313 + $0x5f0] sm:$0xff]
        %v4270 = vld [vmem:[%s313 + $0x5f8] sm:$0xff]
        %v4271 = vld [vmem:[%s313 + $0x600] sm:$0xff]
        %v4272 = vld [vmem:[%s313 + $0x608] sm:$0xff]
        %v4273 = vld [vmem:[%s313 + $0x610] sm:$0xff]
        %v4274 = vld [vmem:[%s313 + $0x618] sm:$0xff]
        %v4275 = vld [vmem:[%s313 + $0x620] sm:$0xff]
        %v4276 = vld [vmem:[%s313 + $0x628] sm:$0xff]
        %v4277 = vld [vmem:[%s313 + $0x630] sm:$0xff]
        %v4278 = vld [vmem:[%s313 + $0x638] sm:$0xff]
        %v4279 = vld [vmem:[%s313 + $0x640] sm:$0xff]
        %v4280 = vld [vmem:[%s313 + $0x648] sm:$0xf]
        %v4281 = vld [vmem:[%s313 + $0x64c] sm:$0xff]
        %v4282 = vld [vmem:[%s313 + $0x654] sm:$0xff]
        %v4283 = vld [vmem:[%s313 + $0x65c] sm:$0xff]
        %v4284 = vld [vmem:[%s313 + $0x664] sm:$0xff]
        %v4285 = vld [vmem:[%s313 + $0x66c] sm:$0xff]
        %v4286 = vld [vmem:[%s313 + $0x674] sm:$0xff]
        %v4287 = vld [vmem:[%s313 + $0x67c] sm:$0xff]
        %v4288 = vld [vmem:[%s313 + $0x684] sm:$0xff]
        %v4289 = vld [vmem:[%s313 + $0x68c] sm:$0xff]
        %v4290 = vld [vmem:[%s313 + $0x694] sm:$0xff]
        %v4291 = vld [vmem:[%s313 + $0x69c] sm:$0xff]
        %v4292 = vld [vmem:[%s313 + $0x6a4] sm:$0xff]
        %v4293 = vld [vmem:[%s313 + $0x6ac] sm:$0xff]
        %v4294 = vld [vmem:[%s313 + $0x6b4] sm:$0xff]
        %v4295 = vld [vmem:[%s313 + $0x6bc] sm:$0xff]
        %v4296 = vld [vmem:[%s313 + $0x6c4] sm:$0xf]
        %v4297 = vld [vmem:[%s313 + $0x6c8] sm:$0xff]
        %v4298 = vld [vmem:[%s313 + $0x6d0] sm:$0xff]
        %v4299 = vld [vmem:[%s313 + $0x6d8] sm:$0xff]
        %v4300 = vld [vmem:[%s313 + $0x6e0] sm:$0xff]
        %v4301 = vld [vmem:[%s313 + $0x6e8] sm:$0xff]
        %v4302 = vld [vmem:[%s313 + $0x6f0] sm:$0xff]
        %v4303 = vld [vmem:[%s313 + $0x6f8] sm:$0xff]
        %v4304 = vld [vmem:[%s313 + $0x700] sm:$0xff]
        %v4305 = vld [vmem:[%s313 + $0x708] sm:$0xff]
        %v4306 = vld [vmem:[%s313 + $0x710] sm:$0xff]
        %v4307 = vld [vmem:[%s313 + $0x718] sm:$0xff]
        %v4308 = vld [vmem:[%s313 + $0x720] sm:$0xff]
        %v4309 = vld [vmem:[%s313 + $0x728] sm:$0xff]
        %v4310 = vld [vmem:[%s313 + $0x730] sm:$0xff]
        %v4311 = vld [vmem:[%s313 + $0x738] sm:$0xff]
        %v4312 = vld [vmem:[%s313 + $0x740] sm:$0xf]
        %v4313 = vld [vmem:[%s313 + $0x744] sm:$0xff]
        %v4314 = vld [vmem:[%s313 + $0x74c] sm:$0xff]
        %v4315 = vld [vmem:[%s313 + $0x754] sm:$0xff]
        %v4316 = vld [vmem:[%s313 + $0x75c] sm:$0xff]
        %v4317 = vld [vmem:[%s313 + $0x764] sm:$0xff]
        %v4318 = vld [vmem:[%s313 + $0x76c] sm:$0xff]
        %v4319 = vld [vmem:[%s313 + $0x774] sm:$0xff]
        %v4320 = vld [vmem:[%s313 + $0x77c] sm:$0xff]
        %v4321 = vld [vmem:[%s313 + $0x784] sm:$0xff]
        %v4322 = vld [vmem:[%s313 + $0x78c] sm:$0xff]
        %v4323 = vld [vmem:[%s313 + $0x794] sm:$0xff]
        %v4324 = vld [vmem:[%s313 + $0x79c] sm:$0xff]
        %v4325 = vld [vmem:[%s313 + $0x7a4] sm:$0xff]
        %v4326 = vld [vmem:[%s313 + $0x7ac] sm:$0xff]
        %v4327 = vld [vmem:[%s313 + $0x7b4] sm:$0xff]
        %v4328 = vld [vmem:[%s313 + $0x7bc] sm:$0xf]
        %v4329 = vld [vmem:[%s313 + $0x7c0] sm:$0xff]
        %v4330 = vld [vmem:[%s313 + $0x7c8] sm:$0xff]
        %v4331 = vld [vmem:[%s313 + $0x7d0] sm:$0xff]
        %v4332 = vld [vmem:[%s313 + $0x7d8] sm:$0xff]
        %v4333 = vld [vmem:[%s313 + $0x7e0] sm:$0xff]
        %v4334 = vld [vmem:[%s313 + $0x7e8] sm:$0xff]
        %v4335 = vld [vmem:[%s313 + $0x7f0] sm:$0xff]
        %v4336 = vld [vmem:[%s313 + $0x7f8] sm:$0xff]
        %v4337 = vld [vmem:[%s313 + $0x800] sm:$0xff]
        %v4338 = vld [vmem:[%s313 + $0x808] sm:$0xff]
        %v4339 = vld [vmem:[%s313 + $0x810] sm:$0xff]
        %v4340 = vld [vmem:[%s313 + $0x818] sm:$0xff]
        %v4341 = vld [vmem:[%s313 + $0x820] sm:$0xff]
        %v4342 = vld [vmem:[%s313 + $0x828] sm:$0xff]
        %v4343 = vld [vmem:[%s313 + $0x830] sm:$0xff]
        %v4344 = vld [vmem:[%s313 + $0x838] sm:$0xf]
        %v4345 = vld [vmem:[%s313 + $0x83c] sm:$0xff]
        %v4346 = vld [vmem:[%s313 + $0x844] sm:$0xff]
        %v4347 = vld [vmem:[%s313 + $0x84c] sm:$0xff]
        %v4348 = vld [vmem:[%s313 + $0x854] sm:$0xff]
        %v4349 = vld [vmem:[%s313 + $0x85c] sm:$0xff]
        %v4350 = vld [vmem:[%s313 + $0x864] sm:$0xff]
        %v4351 = vld [vmem:[%s313 + $0x86c] sm:$0xff]
        %v4352 = vld [vmem:[%s313 + $0x874] sm:$0xff]
        %v4353 = vld [vmem:[%s313 + $0x87c] sm:$0xff]
        %v4354 = vld [vmem:[%s313 + $0x884] sm:$0xff]
        %v4355 = vld [vmem:[%s313 + $0x88c] sm:$0xff]
        %v4356 = vld [vmem:[%s313 + $0x894] sm:$0xff]
        %v4357 = vld [vmem:[%s313 + $0x89c] sm:$0xff]
        %v4358 = vld [vmem:[%s313 + $0x8a4] sm:$0xff]
        %v4359 = vld [vmem:[%s313 + $0x8ac] sm:$0xff]
        %v4360 = vld [vmem:[%s313 + $0x8b4] sm:$0xf]
        %v4361 = vld [vmem:[%s313 + $0x8b8] sm:$0xff]
        %v4362 = vld [vmem:[%s313 + $0x8c0] sm:$0xff]
        %v4363 = vld [vmem:[%s313 + $0x8c8] sm:$0xff]
        %v4364 = vld [vmem:[%s313 + $0x8d0] sm:$0xff]
        %v4365 = vld [vmem:[%s313 + $0x8d8] sm:$0xff]
        %v4366 = vld [vmem:[%s313 + $0x8e0] sm:$0xff]
        %v4367 = vld [vmem:[%s313 + $0x8e8] sm:$0xff]
        %v4368 = vld [vmem:[%s313 + $0x8f0] sm:$0xff]
        %v4369 = vld [vmem:[%s313 + $0x8f8] sm:$0xff]
        %v4370 = vld [vmem:[%s313 + $0x900] sm:$0xff]
        %v4371 = vld [vmem:[%s313 + $0x908] sm:$0xff]
        %v4372 = vld [vmem:[%s313 + $0x910] sm:$0xff]
        %v4373 = vld [vmem:[%s313 + $0x918] sm:$0xff]
        %v4374 = vld [vmem:[%s313 + $0x920] sm:$0xff]
        %v4375 = vld [vmem:[%s313 + $0x928] sm:$0xff]
        %v4376 = vld [vmem:[%s313 + $0x930] sm:$0xf]
        %v4377 = vld [vmem:[%s313 + $0x934] sm:$0xff]
        %v4378 = vld [vmem:[%s313 + $0x93c] sm:$0xff]
        %v4379 = vld [vmem:[%s313 + $0x944] sm:$0xff]
        %v4380 = vld [vmem:[%s313 + $0x94c] sm:$0xff]
        %v4381 = vld [vmem:[%s313 + $0x954] sm:$0xff]
        %v4382 = vld [vmem:[%s313 + $0x95c] sm:$0xff]
        %v4383 = vld [vmem:[%s313 + $0x964] sm:$0xff]
        %v4384 = vld [vmem:[%s313 + $0x96c] sm:$0xff]
        %v4385 = vld [vmem:[%s313 + $0x974] sm:$0xff]
        %v4386 = vld [vmem:[%s313 + $0x97c] sm:$0xff]
        %v4387 = vld [vmem:[%s313 + $0x984] sm:$0xff]
        %v4388 = vld [vmem:[%s313 + $0x98c] sm:$0xff]
        %v4389 = vld [vmem:[%s313 + $0x994] sm:$0xff]
        %v4390 = vld [vmem:[%s313 + $0x99c] sm:$0xff]
        %v4391 = vld [vmem:[%s313 + $0x9a4] sm:$0xff]
        %v4392 = vld [vmem:[%s313 + $0x9ac] sm:$0xf]
        %v4393 = vld [vmem:[%s313 + $0x9b0] sm:$0xff]
        %v4394 = vld [vmem:[%s313 + $0x9b8] sm:$0xff]
        %v4395 = vld [vmem:[%s313 + $0x9c0] sm:$0xff]
        %v4396 = vld [vmem:[%s313 + $0x9c8] sm:$0xff]
        %v4397 = vld [vmem:[%s313 + $0x9d0] sm:$0xff]
        %v4398 = vld [vmem:[%s313 + $0x9d8] sm:$0xff]
        %v4399 = vld [vmem:[%s313 + $0x9e0] sm:$0xff]
        %v4400 = vld [vmem:[%s313 + $0x9e8] sm:$0xff]
        %v4401 = vld [vmem:[%s313 + $0x9f0] sm:$0xff]
        %v4402 = vld [vmem:[%s313 + $0x9f8] sm:$0xff]
        %v4403 = vld [vmem:[%s313 + $0xa00] sm:$0xff]
        %v4404 = vld [vmem:[%s313 + $0xa08] sm:$0xff]
        %v4405 = vld [vmem:[%s313 + $0xa10] sm:$0xff]
        %v4406 = vld [vmem:[%s313 + $0xa18] sm:$0xff]
        %v4407 = vld [vmem:[%s313 + $0xa20] sm:$0xff]
        %v4408 = vld [vmem:[%s313 + $0xa28] sm:$0xf]
        %v4409 = vld [vmem:[%s313 + $0xa2c] sm:$0xff]
        %v4410 = vld [vmem:[%s313 + $0xa34] sm:$0xff]
        %v4411 = vld [vmem:[%s313 + $0xa3c] sm:$0xff]
        %v4412 = vld [vmem:[%s313 + $0xa44] sm:$0xff]
        %v4413 = vld [vmem:[%s313 + $0xa4c] sm:$0xff]
        %v4414 = vld [vmem:[%s313 + $0xa54] sm:$0xff]
        %v4415 = vld [vmem:[%s313 + $0xa5c] sm:$0xff]
        %v4416 = vld [vmem:[%s313 + $0xa64] sm:$0xff]
        %v4417 = vld [vmem:[%s313 + $0xa6c] sm:$0xff]
        %v4418 = vld [vmem:[%s313 + $0xa74] sm:$0xff]
        %v4419 = vld [vmem:[%s313 + $0xa7c] sm:$0xff]
        %v4420 = vld [vmem:[%s313 + $0xa84] sm:$0xff]
        %v4421 = vld [vmem:[%s313 + $0xa8c] sm:$0xff]
        %v4422 = vld [vmem:[%s313 + $0xa94] sm:$0xff]
        %v4423 = vld [vmem:[%s313 + $0xa9c] sm:$0xff]
        %v4424 = vld [vmem:[%s313 + $0xaa4] sm:$0xf]
        %v4425 = vld [vmem:[%s313 + $0xaa8] sm:$0xff]
        %v4426 = vld [vmem:[%s313 + $0xab0] sm:$0xff]
        %v4427 = vld [vmem:[%s313 + $0xab8] sm:$0xff]
        %v4428 = vld [vmem:[%s313 + $0xac0] sm:$0xff]
        %v4429 = vld [vmem:[%s313 + $0xac8] sm:$0xff]
        %v4430 = vld [vmem:[%s313 + $0xad0] sm:$0xff]
        %v4431 = vld [vmem:[%s313 + $0xad8] sm:$0xff]
        %v4432 = vld [vmem:[%s313 + $0xae0] sm:$0xff]
        %v4433 = vld [vmem:[%s313 + $0xae8] sm:$0xff]
        %v4434 = vld [vmem:[%s313 + $0xaf0] sm:$0xff]
        %v4435 = vld [vmem:[%s313 + $0xaf8] sm:$0xff]
        %v4436 = vld [vmem:[%s313 + $0xb00] sm:$0xff]
        %v4437 = vld [vmem:[%s313 + $0xb08] sm:$0xff]
        %v4438 = vld [vmem:[%s313 + $0xb10] sm:$0xff]
        %v4439 = vld [vmem:[%s313 + $0xb18] sm:$0xff]
        %v4440 = vld [vmem:[%s313 + $0xb20] sm:$0xf]
        %v4441 = vld [vmem:[%s313 + $0xb24] sm:$0xff]
        %v4442 = vld [vmem:[%s313 + $0xb2c] sm:$0xff]
        %v4443 = vld [vmem:[%s313 + $0xb34] sm:$0xff]
        %v4444 = vld [vmem:[%s313 + $0xb3c] sm:$0xff]
        %v4445 = vld [vmem:[%s313 + $0xb44] sm:$0xff]
        %v4446 = vld [vmem:[%s313 + $0xb4c] sm:$0xff]
        %v4447 = vld [vmem:[%s313 + $0xb54] sm:$0xff]
        %v4448 = vld [vmem:[%s313 + $0xb5c] sm:$0xff]
        %v4449 = vld [vmem:[%s313 + $0xb64] sm:$0xff]
        %v4450 = vld [vmem:[%s313 + $0xb6c] sm:$0xff]
        %v4451 = vld [vmem:[%s313 + $0xb74] sm:$0xff]
        %v4452 = vld [vmem:[%s313 + $0xb7c] sm:$0xff]
        %v4453 = vld [vmem:[%s313 + $0xb84] sm:$0xff]
        %v4454 = vld [vmem:[%s313 + $0xb8c] sm:$0xff]
        %v4455 = vld [vmem:[%s313 + $0xb94] sm:$0xff]
        %v4456 = vld [vmem:[%s313 + $0xb9c] sm:$0xf]
        %v4457 = vld [vmem:[%s313 + $0xba0] sm:$0xff]
        %v4458 = vld [vmem:[%s313 + $0xba8] sm:$0xff]
        %v4459 = vld [vmem:[%s313 + $0xbb0] sm:$0xff]
        %v4460 = vld [vmem:[%s313 + $0xbb8] sm:$0xff]
        %v4461 = vld [vmem:[%s313 + $0xbc0] sm:$0xff]
        %v4462 = vld [vmem:[%s313 + $0xbc8] sm:$0xff]
        %v4463 = vld [vmem:[%s313 + $0xbd0] sm:$0xff]
        %v4464 = vld [vmem:[%s313 + $0xbd8] sm:$0xff]
        %v4465 = vld [vmem:[%s313 + $0xbe0] sm:$0xff]
        %v4466 = vld [vmem:[%s313 + $0xbe8] sm:$0xff]
        %v4467 = vld [vmem:[%s313 + $0xbf0] sm:$0xff]
        %v4468 = vld [vmem:[%s313 + $0xbf8] sm:$0xff]
        %v4469 = vld [vmem:[%s313 + $0xc00] sm:$0xff]
        %v4470 = vld [vmem:[%s313 + $0xc08] sm:$0xff]
        %v4471 = vld [vmem:[%s313 + $0xc10] sm:$0xff]
        %v4472 = vld [vmem:[%s313 + $0xc18] sm:$0xf]
        %v4473 = vld [vmem:[%s313 + $0xc1c] sm:$0xff]
        %v4474 = vld [vmem:[%s313 + $0xc24] sm:$0xff]
        %v4475 = vld [vmem:[%s313 + $0xc2c] sm:$0xff]
        %v4476 = vld [vmem:[%s313 + $0xc34] sm:$0xff]
        %v4477 = vld [vmem:[%s313 + $0xc3c] sm:$0xff]
        %v4478 = vld [vmem:[%s313 + $0xc44] sm:$0xff]
        %v4479 = vld [vmem:[%s313 + $0xc4c] sm:$0xff]
        %v4480 = vld [vmem:[%s313 + $0xc54] sm:$0xff]
        %v4481 = vld [vmem:[%s313 + $0xc5c] sm:$0xff]
        %v4482 = vld [vmem:[%s313 + $0xc64] sm:$0xff]
        %v4483 = vld [vmem:[%s313 + $0xc6c] sm:$0xff]
        %v4484 = vld [vmem:[%s313 + $0xc74] sm:$0xff]
        %v4485 = vld [vmem:[%s313 + $0xc7c] sm:$0xff]
        %v4486 = vld [vmem:[%s313 + $0xc84] sm:$0xff]
        %v4487 = vld [vmem:[%s313 + $0xc8c] sm:$0xff]
        %v4488 = vld [vmem:[%s313 + $0xc94] sm:$0xf]
        %v4489 = vld [vmem:[%s313 + $0xc98] sm:$0xff]
        %v4490 = vld [vmem:[%s313 + $0xca0] sm:$0xff]
        %v4491 = vld [vmem:[%s313 + $0xca8] sm:$0xff]
        %v4492 = vld [vmem:[%s313 + $0xcb0] sm:$0xff]
        %v4493 = vld [vmem:[%s313 + $0xcb8] sm:$0xff]
        %v4494 = vld [vmem:[%s313 + $0xcc0] sm:$0xff]
        %v4495 = vld [vmem:[%s313 + $0xcc8] sm:$0xff]
        %v4496 = vld [vmem:[%s313 + $0xcd0] sm:$0xff]
        %v4497 = vld [vmem:[%s313 + $0xcd8] sm:$0xff]
        %v4498 = vld [vmem:[%s313 + $0xce0] sm:$0xff]
        %v4499 = vld [vmem:[%s313 + $0xce8] sm:$0xff]
        %v4500 = vld [vmem:[%s313 + $0xcf0] sm:$0xff]
        %v4501 = vld [vmem:[%s313 + $0xcf8] sm:$0xff]
        %v4502 = vld [vmem:[%s313 + $0xd00] sm:$0xff]
        %v4503 = vld [vmem:[%s313 + $0xd08] sm:$0xff]
        %v4504 = vld [vmem:[%s313 + $0xd10] sm:$0xf]
        %v4505 = vld [vmem:[%s313 + $0xd14] sm:$0xff]
        %v4506 = vld [vmem:[%s313 + $0xd1c] sm:$0xff]
        %v4507 = vld [vmem:[%s313 + $0xd24] sm:$0xff]
        %v4508 = vld [vmem:[%s313 + $0xd2c] sm:$0xff]
        %v4509 = vld [vmem:[%s313 + $0xd34] sm:$0xff]
        %v4510 = vld [vmem:[%s313 + $0xd3c] sm:$0xff]
        %v4511 = vld [vmem:[%s313 + $0xd44] sm:$0xff]
        %v4512 = vld [vmem:[%s313 + $0xd4c] sm:$0xff]
        %v4513 = vld [vmem:[%s313 + $0xd54] sm:$0xff]
        %v4514 = vld [vmem:[%s313 + $0xd5c] sm:$0xff]
        %v4515 = vld [vmem:[%s313 + $0xd64] sm:$0xff]
        %v4516 = vld [vmem:[%s313 + $0xd6c] sm:$0xff]
        %v4517 = vld [vmem:[%s313 + $0xd74] sm:$0xff]
        %v4518 = vld [vmem:[%s313 + $0xd7c] sm:$0xff]
        %v4519 = vld [vmem:[%s313 + $0xd84] sm:$0xff]
        %v4520 = vld [vmem:[%s313 + $0xd8c] sm:$0xf]
        %v4521 = vld [vmem:[%s313 + $0xd90] sm:$0xff]
        %v4522 = vld [vmem:[%s313 + $0xd98] sm:$0xff]
        %v4523 = vld [vmem:[%s313 + $0xda0] sm:$0xff]
        %v4524 = vld [vmem:[%s313 + $0xda8] sm:$0xff]
        %v4525 = vld [vmem:[%s313 + $0xdb0] sm:$0xff]
        %v4526 = vld [vmem:[%s313 + $0xdb8] sm:$0xff]
        %v4527 = vld [vmem:[%s313 + $0xdc0] sm:$0xff]
        %v4528 = vld [vmem:[%s313 + $0xdc8] sm:$0xff]
        %v4529 = vld [vmem:[%s313 + $0xdd0] sm:$0xff]
        %v4530 = vld [vmem:[%s313 + $0xdd8] sm:$0xff]
        %v4531 = vld [vmem:[%s313 + $0xde0] sm:$0xff]
        %v4532 = vld [vmem:[%s313 + $0xde8] sm:$0xff]
        %v4533 = vld [vmem:[%s313 + $0xdf0] sm:$0xff]
        %v4534 = vld [vmem:[%s313 + $0xdf8] sm:$0xff]
        %v4535 = vld [vmem:[%s313 + $0xe00] sm:$0xff]
        %v4536 = vld [vmem:[%s313 + $0xe08] sm:$0xf]
        %v4537 = vld [vmem:[%s313 + $0xe0c] sm:$0xff]
        %v4538 = vld [vmem:[%s313 + $0xe14] sm:$0xff]
        %v4539 = vld [vmem:[%s313 + $0xe1c] sm:$0xff]
        %v4540 = vld [vmem:[%s313 + $0xe24] sm:$0xff]
        %v4541 = vld [vmem:[%s313 + $0xe2c] sm:$0xff]
        %v4542 = vld [vmem:[%s313 + $0xe34] sm:$0xff]
        %v4543 = vld [vmem:[%s313 + $0xe3c] sm:$0xff]
        %v4544 = vld [vmem:[%s313 + $0xe44] sm:$0xff]
        %v4545 = vld [vmem:[%s313 + $0xe4c] sm:$0xff]
        %v4546 = vld [vmem:[%s313 + $0xe54] sm:$0xff]
        %v4547 = vld [vmem:[%s313 + $0xe5c] sm:$0xff]
        %v4548 = vld [vmem:[%s313 + $0xe64] sm:$0xff]
        %v4549 = vld [vmem:[%s313 + $0xe6c] sm:$0xff]
        %v4550 = vld [vmem:[%s313 + $0xe74] sm:$0xff]
        %v4551 = vld [vmem:[%s313 + $0xe7c] sm:$0xff]
        %v4552 = vld [vmem:[%s313 + $0xe84] sm:$0xf]
        %v4553 = vld [vmem:[%s313 + $0xe88] sm:$0xff]
        %v4554 = vld [vmem:[%s313 + $0xe90] sm:$0xff]
        %v4555 = vld [vmem:[%s313 + $0xe98] sm:$0xff]
        %v4556 = vld [vmem:[%s313 + $0xea0] sm:$0xff]
        %v4557 = vld [vmem:[%s313 + $0xea8] sm:$0xff]
        %v4558 = vld [vmem:[%s313 + $0xeb0] sm:$0xff]
        %v4559 = vld [vmem:[%s313 + $0xeb8] sm:$0xff]
        %v4560 = vld [vmem:[%s313 + $0xec0] sm:$0xff]
        %v4561 = vld [vmem:[%s313 + $0xec8] sm:$0xff]
        %v4562 = vld [vmem:[%s313 + $0xed0] sm:$0xff]
        %v4563 = vld [vmem:[%s313 + $0xed8] sm:$0xff]
        %v4564 = vld [vmem:[%s313 + $0xee0] sm:$0xff]
        %v4565 = vld [vmem:[%s313 + $0xee8] sm:$0xff]
        %v4566 = vld [vmem:[%s313 + $0xef0] sm:$0xff]
        %v4567 = vld [vmem:[%s313 + $0xef8] sm:$0xff]
        %v4568 = vld [vmem:[%s313 + $0xf00] sm:$0xf]
        %v4569 = vld [vmem:[%s313 + $0xf04] sm:$0xff]
        %v4570 = vld [vmem:[%s313 + $0xf0c] sm:$0xff]
        %v4571 = vld [vmem:[%s313 + $0xf14] sm:$0xff]
        %v4572 = vld [vmem:[%s313 + $0xf1c] sm:$0xff]
        %v4573 = vld [vmem:[%s313 + $0xf24] sm:$0xff]
        %v4574 = vld [vmem:[%s313 + $0xf2c] sm:$0xff]
        %v4575 = vld [vmem:[%s313 + $0xf34] sm:$0xff]
        %v4576 = vld [vmem:[%s313 + $0xf3c] sm:$0xff]
        %v4577 = vld [vmem:[%s313 + $0xf44] sm:$0xff]
        %v4578 = vld [vmem:[%s313 + $0xf4c] sm:$0xff]
        %v4579 = vld [vmem:[%s313 + $0xf54] sm:$0xff]
        %v4580 = vld [vmem:[%s313 + $0xf5c] sm:$0xff]
        %v4581 = vld [vmem:[%s313 + $0xf64] sm:$0xff]
        %v4582 = vld [vmem:[%s313 + $0xf6c] sm:$0xff]
        %v4583 = vld [vmem:[%s313 + $0xf74] sm:$0xff]
        %v4584 = vld [vmem:[%s313 + $0xf7c] sm:$0xf]
        %v4585 = vld [vmem:[%s313 + $0xf80] sm:$0xff]
        %v4586 = vld [vmem:[%s313 + $0xf88] sm:$0xff]
        %v4587 = vld [vmem:[%s313 + $0xf90] sm:$0xff]
        %v4588 = vld [vmem:[%s313 + $0xf98] sm:$0xff]
        %v4589 = vld [vmem:[%s313 + $0xfa0] sm:$0xff]
        %v4590 = vld [vmem:[%s313 + $0xfa8] sm:$0xff]
        %v4591 = vld [vmem:[%s313 + $0xfb0] sm:$0xff]
        %v4592 = vld [vmem:[%s313 + $0xfb8] sm:$0xff]
        %v4593 = vld [vmem:[%s313 + $0xfc0] sm:$0xff]
        %v4594 = vld [vmem:[%s313 + $0xfc8] sm:$0xff]
        %v4595 = vld [vmem:[%s313 + $0xfd0] sm:$0xff]
        %v4596 = vld [vmem:[%s313 + $0xfd8] sm:$0xff]
        %v4597 = vld [vmem:[%s313 + $0xfe0] sm:$0xff]
        %v4598 = vld [vmem:[%s313 + $0xfe8] sm:$0xff]
        %v4599 = vld [vmem:[%s313 + $0xff0] sm:$0xff]
        %v4600 = vld [vmem:[%s313 + $0xff8] sm:$0xf]
        %v4601 = vld [vmem:[%s313 + $0xffc] sm:$0xff]
        %v4602 = vld [vmem:[%s313 + $0x1004] sm:$0xff]
        %v4603 = vld [vmem:[%s313 + $0x100c] sm:$0xff]
        %v4604 = vld [vmem:[%s313 + $0x1014] sm:$0xff]
        %v4605 = vld [vmem:[%s313 + $0x101c] sm:$0xff]
        %v4606 = vld [vmem:[%s313 + $0x1024] sm:$0xff]
        %v4607 = vld [vmem:[%s313 + $0x102c] sm:$0xff]
        %v4608 = vld [vmem:[%s313 + $0x1034] sm:$0xff]
        %v4609 = vld [vmem:[%s313 + $0x103c] sm:$0xff]
        %v4610 = vld [vmem:[%s313 + $0x1044] sm:$0xff]
        %v4611 = vld [vmem:[%s313 + $0x104c] sm:$0xff]
        %v4612 = vld [vmem:[%s313 + $0x1054] sm:$0xff]
        %v4613 = vld [vmem:[%s313 + $0x105c] sm:$0xff]
        %v4614 = vld [vmem:[%s313 + $0x1064] sm:$0xff]
        %v4615 = vld [vmem:[%s313 + $0x106c] sm:$0xff]
        %v4616 = vld [vmem:[%s313 + $0x1074] sm:$0xf]
        %v4617 = vld [vmem:[%s313 + $0x1078] sm:$0xff]
        %v4618 = vld [vmem:[%s313 + $0x1080] sm:$0xff]
        %v4619 = vld [vmem:[%s313 + $0x1088] sm:$0xff]
        %v4620 = vld [vmem:[%s313 + $0x1090] sm:$0xff]
        %v4621 = vld [vmem:[%s313 + $0x1098] sm:$0xff]
        %v4622 = vld [vmem:[%s313 + $0x10a0] sm:$0xff]
        %v4623 = vld [vmem:[%s313 + $0x10a8] sm:$0xff]
        %v4624 = vld [vmem:[%s313 + $0x10b0] sm:$0xff]
        %v4625 = vld [vmem:[%s313 + $0x10b8] sm:$0xff]
        %v4626 = vld [vmem:[%s313 + $0x10c0] sm:$0xff]
        %v4627 = vld [vmem:[%s313 + $0x10c8] sm:$0xff]
        %v4628 = vld [vmem:[%s313 + $0x10d0] sm:$0xff]
        %v4629 = vld [vmem:[%s313 + $0x10d8] sm:$0xff]
        %v4630 = vld [vmem:[%s313 + $0x10e0] sm:$0xff]
        %v4631 = vld [vmem:[%s313 + $0x10e8] sm:$0xff]
        %v4632 = vld [vmem:[%s313 + $0x10f0] sm:$0xf]
        %v4633 = vld [vmem:[%s313 + $0x10f4] sm:$0xff]
        %v4634 = vld [vmem:[%s313 + $0x10fc] sm:$0xff]
        %v4635 = vld [vmem:[%s313 + $0x1104] sm:$0xff]
        %v4636 = vld [vmem:[%s313 + $0x110c] sm:$0xff]
        %v4637 = vld [vmem:[%s313 + $0x1114] sm:$0xff]
        %v4638 = vld [vmem:[%s313 + $0x111c] sm:$0xff]
        %v4639 = vld [vmem:[%s313 + $0x1124] sm:$0xff]
        %v4640 = vld [vmem:[%s313 + $0x112c] sm:$0xff]
        %v4641 = vld [vmem:[%s313 + $0x1134] sm:$0xff]
        %v4642 = vld [vmem:[%s313 + $0x113c] sm:$0xff]
        %v4643 = vld [vmem:[%s313 + $0x1144] sm:$0xff]
        %v4644 = vld [vmem:[%s313 + $0x114c] sm:$0xff]
        %v4645 = vld [vmem:[%s313 + $0x1154] sm:$0xff]
        %v4646 = vld [vmem:[%s313 + $0x115c] sm:$0xff]
        %v4647 = vld [vmem:[%s313 + $0x1164] sm:$0xff]
        %v4648 = vld [vmem:[%s313 + $0x116c] sm:$0xf]
        %v4649 = vld [vmem:[%s313 + $0x1170] sm:$0xff]
        %v4650 = vld [vmem:[%s313 + $0x1178] sm:$0xff]
        %v4651 = vld [vmem:[%s313 + $0x1180] sm:$0xff]
        %v4652 = vld [vmem:[%s313 + $0x1188] sm:$0xff]
        %v4653 = vld [vmem:[%s313 + $0x1190] sm:$0xff]
        %v4654 = vld [vmem:[%s313 + $0x1198] sm:$0xff]
        %v4655 = vld [vmem:[%s313 + $0x11a0] sm:$0xff]
        %v4656 = vld [vmem:[%s313 + $0x11a8] sm:$0xff]
        %v4657 = vld [vmem:[%s313 + $0x11b0] sm:$0xff]
        %v4658 = vld [vmem:[%s313 + $0x11b8] sm:$0xff]
        %v4659 = vld [vmem:[%s313 + $0x11c0] sm:$0xff]
        %v4660 = vld [vmem:[%s313 + $0x11c8] sm:$0xff]
        %v4661 = vld [vmem:[%s313 + $0x11d0] sm:$0xff]
        %v4662 = vld [vmem:[%s313 + $0x11d8] sm:$0xff]
        %v4663 = vld [vmem:[%s313 + $0x11e0] sm:$0xff]
        %v4664 = vld [vmem:[%s313 + $0x11e8] sm:$0xf]
        %v4665 = vld [vmem:[%s313 + $0x11ec] sm:$0xff]
        %v4666 = vld [vmem:[%s313 + $0x11f4] sm:$0xff]
        %v4667 = vld [vmem:[%s313 + $0x11fc] sm:$0xff]
        %v4668 = vld [vmem:[%s313 + $0x1204] sm:$0xff]
        %v4669 = vld [vmem:[%s313 + $0x120c] sm:$0xff]
        %v4670 = vld [vmem:[%s313 + $0x1214] sm:$0xff]
        %v4671 = vld [vmem:[%s313 + $0x121c] sm:$0xff]
        %v4672 = vld [vmem:[%s313 + $0x1224] sm:$0xff]
        %v4673 = vld [vmem:[%s313 + $0x122c] sm:$0xff]
        %v4674 = vld [vmem:[%s313 + $0x1234] sm:$0xff]
        %v4675 = vld [vmem:[%s313 + $0x123c] sm:$0xff]
        %v4676 = vld [vmem:[%s313 + $0x1244] sm:$0xff]
        %v4677 = vld [vmem:[%s313 + $0x124c] sm:$0xff]
        %v4678 = vld [vmem:[%s313 + $0x1254] sm:$0xff]
        %v4679 = vld [vmem:[%s313 + $0x125c] sm:$0xff]
        %v4680 = vld [vmem:[%s313 + $0x1264] sm:$0xf]
        %v4681 = vld [vmem:[%s313 + $0x1268] sm:$0xff]
        %v4682 = vld [vmem:[%s313 + $0x1270] sm:$0xff]
        %v4683 = vld [vmem:[%s313 + $0x1278] sm:$0xff]
        %v4684 = vld [vmem:[%s313 + $0x1280] sm:$0xff]
        %v4685 = vld [vmem:[%s313 + $0x1288] sm:$0xff]
        %v4686 = vld [vmem:[%s313 + $0x1290] sm:$0xff]
        %v4687 = vld [vmem:[%s313 + $0x1298] sm:$0xff]
        %v4688 = vld [vmem:[%s313 + $0x12a0] sm:$0xff]
        %v4689 = vld [vmem:[%s313 + $0x12a8] sm:$0xff]
        %v4690 = vld [vmem:[%s313 + $0x12b0] sm:$0xff]
        %v4691 = vld [vmem:[%s313 + $0x12b8] sm:$0xff]
        %v4692 = vld [vmem:[%s313 + $0x12c0] sm:$0xff]
        %v4693 = vld [vmem:[%s313 + $0x12c8] sm:$0xff]
        %v4694 = vld [vmem:[%s313 + $0x12d0] sm:$0xff]
        %v4695 = vld [vmem:[%s313 + $0x12d8] sm:$0xff]
        %v4696 = vld [vmem:[%s313 + $0x12e0] sm:$0xf]
        %v4697 = vld [vmem:[%s313 + $0x12e4] sm:$0xff]
        %v4698 = vld [vmem:[%s313 + $0x12ec] sm:$0xff]
        %v4699 = vld [vmem:[%s313 + $0x12f4] sm:$0xff]
        %v4700 = vld [vmem:[%s313 + $0x12fc] sm:$0xff]
        %v4701 = vld [vmem:[%s313 + $0x1304] sm:$0xff]
        %v4702 = vld [vmem:[%s313 + $0x130c] sm:$0xff]
        %v4703 = vld [vmem:[%s313 + $0x1314] sm:$0xff]
        %v4704 = vld [vmem:[%s313 + $0x131c] sm:$0xff]
        %v4705 = vld [vmem:[%s313 + $0x1324] sm:$0xff]
        %v4706 = vld [vmem:[%s313 + $0x132c] sm:$0xff]
        %v4707 = vld [vmem:[%s313 + $0x1334] sm:$0xff]
        %v4708 = vld [vmem:[%s313 + $0x133c] sm:$0xff]
        %v4709 = vld [vmem:[%s313 + $0x1344] sm:$0xff]
        %v4710 = vld [vmem:[%s313 + $0x134c] sm:$0xff]
        %v4711 = vld [vmem:[%s313 + $0x1354] sm:$0xff]
        %v4712 = vld [vmem:[%s313 + $0x135c] sm:$0xf]
        %v4713 = vld [vmem:[%s313 + $0x1360] sm:$0xff]
        %v4714 = vld [vmem:[%s313 + $0x1368] sm:$0xff]
        %v4715 = vld [vmem:[%s313 + $0x1370] sm:$0xff]
        %v4716 = vld [vmem:[%s313 + $0x1378] sm:$0xff]
        %v4717 = vld [vmem:[%s313 + $0x1380] sm:$0xff]
        %v4718 = vld [vmem:[%s313 + $0x1388] sm:$0xff]
        %v4719 = vld [vmem:[%s313 + $0x1390] sm:$0xff]
        %v4720 = vld [vmem:[%s313 + $0x1398] sm:$0xff]
        %v4721 = vld [vmem:[%s313 + $0x13a0] sm:$0xff]
        %v4722 = vld [vmem:[%s313 + $0x13a8] sm:$0xff]
        %v4723 = vld [vmem:[%s313 + $0x13b0] sm:$0xff]
        %v4724 = vld [vmem:[%s313 + $0x13b8] sm:$0xff]
        %v4725 = vld [vmem:[%s313 + $0x13c0] sm:$0xff]
        %v4726 = vld [vmem:[%s313 + $0x13c8] sm:$0xff]
        %v4727 = vld [vmem:[%s313 + $0x13d0] sm:$0xff]
        %v4728 = vld [vmem:[%s313 + $0x13d8] sm:$0xf]
        %v4729 = vld [vmem:[%s313 + $0x13dc] sm:$0xff]
        %v4730 = vld [vmem:[%s313 + $0x13e4] sm:$0xff]
        %v4731 = vld [vmem:[%s313 + $0x13ec] sm:$0xff]
        %v4732 = vld [vmem:[%s313 + $0x13f4] sm:$0xff]
        %v4733 = vld [vmem:[%s313 + $0x13fc] sm:$0xff]
        %v4734 = vld [vmem:[%s313 + $0x1404] sm:$0xff]
        %v4735 = vld [vmem:[%s313 + $0x140c] sm:$0xff]
        %v4736 = vld [vmem:[%s313 + $0x1414] sm:$0xff]
        %v4737 = vld [vmem:[%s313 + $0x141c] sm:$0xff]
        %v4738 = vld [vmem:[%s313 + $0x1424] sm:$0xff]
        %v4739 = vld [vmem:[%s313 + $0x142c] sm:$0xff]
        %v4740 = vld [vmem:[%s313 + $0x1434] sm:$0xff]
        %v4741 = vld [vmem:[%s313 + $0x143c] sm:$0xff]
        %v4742 = vld [vmem:[%s313 + $0x1444] sm:$0xff]
        %v4743 = vld [vmem:[%s313 + $0x144c] sm:$0xff]
        %v4744 = vld [vmem:[%s313 + $0x1454] sm:$0xf]
        %v4745 = vld [vmem:[%s313 + $0x1458] sm:$0xff]
        %v4746 = vld [vmem:[%s313 + $0x1460] sm:$0xff]
        %v4747 = vld [vmem:[%s313 + $0x1468] sm:$0xff]
        %v4748 = vld [vmem:[%s313 + $0x1470] sm:$0xff]
        %v4749 = vld [vmem:[%s313 + $0x1478] sm:$0xff]
        %v4750 = vld [vmem:[%s313 + $0x1480] sm:$0xff]
        %v4751 = vld [vmem:[%s313 + $0x1488] sm:$0xff]
        %v4752 = vld [vmem:[%s313 + $0x1490] sm:$0xff]
        %v4753 = vld [vmem:[%s313 + $0x1498] sm:$0xff]
        %v4754 = vld [vmem:[%s313 + $0x14a0] sm:$0xff]
        %v4755 = vld [vmem:[%s313 + $0x14a8] sm:$0xff]
        %v4756 = vld [vmem:[%s313 + $0x14b0] sm:$0xff]
        %v4757 = vld [vmem:[%s313 + $0x14b8] sm:$0xff]
        %v4758 = vld [vmem:[%s313 + $0x14c0] sm:$0xff]
        %v4759 = vld [vmem:[%s313 + $0x14c8] sm:$0xff]
        %v4760 = vld [vmem:[%s313 + $0x14d0] sm:$0xf]
        %v4761 = vld [vmem:[%s313 + $0x14d4] sm:$0xff]
        %v4762 = vld [vmem:[%s313 + $0x14dc] sm:$0xff]
        %v4763 = vld [vmem:[%s313 + $0x14e4] sm:$0xff]
        %v4764 = vld [vmem:[%s313 + $0x14ec] sm:$0xff]
        %v4765 = vld [vmem:[%s313 + $0x14f4] sm:$0xff]
        %v4766 = vld [vmem:[%s313 + $0x14fc] sm:$0xff]
        %v4767 = vld [vmem:[%s313 + $0x1504] sm:$0xff]
        %v4768 = vld [vmem:[%s313 + $0x150c] sm:$0xff]
        %v4769 = vld [vmem:[%s313 + $0x1514] sm:$0xff]
        %v4770 = vld [vmem:[%s313 + $0x151c] sm:$0xff]
        %v4771 = vld [vmem:[%s313 + $0x1524] sm:$0xff]
        %v4772 = vld [vmem:[%s313 + $0x152c] sm:$0xff]
        %v4773 = vld [vmem:[%s313 + $0x1534] sm:$0xff]
        %v4774 = vld [vmem:[%s313 + $0x153c] sm:$0xff]
        %v4775 = vld [vmem:[%s313 + $0x1544] sm:$0xff]
        %v4776 = vld [vmem:[%s313 + $0x154c] sm:$0xf]
        %v4777 = vld [vmem:[%s313 + $0x1550] sm:$0xff]
        %v4778 = vld [vmem:[%s313 + $0x1558] sm:$0xff]
        %v4779 = vld [vmem:[%s313 + $0x1560] sm:$0xff]
        %v4780 = vld [vmem:[%s313 + $0x1568] sm:$0xff]
        %v4781 = vld [vmem:[%s313 + $0x1570] sm:$0xff]
        %v4782 = vld [vmem:[%s313 + $0x1578] sm:$0xff]
        %v4783 = vld [vmem:[%s313 + $0x1580] sm:$0xff]
        %v4784 = vld [vmem:[%s313 + $0x1588] sm:$0xff]
        %v4785 = vld [vmem:[%s313 + $0x1590] sm:$0xff]
        %v4786 = vld [vmem:[%s313 + $0x1598] sm:$0xff]
        %v4787 = vld [vmem:[%s313 + $0x15a0] sm:$0xff]
        %v4788 = vld [vmem:[%s313 + $0x15a8] sm:$0xff]
        %v4789 = vld [vmem:[%s313 + $0x15b0] sm:$0xff]
        %v4790 = vld [vmem:[%s313 + $0x15b8] sm:$0xff]
        %v4791 = vld [vmem:[%s313 + $0x15c0] sm:$0xff]
        %v4792 = vld [vmem:[%s313 + $0x15c8] sm:$0xf]
        %v4793 = vld [vmem:[%s313 + $0x15cc] sm:$0xff]
        %v4794 = vld [vmem:[%s313 + $0x15d4] sm:$0xff]
        %v4795 = vld [vmem:[%s313 + $0x15dc] sm:$0xff]
        %v4796 = vld [vmem:[%s313 + $0x15e4] sm:$0xff]
        %v4797 = vld [vmem:[%s313 + $0x15ec] sm:$0xff]
        %v4798 = vld [vmem:[%s313 + $0x15f4] sm:$0xff]
        %v4799 = vld [vmem:[%s313 + $0x15fc] sm:$0xff]
        %v4800 = vld [vmem:[%s313 + $0x1604] sm:$0xff]
        %v4801 = vld [vmem:[%s313 + $0x160c] sm:$0xff]
        %v4802 = vld [vmem:[%s313 + $0x1614] sm:$0xff]
        %v4803 = vld [vmem:[%s313 + $0x161c] sm:$0xff]
        %v4804 = vld [vmem:[%s313 + $0x1624] sm:$0xff]
        %v4805 = vld [vmem:[%s313 + $0x162c] sm:$0xff]
        %v4806 = vld [vmem:[%s313 + $0x1634] sm:$0xff]
        %v4807 = vld [vmem:[%s313 + $0x163c] sm:$0xff]
        %v4808 = vld [vmem:[%s313 + $0x1644] sm:$0xf]
        %v4809 = vld [vmem:[%s313 + $0x1648] sm:$0xff]
        %v4810 = vld [vmem:[%s313 + $0x1650] sm:$0xff]
        %v4811 = vld [vmem:[%s313 + $0x1658] sm:$0xff]
        %v4812 = vld [vmem:[%s313 + $0x1660] sm:$0xff]
        %v4813 = vld [vmem:[%s313 + $0x1668] sm:$0xff]
        %v4814 = vld [vmem:[%s313 + $0x1670] sm:$0xff]
        %v4815 = vld [vmem:[%s313 + $0x1678] sm:$0xff]
        %v4816 = vld [vmem:[%s313 + $0x1680] sm:$0xff]
        %v4817 = vld [vmem:[%s313 + $0x1688] sm:$0xff]
        %v4818 = vld [vmem:[%s313 + $0x1690] sm:$0xff]
        %v4819 = vld [vmem:[%s313 + $0x1698] sm:$0xff]
        %v4820 = vld [vmem:[%s313 + $0x16a0] sm:$0xff]
        %v4821 = vld [vmem:[%s313 + $0x16a8] sm:$0xff]
        %v4822 = vld [vmem:[%s313 + $0x16b0] sm:$0xff]
        %v4823 = vld [vmem:[%s313 + $0x16b8] sm:$0xff]
        %v4824 = vld [vmem:[%s313 + $0x16c0] sm:$0xf]
        %v4825 = vld [vmem:[%s313 + $0x16c4] sm:$0xff]
        %v4826 = vld [vmem:[%s313 + $0x16cc] sm:$0xff]
        %v4827 = vld [vmem:[%s313 + $0x16d4] sm:$0xff]
        %v4828 = vld [vmem:[%s313 + $0x16dc] sm:$0xff]
        %v4829 = vld [vmem:[%s313 + $0x16e4] sm:$0xff]
        %v4830 = vld [vmem:[%s313 + $0x16ec] sm:$0xff]
        %v4831 = vld [vmem:[%s313 + $0x16f4] sm:$0xff]
        %v4832 = vld [vmem:[%s313 + $0x16fc] sm:$0xff]
        %v4833 = vld [vmem:[%s313 + $0x1704] sm:$0xff]
        %v4834 = vld [vmem:[%s313 + $0x170c] sm:$0xff]
        %v4835 = vld [vmem:[%s313 + $0x1714] sm:$0xff]
        %v4836 = vld [vmem:[%s313 + $0x171c] sm:$0xff]
        %v4837 = vld [vmem:[%s313 + $0x1724] sm:$0xff]
        %v4838 = vld [vmem:[%s313 + $0x172c] sm:$0xff]
        %v4839 = vld [vmem:[%s313 + $0x1734] sm:$0xff]
        %v4840 = vld [vmem:[%s313 + $0x173c] sm:$0xf]
        %v4841 = vld [vmem:[%s313 + $0x1740] sm:$0xff]
        %v4842 = vld [vmem:[%s313 + $0x1748] sm:$0xff]
        %v4843 = vld [vmem:[%s313 + $0x1750] sm:$0xff]
        %v4844 = vld [vmem:[%s313 + $0x1758] sm:$0xff]
        %v4845 = vld [vmem:[%s313 + $0x1760] sm:$0xff]
        %v4846 = vld [vmem:[%s313 + $0x1768] sm:$0xff]
        %v4847 = vld [vmem:[%s313 + $0x1770] sm:$0xff]
        %v4848 = vld [vmem:[%s313 + $0x1778] sm:$0xff]
        %v4849 = vld [vmem:[%s313 + $0x1780] sm:$0xff]
        %v4850 = vld [vmem:[%s313 + $0x1788] sm:$0xff]
        %v4851 = vld [vmem:[%s313 + $0x1790] sm:$0xff]
        %v4852 = vld [vmem:[%s313 + $0x1798] sm:$0xff]
        %v4853 = vld [vmem:[%s313 + $0x17a0] sm:$0xff]
        %v4854 = vld [vmem:[%s313 + $0x17a8] sm:$0xff]
        %v4855 = vld [vmem:[%s313 + $0x17b0] sm:$0xff]
        %v4856 = vld [vmem:[%s313 + $0x17b8] sm:$0xf]
        %v4857 = vld [vmem:[%s313 + $0x17bc] sm:$0xff]
        %v4858 = vld [vmem:[%s313 + $0x17c4] sm:$0xff]
        %v4859 = vld [vmem:[%s313 + $0x17cc] sm:$0xff]
        %v4860 = vld [vmem:[%s313 + $0x17d4] sm:$0xff]
        %v4861 = vld [vmem:[%s313 + $0x17dc] sm:$0xff]
        %v4862 = vld [vmem:[%s313 + $0x17e4] sm:$0xff]
        %v4863 = vld [vmem:[%s313 + $0x17ec] sm:$0xff]
        %v4864 = vld [vmem:[%s313 + $0x17f4] sm:$0xff]
        %v4865 = vld [vmem:[%s313 + $0x17fc] sm:$0xff]
        %v4866 = vld [vmem:[%s313 + $0x1804] sm:$0xff]
        %v4867 = vld [vmem:[%s313 + $0x180c] sm:$0xff]
        %v4868 = vld [vmem:[%s313 + $0x1814] sm:$0xff]
        %v4869 = vld [vmem:[%s313 + $0x181c] sm:$0xff]
        %v4870 = vld [vmem:[%s313 + $0x1824] sm:$0xff]
        %v4871 = vld [vmem:[%s313 + $0x182c] sm:$0xff]
        %v4872 = vld [vmem:[%s313 + $0x1834] sm:$0xf]
        %v4873 = vld [vmem:[%s313 + $0x1838] sm:$0xff]
        %v4874 = vld [vmem:[%s313 + $0x1840] sm:$0xff]
        %v4875 = vld [vmem:[%s313 + $0x1848] sm:$0xff]
        %v4876 = vld [vmem:[%s313 + $0x1850] sm:$0xff]
        %v4877 = vld [vmem:[%s313 + $0x1858] sm:$0xff]
        %v4878 = vld [vmem:[%s313 + $0x1860] sm:$0xff]
        %v4879 = vld [vmem:[%s313 + $0x1868] sm:$0xff]
        %v4880 = vld [vmem:[%s313 + $0x1870] sm:$0xff]
        %v4881 = vld [vmem:[%s313 + $0x1878] sm:$0xff]
        %v4882 = vld [vmem:[%s313 + $0x1880] sm:$0xff]
        %v4883 = vld [vmem:[%s313 + $0x1888] sm:$0xff]
        %v4884 = vld [vmem:[%s313 + $0x1890] sm:$0xff]
        %v4885 = vld [vmem:[%s313 + $0x1898] sm:$0xff]
        %v4886 = vld [vmem:[%s313 + $0x18a0] sm:$0xff]
        %v4887 = vld [vmem:[%s313 + $0x18a8] sm:$0xff]
        %v4888 = vld [vmem:[%s313 + $0x18b0] sm:$0xf]
        %v4889 = vld [vmem:[%s313 + $0x18b4] sm:$0xff]
        %v4890 = vld [vmem:[%s313 + $0x18bc] sm:$0xff]
        %v4891 = vld [vmem:[%s313 + $0x18c4] sm:$0xff]
        %v4892 = vld [vmem:[%s313 + $0x18cc] sm:$0xff]
        %v4893 = vld [vmem:[%s313 + $0x18d4] sm:$0xff]
        %v4894 = vld [vmem:[%s313 + $0x18dc] sm:$0xff]
        %v4895 = vld [vmem:[%s313 + $0x18e4] sm:$0xff]
        %v4896 = vld [vmem:[%s313 + $0x18ec] sm:$0xff]
        %v4897 = vld [vmem:[%s313 + $0x18f4] sm:$0xff]
        %v4898 = vld [vmem:[%s313 + $0x18fc] sm:$0xff]
        %v4899 = vld [vmem:[%s313 + $0x1904] sm:$0xff]
        %v4900 = vld [vmem:[%s313 + $0x190c] sm:$0xff]
        %v4901 = vld [vmem:[%s313 + $0x1914] sm:$0xff]
        %v4902 = vld [vmem:[%s313 + $0x191c] sm:$0xff]
        %v4903 = vld [vmem:[%s313 + $0x1924] sm:$0xff]
        %v4904 = vld [vmem:[%s313 + $0x192c] sm:$0xf]
        %v4905 = vld [vmem:[%s313 + $0x1930] sm:$0xff]
        %v4906 = vld [vmem:[%s313 + $0x1938] sm:$0xff]
        %v4907 = vld [vmem:[%s313 + $0x1940] sm:$0xff]
        %v4908 = vld [vmem:[%s313 + $0x1948] sm:$0xff]
        %v4909 = vld [vmem:[%s313 + $0x1950] sm:$0xff]
        %v4910 = vld [vmem:[%s313 + $0x1958] sm:$0xff]
        %v4911 = vld [vmem:[%s313 + $0x1960] sm:$0xff]
        %v4912 = vld [vmem:[%s313 + $0x1968] sm:$0xff]
        %v4913 = vld [vmem:[%s313 + $0x1970] sm:$0xff]
        %v4914 = vld [vmem:[%s313 + $0x1978] sm:$0xff]
        %v4915 = vld [vmem:[%s313 + $0x1980] sm:$0xff]
        %v4916 = vld [vmem:[%s313 + $0x1988] sm:$0xff]
        %v4917 = vld [vmem:[%s313 + $0x1990] sm:$0xff]
        %v4918 = vld [vmem:[%s313 + $0x1998] sm:$0xff]
        %v4919 = vld [vmem:[%s313 + $0x19a0] sm:$0xff]
        %v4920 = vld [vmem:[%s313 + $0x19a8] sm:$0xf]
        %v4921 = vld [vmem:[%s313 + $0x19ac] sm:$0xff]
        %v4922 = vld [vmem:[%s313 + $0x19b4] sm:$0xff]
        %v4923 = vld [vmem:[%s313 + $0x19bc] sm:$0xff]
        %v4924 = vld [vmem:[%s313 + $0x19c4] sm:$0xff]
        %v4925 = vld [vmem:[%s313 + $0x19cc] sm:$0xff]
        %v4926 = vld [vmem:[%s313 + $0x19d4] sm:$0xff]
        %v4927 = vld [vmem:[%s313 + $0x19dc] sm:$0xff]
        %v4928 = vld [vmem:[%s313 + $0x19e4] sm:$0xff]
        %v4929 = vld [vmem:[%s313 + $0x19ec] sm:$0xff]
        %v4930 = vld [vmem:[%s313 + $0x19f4] sm:$0xff]
        %v4931 = vld [vmem:[%s313 + $0x19fc] sm:$0xff]
        %v4932 = vld [vmem:[%s313 + $0x1a04] sm:$0xff]
        %v4933 = vld [vmem:[%s313 + $0x1a0c] sm:$0xff]
        %v4934 = vld [vmem:[%s313 + $0x1a14] sm:$0xff]
        %v4935 = vld [vmem:[%s313 + $0x1a1c] sm:$0xff]
        %v4936 = vld [vmem:[%s313 + $0x1a24] sm:$0xf]
        %v4937 = vld [vmem:[%s313 + $0x1a28] sm:$0xff]
        %v4938 = vld [vmem:[%s313 + $0x1a30] sm:$0xff]
        %v4939 = vld [vmem:[%s313 + $0x1a38] sm:$0xff]
        %v4940 = vld [vmem:[%s313 + $0x1a40] sm:$0xff]
        %v4941 = vld [vmem:[%s313 + $0x1a48] sm:$0xff]
        %v4942 = vld [vmem:[%s313 + $0x1a50] sm:$0xff]
        %v4943 = vld [vmem:[%s313 + $0x1a58] sm:$0xff]
        %v4944 = vld [vmem:[%s313 + $0x1a60] sm:$0xff]
        %v4945 = vld [vmem:[%s313 + $0x1a68] sm:$0xff]
        %v4946 = vld [vmem:[%s313 + $0x1a70] sm:$0xff]
        %v4947 = vld [vmem:[%s313 + $0x1a78] sm:$0xff]
        %v4948 = vld [vmem:[%s313 + $0x1a80] sm:$0xff]
        %v4949 = vld [vmem:[%s313 + $0x1a88] sm:$0xff]
        %v4950 = vld [vmem:[%s313 + $0x1a90] sm:$0xff]
        %v4951 = vld [vmem:[%s313 + $0x1a98] sm:$0xff]
        %v4952 = vld [vmem:[%s313 + $0x1aa0] sm:$0xf]
        %v4953 = vld [vmem:[%s313 + $0x1aa4] sm:$0xff]
        %v4954 = vld [vmem:[%s313 + $0x1aac] sm:$0xff]
        %v4955 = vld [vmem:[%s313 + $0x1ab4] sm:$0xff]
        %v4956 = vld [vmem:[%s313 + $0x1abc] sm:$0xff]
        %v4957 = vld [vmem:[%s313 + $0x1ac4] sm:$0xff]
        %v4958 = vld [vmem:[%s313 + $0x1acc] sm:$0xff]
        %v4959 = vld [vmem:[%s313 + $0x1ad4] sm:$0xff]
        %v4960 = vld [vmem:[%s313 + $0x1adc] sm:$0xff]
        %v4961 = vld [vmem:[%s313 + $0x1ae4] sm:$0xff]
        %v4962 = vld [vmem:[%s313 + $0x1aec] sm:$0xff]
        %v4963 = vld [vmem:[%s313 + $0x1af4] sm:$0xff]
        %v4964 = vld [vmem:[%s313 + $0x1afc] sm:$0xff]
        %v4965 = vld [vmem:[%s313 + $0x1b04] sm:$0xff]
        %v4966 = vld [vmem:[%s313 + $0x1b0c] sm:$0xff]
        %v4967 = vld [vmem:[%s313 + $0x1b14] sm:$0xff]
        %v4968 = vld [vmem:[%s313 + $0x1b1c] sm:$0xf]
        %v4969 = vld [vmem:[%s313 + $0x1b20] sm:$0xff]
        %v4970 = vld [vmem:[%s313 + $0x1b28] sm:$0xff]
        %v4971 = vld [vmem:[%s313 + $0x1b30] sm:$0xff]
        %v4972 = vld [vmem:[%s313 + $0x1b38] sm:$0xff]
        %v4973 = vld [vmem:[%s313 + $0x1b40] sm:$0xff]
        %v4974 = vld [vmem:[%s313 + $0x1b48] sm:$0xff]
        %v4975 = vld [vmem:[%s313 + $0x1b50] sm:$0xff]
        %v4976 = vld [vmem:[%s313 + $0x1b58] sm:$0xff]
        %v4977 = vld [vmem:[%s313 + $0x1b60] sm:$0xff]
        %v4978 = vld [vmem:[%s313 + $0x1b68] sm:$0xff]
        %v4979 = vld [vmem:[%s313 + $0x1b70] sm:$0xff]
        %v4980 = vld [vmem:[%s313 + $0x1b78] sm:$0xff]
        %v4981 = vld [vmem:[%s313 + $0x1b80] sm:$0xff]
        %v4982 = vld [vmem:[%s313 + $0x1b88] sm:$0xff]
        %v4983 = vld [vmem:[%s313 + $0x1b90] sm:$0xff]
        %v4984 = vld [vmem:[%s313 + $0x1b98] sm:$0xf]
        %v4985 = vld [vmem:[%s313 + $0x1b9c] sm:$0xff]
        %v4986 = vld [vmem:[%s313 + $0x1ba4] sm:$0xff]
        %v4987 = vld [vmem:[%s313 + $0x1bac] sm:$0xff]
        %v4988 = vld [vmem:[%s313 + $0x1bb4] sm:$0xff]
        %v4989 = vld [vmem:[%s313 + $0x1bbc] sm:$0xff]
        %v4990 = vld [vmem:[%s313 + $0x1bc4] sm:$0xff]
        %v4991 = vld [vmem:[%s313 + $0x1bcc] sm:$0xff]
        %v4992 = vld [vmem:[%s313 + $0x1bd4] sm:$0xff]
        %v4993 = vld [vmem:[%s313 + $0x1bdc] sm:$0xff]
        %v4994 = vld [vmem:[%s313 + $0x1be4] sm:$0xff]
        %v4995 = vld [vmem:[%s313 + $0x1bec] sm:$0xff]
        %v4996 = vld [vmem:[%s313 + $0x1bf4] sm:$0xff]
        %v4997 = vld [vmem:[%s313 + $0x1bfc] sm:$0xff]
        %v4998 = vld [vmem:[%s313 + $0x1c04] sm:$0xff]
        %v4999 = vld [vmem:[%s313 + $0x1c0c] sm:$0xff]
        %v5000 = vld [vmem:[%s313 + $0x1c14] sm:$0xf]
        %v5001 = vld [vmem:[%s313 + $0x1c18] sm:$0xff]
        %v5002 = vld [vmem:[%s313 + $0x1c20] sm:$0xff]
        %v5003 = vld [vmem:[%s313 + $0x1c28] sm:$0xff]
        %v5004 = vld [vmem:[%s313 + $0x1c30] sm:$0xff]
        %v5005 = vld [vmem:[%s313 + $0x1c38] sm:$0xff]
        %v5006 = vld [vmem:[%s313 + $0x1c40] sm:$0xff]
        %v5007 = vld [vmem:[%s313 + $0x1c48] sm:$0xff]
        %v5008 = vld [vmem:[%s313 + $0x1c50] sm:$0xff]
        %v5009 = vld [vmem:[%s313 + $0x1c58] sm:$0xff]
        %v5010 = vld [vmem:[%s313 + $0x1c60] sm:$0xff]
        %v5011 = vld [vmem:[%s313 + $0x1c68] sm:$0xff]
        %v5012 = vld [vmem:[%s313 + $0x1c70] sm:$0xff]
        %v5013 = vld [vmem:[%s313 + $0x1c78] sm:$0xff]
        %v5014 = vld [vmem:[%s313 + $0x1c80] sm:$0xff]
        %v5015 = vld [vmem:[%s313 + $0x1c88] sm:$0xff]
        %v5016 = vld [vmem:[%s313 + $0x1c90] sm:$0xf]
        %v5017 = vld [vmem:[%s313 + $0x1c94] sm:$0xff]
        %v5018 = vld [vmem:[%s313 + $0x1c9c] sm:$0xff]
        %v5019 = vld [vmem:[%s313 + $0x1ca4] sm:$0xff]
        %v5020 = vld [vmem:[%s313 + $0x1cac] sm:$0xff]
        %v5021 = vld [vmem:[%s313 + $0x1cb4] sm:$0xff]
        %v5022 = vld [vmem:[%s313 + $0x1cbc] sm:$0xff]
        %v5023 = vld [vmem:[%s313 + $0x1cc4] sm:$0xff]
        %v5024 = vld [vmem:[%s313 + $0x1ccc] sm:$0xff]
        %v5025 = vld [vmem:[%s313 + $0x1cd4] sm:$0xff]
        %v5026 = vld [vmem:[%s313 + $0x1cdc] sm:$0xff]
        %v5027 = vld [vmem:[%s313 + $0x1ce4] sm:$0xff]
        %v5028 = vld [vmem:[%s313 + $0x1cec] sm:$0xff]
        %v5029 = vld [vmem:[%s313 + $0x1cf4] sm:$0xff]
        %v5030 = vld [vmem:[%s313 + $0x1cfc] sm:$0xff]
        %v5031 = vld [vmem:[%s313 + $0x1d04] sm:$0xff]
        %v5032 = vld [vmem:[%s313 + $0x1d0c] sm:$0xf]
        %v5033 = vld [vmem:[%s313 + $0x1d10] sm:$0xff]
        %v5034 = vld [vmem:[%s313 + $0x1d18] sm:$0xff]
        %v5035 = vld [vmem:[%s313 + $0x1d20] sm:$0xff]
        %v5036 = vld [vmem:[%s313 + $0x1d28] sm:$0xff]
        %v5037 = vld [vmem:[%s313 + $0x1d30] sm:$0xff]
        %v5038 = vld [vmem:[%s313 + $0x1d38] sm:$0xff]
        %v5039 = vld [vmem:[%s313 + $0x1d40] sm:$0xff]
        %v5040 = vld [vmem:[%s313 + $0x1d48] sm:$0xff]
        %v5041 = vld [vmem:[%s313 + $0x1d50] sm:$0xff]
        %v5042 = vld [vmem:[%s313 + $0x1d58] sm:$0xff]
        %v5043 = vld [vmem:[%s313 + $0x1d60] sm:$0xff]
        %v5044 = vld [vmem:[%s313 + $0x1d68] sm:$0xff]
        %v5045 = vld [vmem:[%s313 + $0x1d70] sm:$0xff]
        %v5046 = vld [vmem:[%s313 + $0x1d78] sm:$0xff]
        %v5047 = vld [vmem:[%s313 + $0x1d80] sm:$0xff]
        %v5048 = vld [vmem:[%s313 + $0x1d88] sm:$0xf]
        %v5049 = vld [vmem:[%s313 + $0x1d8c] sm:$0xff]
        %v5050 = vld [vmem:[%s313 + $0x1d94] sm:$0xff]
        %v5051 = vld [vmem:[%s313 + $0x1d9c] sm:$0xff]
        %v5052 = vld [vmem:[%s313 + $0x1da4] sm:$0xff]
        %v5053 = vld [vmem:[%s313 + $0x1dac] sm:$0xff]
        %v5054 = vld [vmem:[%s313 + $0x1db4] sm:$0xff]
        %v5055 = vld [vmem:[%s313 + $0x1dbc] sm:$0xff]
        %v5056 = vld [vmem:[%s313 + $0x1dc4] sm:$0xff]
        %v5057 = vld [vmem:[%s313 + $0x1dcc] sm:$0xff]
        %v5058 = vld [vmem:[%s313 + $0x1dd4] sm:$0xff]
        %v5059 = vld [vmem:[%s313 + $0x1ddc] sm:$0xff]
        %v5060 = vld [vmem:[%s313 + $0x1de4] sm:$0xff]
        %v5061 = vld [vmem:[%s313 + $0x1dec] sm:$0xff]
        %v5062 = vld [vmem:[%s313 + $0x1df4] sm:$0xff]
        %v5063 = vld [vmem:[%s313 + $0x1dfc] sm:$0xff]
        %v5064 = vld [vmem:[%s313 + $0x1e04] sm:$0xf]
        %v5065 = vld [vmem:[%s313 + $0x1e08] sm:$0xff]
        %v5066 = vld [vmem:[%s313 + $0x1e10] sm:$0xff]
        %v5067 = vld [vmem:[%s313 + $0x1e18] sm:$0xff]
        %v5068 = vld [vmem:[%s313 + $0x1e20] sm:$0xff]
        %v5069 = vld [vmem:[%s313 + $0x1e28] sm:$0xff]
        %v5070 = vld [vmem:[%s313 + $0x1e30] sm:$0xff]
        %v5071 = vld [vmem:[%s313 + $0x1e38] sm:$0xff]
        %v5072 = vld [vmem:[%s313 + $0x1e40] sm:$0xff]
        %v5073 = vld [vmem:[%s313 + $0x1e48] sm:$0xff]
        %v5074 = vld [vmem:[%s313 + $0x1e50] sm:$0xff]
        %v5075 = vld [vmem:[%s313 + $0x1e58] sm:$0xff]
        %v5076 = vld [vmem:[%s313 + $0x1e60] sm:$0xff]
        %v5077 = vld [vmem:[%s313 + $0x1e68] sm:$0xff]
        %v5078 = vld [vmem:[%s313 + $0x1e70] sm:$0xff]
        %v5079 = vld [vmem:[%s313 + $0x1e78] sm:$0xff]
        %v5080 = vld [vmem:[%s313 + $0x1e80] sm:$0xf]
        %v5081 = vld [vmem:[%s313 + $0x1e84] sm:$0xff]
        %v5082 = vld [vmem:[%s313 + $0x1e8c] sm:$0xff]
        %v5083 = vld [vmem:[%s313 + $0x1e94] sm:$0xff]
        %v5084 = vld [vmem:[%s313 + $0x1e9c] sm:$0xff]
        %v5085 = vld [vmem:[%s313 + $0x1ea4] sm:$0xff]
        %v5086 = vld [vmem:[%s313 + $0x1eac] sm:$0xff]
        %v5087 = vld [vmem:[%s313 + $0x1eb4] sm:$0xff]
        %v5088 = vld [vmem:[%s313 + $0x1ebc] sm:$0xff]
        %v5089 = vld [vmem:[%s313 + $0x1ec4] sm:$0xff]
        %v5090 = vld [vmem:[%s313 + $0x1ecc] sm:$0xff]
        %v5091 = vld [vmem:[%s313 + $0x1ed4] sm:$0xff]
        %v5092 = vld [vmem:[%s313 + $0x1edc] sm:$0xff]
        %v5093 = vld [vmem:[%s313 + $0x1ee4] sm:$0xff]
        %v5094 = vld [vmem:[%s313 + $0x1eec] sm:$0xff]
        %v5095 = vld [vmem:[%s313 + $0x1ef4] sm:$0xff]
        %v5096 = vld [vmem:[%s313 + $0x1efc] sm:$0xf]
        %v6121 = vunpack.c.l.b16 %v4073
        %v6122 = vunpack.c.h.b16 %v4073
        %v6123 = vunpack.c.l.b16 %v4074
        %v6124 = vunpack.c.h.b16 %v4074
        %v6125 = vunpack.c.l.b16 %v4075
        %v6126 = vunpack.c.h.b16 %v4075
        %v6127 = vunpack.c.l.b16 %v4076
        %v6128 = vunpack.c.h.b16 %v4076
        %v6129 = vunpack.c.l.b16 %v4077
        %v6130 = vunpack.c.h.b16 %v4077
        %v6131 = vunpack.c.l.b16 %v4078
        %v6132 = vunpack.c.h.b16 %v4078
        %v6133 = vunpack.c.l.b16 %v4079
        %v6134 = vunpack.c.h.b16 %v4079
        %v6135 = vunpack.c.l.b16 %v4080
        %v6136 = vunpack.c.h.b16 %v4080
        %v6137 = vunpack.c.l.b16 %v4081
        %v6138 = vunpack.c.h.b16 %v4081
        %v6139 = vunpack.c.l.b16 %v4082
        %v6140 = vunpack.c.h.b16 %v4082
        %v6141 = vunpack.c.l.b16 %v4083
        %v6142 = vunpack.c.h.b16 %v4083
        %v6143 = vunpack.c.l.b16 %v4084
        %v6144 = vunpack.c.h.b16 %v4084
        %v6145 = vunpack.c.l.b16 %v4085
        %v6146 = vunpack.c.h.b16 %v4085
        %v6147 = vunpack.c.l.b16 %v4086
        %v6148 = vunpack.c.h.b16 %v4086
        %v6149 = vunpack.c.l.b16 %v4087
        %v6150 = vunpack.c.h.b16 %v4087
        %v6151 = vunpack.c.l.b16 %v4088
        %v6152 = vunpack.c.l.b16 %v4089
        %v6153 = vunpack.c.h.b16 %v4089
        %v6154 = vunpack.c.l.b16 %v4090
        %v6155 = vunpack.c.h.b16 %v4090
        %v6156 = vunpack.c.l.b16 %v4091
        %v6157 = vunpack.c.h.b16 %v4091
        %v6158 = vunpack.c.l.b16 %v4092
        %v6159 = vunpack.c.h.b16 %v4092
        %v6160 = vunpack.c.l.b16 %v4093
        %v6161 = vunpack.c.h.b16 %v4093
        %v6162 = vunpack.c.l.b16 %v4094
        %v6163 = vunpack.c.h.b16 %v4094
        %v6164 = vunpack.c.l.b16 %v4095
        %v6165 = vunpack.c.h.b16 %v4095
        %v6166 = vunpack.c.l.b16 %v4096
        %v6167 = vunpack.c.h.b16 %v4096
        %v6168 = vunpack.c.l.b16 %v4097
        %v6169 = vunpack.c.h.b16 %v4097
        %v6170 = vunpack.c.l.b16 %v4098
        %v6171 = vunpack.c.h.b16 %v4098
        %v6172 = vunpack.c.l.b16 %v4099
        %v6173 = vunpack.c.h.b16 %v4099
        %v6174 = vunpack.c.l.b16 %v4100
        %v6175 = vunpack.c.h.b16 %v4100
        %v6176 = vunpack.c.l.b16 %v4101
        %v6177 = vunpack.c.h.b16 %v4101
        %v6178 = vunpack.c.l.b16 %v4102
        %v6179 = vunpack.c.h.b16 %v4102
        %v6180 = vunpack.c.l.b16 %v4103
        %v6181 = vunpack.c.h.b16 %v4103
        %v6182 = vunpack.c.l.b16 %v4104
        %v6183 = vunpack.c.l.b16 %v4105
        %v6184 = vunpack.c.h.b16 %v4105
        %v6185 = vunpack.c.l.b16 %v4106
        %v6186 = vunpack.c.h.b16 %v4106
        %v6187 = vunpack.c.l.b16 %v4107
        %v6188 = vunpack.c.h.b16 %v4107
        %v6189 = vunpack.c.l.b16 %v4108
        %v6190 = vunpack.c.h.b16 %v4108
        %v6191 = vunpack.c.l.b16 %v4109
        %v6192 = vunpack.c.h.b16 %v4109
        %v6193 = vunpack.c.l.b16 %v4110
        %v6194 = vunpack.c.h.b16 %v4110
        %v6195 = vunpack.c.l.b16 %v4111
        %v6196 = vunpack.c.h.b16 %v4111
        %v6197 = vunpack.c.l.b16 %v4112
        %v6198 = vunpack.c.h.b16 %v4112
        %v6199 = vunpack.c.l.b16 %v4113
        %v6200 = vunpack.c.h.b16 %v4113
        %v6201 = vunpack.c.l.b16 %v4114
        %v6202 = vunpack.c.h.b16 %v4114
        %v6203 = vunpack.c.l.b16 %v4115
        %v6204 = vunpack.c.h.b16 %v4115
        %v6205 = vunpack.c.l.b16 %v4116
        %v6206 = vunpack.c.h.b16 %v4116
        %v6207 = vunpack.c.l.b16 %v4117
        %v6208 = vunpack.c.h.b16 %v4117
        %v6209 = vunpack.c.l.b16 %v4118
        %v6210 = vunpack.c.h.b16 %v4118
        %v6211 = vunpack.c.l.b16 %v4119
        %v6212 = vunpack.c.h.b16 %v4119
        %v6213 = vunpack.c.l.b16 %v4120
        %v6214 = vunpack.c.l.b16 %v4121
        %v6215 = vunpack.c.h.b16 %v4121
        %v6216 = vunpack.c.l.b16 %v4122
        %v6217 = vunpack.c.h.b16 %v4122
        %v6218 = vunpack.c.l.b16 %v4123
        %v6219 = vunpack.c.h.b16 %v4123
        %v6220 = vunpack.c.l.b16 %v4124
        %v6221 = vunpack.c.h.b16 %v4124
        %v6222 = vunpack.c.l.b16 %v4125
        %v6223 = vunpack.c.h.b16 %v4125
        %v6224 = vunpack.c.l.b16 %v4126
        %v6225 = vunpack.c.h.b16 %v4126
        %v6226 = vunpack.c.l.b16 %v4127
        %v6227 = vunpack.c.h.b16 %v4127
        %v6228 = vunpack.c.l.b16 %v4128
        %v6229 = vunpack.c.h.b16 %v4128
        %v6230 = vunpack.c.l.b16 %v4129
        %v6231 = vunpack.c.h.b16 %v4129
        %v6232 = vunpack.c.l.b16 %v4130
        %v6233 = vunpack.c.h.b16 %v4130
        %v6234 = vunpack.c.l.b16 %v4131
        %v6235 = vunpack.c.h.b16 %v4131
        %v6236 = vunpack.c.l.b16 %v4132
        %v6237 = vunpack.c.h.b16 %v4132
        %v6238 = vunpack.c.l.b16 %v4133
        %v6239 = vunpack.c.h.b16 %v4133
        %v6240 = vunpack.c.l.b16 %v4134
        %v6241 = vunpack.c.h.b16 %v4134
        %v6242 = vunpack.c.l.b16 %v4135
        %v6243 = vunpack.c.h.b16 %v4135
        %v6244 = vunpack.c.l.b16 %v4136
        %v6245 = vunpack.c.l.b16 %v4137
        %v6246 = vunpack.c.h.b16 %v4137
        %v6247 = vunpack.c.l.b16 %v4138
        %v6248 = vunpack.c.h.b16 %v4138
        %v6249 = vunpack.c.l.b16 %v4139
        %v6250 = vunpack.c.h.b16 %v4139
        %v6251 = vunpack.c.l.b16 %v4140
        %v6252 = vunpack.c.h.b16 %v4140
        %v6253 = vunpack.c.l.b16 %v4141
        %v6254 = vunpack.c.h.b16 %v4141
        %v6255 = vunpack.c.l.b16 %v4142
        %v6256 = vunpack.c.h.b16 %v4142
        %v6257 = vunpack.c.l.b16 %v4143
        %v6258 = vunpack.c.h.b16 %v4143
        %v6259 = vunpack.c.l.b16 %v4144
        %v6260 = vunpack.c.h.b16 %v4144
        %v6261 = vunpack.c.l.b16 %v4145
        %v6262 = vunpack.c.h.b16 %v4145
        %v6263 = vunpack.c.l.b16 %v4146
        %v6264 = vunpack.c.h.b16 %v4146
        %v6265 = vunpack.c.l.b16 %v4147
        %v6266 = vunpack.c.h.b16 %v4147
        %v6267 = vunpack.c.l.b16 %v4148
        %v6268 = vunpack.c.h.b16 %v4148
        %v6269 = vunpack.c.l.b16 %v4149
        %v6270 = vunpack.c.h.b16 %v4149
        %v6271 = vunpack.c.l.b16 %v4150
        %v6272 = vunpack.c.h.b16 %v4150
        %v6273 = vunpack.c.l.b16 %v4151
        %v6274 = vunpack.c.h.b16 %v4151
        %v6275 = vunpack.c.l.b16 %v4152
        %v6276 = vunpack.c.l.b16 %v4153
        %v6277 = vunpack.c.h.b16 %v4153
        %v6278 = vunpack.c.l.b16 %v4154
        %v6279 = vunpack.c.h.b16 %v4154
        %v6280 = vunpack.c.l.b16 %v4155
        %v6281 = vunpack.c.h.b16 %v4155
        %v6282 = vunpack.c.l.b16 %v4156
        %v6283 = vunpack.c.h.b16 %v4156
        %v6284 = vunpack.c.l.b16 %v4157
        %v6285 = vunpack.c.h.b16 %v4157
        %v6286 = vunpack.c.l.b16 %v4158
        %v6287 = vunpack.c.h.b16 %v4158
        %v6288 = vunpack.c.l.b16 %v4159
        %v6289 = vunpack.c.h.b16 %v4159
        %v6290 = vunpack.c.l.b16 %v4160
        %v6291 = vunpack.c.h.b16 %v4160
        %v6292 = vunpack.c.l.b16 %v4161
        %v6293 = vunpack.c.h.b16 %v4161
        %v6294 = vunpack.c.l.b16 %v4162
        %v6295 = vunpack.c.h.b16 %v4162
        %v6296 = vunpack.c.l.b16 %v4163
        %v6297 = vunpack.c.h.b16 %v4163
        %v6298 = vunpack.c.l.b16 %v4164
        %v6299 = vunpack.c.h.b16 %v4164
        %v6300 = vunpack.c.l.b16 %v4165
        %v6301 = vunpack.c.h.b16 %v4165
        %v6302 = vunpack.c.l.b16 %v4166
        %v6303 = vunpack.c.h.b16 %v4166
        %v6304 = vunpack.c.l.b16 %v4167
        %v6305 = vunpack.c.h.b16 %v4167
        %v6306 = vunpack.c.l.b16 %v4168
        %v6307 = vunpack.c.l.b16 %v4169
        %v6308 = vunpack.c.h.b16 %v4169
        %v6309 = vunpack.c.l.b16 %v4170
        %v6310 = vunpack.c.h.b16 %v4170
        %v6311 = vunpack.c.l.b16 %v4171
        %v6312 = vunpack.c.h.b16 %v4171
        %v6313 = vunpack.c.l.b16 %v4172
        %v6314 = vunpack.c.h.b16 %v4172
        %v6315 = vunpack.c.l.b16 %v4173
        %v6316 = vunpack.c.h.b16 %v4173
        %v6317 = vunpack.c.l.b16 %v4174
        %v6318 = vunpack.c.h.b16 %v4174
        %v6319 = vunpack.c.l.b16 %v4175
        %v6320 = vunpack.c.h.b16 %v4175
        %v6321 = vunpack.c.l.b16 %v4176
        %v6322 = vunpack.c.h.b16 %v4176
        %v6323 = vunpack.c.l.b16 %v4177
        %v6324 = vunpack.c.h.b16 %v4177
        %v6325 = vunpack.c.l.b16 %v4178
        %v6326 = vunpack.c.h.b16 %v4178
        %v6327 = vunpack.c.l.b16 %v4179
        %v6328 = vunpack.c.h.b16 %v4179
        %v6329 = vunpack.c.l.b16 %v4180
        %v6330 = vunpack.c.h.b16 %v4180
        %v6331 = vunpack.c.l.b16 %v4181
        %v6332 = vunpack.c.h.b16 %v4181
        %v6333 = vunpack.c.l.b16 %v4182
        %v6334 = vunpack.c.h.b16 %v4182
        %v6335 = vunpack.c.l.b16 %v4183
        %v6336 = vunpack.c.h.b16 %v4183
        %v6337 = vunpack.c.l.b16 %v4184
        %v6338 = vunpack.c.l.b16 %v4185
        %v6339 = vunpack.c.h.b16 %v4185
        %v6340 = vunpack.c.l.b16 %v4186
        %v6341 = vunpack.c.h.b16 %v4186
        %v6342 = vunpack.c.l.b16 %v4187
        %v6343 = vunpack.c.h.b16 %v4187
        %v6344 = vunpack.c.l.b16 %v4188
        %v6345 = vunpack.c.h.b16 %v4188
        %v6346 = vunpack.c.l.b16 %v4189
        %v6347 = vunpack.c.h.b16 %v4189
        %v6348 = vunpack.c.l.b16 %v4190
        %v6349 = vunpack.c.h.b16 %v4190
        %v6350 = vunpack.c.l.b16 %v4191
        %v6351 = vunpack.c.h.b16 %v4191
        %v6352 = vunpack.c.l.b16 %v4192
        %v6353 = vunpack.c.h.b16 %v4192
        %v6354 = vunpack.c.l.b16 %v4193
        %v6355 = vunpack.c.h.b16 %v4193
        %v6356 = vunpack.c.l.b16 %v4194
        %v6357 = vunpack.c.h.b16 %v4194
        %v6358 = vunpack.c.l.b16 %v4195
        %v6359 = vunpack.c.h.b16 %v4195
        %v6360 = vunpack.c.l.b16 %v4196
        %v6361 = vunpack.c.h.b16 %v4196
        %v6362 = vunpack.c.l.b16 %v4197
        %v6363 = vunpack.c.h.b16 %v4197
        %v6364 = vunpack.c.l.b16 %v4198
        %v6365 = vunpack.c.h.b16 %v4198
        %v6366 = vunpack.c.l.b16 %v4199
        %v6367 = vunpack.c.h.b16 %v4199
        %v6368 = vunpack.c.l.b16 %v4200
        %v6369 = vunpack.c.l.b16 %v4201
        %v6370 = vunpack.c.h.b16 %v4201
        %v6371 = vunpack.c.l.b16 %v4202
        %v6372 = vunpack.c.h.b16 %v4202
        %v6373 = vunpack.c.l.b16 %v4203
        %v6374 = vunpack.c.h.b16 %v4203
        %v6375 = vunpack.c.l.b16 %v4204
        %v6376 = vunpack.c.h.b16 %v4204
        %v6377 = vunpack.c.l.b16 %v4205
        %v6378 = vunpack.c.h.b16 %v4205
        %v6379 = vunpack.c.l.b16 %v4206
        %v6380 = vunpack.c.h.b16 %v4206
        %v6381 = vunpack.c.l.b16 %v4207
        %v6382 = vunpack.c.h.b16 %v4207
        %v6383 = vunpack.c.l.b16 %v4208
        %v6384 = vunpack.c.h.b16 %v4208
        %v6385 = vunpack.c.l.b16 %v4209
        %v6386 = vunpack.c.h.b16 %v4209
        %v6387 = vunpack.c.l.b16 %v4210
        %v6388 = vunpack.c.h.b16 %v4210
        %v6389 = vunpack.c.l.b16 %v4211
        %v6390 = vunpack.c.h.b16 %v4211
        %v6391 = vunpack.c.l.b16 %v4212
        %v6392 = vunpack.c.h.b16 %v4212
        %v6393 = vunpack.c.l.b16 %v4213
        %v6394 = vunpack.c.h.b16 %v4213
        %v6395 = vunpack.c.l.b16 %v4214
        %v6396 = vunpack.c.h.b16 %v4214
        %v6397 = vunpack.c.l.b16 %v4215
        %v6398 = vunpack.c.h.b16 %v4215
        %v6399 = vunpack.c.l.b16 %v4216
        %v6400 = vunpack.c.l.b16 %v4217
        %v6401 = vunpack.c.h.b16 %v4217
        %v6402 = vunpack.c.l.b16 %v4218
        %v6403 = vunpack.c.h.b16 %v4218
        %v6404 = vunpack.c.l.b16 %v4219
        %v6405 = vunpack.c.h.b16 %v4219
        %v6406 = vunpack.c.l.b16 %v4220
        %v6407 = vunpack.c.h.b16 %v4220
        %v6408 = vunpack.c.l.b16 %v4221
        %v6409 = vunpack.c.h.b16 %v4221
        %v6410 = vunpack.c.l.b16 %v4222
        %v6411 = vunpack.c.h.b16 %v4222
        %v6412 = vunpack.c.l.b16 %v4223
        %v6413 = vunpack.c.h.b16 %v4223
        %v6414 = vunpack.c.l.b16 %v4224
        %v6415 = vunpack.c.h.b16 %v4224
        %v6416 = vunpack.c.l.b16 %v4225
        %v6417 = vunpack.c.h.b16 %v4225
        %v6418 = vunpack.c.l.b16 %v4226
        %v6419 = vunpack.c.h.b16 %v4226
        %v6420 = vunpack.c.l.b16 %v4227
        %v6421 = vunpack.c.h.b16 %v4227
        %v6422 = vunpack.c.l.b16 %v4228
        %v6423 = vunpack.c.h.b16 %v4228
        %v6424 = vunpack.c.l.b16 %v4229
        %v6425 = vunpack.c.h.b16 %v4229
        %v6426 = vunpack.c.l.b16 %v4230
        %v6427 = vunpack.c.h.b16 %v4230
        %v6428 = vunpack.c.l.b16 %v4231
        %v6429 = vunpack.c.h.b16 %v4231
        %v6430 = vunpack.c.l.b16 %v4232
        %v6431 = vunpack.c.l.b16 %v4233
        %v6432 = vunpack.c.h.b16 %v4233
        %v6433 = vunpack.c.l.b16 %v4234
        %v6434 = vunpack.c.h.b16 %v4234
        %v6435 = vunpack.c.l.b16 %v4235
        %v6436 = vunpack.c.h.b16 %v4235
        %v6437 = vunpack.c.l.b16 %v4236
        %v6438 = vunpack.c.h.b16 %v4236
        %v6439 = vunpack.c.l.b16 %v4237
        %v6440 = vunpack.c.h.b16 %v4237
        %v6441 = vunpack.c.l.b16 %v4238
        %v6442 = vunpack.c.h.b16 %v4238
        %v6443 = vunpack.c.l.b16 %v4239
        %v6444 = vunpack.c.h.b16 %v4239
        %v6445 = vunpack.c.l.b16 %v4240
        %v6446 = vunpack.c.h.b16 %v4240
        %v6447 = vunpack.c.l.b16 %v4241
        %v6448 = vunpack.c.h.b16 %v4241
        %v6449 = vunpack.c.l.b16 %v4242
        %v6450 = vunpack.c.h.b16 %v4242
        %v6451 = vunpack.c.l.b16 %v4243
        %v6452 = vunpack.c.h.b16 %v4243
        %v6453 = vunpack.c.l.b16 %v4244
        %v6454 = vunpack.c.h.b16 %v4244
        %v6455 = vunpack.c.l.b16 %v4245
        %v6456 = vunpack.c.h.b16 %v4245
        %v6457 = vunpack.c.l.b16 %v4246
        %v6458 = vunpack.c.h.b16 %v4246
        %v6459 = vunpack.c.l.b16 %v4247
        %v6460 = vunpack.c.h.b16 %v4247
        %v6461 = vunpack.c.l.b16 %v4248
        %v6462 = vunpack.c.l.b16 %v4249
        %v6463 = vunpack.c.h.b16 %v4249
        %v6464 = vunpack.c.l.b16 %v4250
        %v6465 = vunpack.c.h.b16 %v4250
        %v6466 = vunpack.c.l.b16 %v4251
        %v6467 = vunpack.c.h.b16 %v4251
        %v6468 = vunpack.c.l.b16 %v4252
        %v6469 = vunpack.c.h.b16 %v4252
        %v6470 = vunpack.c.l.b16 %v4253
        %v6471 = vunpack.c.h.b16 %v4253
        %v6472 = vunpack.c.l.b16 %v4254
        %v6473 = vunpack.c.h.b16 %v4254
        %v6474 = vunpack.c.l.b16 %v4255
        %v6475 = vunpack.c.h.b16 %v4255
        %v6476 = vunpack.c.l.b16 %v4256
        %v6477 = vunpack.c.h.b16 %v4256
        %v6478 = vunpack.c.l.b16 %v4257
        %v6479 = vunpack.c.h.b16 %v4257
        %v6480 = vunpack.c.l.b16 %v4258
        %v6481 = vunpack.c.h.b16 %v4258
        %v6482 = vunpack.c.l.b16 %v4259
        %v6483 = vunpack.c.h.b16 %v4259
        %v6484 = vunpack.c.l.b16 %v4260
        %v6485 = vunpack.c.h.b16 %v4260
        %v6486 = vunpack.c.l.b16 %v4261
        %v6487 = vunpack.c.h.b16 %v4261
        %v6488 = vunpack.c.l.b16 %v4262
        %v6489 = vunpack.c.h.b16 %v4262
        %v6490 = vunpack.c.l.b16 %v4263
        %v6491 = vunpack.c.h.b16 %v4263
        %v6492 = vunpack.c.l.b16 %v4264
        %v6493 = vunpack.c.l.b16 %v4265
        %v6494 = vunpack.c.h.b16 %v4265
        %v6495 = vunpack.c.l.b16 %v4266
        %v6496 = vunpack.c.h.b16 %v4266
        %v6497 = vunpack.c.l.b16 %v4267
        %v6498 = vunpack.c.h.b16 %v4267
        %v6499 = vunpack.c.l.b16 %v4268
        %v6500 = vunpack.c.h.b16 %v4268
        %v6501 = vunpack.c.l.b16 %v4269
        %v6502 = vunpack.c.h.b16 %v4269
        %v6503 = vunpack.c.l.b16 %v4270
        %v6504 = vunpack.c.h.b16 %v4270
        %v6505 = vunpack.c.l.b16 %v4271
        %v6506 = vunpack.c.h.b16 %v4271
        %v6507 = vunpack.c.l.b16 %v4272
        %v6508 = vunpack.c.h.b16 %v4272
        %v6509 = vunpack.c.l.b16 %v4273
        %v6510 = vunpack.c.h.b16 %v4273
        %v6511 = vunpack.c.l.b16 %v4274
        %v6512 = vunpack.c.h.b16 %v4274
        %v6513 = vunpack.c.l.b16 %v4275
        %v6514 = vunpack.c.h.b16 %v4275
        %v6515 = vunpack.c.l.b16 %v4276
        %v6516 = vunpack.c.h.b16 %v4276
        %v6517 = vunpack.c.l.b16 %v4277
        %v6518 = vunpack.c.h.b16 %v4277
        %v6519 = vunpack.c.l.b16 %v4278
        %v6520 = vunpack.c.h.b16 %v4278
        %v6521 = vunpack.c.l.b16 %v4279
        %v6522 = vunpack.c.h.b16 %v4279
        %v6523 = vunpack.c.l.b16 %v4280
        %v6524 = vunpack.c.l.b16 %v4281
        %v6525 = vunpack.c.h.b16 %v4281
        %v6526 = vunpack.c.l.b16 %v4282
        %v6527 = vunpack.c.h.b16 %v4282
        %v6528 = vunpack.c.l.b16 %v4283
        %v6529 = vunpack.c.h.b16 %v4283
        %v6530 = vunpack.c.l.b16 %v4284
        %v6531 = vunpack.c.h.b16 %v4284
        %v6532 = vunpack.c.l.b16 %v4285
        %v6533 = vunpack.c.h.b16 %v4285
        %v6534 = vunpack.c.l.b16 %v4286
        %v6535 = vunpack.c.h.b16 %v4286
        %v6536 = vunpack.c.l.b16 %v4287
        %v6537 = vunpack.c.h.b16 %v4287
        %v6538 = vunpack.c.l.b16 %v4288
        %v6539 = vunpack.c.h.b16 %v4288
        %v6540 = vunpack.c.l.b16 %v4289
        %v6541 = vunpack.c.h.b16 %v4289
        %v6542 = vunpack.c.l.b16 %v4290
        %v6543 = vunpack.c.h.b16 %v4290
        %v6544 = vunpack.c.l.b16 %v4291
        %v6545 = vunpack.c.h.b16 %v4291
        %v6546 = vunpack.c.l.b16 %v4292
        %v6547 = vunpack.c.h.b16 %v4292
        %v6548 = vunpack.c.l.b16 %v4293
        %v6549 = vunpack.c.h.b16 %v4293
        %v6550 = vunpack.c.l.b16 %v4294
        %v6551 = vunpack.c.h.b16 %v4294
        %v6552 = vunpack.c.l.b16 %v4295
        %v6553 = vunpack.c.h.b16 %v4295
        %v6554 = vunpack.c.l.b16 %v4296
        %v6555 = vunpack.c.l.b16 %v4297
        %v6556 = vunpack.c.h.b16 %v4297
        %v6557 = vunpack.c.l.b16 %v4298
        %v6558 = vunpack.c.h.b16 %v4298
        %v6559 = vunpack.c.l.b16 %v4299
        %v6560 = vunpack.c.h.b16 %v4299
        %v6561 = vunpack.c.l.b16 %v4300
        %v6562 = vunpack.c.h.b16 %v4300
        %v6563 = vunpack.c.l.b16 %v4301
        %v6564 = vunpack.c.h.b16 %v4301
        %v6565 = vunpack.c.l.b16 %v4302
        %v6566 = vunpack.c.h.b16 %v4302
        %v6567 = vunpack.c.l.b16 %v4303
        %v6568 = vunpack.c.h.b16 %v4303
        %v6569 = vunpack.c.l.b16 %v4304
        %v6570 = vunpack.c.h.b16 %v4304
        %v6571 = vunpack.c.l.b16 %v4305
        %v6572 = vunpack.c.h.b16 %v4305
        %v6573 = vunpack.c.l.b16 %v4306
        %v6574 = vunpack.c.h.b16 %v4306
        %v6575 = vunpack.c.l.b16 %v4307
        %v6576 = vunpack.c.h.b16 %v4307
        %v6577 = vunpack.c.l.b16 %v4308
        %v6578 = vunpack.c.h.b16 %v4308
        %v6579 = vunpack.c.l.b16 %v4309
        %v6580 = vunpack.c.h.b16 %v4309
        %v6581 = vunpack.c.l.b16 %v4310
        %v6582 = vunpack.c.h.b16 %v4310
        %v6583 = vunpack.c.l.b16 %v4311
        %v6584 = vunpack.c.h.b16 %v4311
        %v6585 = vunpack.c.l.b16 %v4312
        %v6586 = vunpack.c.l.b16 %v4313
        %v6587 = vunpack.c.h.b16 %v4313
        %v6588 = vunpack.c.l.b16 %v4314
        %v6589 = vunpack.c.h.b16 %v4314
        %v6590 = vunpack.c.l.b16 %v4315
        %v6591 = vunpack.c.h.b16 %v4315
        %v6592 = vunpack.c.l.b16 %v4316
        %v6593 = vunpack.c.h.b16 %v4316
        %v6594 = vunpack.c.l.b16 %v4317
        %v6595 = vunpack.c.h.b16 %v4317
        %v6596 = vunpack.c.l.b16 %v4318
        %v6597 = vunpack.c.h.b16 %v4318
        %v6598 = vunpack.c.l.b16 %v4319
        %v6599 = vunpack.c.h.b16 %v4319
        %v6600 = vunpack.c.l.b16 %v4320
        %v6601 = vunpack.c.h.b16 %v4320
        %v6602 = vunpack.c.l.b16 %v4321
        %v6603 = vunpack.c.h.b16 %v4321
        %v6604 = vunpack.c.l.b16 %v4322
        %v6605 = vunpack.c.h.b16 %v4322
        %v6606 = vunpack.c.l.b16 %v4323
        %v6607 = vunpack.c.h.b16 %v4323
        %v6608 = vunpack.c.l.b16 %v4324
        %v6609 = vunpack.c.h.b16 %v4324
        %v6610 = vunpack.c.l.b16 %v4325
        %v6611 = vunpack.c.h.b16 %v4325
        %v6612 = vunpack.c.l.b16 %v4326
        %v6613 = vunpack.c.h.b16 %v4326
        %v6614 = vunpack.c.l.b16 %v4327
        %v6615 = vunpack.c.h.b16 %v4327
        %v6616 = vunpack.c.l.b16 %v4328
        %v6617 = vunpack.c.l.b16 %v4329
        %v6618 = vunpack.c.h.b16 %v4329
        %v6619 = vunpack.c.l.b16 %v4330
        %v6620 = vunpack.c.h.b16 %v4330
        %v6621 = vunpack.c.l.b16 %v4331
        %v6622 = vunpack.c.h.b16 %v4331
        %v6623 = vunpack.c.l.b16 %v4332
        %v6624 = vunpack.c.h.b16 %v4332
        %v6625 = vunpack.c.l.b16 %v4333
        %v6626 = vunpack.c.h.b16 %v4333
        %v6627 = vunpack.c.l.b16 %v4334
        %v6628 = vunpack.c.h.b16 %v4334
        %v6629 = vunpack.c.l.b16 %v4335
        %v6630 = vunpack.c.h.b16 %v4335
        %v6631 = vunpack.c.l.b16 %v4336
        %v6632 = vunpack.c.h.b16 %v4336
        %v6633 = vunpack.c.l.b16 %v4337
        %v6634 = vunpack.c.h.b16 %v4337
        %v6635 = vunpack.c.l.b16 %v4338
        %v6636 = vunpack.c.h.b16 %v4338
        %v6637 = vunpack.c.l.b16 %v4339
        %v6638 = vunpack.c.h.b16 %v4339
        %v6639 = vunpack.c.l.b16 %v4340
        %v6640 = vunpack.c.h.b16 %v4340
        %v6641 = vunpack.c.l.b16 %v4341
        %v6642 = vunpack.c.h.b16 %v4341
        %v6643 = vunpack.c.l.b16 %v4342
        %v6644 = vunpack.c.h.b16 %v4342
        %v6645 = vunpack.c.l.b16 %v4343
        %v6646 = vunpack.c.h.b16 %v4343
        %v6647 = vunpack.c.l.b16 %v4344
        %v6648 = vunpack.c.l.b16 %v4345
        %v6649 = vunpack.c.h.b16 %v4345
        %v6650 = vunpack.c.l.b16 %v4346
        %v6651 = vunpack.c.h.b16 %v4346
        %v6652 = vunpack.c.l.b16 %v4347
        %v6653 = vunpack.c.h.b16 %v4347
        %v6654 = vunpack.c.l.b16 %v4348
        %v6655 = vunpack.c.h.b16 %v4348
        %v6656 = vunpack.c.l.b16 %v4349
        %v6657 = vunpack.c.h.b16 %v4349
        %v6658 = vunpack.c.l.b16 %v4350
        %v6659 = vunpack.c.h.b16 %v4350
        %v6660 = vunpack.c.l.b16 %v4351
        %v6661 = vunpack.c.h.b16 %v4351
        %v6662 = vunpack.c.l.b16 %v4352
        %v6663 = vunpack.c.h.b16 %v4352
        %v6664 = vunpack.c.l.b16 %v4353
        %v6665 = vunpack.c.h.b16 %v4353
        %v6666 = vunpack.c.l.b16 %v4354
        %v6667 = vunpack.c.h.b16 %v4354
        %v6668 = vunpack.c.l.b16 %v4355
        %v6669 = vunpack.c.h.b16 %v4355
        %v6670 = vunpack.c.l.b16 %v4356
        %v6671 = vunpack.c.h.b16 %v4356
        %v6672 = vunpack.c.l.b16 %v4357
        %v6673 = vunpack.c.h.b16 %v4357
        %v6674 = vunpack.c.l.b16 %v4358
        %v6675 = vunpack.c.h.b16 %v4358
        %v6676 = vunpack.c.l.b16 %v4359
        %v6677 = vunpack.c.h.b16 %v4359
        %v6678 = vunpack.c.l.b16 %v4360
        %v6679 = vunpack.c.l.b16 %v4361
        %v6680 = vunpack.c.h.b16 %v4361
        %v6681 = vunpack.c.l.b16 %v4362
        %v6682 = vunpack.c.h.b16 %v4362
        %v6683 = vunpack.c.l.b16 %v4363
        %v6684 = vunpack.c.h.b16 %v4363
        %v6685 = vunpack.c.l.b16 %v4364
        %v6686 = vunpack.c.h.b16 %v4364
        %v6687 = vunpack.c.l.b16 %v4365
        %v6688 = vunpack.c.h.b16 %v4365
        %v6689 = vunpack.c.l.b16 %v4366
        %v6690 = vunpack.c.h.b16 %v4366
        %v6691 = vunpack.c.l.b16 %v4367
        %v6692 = vunpack.c.h.b16 %v4367
        %v6693 = vunpack.c.l.b16 %v4368
        %v6694 = vunpack.c.h.b16 %v4368
        %v6695 = vunpack.c.l.b16 %v4369
        %v6696 = vunpack.c.h.b16 %v4369
        %v6697 = vunpack.c.l.b16 %v4370
        %v6698 = vunpack.c.h.b16 %v4370
        %v6699 = vunpack.c.l.b16 %v4371
        %v6700 = vunpack.c.h.b16 %v4371
        %v6701 = vunpack.c.l.b16 %v4372
        %v6702 = vunpack.c.h.b16 %v4372
        %v6703 = vunpack.c.l.b16 %v4373
        %v6704 = vunpack.c.h.b16 %v4373
        %v6705 = vunpack.c.l.b16 %v4374
        %v6706 = vunpack.c.h.b16 %v4374
        %v6707 = vunpack.c.l.b16 %v4375
        %v6708 = vunpack.c.h.b16 %v4375
        %v6709 = vunpack.c.l.b16 %v4376
        %v6710 = vunpack.c.l.b16 %v4377
        %v6711 = vunpack.c.h.b16 %v4377
        %v6712 = vunpack.c.l.b16 %v4378
        %v6713 = vunpack.c.h.b16 %v4378
        %v6714 = vunpack.c.l.b16 %v4379
        %v6715 = vunpack.c.h.b16 %v4379
        %v6716 = vunpack.c.l.b16 %v4380
        %v6717 = vunpack.c.h.b16 %v4380
        %v6718 = vunpack.c.l.b16 %v4381
        %v6719 = vunpack.c.h.b16 %v4381
        %v6720 = vunpack.c.l.b16 %v4382
        %v6721 = vunpack.c.h.b16 %v4382
        %v6722 = vunpack.c.l.b16 %v4383
        %v6723 = vunpack.c.h.b16 %v4383
        %v6724 = vunpack.c.l.b16 %v4384
        %v6725 = vunpack.c.h.b16 %v4384
        %v6726 = vunpack.c.l.b16 %v4385
        %v6727 = vunpack.c.h.b16 %v4385
        %v6728 = vunpack.c.l.b16 %v4386
        %v6729 = vunpack.c.h.b16 %v4386
        %v6730 = vunpack.c.l.b16 %v4387
        %v6731 = vunpack.c.h.b16 %v4387
        %v6732 = vunpack.c.l.b16 %v4388
        %v6733 = vunpack.c.h.b16 %v4388
        %v6734 = vunpack.c.l.b16 %v4389
        %v6735 = vunpack.c.h.b16 %v4389
        %v6736 = vunpack.c.l.b16 %v4390
        %v6737 = vunpack.c.h.b16 %v4390
        %v6738 = vunpack.c.l.b16 %v4391
        %v6739 = vunpack.c.h.b16 %v4391
        %v6740 = vunpack.c.l.b16 %v4392
        %v6741 = vunpack.c.l.b16 %v4393
        %v6742 = vunpack.c.h.b16 %v4393
        %v6743 = vunpack.c.l.b16 %v4394
        %v6744 = vunpack.c.h.b16 %v4394
        %v6745 = vunpack.c.l.b16 %v4395
        %v6746 = vunpack.c.h.b16 %v4395
        %v6747 = vunpack.c.l.b16 %v4396
        %v6748 = vunpack.c.h.b16 %v4396
        %v6749 = vunpack.c.l.b16 %v4397
        %v6750 = vunpack.c.h.b16 %v4397
        %v6751 = vunpack.c.l.b16 %v4398
        %v6752 = vunpack.c.h.b16 %v4398
        %v6753 = vunpack.c.l.b16 %v4399
        %v6754 = vunpack.c.h.b16 %v4399
        %v6755 = vunpack.c.l.b16 %v4400
        %v6756 = vunpack.c.h.b16 %v4400
        %v6757 = vunpack.c.l.b16 %v4401
        %v6758 = vunpack.c.h.b16 %v4401
        %v6759 = vunpack.c.l.b16 %v4402
        %v6760 = vunpack.c.h.b16 %v4402
        %v6761 = vunpack.c.l.b16 %v4403
        %v6762 = vunpack.c.h.b16 %v4403
        %v6763 = vunpack.c.l.b16 %v4404
        %v6764 = vunpack.c.h.b16 %v4404
        %v6765 = vunpack.c.l.b16 %v4405
        %v6766 = vunpack.c.h.b16 %v4405
        %v6767 = vunpack.c.l.b16 %v4406
        %v6768 = vunpack.c.h.b16 %v4406
        %v6769 = vunpack.c.l.b16 %v4407
        %v6770 = vunpack.c.h.b16 %v4407
        %v6771 = vunpack.c.l.b16 %v4408
        %v6772 = vunpack.c.l.b16 %v4409
        %v6773 = vunpack.c.h.b16 %v4409
        %v6774 = vunpack.c.l.b16 %v4410
        %v6775 = vunpack.c.h.b16 %v4410
        %v6776 = vunpack.c.l.b16 %v4411
        %v6777 = vunpack.c.h.b16 %v4411
        %v6778 = vunpack.c.l.b16 %v4412
        %v6779 = vunpack.c.h.b16 %v4412
        %v6780 = vunpack.c.l.b16 %v4413
        %v6781 = vunpack.c.h.b16 %v4413
        %v6782 = vunpack.c.l.b16 %v4414
        %v6783 = vunpack.c.h.b16 %v4414
        %v6784 = vunpack.c.l.b16 %v4415
        %v6785 = vunpack.c.h.b16 %v4415
        %v6786 = vunpack.c.l.b16 %v4416
        %v6787 = vunpack.c.h.b16 %v4416
        %v6788 = vunpack.c.l.b16 %v4417
        %v6789 = vunpack.c.h.b16 %v4417
        %v6790 = vunpack.c.l.b16 %v4418
        %v6791 = vunpack.c.h.b16 %v4418
        %v6792 = vunpack.c.l.b16 %v4419
        %v6793 = vunpack.c.h.b16 %v4419
        %v6794 = vunpack.c.l.b16 %v4420
        %v6795 = vunpack.c.h.b16 %v4420
        %v6796 = vunpack.c.l.b16 %v4421
        %v6797 = vunpack.c.h.b16 %v4421
        %v6798 = vunpack.c.l.b16 %v4422
        %v6799 = vunpack.c.h.b16 %v4422
        %v6800 = vunpack.c.l.b16 %v4423
        %v6801 = vunpack.c.h.b16 %v4423
        %v6802 = vunpack.c.l.b16 %v4424
        %v6803 = vunpack.c.l.b16 %v4425
        %v6804 = vunpack.c.h.b16 %v4425
        %v6805 = vunpack.c.l.b16 %v4426
        %v6806 = vunpack.c.h.b16 %v4426
        %v6807 = vunpack.c.l.b16 %v4427
        %v6808 = vunpack.c.h.b16 %v4427
        %v6809 = vunpack.c.l.b16 %v4428
        %v6810 = vunpack.c.h.b16 %v4428
        %v6811 = vunpack.c.l.b16 %v4429
        %v6812 = vunpack.c.h.b16 %v4429
        %v6813 = vunpack.c.l.b16 %v4430
        %v6814 = vunpack.c.h.b16 %v4430
        %v6815 = vunpack.c.l.b16 %v4431
        %v6816 = vunpack.c.h.b16 %v4431
        %v6817 = vunpack.c.l.b16 %v4432
        %v6818 = vunpack.c.h.b16 %v4432
        %v6819 = vunpack.c.l.b16 %v4433
        %v6820 = vunpack.c.h.b16 %v4433
        %v6821 = vunpack.c.l.b16 %v4434
        %v6822 = vunpack.c.h.b16 %v4434
        %v6823 = vunpack.c.l.b16 %v4435
        %v6824 = vunpack.c.h.b16 %v4435
        %v6825 = vunpack.c.l.b16 %v4436
        %v6826 = vunpack.c.h.b16 %v4436
        %v6827 = vunpack.c.l.b16 %v4437
        %v6828 = vunpack.c.h.b16 %v4437
        %v6829 = vunpack.c.l.b16 %v4438
        %v6830 = vunpack.c.h.b16 %v4438
        %v6831 = vunpack.c.l.b16 %v4439
        %v6832 = vunpack.c.h.b16 %v4439
        %v6833 = vunpack.c.l.b16 %v4440
        %v6834 = vunpack.c.l.b16 %v4441
        %v6835 = vunpack.c.h.b16 %v4441
        %v6836 = vunpack.c.l.b16 %v4442
        %v6837 = vunpack.c.h.b16 %v4442
        %v6838 = vunpack.c.l.b16 %v4443
        %v6839 = vunpack.c.h.b16 %v4443
        %v6840 = vunpack.c.l.b16 %v4444
        %v6841 = vunpack.c.h.b16 %v4444
        %v6842 = vunpack.c.l.b16 %v4445
        %v6843 = vunpack.c.h.b16 %v4445
        %v6844 = vunpack.c.l.b16 %v4446
        %v6845 = vunpack.c.h.b16 %v4446
        %v6846 = vunpack.c.l.b16 %v4447
        %v6847 = vunpack.c.h.b16 %v4447
        %v6848 = vunpack.c.l.b16 %v4448
        %v6849 = vunpack.c.h.b16 %v4448
        %v6850 = vunpack.c.l.b16 %v4449
        %v6851 = vunpack.c.h.b16 %v4449
        %v6852 = vunpack.c.l.b16 %v4450
        %v6853 = vunpack.c.h.b16 %v4450
        %v6854 = vunpack.c.l.b16 %v4451
        %v6855 = vunpack.c.h.b16 %v4451
        %v6856 = vunpack.c.l.b16 %v4452
        %v6857 = vunpack.c.h.b16 %v4452
        %v6858 = vunpack.c.l.b16 %v4453
        %v6859 = vunpack.c.h.b16 %v4453
        %v6860 = vunpack.c.l.b16 %v4454
        %v6861 = vunpack.c.h.b16 %v4454
        %v6862 = vunpack.c.l.b16 %v4455
        %v6863 = vunpack.c.h.b16 %v4455
        %v6864 = vunpack.c.l.b16 %v4456
        %v6865 = vunpack.c.l.b16 %v4457
        %v6866 = vunpack.c.h.b16 %v4457
        %v6867 = vunpack.c.l.b16 %v4458
        %v6868 = vunpack.c.h.b16 %v4458
        %v6869 = vunpack.c.l.b16 %v4459
        %v6870 = vunpack.c.h.b16 %v4459
        %v6871 = vunpack.c.l.b16 %v4460
        %v6872 = vunpack.c.h.b16 %v4460
        %v6873 = vunpack.c.l.b16 %v4461
        %v6874 = vunpack.c.h.b16 %v4461
        %v6875 = vunpack.c.l.b16 %v4462
        %v6876 = vunpack.c.h.b16 %v4462
        %v6877 = vunpack.c.l.b16 %v4463
        %v6878 = vunpack.c.h.b16 %v4463
        %v6879 = vunpack.c.l.b16 %v4464
        %v6880 = vunpack.c.h.b16 %v4464
        %v6881 = vunpack.c.l.b16 %v4465
        %v6882 = vunpack.c.h.b16 %v4465
        %v6883 = vunpack.c.l.b16 %v4466
        %v6884 = vunpack.c.h.b16 %v4466
        %v6885 = vunpack.c.l.b16 %v4467
        %v6886 = vunpack.c.h.b16 %v4467
        %v6887 = vunpack.c.l.b16 %v4468
        %v6888 = vunpack.c.h.b16 %v4468
        %v6889 = vunpack.c.l.b16 %v4469
        %v6890 = vunpack.c.h.b16 %v4469
        %v6891 = vunpack.c.l.b16 %v4470
        %v6892 = vunpack.c.h.b16 %v4470
        %v6893 = vunpack.c.l.b16 %v4471
        %v6894 = vunpack.c.h.b16 %v4471
        %v6895 = vunpack.c.l.b16 %v4472
        %v6896 = vunpack.c.l.b16 %v4473
        %v6897 = vunpack.c.h.b16 %v4473
        %v6898 = vunpack.c.l.b16 %v4474
        %v6899 = vunpack.c.h.b16 %v4474
        %v6900 = vunpack.c.l.b16 %v4475
        %v6901 = vunpack.c.h.b16 %v4475
        %v6902 = vunpack.c.l.b16 %v4476
        %v6903 = vunpack.c.h.b16 %v4476
        %v6904 = vunpack.c.l.b16 %v4477
        %v6905 = vunpack.c.h.b16 %v4477
        %v6906 = vunpack.c.l.b16 %v4478
        %v6907 = vunpack.c.h.b16 %v4478
        %v6908 = vunpack.c.l.b16 %v4479
        %v6909 = vunpack.c.h.b16 %v4479
        %v6910 = vunpack.c.l.b16 %v4480
        %v6911 = vunpack.c.h.b16 %v4480
        %v6912 = vunpack.c.l.b16 %v4481
        %v6913 = vunpack.c.h.b16 %v4481
        %v6914 = vunpack.c.l.b16 %v4482
        %v6915 = vunpack.c.h.b16 %v4482
        %v6916 = vunpack.c.l.b16 %v4483
        %v6917 = vunpack.c.h.b16 %v4483
        %v6918 = vunpack.c.l.b16 %v4484
        %v6919 = vunpack.c.h.b16 %v4484
        %v6920 = vunpack.c.l.b16 %v4485
        %v6921 = vunpack.c.h.b16 %v4485
        %v6922 = vunpack.c.l.b16 %v4486
        %v6923 = vunpack.c.h.b16 %v4486
        %v6924 = vunpack.c.l.b16 %v4487
        %v6925 = vunpack.c.h.b16 %v4487
        %v6926 = vunpack.c.l.b16 %v4488
        %v6927 = vunpack.c.l.b16 %v4489
        %v6928 = vunpack.c.h.b16 %v4489
        %v6929 = vunpack.c.l.b16 %v4490
        %v6930 = vunpack.c.h.b16 %v4490
        %v6931 = vunpack.c.l.b16 %v4491
        %v6932 = vunpack.c.h.b16 %v4491
        %v6933 = vunpack.c.l.b16 %v4492
        %v6934 = vunpack.c.h.b16 %v4492
        %v6935 = vunpack.c.l.b16 %v4493
        %v6936 = vunpack.c.h.b16 %v4493
        %v6937 = vunpack.c.l.b16 %v4494
        %v6938 = vunpack.c.h.b16 %v4494
        %v6939 = vunpack.c.l.b16 %v4495
        %v6940 = vunpack.c.h.b16 %v4495
        %v6941 = vunpack.c.l.b16 %v4496
        %v6942 = vunpack.c.h.b16 %v4496
        %v6943 = vunpack.c.l.b16 %v4497
        %v6944 = vunpack.c.h.b16 %v4497
        %v6945 = vunpack.c.l.b16 %v4498
        %v6946 = vunpack.c.h.b16 %v4498
        %v6947 = vunpack.c.l.b16 %v4499
        %v6948 = vunpack.c.h.b16 %v4499
        %v6949 = vunpack.c.l.b16 %v4500
        %v6950 = vunpack.c.h.b16 %v4500
        %v6951 = vunpack.c.l.b16 %v4501
        %v6952 = vunpack.c.h.b16 %v4501
        %v6953 = vunpack.c.l.b16 %v4502
        %v6954 = vunpack.c.h.b16 %v4502
        %v6955 = vunpack.c.l.b16 %v4503
        %v6956 = vunpack.c.h.b16 %v4503
        %v6957 = vunpack.c.l.b16 %v4504
        %v6958 = vunpack.c.l.b16 %v4505
        %v6959 = vunpack.c.h.b16 %v4505
        %v6960 = vunpack.c.l.b16 %v4506
        %v6961 = vunpack.c.h.b16 %v4506
        %v6962 = vunpack.c.l.b16 %v4507
        %v6963 = vunpack.c.h.b16 %v4507
        %v6964 = vunpack.c.l.b16 %v4508
        %v6965 = vunpack.c.h.b16 %v4508
        %v6966 = vunpack.c.l.b16 %v4509
        %v6967 = vunpack.c.h.b16 %v4509
        %v6968 = vunpack.c.l.b16 %v4510
        %v6969 = vunpack.c.h.b16 %v4510
        %v6970 = vunpack.c.l.b16 %v4511
        %v6971 = vunpack.c.h.b16 %v4511
        %v6972 = vunpack.c.l.b16 %v4512
        %v6973 = vunpack.c.h.b16 %v4512
        %v6974 = vunpack.c.l.b16 %v4513
        %v6975 = vunpack.c.h.b16 %v4513
        %v6976 = vunpack.c.l.b16 %v4514
        %v6977 = vunpack.c.h.b16 %v4514
        %v6978 = vunpack.c.l.b16 %v4515
        %v6979 = vunpack.c.h.b16 %v4515
        %v6980 = vunpack.c.l.b16 %v4516
        %v6981 = vunpack.c.h.b16 %v4516
        %v6982 = vunpack.c.l.b16 %v4517
        %v6983 = vunpack.c.h.b16 %v4517
        %v6984 = vunpack.c.l.b16 %v4518
        %v6985 = vunpack.c.h.b16 %v4518
        %v6986 = vunpack.c.l.b16 %v4519
        %v6987 = vunpack.c.h.b16 %v4519
        %v6988 = vunpack.c.l.b16 %v4520
        %v6989 = vunpack.c.l.b16 %v4521
        %v6990 = vunpack.c.h.b16 %v4521
        %v6991 = vunpack.c.l.b16 %v4522
        %v6992 = vunpack.c.h.b16 %v4522
        %v6993 = vunpack.c.l.b16 %v4523
        %v6994 = vunpack.c.h.b16 %v4523
        %v6995 = vunpack.c.l.b16 %v4524
        %v6996 = vunpack.c.h.b16 %v4524
        %v6997 = vunpack.c.l.b16 %v4525
        %v6998 = vunpack.c.h.b16 %v4525
        %v6999 = vunpack.c.l.b16 %v4526
        %v7000 = vunpack.c.h.b16 %v4526
        %v7001 = vunpack.c.l.b16 %v4527
        %v7002 = vunpack.c.h.b16 %v4527
        %v7003 = vunpack.c.l.b16 %v4528
        %v7004 = vunpack.c.h.b16 %v4528
        %v7005 = vunpack.c.l.b16 %v4529
        %v7006 = vunpack.c.h.b16 %v4529
        %v7007 = vunpack.c.l.b16 %v4530
        %v7008 = vunpack.c.h.b16 %v4530
        %v7009 = vunpack.c.l.b16 %v4531
        %v7010 = vunpack.c.h.b16 %v4531
        %v7011 = vunpack.c.l.b16 %v4532
        %v7012 = vunpack.c.h.b16 %v4532
        %v7013 = vunpack.c.l.b16 %v4533
        %v7014 = vunpack.c.h.b16 %v4533
        %v7015 = vunpack.c.l.b16 %v4534
        %v7016 = vunpack.c.h.b16 %v4534
        %v7017 = vunpack.c.l.b16 %v4535
        %v7018 = vunpack.c.h.b16 %v4535
        %v7019 = vunpack.c.l.b16 %v4536
        %v7020 = vunpack.c.l.b16 %v4537
        %v7021 = vunpack.c.h.b16 %v4537
        %v7022 = vunpack.c.l.b16 %v4538
        %v7023 = vunpack.c.h.b16 %v4538
        %v7024 = vunpack.c.l.b16 %v4539
        %v7025 = vunpack.c.h.b16 %v4539
        %v7026 = vunpack.c.l.b16 %v4540
        %v7027 = vunpack.c.h.b16 %v4540
        %v7028 = vunpack.c.l.b16 %v4541
        %v7029 = vunpack.c.h.b16 %v4541
        %v7030 = vunpack.c.l.b16 %v4542
        %v7031 = vunpack.c.h.b16 %v4542
        %v7032 = vunpack.c.l.b16 %v4543
        %v7033 = vunpack.c.h.b16 %v4543
        %v7034 = vunpack.c.l.b16 %v4544
        %v7035 = vunpack.c.h.b16 %v4544
        %v7036 = vunpack.c.l.b16 %v4545
        %v7037 = vunpack.c.h.b16 %v4545
        %v7038 = vunpack.c.l.b16 %v4546
        %v7039 = vunpack.c.h.b16 %v4546
        %v7040 = vunpack.c.l.b16 %v4547
        %v7041 = vunpack.c.h.b16 %v4547
        %v7042 = vunpack.c.l.b16 %v4548
        %v7043 = vunpack.c.h.b16 %v4548
        %v7044 = vunpack.c.l.b16 %v4549
        %v7045 = vunpack.c.h.b16 %v4549
        %v7046 = vunpack.c.l.b16 %v4550
        %v7047 = vunpack.c.h.b16 %v4550
        %v7048 = vunpack.c.l.b16 %v4551
        %v7049 = vunpack.c.h.b16 %v4551
        %v7050 = vunpack.c.l.b16 %v4552
        %v7051 = vunpack.c.l.b16 %v4553
        %v7052 = vunpack.c.h.b16 %v4553
        %v7053 = vunpack.c.l.b16 %v4554
        %v7054 = vunpack.c.h.b16 %v4554
        %v7055 = vunpack.c.l.b16 %v4555
        %v7056 = vunpack.c.h.b16 %v4555
        %v7057 = vunpack.c.l.b16 %v4556
        %v7058 = vunpack.c.h.b16 %v4556
        %v7059 = vunpack.c.l.b16 %v4557
        %v7060 = vunpack.c.h.b16 %v4557
        %v7061 = vunpack.c.l.b16 %v4558
        %v7062 = vunpack.c.h.b16 %v4558
        %v7063 = vunpack.c.l.b16 %v4559
        %v7064 = vunpack.c.h.b16 %v4559
        %v7065 = vunpack.c.l.b16 %v4560
        %v7066 = vunpack.c.h.b16 %v4560
        %v7067 = vunpack.c.l.b16 %v4561
        %v7068 = vunpack.c.h.b16 %v4561
        %v7069 = vunpack.c.l.b16 %v4562
        %v7070 = vunpack.c.h.b16 %v4562
        %v7071 = vunpack.c.l.b16 %v4563
        %v7072 = vunpack.c.h.b16 %v4563
        %v7073 = vunpack.c.l.b16 %v4564
        %v7074 = vunpack.c.h.b16 %v4564
        %v7075 = vunpack.c.l.b16 %v4565
        %v7076 = vunpack.c.h.b16 %v4565
        %v7077 = vunpack.c.l.b16 %v4566
        %v7078 = vunpack.c.h.b16 %v4566
        %v7079 = vunpack.c.l.b16 %v4567
        %v7080 = vunpack.c.h.b16 %v4567
        %v7081 = vunpack.c.l.b16 %v4568
        %v7082 = vunpack.c.l.b16 %v4569
        %v7083 = vunpack.c.h.b16 %v4569
        %v7084 = vunpack.c.l.b16 %v4570
        %v7085 = vunpack.c.h.b16 %v4570
        %v7086 = vunpack.c.l.b16 %v4571
        %v7087 = vunpack.c.h.b16 %v4571
        %v7088 = vunpack.c.l.b16 %v4572
        %v7089 = vunpack.c.h.b16 %v4572
        %v7090 = vunpack.c.l.b16 %v4573
        %v7091 = vunpack.c.h.b16 %v4573
        %v7092 = vunpack.c.l.b16 %v4574
        %v7093 = vunpack.c.h.b16 %v4574
        %v7094 = vunpack.c.l.b16 %v4575
        %v7095 = vunpack.c.h.b16 %v4575
        %v7096 = vunpack.c.l.b16 %v4576
        %v7097 = vunpack.c.h.b16 %v4576
        %v7098 = vunpack.c.l.b16 %v4577
        %v7099 = vunpack.c.h.b16 %v4577
        %v7100 = vunpack.c.l.b16 %v4578
        %v7101 = vunpack.c.h.b16 %v4578
        %v7102 = vunpack.c.l.b16 %v4579
        %v7103 = vunpack.c.h.b16 %v4579
        %v7104 = vunpack.c.l.b16 %v4580
        %v7105 = vunpack.c.h.b16 %v4580
        %v7106 = vunpack.c.l.b16 %v4581
        %v7107 = vunpack.c.h.b16 %v4581
        %v7108 = vunpack.c.l.b16 %v4582
        %v7109 = vunpack.c.h.b16 %v4582
        %v7110 = vunpack.c.l.b16 %v4583
        %v7111 = vunpack.c.h.b16 %v4583
        %v7112 = vunpack.c.l.b16 %v4584
        %v7113 = vunpack.c.l.b16 %v4585
        %v7114 = vunpack.c.h.b16 %v4585
        %v7115 = vunpack.c.l.b16 %v4586
        %v7116 = vunpack.c.h.b16 %v4586
        %v7117 = vunpack.c.l.b16 %v4587
        %v7118 = vunpack.c.h.b16 %v4587
        %v7119 = vunpack.c.l.b16 %v4588
        %v7120 = vunpack.c.h.b16 %v4588
        %v7121 = vunpack.c.l.b16 %v4589
        %v7122 = vunpack.c.h.b16 %v4589
        %v7123 = vunpack.c.l.b16 %v4590
        %v7124 = vunpack.c.h.b16 %v4590
        %v7125 = vunpack.c.l.b16 %v4591
        %v7126 = vunpack.c.h.b16 %v4591
        %v7127 = vunpack.c.l.b16 %v4592
        %v7128 = vunpack.c.h.b16 %v4592
        %v7129 = vunpack.c.l.b16 %v4593
        %v7130 = vunpack.c.h.b16 %v4593
        %v7131 = vunpack.c.l.b16 %v4594
        %v7132 = vunpack.c.h.b16 %v4594
        %v7133 = vunpack.c.l.b16 %v4595
        %v7134 = vunpack.c.h.b16 %v4595
        %v7135 = vunpack.c.l.b16 %v4596
        %v7136 = vunpack.c.h.b16 %v4596
        %v7137 = vunpack.c.l.b16 %v4597
        %v7138 = vunpack.c.h.b16 %v4597
        %v7139 = vunpack.c.l.b16 %v4598
        %v7140 = vunpack.c.h.b16 %v4598
        %v7141 = vunpack.c.l.b16 %v4599
        %v7142 = vunpack.c.h.b16 %v4599
        %v7143 = vunpack.c.l.b16 %v4600
        %v7144 = vunpack.c.l.b16 %v4601
        %v7145 = vunpack.c.h.b16 %v4601
        %v7146 = vunpack.c.l.b16 %v4602
        %v7147 = vunpack.c.h.b16 %v4602
        %v7148 = vunpack.c.l.b16 %v4603
        %v7149 = vunpack.c.h.b16 %v4603
        %v7150 = vunpack.c.l.b16 %v4604
        %v7151 = vunpack.c.h.b16 %v4604
        %v7152 = vunpack.c.l.b16 %v4605
        %v7153 = vunpack.c.h.b16 %v4605
        %v7154 = vunpack.c.l.b16 %v4606
        %v7155 = vunpack.c.h.b16 %v4606
        %v7156 = vunpack.c.l.b16 %v4607
        %v7157 = vunpack.c.h.b16 %v4607
        %v7158 = vunpack.c.l.b16 %v4608
        %v7159 = vunpack.c.h.b16 %v4608
        %v7160 = vunpack.c.l.b16 %v4609
        %v7161 = vunpack.c.h.b16 %v4609
        %v7162 = vunpack.c.l.b16 %v4610
        %v7163 = vunpack.c.h.b16 %v4610
        %v7164 = vunpack.c.l.b16 %v4611
        %v7165 = vunpack.c.h.b16 %v4611
        %v7166 = vunpack.c.l.b16 %v4612
        %v7167 = vunpack.c.h.b16 %v4612
        %v7168 = vunpack.c.l.b16 %v4613
        %v7169 = vunpack.c.h.b16 %v4613
        %v7170 = vunpack.c.l.b16 %v4614
        %v7171 = vunpack.c.h.b16 %v4614
        %v7172 = vunpack.c.l.b16 %v4615
        %v7173 = vunpack.c.h.b16 %v4615
        %v7174 = vunpack.c.l.b16 %v4616
        %v7175 = vunpack.c.l.b16 %v4617
        %v7176 = vunpack.c.h.b16 %v4617
        %v7177 = vunpack.c.l.b16 %v4618
        %v7178 = vunpack.c.h.b16 %v4618
        %v7179 = vunpack.c.l.b16 %v4619
        %v7180 = vunpack.c.h.b16 %v4619
        %v7181 = vunpack.c.l.b16 %v4620
        %v7182 = vunpack.c.h.b16 %v4620
        %v7183 = vunpack.c.l.b16 %v4621
        %v7184 = vunpack.c.h.b16 %v4621
        %v7185 = vunpack.c.l.b16 %v4622
        %v7186 = vunpack.c.h.b16 %v4622
        %v7187 = vunpack.c.l.b16 %v4623
        %v7188 = vunpack.c.h.b16 %v4623
        %v7189 = vunpack.c.l.b16 %v4624
        %v7190 = vunpack.c.h.b16 %v4624
        %v7191 = vunpack.c.l.b16 %v4625
        %v7192 = vunpack.c.h.b16 %v4625
        %v7193 = vunpack.c.l.b16 %v4626
        %v7194 = vunpack.c.h.b16 %v4626
        %v7195 = vunpack.c.l.b16 %v4627
        %v7196 = vunpack.c.h.b16 %v4627
        %v7197 = vunpack.c.l.b16 %v4628
        %v7198 = vunpack.c.h.b16 %v4628
        %v7199 = vunpack.c.l.b16 %v4629
        %v7200 = vunpack.c.h.b16 %v4629
        %v7201 = vunpack.c.l.b16 %v4630
        %v7202 = vunpack.c.h.b16 %v4630
        %v7203 = vunpack.c.l.b16 %v4631
        %v7204 = vunpack.c.h.b16 %v4631
        %v7205 = vunpack.c.l.b16 %v4632
        %v7206 = vunpack.c.l.b16 %v4633
        %v7207 = vunpack.c.h.b16 %v4633
        %v7208 = vunpack.c.l.b16 %v4634
        %v7209 = vunpack.c.h.b16 %v4634
        %v7210 = vunpack.c.l.b16 %v4635
        %v7211 = vunpack.c.h.b16 %v4635
        %v7212 = vunpack.c.l.b16 %v4636
        %v7213 = vunpack.c.h.b16 %v4636
        %v7214 = vunpack.c.l.b16 %v4637
        %v7215 = vunpack.c.h.b16 %v4637
        %v7216 = vunpack.c.l.b16 %v4638
        %v7217 = vunpack.c.h.b16 %v4638
        %v7218 = vunpack.c.l.b16 %v4639
        %v7219 = vunpack.c.h.b16 %v4639
        %v7220 = vunpack.c.l.b16 %v4640
        %v7221 = vunpack.c.h.b16 %v4640
        %v7222 = vunpack.c.l.b16 %v4641
        %v7223 = vunpack.c.h.b16 %v4641
        %v7224 = vunpack.c.l.b16 %v4642
        %v7225 = vunpack.c.h.b16 %v4642
        %v7226 = vunpack.c.l.b16 %v4643
        %v7227 = vunpack.c.h.b16 %v4643
        %v7228 = vunpack.c.l.b16 %v4644
        %v7229 = vunpack.c.h.b16 %v4644
        %v7230 = vunpack.c.l.b16 %v4645
        %v7231 = vunpack.c.h.b16 %v4645
        %v7232 = vunpack.c.l.b16 %v4646
        %v7233 = vunpack.c.h.b16 %v4646
        %v7234 = vunpack.c.l.b16 %v4647
        %v7235 = vunpack.c.h.b16 %v4647
        %v7236 = vunpack.c.l.b16 %v4648
        %v7237 = vunpack.c.l.b16 %v4649
        %v7238 = vunpack.c.h.b16 %v4649
        %v7239 = vunpack.c.l.b16 %v4650
        %v7240 = vunpack.c.h.b16 %v4650
        %v7241 = vunpack.c.l.b16 %v4651
        %v7242 = vunpack.c.h.b16 %v4651
        %v7243 = vunpack.c.l.b16 %v4652
        %v7244 = vunpack.c.h.b16 %v4652
        %v7245 = vunpack.c.l.b16 %v4653
        %v7246 = vunpack.c.h.b16 %v4653
        %v7247 = vunpack.c.l.b16 %v4654
        %v7248 = vunpack.c.h.b16 %v4654
        %v7249 = vunpack.c.l.b16 %v4655
        %v7250 = vunpack.c.h.b16 %v4655
        %v7251 = vunpack.c.l.b16 %v4656
        %v7252 = vunpack.c.h.b16 %v4656
        %v7253 = vunpack.c.l.b16 %v4657
        %v7254 = vunpack.c.h.b16 %v4657
        %v7255 = vunpack.c.l.b16 %v4658
        %v7256 = vunpack.c.h.b16 %v4658
        %v7257 = vunpack.c.l.b16 %v4659
        %v7258 = vunpack.c.h.b16 %v4659
        %v7259 = vunpack.c.l.b16 %v4660
        %v7260 = vunpack.c.h.b16 %v4660
        %v7261 = vunpack.c.l.b16 %v4661
        %v7262 = vunpack.c.h.b16 %v4661
        %v7263 = vunpack.c.l.b16 %v4662
        %v7264 = vunpack.c.h.b16 %v4662
        %v7265 = vunpack.c.l.b16 %v4663
        %v7266 = vunpack.c.h.b16 %v4663
        %v7267 = vunpack.c.l.b16 %v4664
        %v7268 = vunpack.c.l.b16 %v4665
        %v7269 = vunpack.c.h.b16 %v4665
        %v7270 = vunpack.c.l.b16 %v4666
        %v7271 = vunpack.c.h.b16 %v4666
        %v7272 = vunpack.c.l.b16 %v4667
        %v7273 = vunpack.c.h.b16 %v4667
        %v7274 = vunpack.c.l.b16 %v4668
        %v7275 = vunpack.c.h.b16 %v4668
        %v7276 = vunpack.c.l.b16 %v4669
        %v7277 = vunpack.c.h.b16 %v4669
        %v7278 = vunpack.c.l.b16 %v4670
        %v7279 = vunpack.c.h.b16 %v4670
        %v7280 = vunpack.c.l.b16 %v4671
        %v7281 = vunpack.c.h.b16 %v4671
        %v7282 = vunpack.c.l.b16 %v4672
        %v7283 = vunpack.c.h.b16 %v4672
        %v7284 = vunpack.c.l.b16 %v4673
        %v7285 = vunpack.c.h.b16 %v4673
        %v7286 = vunpack.c.l.b16 %v4674
        %v7287 = vunpack.c.h.b16 %v4674
        %v7288 = vunpack.c.l.b16 %v4675
        %v7289 = vunpack.c.h.b16 %v4675
        %v7290 = vunpack.c.l.b16 %v4676
        %v7291 = vunpack.c.h.b16 %v4676
        %v7292 = vunpack.c.l.b16 %v4677
        %v7293 = vunpack.c.h.b16 %v4677
        %v7294 = vunpack.c.l.b16 %v4678
        %v7295 = vunpack.c.h.b16 %v4678
        %v7296 = vunpack.c.l.b16 %v4679
        %v7297 = vunpack.c.h.b16 %v4679
        %v7298 = vunpack.c.l.b16 %v4680
        %v7299 = vunpack.c.l.b16 %v4681
        %v7300 = vunpack.c.h.b16 %v4681
        %v7301 = vunpack.c.l.b16 %v4682
        %v7302 = vunpack.c.h.b16 %v4682
        %v7303 = vunpack.c.l.b16 %v4683
        %v7304 = vunpack.c.h.b16 %v4683
        %v7305 = vunpack.c.l.b16 %v4684
        %v7306 = vunpack.c.h.b16 %v4684
        %v7307 = vunpack.c.l.b16 %v4685
        %v7308 = vunpack.c.h.b16 %v4685
        %v7309 = vunpack.c.l.b16 %v4686
        %v7310 = vunpack.c.h.b16 %v4686
        %v7311 = vunpack.c.l.b16 %v4687
        %v7312 = vunpack.c.h.b16 %v4687
        %v7313 = vunpack.c.l.b16 %v4688
        %v7314 = vunpack.c.h.b16 %v4688
        %v7315 = vunpack.c.l.b16 %v4689
        %v7316 = vunpack.c.h.b16 %v4689
        %v7317 = vunpack.c.l.b16 %v4690
        %v7318 = vunpack.c.h.b16 %v4690
        %v7319 = vunpack.c.l.b16 %v4691
        %v7320 = vunpack.c.h.b16 %v4691
        %v7321 = vunpack.c.l.b16 %v4692
        %v7322 = vunpack.c.h.b16 %v4692
        %v7323 = vunpack.c.l.b16 %v4693
        %v7324 = vunpack.c.h.b16 %v4693
        %v7325 = vunpack.c.l.b16 %v4694
        %v7326 = vunpack.c.h.b16 %v4694
        %v7327 = vunpack.c.l.b16 %v4695
        %v7328 = vunpack.c.h.b16 %v4695
        %v7329 = vunpack.c.l.b16 %v4696
        %v7330 = vunpack.c.l.b16 %v4697
        %v7331 = vunpack.c.h.b16 %v4697
        %v7332 = vunpack.c.l.b16 %v4698
        %v7333 = vunpack.c.h.b16 %v4698
        %v7334 = vunpack.c.l.b16 %v4699
        %v7335 = vunpack.c.h.b16 %v4699
        %v7336 = vunpack.c.l.b16 %v4700
        %v7337 = vunpack.c.h.b16 %v4700
        %v7338 = vunpack.c.l.b16 %v4701
        %v7339 = vunpack.c.h.b16 %v4701
        %v7340 = vunpack.c.l.b16 %v4702
        %v7341 = vunpack.c.h.b16 %v4702
        %v7342 = vunpack.c.l.b16 %v4703
        %v7343 = vunpack.c.h.b16 %v4703
        %v7344 = vunpack.c.l.b16 %v4704
        %v7345 = vunpack.c.h.b16 %v4704
        %v7346 = vunpack.c.l.b16 %v4705
        %v7347 = vunpack.c.h.b16 %v4705
        %v7348 = vunpack.c.l.b16 %v4706
        %v7349 = vunpack.c.h.b16 %v4706
        %v7350 = vunpack.c.l.b16 %v4707
        %v7351 = vunpack.c.h.b16 %v4707
        %v7352 = vunpack.c.l.b16 %v4708
        %v7353 = vunpack.c.h.b16 %v4708
        %v7354 = vunpack.c.l.b16 %v4709
        %v7355 = vunpack.c.h.b16 %v4709
        %v7356 = vunpack.c.l.b16 %v4710
        %v7357 = vunpack.c.h.b16 %v4710
        %v7358 = vunpack.c.l.b16 %v4711
        %v7359 = vunpack.c.h.b16 %v4711
        %v7360 = vunpack.c.l.b16 %v4712
        %v7361 = vunpack.c.l.b16 %v4713
        %v7362 = vunpack.c.h.b16 %v4713
        %v7363 = vunpack.c.l.b16 %v4714
        %v7364 = vunpack.c.h.b16 %v4714
        %v7365 = vunpack.c.l.b16 %v4715
        %v7366 = vunpack.c.h.b16 %v4715
        %v7367 = vunpack.c.l.b16 %v4716
        %v7368 = vunpack.c.h.b16 %v4716
        %v7369 = vunpack.c.l.b16 %v4717
        %v7370 = vunpack.c.h.b16 %v4717
        %v7371 = vunpack.c.l.b16 %v4718
        %v7372 = vunpack.c.h.b16 %v4718
        %v7373 = vunpack.c.l.b16 %v4719
        %v7374 = vunpack.c.h.b16 %v4719
        %v7375 = vunpack.c.l.b16 %v4720
        %v7376 = vunpack.c.h.b16 %v4720
        %v7377 = vunpack.c.l.b16 %v4721
        %v7378 = vunpack.c.h.b16 %v4721
        %v7379 = vunpack.c.l.b16 %v4722
        %v7380 = vunpack.c.h.b16 %v4722
        %v7381 = vunpack.c.l.b16 %v4723
        %v7382 = vunpack.c.h.b16 %v4723
        %v7383 = vunpack.c.l.b16 %v4724
        %v7384 = vunpack.c.h.b16 %v4724
        %v7385 = vunpack.c.l.b16 %v4725
        %v7386 = vunpack.c.h.b16 %v4725
        %v7387 = vunpack.c.l.b16 %v4726
        %v7388 = vunpack.c.h.b16 %v4726
        %v7389 = vunpack.c.l.b16 %v4727
        %v7390 = vunpack.c.h.b16 %v4727
        %v7391 = vunpack.c.l.b16 %v4728
        %v7392 = vunpack.c.l.b16 %v4729
        %v7393 = vunpack.c.h.b16 %v4729
        %v7394 = vunpack.c.l.b16 %v4730
        %v7395 = vunpack.c.h.b16 %v4730
        %v7396 = vunpack.c.l.b16 %v4731
        %v7397 = vunpack.c.h.b16 %v4731
        %v7398 = vunpack.c.l.b16 %v4732
        %v7399 = vunpack.c.h.b16 %v4732
        %v7400 = vunpack.c.l.b16 %v4733
        %v7401 = vunpack.c.h.b16 %v4733
        %v7402 = vunpack.c.l.b16 %v4734
        %v7403 = vunpack.c.h.b16 %v4734
        %v7404 = vunpack.c.l.b16 %v4735
        %v7405 = vunpack.c.h.b16 %v4735
        %v7406 = vunpack.c.l.b16 %v4736
        %v7407 = vunpack.c.h.b16 %v4736
        %v7408 = vunpack.c.l.b16 %v4737
        %v7409 = vunpack.c.h.b16 %v4737
        %v7410 = vunpack.c.l.b16 %v4738
        %v7411 = vunpack.c.h.b16 %v4738
        %v7412 = vunpack.c.l.b16 %v4739
        %v7413 = vunpack.c.h.b16 %v4739
        %v7414 = vunpack.c.l.b16 %v4740
        %v7415 = vunpack.c.h.b16 %v4740
        %v7416 = vunpack.c.l.b16 %v4741
        %v7417 = vunpack.c.h.b16 %v4741
        %v7418 = vunpack.c.l.b16 %v4742
        %v7419 = vunpack.c.h.b16 %v4742
        %v7420 = vunpack.c.l.b16 %v4743
        %v7421 = vunpack.c.h.b16 %v4743
        %v7422 = vunpack.c.l.b16 %v4744
        %v7423 = vunpack.c.l.b16 %v4745
        %v7424 = vunpack.c.h.b16 %v4745
        %v7425 = vunpack.c.l.b16 %v4746
        %v7426 = vunpack.c.h.b16 %v4746
        %v7427 = vunpack.c.l.b16 %v4747
        %v7428 = vunpack.c.h.b16 %v4747
        %v7429 = vunpack.c.l.b16 %v4748
        %v7430 = vunpack.c.h.b16 %v4748
        %v7431 = vunpack.c.l.b16 %v4749
        %v7432 = vunpack.c.h.b16 %v4749
        %v7433 = vunpack.c.l.b16 %v4750
        %v7434 = vunpack.c.h.b16 %v4750
        %v7435 = vunpack.c.l.b16 %v4751
        %v7436 = vunpack.c.h.b16 %v4751
        %v7437 = vunpack.c.l.b16 %v4752
        %v7438 = vunpack.c.h.b16 %v4752
        %v7439 = vunpack.c.l.b16 %v4753
        %v7440 = vunpack.c.h.b16 %v4753
        %v7441 = vunpack.c.l.b16 %v4754
        %v7442 = vunpack.c.h.b16 %v4754
        %v7443 = vunpack.c.l.b16 %v4755
        %v7444 = vunpack.c.h.b16 %v4755
        %v7445 = vunpack.c.l.b16 %v4756
        %v7446 = vunpack.c.h.b16 %v4756
        %v7447 = vunpack.c.l.b16 %v4757
        %v7448 = vunpack.c.h.b16 %v4757
        %v7449 = vunpack.c.l.b16 %v4758
        %v7450 = vunpack.c.h.b16 %v4758
        %v7451 = vunpack.c.l.b16 %v4759
        %v7452 = vunpack.c.h.b16 %v4759
        %v7453 = vunpack.c.l.b16 %v4760
        %v7454 = vunpack.c.l.b16 %v4761
        %v7455 = vunpack.c.h.b16 %v4761
        %v7456 = vunpack.c.l.b16 %v4762
        %v7457 = vunpack.c.h.b16 %v4762
        %v7458 = vunpack.c.l.b16 %v4763
        %v7459 = vunpack.c.h.b16 %v4763
        %v7460 = vunpack.c.l.b16 %v4764
        %v7461 = vunpack.c.h.b16 %v4764
        %v7462 = vunpack.c.l.b16 %v4765
        %v7463 = vunpack.c.h.b16 %v4765
        %v7464 = vunpack.c.l.b16 %v4766
        %v7465 = vunpack.c.h.b16 %v4766
        %v7466 = vunpack.c.l.b16 %v4767
        %v7467 = vunpack.c.h.b16 %v4767
        %v7468 = vunpack.c.l.b16 %v4768
        %v7469 = vunpack.c.h.b16 %v4768
        %v7470 = vunpack.c.l.b16 %v4769
        %v7471 = vunpack.c.h.b16 %v4769
        %v7472 = vunpack.c.l.b16 %v4770
        %v7473 = vunpack.c.h.b16 %v4770
        %v7474 = vunpack.c.l.b16 %v4771
        %v7475 = vunpack.c.h.b16 %v4771
        %v7476 = vunpack.c.l.b16 %v4772
        %v7477 = vunpack.c.h.b16 %v4772
        %v7478 = vunpack.c.l.b16 %v4773
        %v7479 = vunpack.c.h.b16 %v4773
        %v7480 = vunpack.c.l.b16 %v4774
        %v7481 = vunpack.c.h.b16 %v4774
        %v7482 = vunpack.c.l.b16 %v4775
        %v7483 = vunpack.c.h.b16 %v4775
        %v7484 = vunpack.c.l.b16 %v4776
        %v7485 = vunpack.c.l.b16 %v4777
        %v7486 = vunpack.c.h.b16 %v4777
        %v7487 = vunpack.c.l.b16 %v4778
        %v7488 = vunpack.c.h.b16 %v4778
        %v7489 = vunpack.c.l.b16 %v4779
        %v7490 = vunpack.c.h.b16 %v4779
        %v7491 = vunpack.c.l.b16 %v4780
        %v7492 = vunpack.c.h.b16 %v4780
        %v7493 = vunpack.c.l.b16 %v4781
        %v7494 = vunpack.c.h.b16 %v4781
        %v7495 = vunpack.c.l.b16 %v4782
        %v7496 = vunpack.c.h.b16 %v4782
        %v7497 = vunpack.c.l.b16 %v4783
        %v7498 = vunpack.c.h.b16 %v4783
        %v7499 = vunpack.c.l.b16 %v4784
        %v7500 = vunpack.c.h.b16 %v4784
        %v7501 = vunpack.c.l.b16 %v4785
        %v7502 = vunpack.c.h.b16 %v4785
        %v7503 = vunpack.c.l.b16 %v4786
        %v7504 = vunpack.c.h.b16 %v4786
        %v7505 = vunpack.c.l.b16 %v4787
        %v7506 = vunpack.c.h.b16 %v4787
        %v7507 = vunpack.c.l.b16 %v4788
        %v7508 = vunpack.c.h.b16 %v4788
        %v7509 = vunpack.c.l.b16 %v4789
        %v7510 = vunpack.c.h.b16 %v4789
        %v7511 = vunpack.c.l.b16 %v4790
        %v7512 = vunpack.c.h.b16 %v4790
        %v7513 = vunpack.c.l.b16 %v4791
        %v7514 = vunpack.c.h.b16 %v4791
        %v7515 = vunpack.c.l.b16 %v4792
        %v7516 = vunpack.c.l.b16 %v4793
        %v7517 = vunpack.c.h.b16 %v4793
        %v7518 = vunpack.c.l.b16 %v4794
        %v7519 = vunpack.c.h.b16 %v4794
        %v7520 = vunpack.c.l.b16 %v4795
        %v7521 = vunpack.c.h.b16 %v4795
        %v7522 = vunpack.c.l.b16 %v4796
        %v7523 = vunpack.c.h.b16 %v4796
        %v7524 = vunpack.c.l.b16 %v4797
        %v7525 = vunpack.c.h.b16 %v4797
        %v7526 = vunpack.c.l.b16 %v4798
        %v7527 = vunpack.c.h.b16 %v4798
        %v7528 = vunpack.c.l.b16 %v4799
        %v7529 = vunpack.c.h.b16 %v4799
        %v7530 = vunpack.c.l.b16 %v4800
        %v7531 = vunpack.c.h.b16 %v4800
        %v7532 = vunpack.c.l.b16 %v4801
        %v7533 = vunpack.c.h.b16 %v4801
        %v7534 = vunpack.c.l.b16 %v4802
        %v7535 = vunpack.c.h.b16 %v4802
        %v7536 = vunpack.c.l.b16 %v4803
        %v7537 = vunpack.c.h.b16 %v4803
        %v7538 = vunpack.c.l.b16 %v4804
        %v7539 = vunpack.c.h.b16 %v4804
        %v7540 = vunpack.c.l.b16 %v4805
        %v7541 = vunpack.c.h.b16 %v4805
        %v7542 = vunpack.c.l.b16 %v4806
        %v7543 = vunpack.c.h.b16 %v4806
        %v7544 = vunpack.c.l.b16 %v4807
        %v7545 = vunpack.c.h.b16 %v4807
        %v7546 = vunpack.c.l.b16 %v4808
        %v7547 = vunpack.c.l.b16 %v4809
        %v7548 = vunpack.c.h.b16 %v4809
        %v7549 = vunpack.c.l.b16 %v4810
        %v7550 = vunpack.c.h.b16 %v4810
        %v7551 = vunpack.c.l.b16 %v4811
        %v7552 = vunpack.c.h.b16 %v4811
        %v7553 = vunpack.c.l.b16 %v4812
        %v7554 = vunpack.c.h.b16 %v4812
        %v7555 = vunpack.c.l.b16 %v4813
        %v7556 = vunpack.c.h.b16 %v4813
        %v7557 = vunpack.c.l.b16 %v4814
        %v7558 = vunpack.c.h.b16 %v4814
        %v7559 = vunpack.c.l.b16 %v4815
        %v7560 = vunpack.c.h.b16 %v4815
        %v7561 = vunpack.c.l.b16 %v4816
        %v7562 = vunpack.c.h.b16 %v4816
        %v7563 = vunpack.c.l.b16 %v4817
        %v7564 = vunpack.c.h.b16 %v4817
        %v7565 = vunpack.c.l.b16 %v4818
        %v7566 = vunpack.c.h.b16 %v4818
        %v7567 = vunpack.c.l.b16 %v4819
        %v7568 = vunpack.c.h.b16 %v4819
        %v7569 = vunpack.c.l.b16 %v4820
        %v7570 = vunpack.c.h.b16 %v4820
        %v7571 = vunpack.c.l.b16 %v4821
        %v7572 = vunpack.c.h.b16 %v4821
        %v7573 = vunpack.c.l.b16 %v4822
        %v7574 = vunpack.c.h.b16 %v4822
        %v7575 = vunpack.c.l.b16 %v4823
        %v7576 = vunpack.c.h.b16 %v4823
        %v7577 = vunpack.c.l.b16 %v4824
        %v7578 = vunpack.c.l.b16 %v4825
        %v7579 = vunpack.c.h.b16 %v4825
        %v7580 = vunpack.c.l.b16 %v4826
        %v7581 = vunpack.c.h.b16 %v4826
        %v7582 = vunpack.c.l.b16 %v4827
        %v7583 = vunpack.c.h.b16 %v4827
        %v7584 = vunpack.c.l.b16 %v4828
        %v7585 = vunpack.c.h.b16 %v4828
        %v7586 = vunpack.c.l.b16 %v4829
        %v7587 = vunpack.c.h.b16 %v4829
        %v7588 = vunpack.c.l.b16 %v4830
        %v7589 = vunpack.c.h.b16 %v4830
        %v7590 = vunpack.c.l.b16 %v4831
        %v7591 = vunpack.c.h.b16 %v4831
        %v7592 = vunpack.c.l.b16 %v4832
        %v7593 = vunpack.c.h.b16 %v4832
        %v7594 = vunpack.c.l.b16 %v4833
        %v7595 = vunpack.c.h.b16 %v4833
        %v7596 = vunpack.c.l.b16 %v4834
        %v7597 = vunpack.c.h.b16 %v4834
        %v7598 = vunpack.c.l.b16 %v4835
        %v7599 = vunpack.c.h.b16 %v4835
        %v7600 = vunpack.c.l.b16 %v4836
        %v7601 = vunpack.c.h.b16 %v4836
        %v7602 = vunpack.c.l.b16 %v4837
        %v7603 = vunpack.c.h.b16 %v4837
        %v7604 = vunpack.c.l.b16 %v4838
        %v7605 = vunpack.c.h.b16 %v4838
        %v7606 = vunpack.c.l.b16 %v4839
        %v7607 = vunpack.c.h.b16 %v4839
        %v7608 = vunpack.c.l.b16 %v4840
        %v7609 = vunpack.c.l.b16 %v4841
        %v7610 = vunpack.c.h.b16 %v4841
        %v7611 = vunpack.c.l.b16 %v4842
        %v7612 = vunpack.c.h.b16 %v4842
        %v7613 = vunpack.c.l.b16 %v4843
        %v7614 = vunpack.c.h.b16 %v4843
        %v7615 = vunpack.c.l.b16 %v4844
        %v7616 = vunpack.c.h.b16 %v4844
        %v7617 = vunpack.c.l.b16 %v4845
        %v7618 = vunpack.c.h.b16 %v4845
        %v7619 = vunpack.c.l.b16 %v4846
        %v7620 = vunpack.c.h.b16 %v4846
        %v7621 = vunpack.c.l.b16 %v4847
        %v7622 = vunpack.c.h.b16 %v4847
        %v7623 = vunpack.c.l.b16 %v4848
        %v7624 = vunpack.c.h.b16 %v4848
        %v7625 = vunpack.c.l.b16 %v4849
        %v7626 = vunpack.c.h.b16 %v4849
        %v7627 = vunpack.c.l.b16 %v4850
        %v7628 = vunpack.c.h.b16 %v4850
        %v7629 = vunpack.c.l.b16 %v4851
        %v7630 = vunpack.c.h.b16 %v4851
        %v7631 = vunpack.c.l.b16 %v4852
        %v7632 = vunpack.c.h.b16 %v4852
        %v7633 = vunpack.c.l.b16 %v4853
        %v7634 = vunpack.c.h.b16 %v4853
        %v7635 = vunpack.c.l.b16 %v4854
        %v7636 = vunpack.c.h.b16 %v4854
        %v7637 = vunpack.c.l.b16 %v4855
        %v7638 = vunpack.c.h.b16 %v4855
        %v7639 = vunpack.c.l.b16 %v4856
        %v7640 = vunpack.c.l.b16 %v4857
        %v7641 = vunpack.c.h.b16 %v4857
        %v7642 = vunpack.c.l.b16 %v4858
        %v7643 = vunpack.c.h.b16 %v4858
        %v7644 = vunpack.c.l.b16 %v4859
        %v7645 = vunpack.c.h.b16 %v4859
        %v7646 = vunpack.c.l.b16 %v4860
        %v7647 = vunpack.c.h.b16 %v4860
        %v7648 = vunpack.c.l.b16 %v4861
        %v7649 = vunpack.c.h.b16 %v4861
        %v7650 = vunpack.c.l.b16 %v4862
        %v7651 = vunpack.c.h.b16 %v4862
        %v7652 = vunpack.c.l.b16 %v4863
        %v7653 = vunpack.c.h.b16 %v4863
        %v7654 = vunpack.c.l.b16 %v4864
        %v7655 = vunpack.c.h.b16 %v4864
        %v7656 = vunpack.c.l.b16 %v4865
        %v7657 = vunpack.c.h.b16 %v4865
        %v7658 = vunpack.c.l.b16 %v4866
        %v7659 = vunpack.c.h.b16 %v4866
        %v7660 = vunpack.c.l.b16 %v4867
        %v7661 = vunpack.c.h.b16 %v4867
        %v7662 = vunpack.c.l.b16 %v4868
        %v7663 = vunpack.c.h.b16 %v4868
        %v7664 = vunpack.c.l.b16 %v4869
        %v7665 = vunpack.c.h.b16 %v4869
        %v7666 = vunpack.c.l.b16 %v4870
        %v7667 = vunpack.c.h.b16 %v4870
        %v7668 = vunpack.c.l.b16 %v4871
        %v7669 = vunpack.c.h.b16 %v4871
        %v7670 = vunpack.c.l.b16 %v4872
        %v7671 = vunpack.c.l.b16 %v4873
        %v7672 = vunpack.c.h.b16 %v4873
        %v7673 = vunpack.c.l.b16 %v4874
        %v7674 = vunpack.c.h.b16 %v4874
        %v7675 = vunpack.c.l.b16 %v4875
        %v7676 = vunpack.c.h.b16 %v4875
        %v7677 = vunpack.c.l.b16 %v4876
        %v7678 = vunpack.c.h.b16 %v4876
        %v7679 = vunpack.c.l.b16 %v4877
        %v7680 = vunpack.c.h.b16 %v4877
        %v7681 = vunpack.c.l.b16 %v4878
        %v7682 = vunpack.c.h.b16 %v4878
        %v7683 = vunpack.c.l.b16 %v4879
        %v7684 = vunpack.c.h.b16 %v4879
        %v7685 = vunpack.c.l.b16 %v4880
        %v7686 = vunpack.c.h.b16 %v4880
        %v7687 = vunpack.c.l.b16 %v4881
        %v7688 = vunpack.c.h.b16 %v4881
        %v7689 = vunpack.c.l.b16 %v4882
        %v7690 = vunpack.c.h.b16 %v4882
        %v7691 = vunpack.c.l.b16 %v4883
        %v7692 = vunpack.c.h.b16 %v4883
        %v7693 = vunpack.c.l.b16 %v4884
        %v7694 = vunpack.c.h.b16 %v4884
        %v7695 = vunpack.c.l.b16 %v4885
        %v7696 = vunpack.c.h.b16 %v4885
        %v7697 = vunpack.c.l.b16 %v4886
        %v7698 = vunpack.c.h.b16 %v4886
        %v7699 = vunpack.c.l.b16 %v4887
        %v7700 = vunpack.c.h.b16 %v4887
        %v7701 = vunpack.c.l.b16 %v4888
        %v7702 = vunpack.c.l.b16 %v4889
        %v7703 = vunpack.c.h.b16 %v4889
        %v7704 = vunpack.c.l.b16 %v4890
        %v7705 = vunpack.c.h.b16 %v4890
        %v7706 = vunpack.c.l.b16 %v4891
        %v7707 = vunpack.c.h.b16 %v4891
        %v7708 = vunpack.c.l.b16 %v4892
        %v7709 = vunpack.c.h.b16 %v4892
        %v7710 = vunpack.c.l.b16 %v4893
        %v7711 = vunpack.c.h.b16 %v4893
        %v7712 = vunpack.c.l.b16 %v4894
        %v7713 = vunpack.c.h.b16 %v4894
        %v7714 = vunpack.c.l.b16 %v4895
        %v7715 = vunpack.c.h.b16 %v4895
        %v7716 = vunpack.c.l.b16 %v4896
        %v7717 = vunpack.c.h.b16 %v4896
        %v7718 = vunpack.c.l.b16 %v4897
        %v7719 = vunpack.c.h.b16 %v4897
        %v7720 = vunpack.c.l.b16 %v4898
        %v7721 = vunpack.c.h.b16 %v4898
        %v7722 = vunpack.c.l.b16 %v4899
        %v7723 = vunpack.c.h.b16 %v4899
        %v7724 = vunpack.c.l.b16 %v4900
        %v7725 = vunpack.c.h.b16 %v4900
        %v7726 = vunpack.c.l.b16 %v4901
        %v7727 = vunpack.c.h.b16 %v4901
        %v7728 = vunpack.c.l.b16 %v4902
        %v7729 = vunpack.c.h.b16 %v4902
        %v7730 = vunpack.c.l.b16 %v4903
        %v7731 = vunpack.c.h.b16 %v4903
        %v7732 = vunpack.c.l.b16 %v4904
        %v7733 = vunpack.c.l.b16 %v4905
        %v7734 = vunpack.c.h.b16 %v4905
        %v7735 = vunpack.c.l.b16 %v4906
        %v7736 = vunpack.c.h.b16 %v4906
        %v7737 = vunpack.c.l.b16 %v4907
        %v7738 = vunpack.c.h.b16 %v4907
        %v7739 = vunpack.c.l.b16 %v4908
        %v7740 = vunpack.c.h.b16 %v4908
        %v7741 = vunpack.c.l.b16 %v4909
        %v7742 = vunpack.c.h.b16 %v4909
        %v7743 = vunpack.c.l.b16 %v4910
        %v7744 = vunpack.c.h.b16 %v4910
        %v7745 = vunpack.c.l.b16 %v4911
        %v7746 = vunpack.c.h.b16 %v4911
        %v7747 = vunpack.c.l.b16 %v4912
        %v7748 = vunpack.c.h.b16 %v4912
        %v7749 = vunpack.c.l.b16 %v4913
        %v7750 = vunpack.c.h.b16 %v4913
        %v7751 = vunpack.c.l.b16 %v4914
        %v7752 = vunpack.c.h.b16 %v4914
        %v7753 = vunpack.c.l.b16 %v4915
        %v7754 = vunpack.c.h.b16 %v4915
        %v7755 = vunpack.c.l.b16 %v4916
        %v7756 = vunpack.c.h.b16 %v4916
        %v7757 = vunpack.c.l.b16 %v4917
        %v7758 = vunpack.c.h.b16 %v4917
        %v7759 = vunpack.c.l.b16 %v4918
        %v7760 = vunpack.c.h.b16 %v4918
        %v7761 = vunpack.c.l.b16 %v4919
        %v7762 = vunpack.c.h.b16 %v4919
        %v7763 = vunpack.c.l.b16 %v4920
        %v7764 = vunpack.c.l.b16 %v4921
        %v7765 = vunpack.c.h.b16 %v4921
        %v7766 = vunpack.c.l.b16 %v4922
        %v7767 = vunpack.c.h.b16 %v4922
        %v7768 = vunpack.c.l.b16 %v4923
        %v7769 = vunpack.c.h.b16 %v4923
        %v7770 = vunpack.c.l.b16 %v4924
        %v7771 = vunpack.c.h.b16 %v4924
        %v7772 = vunpack.c.l.b16 %v4925
        %v7773 = vunpack.c.h.b16 %v4925
        %v7774 = vunpack.c.l.b16 %v4926
        %v7775 = vunpack.c.h.b16 %v4926
        %v7776 = vunpack.c.l.b16 %v4927
        %v7777 = vunpack.c.h.b16 %v4927
        %v7778 = vunpack.c.l.b16 %v4928
        %v7779 = vunpack.c.h.b16 %v4928
        %v7780 = vunpack.c.l.b16 %v4929
        %v7781 = vunpack.c.h.b16 %v4929
        %v7782 = vunpack.c.l.b16 %v4930
        %v7783 = vunpack.c.h.b16 %v4930
        %v7784 = vunpack.c.l.b16 %v4931
        %v7785 = vunpack.c.h.b16 %v4931
        %v7786 = vunpack.c.l.b16 %v4932
        %v7787 = vunpack.c.h.b16 %v4932
        %v7788 = vunpack.c.l.b16 %v4933
        %v7789 = vunpack.c.h.b16 %v4933
        %v7790 = vunpack.c.l.b16 %v4934
        %v7791 = vunpack.c.h.b16 %v4934
        %v7792 = vunpack.c.l.b16 %v4935
        %v7793 = vunpack.c.h.b16 %v4935
        %v7794 = vunpack.c.l.b16 %v4936
        %v7795 = vunpack.c.l.b16 %v4937
        %v7796 = vunpack.c.h.b16 %v4937
        %v7797 = vunpack.c.l.b16 %v4938
        %v7798 = vunpack.c.h.b16 %v4938
        %v7799 = vunpack.c.l.b16 %v4939
        %v7800 = vunpack.c.h.b16 %v4939
        %v7801 = vunpack.c.l.b16 %v4940
        %v7802 = vunpack.c.h.b16 %v4940
        %v7803 = vunpack.c.l.b16 %v4941
        %v7804 = vunpack.c.h.b16 %v4941
        %v7805 = vunpack.c.l.b16 %v4942
        %v7806 = vunpack.c.h.b16 %v4942
        %v7807 = vunpack.c.l.b16 %v4943
        %v7808 = vunpack.c.h.b16 %v4943
        %v7809 = vunpack.c.l.b16 %v4944
        %v7810 = vunpack.c.h.b16 %v4944
        %v7811 = vunpack.c.l.b16 %v4945
        %v7812 = vunpack.c.h.b16 %v4945
        %v7813 = vunpack.c.l.b16 %v4946
        %v7814 = vunpack.c.h.b16 %v4946
        %v7815 = vunpack.c.l.b16 %v4947
        %v7816 = vunpack.c.h.b16 %v4947
        %v7817 = vunpack.c.l.b16 %v4948
        %v7818 = vunpack.c.h.b16 %v4948
        %v7819 = vunpack.c.l.b16 %v4949
        %v7820 = vunpack.c.h.b16 %v4949
        %v7821 = vunpack.c.l.b16 %v4950
        %v7822 = vunpack.c.h.b16 %v4950
        %v7823 = vunpack.c.l.b16 %v4951
        %v7824 = vunpack.c.h.b16 %v4951
        %v7825 = vunpack.c.l.b16 %v4952
        %v7826 = vunpack.c.l.b16 %v4953
        %v7827 = vunpack.c.h.b16 %v4953
        %v7828 = vunpack.c.l.b16 %v4954
        %v7829 = vunpack.c.h.b16 %v4954
        %v7830 = vunpack.c.l.b16 %v4955
        %v7831 = vunpack.c.h.b16 %v4955
        %v7832 = vunpack.c.l.b16 %v4956
        %v7833 = vunpack.c.h.b16 %v4956
        %v7834 = vunpack.c.l.b16 %v4957
        %v7835 = vunpack.c.h.b16 %v4957
        %v7836 = vunpack.c.l.b16 %v4958
        %v7837 = vunpack.c.h.b16 %v4958
        %v7838 = vunpack.c.l.b16 %v4959
        %v7839 = vunpack.c.h.b16 %v4959
        %v7840 = vunpack.c.l.b16 %v4960
        %v7841 = vunpack.c.h.b16 %v4960
        %v7842 = vunpack.c.l.b16 %v4961
        %v7843 = vunpack.c.h.b16 %v4961
        %v7844 = vunpack.c.l.b16 %v4962
        %v7845 = vunpack.c.h.b16 %v4962
        %v7846 = vunpack.c.l.b16 %v4963
        %v7847 = vunpack.c.h.b16 %v4963
        %v7848 = vunpack.c.l.b16 %v4964
        %v7849 = vunpack.c.h.b16 %v4964
        %v7850 = vunpack.c.l.b16 %v4965
        %v7851 = vunpack.c.h.b16 %v4965
        %v7852 = vunpack.c.l.b16 %v4966
        %v7853 = vunpack.c.h.b16 %v4966
        %v7854 = vunpack.c.l.b16 %v4967
        %v7855 = vunpack.c.h.b16 %v4967
        %v7856 = vunpack.c.l.b16 %v4968
        %v7857 = vunpack.c.l.b16 %v4969
        %v7858 = vunpack.c.h.b16 %v4969
        %v7859 = vunpack.c.l.b16 %v4970
        %v7860 = vunpack.c.h.b16 %v4970
        %v7861 = vunpack.c.l.b16 %v4971
        %v7862 = vunpack.c.h.b16 %v4971
        %v7863 = vunpack.c.l.b16 %v4972
        %v7864 = vunpack.c.h.b16 %v4972
        %v7865 = vunpack.c.l.b16 %v4973
        %v7866 = vunpack.c.h.b16 %v4973
        %v7867 = vunpack.c.l.b16 %v4974
        %v7868 = vunpack.c.h.b16 %v4974
        %v7869 = vunpack.c.l.b16 %v4975
        %v7870 = vunpack.c.h.b16 %v4975
        %v7871 = vunpack.c.l.b16 %v4976
        %v7872 = vunpack.c.h.b16 %v4976
        %v7873 = vunpack.c.l.b16 %v4977
        %v7874 = vunpack.c.h.b16 %v4977
        %v7875 = vunpack.c.l.b16 %v4978
        %v7876 = vunpack.c.h.b16 %v4978
        %v7877 = vunpack.c.l.b16 %v4979
        %v7878 = vunpack.c.h.b16 %v4979
        %v7879 = vunpack.c.l.b16 %v4980
        %v7880 = vunpack.c.h.b16 %v4980
        %v7881 = vunpack.c.l.b16 %v4981
        %v7882 = vunpack.c.h.b16 %v4981
        %v7883 = vunpack.c.l.b16 %v4982
        %v7884 = vunpack.c.h.b16 %v4982
        %v7885 = vunpack.c.l.b16 %v4983
        %v7886 = vunpack.c.h.b16 %v4983
        %v7887 = vunpack.c.l.b16 %v4984
        %v7888 = vunpack.c.l.b16 %v4985
        %v7889 = vunpack.c.h.b16 %v4985
        %v7890 = vunpack.c.l.b16 %v4986
        %v7891 = vunpack.c.h.b16 %v4986
        %v7892 = vunpack.c.l.b16 %v4987
        %v7893 = vunpack.c.h.b16 %v4987
        %v7894 = vunpack.c.l.b16 %v4988
        %v7895 = vunpack.c.h.b16 %v4988
        %v7896 = vunpack.c.l.b16 %v4989
        %v7897 = vunpack.c.h.b16 %v4989
        %v7898 = vunpack.c.l.b16 %v4990
        %v7899 = vunpack.c.h.b16 %v4990
        %v7900 = vunpack.c.l.b16 %v4991
        %v7901 = vunpack.c.h.b16 %v4991
        %v7902 = vunpack.c.l.b16 %v4992
        %v7903 = vunpack.c.h.b16 %v4992
        %v7904 = vunpack.c.l.b16 %v4993
        %v7905 = vunpack.c.h.b16 %v4993
        %v7906 = vunpack.c.l.b16 %v4994
        %v7907 = vunpack.c.h.b16 %v4994
        %v7908 = vunpack.c.l.b16 %v4995
        %v7909 = vunpack.c.h.b16 %v4995
        %v7910 = vunpack.c.l.b16 %v4996
        %v7911 = vunpack.c.h.b16 %v4996
        %v7912 = vunpack.c.l.b16 %v4997
        %v7913 = vunpack.c.h.b16 %v4997
        %v7914 = vunpack.c.l.b16 %v4998
        %v7915 = vunpack.c.h.b16 %v4998
        %v7916 = vunpack.c.l.b16 %v4999
        %v7917 = vunpack.c.h.b16 %v4999
        %v7918 = vunpack.c.l.b16 %v5000
        %v7919 = vunpack.c.l.b16 %v5001
        %v7920 = vunpack.c.h.b16 %v5001
        %v7921 = vunpack.c.l.b16 %v5002
        %v7922 = vunpack.c.h.b16 %v5002
        %v7923 = vunpack.c.l.b16 %v5003
        %v7924 = vunpack.c.h.b16 %v5003
        %v7925 = vunpack.c.l.b16 %v5004
        %v7926 = vunpack.c.h.b16 %v5004
        %v7927 = vunpack.c.l.b16 %v5005
        %v7928 = vunpack.c.h.b16 %v5005
        %v7929 = vunpack.c.l.b16 %v5006
        %v7930 = vunpack.c.h.b16 %v5006
        %v7931 = vunpack.c.l.b16 %v5007
        %v7932 = vunpack.c.h.b16 %v5007
        %v7933 = vunpack.c.l.b16 %v5008
        %v7934 = vunpack.c.h.b16 %v5008
        %v7935 = vunpack.c.l.b16 %v5009
        %v7936 = vunpack.c.h.b16 %v5009
        %v7937 = vunpack.c.l.b16 %v5010
        %v7938 = vunpack.c.h.b16 %v5010
        %v7939 = vunpack.c.l.b16 %v5011
        %v7940 = vunpack.c.h.b16 %v5011
        %v7941 = vunpack.c.l.b16 %v5012
        %v7942 = vunpack.c.h.b16 %v5012
        %v7943 = vunpack.c.l.b16 %v5013
        %v7944 = vunpack.c.h.b16 %v5013
        %v7945 = vunpack.c.l.b16 %v5014
        %v7946 = vunpack.c.h.b16 %v5014
        %v7947 = vunpack.c.l.b16 %v5015
        %v7948 = vunpack.c.h.b16 %v5015
        %v7949 = vunpack.c.l.b16 %v5016
        %v7950 = vunpack.c.l.b16 %v5017
        %v7951 = vunpack.c.h.b16 %v5017
        %v7952 = vunpack.c.l.b16 %v5018
        %v7953 = vunpack.c.h.b16 %v5018
        %v7954 = vunpack.c.l.b16 %v5019
        %v7955 = vunpack.c.h.b16 %v5019
        %v7956 = vunpack.c.l.b16 %v5020
        %v7957 = vunpack.c.h.b16 %v5020
        %v7958 = vunpack.c.l.b16 %v5021
        %v7959 = vunpack.c.h.b16 %v5021
        %v7960 = vunpack.c.l.b16 %v5022
        %v7961 = vunpack.c.h.b16 %v5022
        %v7962 = vunpack.c.l.b16 %v5023
        %v7963 = vunpack.c.h.b16 %v5023
        %v7964 = vunpack.c.l.b16 %v5024
        %v7965 = vunpack.c.h.b16 %v5024
        %v7966 = vunpack.c.l.b16 %v5025
        %v7967 = vunpack.c.h.b16 %v5025
        %v7968 = vunpack.c.l.b16 %v5026
        %v7969 = vunpack.c.h.b16 %v5026
        %v7970 = vunpack.c.l.b16 %v5027
        %v7971 = vunpack.c.h.b16 %v5027
        %v7972 = vunpack.c.l.b16 %v5028
        %v7973 = vunpack.c.h.b16 %v5028
        %v7974 = vunpack.c.l.b16 %v5029
        %v7975 = vunpack.c.h.b16 %v5029
        %v7976 = vunpack.c.l.b16 %v5030
        %v7977 = vunpack.c.h.b16 %v5030
        %v7978 = vunpack.c.l.b16 %v5031
        %v7979 = vunpack.c.h.b16 %v5031
        %v7980 = vunpack.c.l.b16 %v5032
        %v7981 = vunpack.c.l.b16 %v5033
        %v7982 = vunpack.c.h.b16 %v5033
        %v7983 = vunpack.c.l.b16 %v5034
        %v7984 = vunpack.c.h.b16 %v5034
        %v7985 = vunpack.c.l.b16 %v5035
        %v7986 = vunpack.c.h.b16 %v5035
        %v7987 = vunpack.c.l.b16 %v5036
        %v7988 = vunpack.c.h.b16 %v5036
        %v7989 = vunpack.c.l.b16 %v5037
        %v7990 = vunpack.c.h.b16 %v5037
        %v7991 = vunpack.c.l.b16 %v5038
        %v7992 = vunpack.c.h.b16 %v5038
        %v7993 = vunpack.c.l.b16 %v5039
        %v7994 = vunpack.c.h.b16 %v5039
        %v7995 = vunpack.c.l.b16 %v5040
        %v7996 = vunpack.c.h.b16 %v5040
        %v7997 = vunpack.c.l.b16 %v5041
        %v7998 = vunpack.c.h.b16 %v5041
        %v7999 = vunpack.c.l.b16 %v5042
        %v8000 = vunpack.c.h.b16 %v5042
        %v8001 = vunpack.c.l.b16 %v5043
        %v8002 = vunpack.c.h.b16 %v5043
        %v8003 = vunpack.c.l.b16 %v5044
        %v8004 = vunpack.c.h.b16 %v5044
        %v8005 = vunpack.c.l.b16 %v5045
        %v8006 = vunpack.c.h.b16 %v5045
        %v8007 = vunpack.c.l.b16 %v5046
        %v8008 = vunpack.c.h.b16 %v5046
        %v8009 = vunpack.c.l.b16 %v5047
        %v8010 = vunpack.c.h.b16 %v5047
        %v8011 = vunpack.c.l.b16 %v5048
        %v8012 = vunpack.c.l.b16 %v5049
        %v8013 = vunpack.c.h.b16 %v5049
        %v8014 = vunpack.c.l.b16 %v5050
        %v8015 = vunpack.c.h.b16 %v5050
        %v8016 = vunpack.c.l.b16 %v5051
        %v8017 = vunpack.c.h.b16 %v5051
        %v8018 = vunpack.c.l.b16 %v5052
        %v8019 = vunpack.c.h.b16 %v5052
        %v8020 = vunpack.c.l.b16 %v5053
        %v8021 = vunpack.c.h.b16 %v5053
        %v8022 = vunpack.c.l.b16 %v5054
        %v8023 = vunpack.c.h.b16 %v5054
        %v8024 = vunpack.c.l.b16 %v5055
        %v8025 = vunpack.c.h.b16 %v5055
        %v8026 = vunpack.c.l.b16 %v5056
        %v8027 = vunpack.c.h.b16 %v5056
        %v8028 = vunpack.c.l.b16 %v5057
        %v8029 = vunpack.c.h.b16 %v5057
        %v8030 = vunpack.c.l.b16 %v5058
        %v8031 = vunpack.c.h.b16 %v5058
        %v8032 = vunpack.c.l.b16 %v5059
        %v8033 = vunpack.c.h.b16 %v5059
        %v8034 = vunpack.c.l.b16 %v5060
        %v8035 = vunpack.c.h.b16 %v5060
        %v8036 = vunpack.c.l.b16 %v5061
        %v8037 = vunpack.c.h.b16 %v5061
        %v8038 = vunpack.c.l.b16 %v5062
        %v8039 = vunpack.c.h.b16 %v5062
        %v8040 = vunpack.c.l.b16 %v5063
        %v8041 = vunpack.c.h.b16 %v5063
        %v8042 = vunpack.c.l.b16 %v5064
        %v8043 = vunpack.c.l.b16 %v5065
        %v8044 = vunpack.c.h.b16 %v5065
        %v8045 = vunpack.c.l.b16 %v5066
        %v8046 = vunpack.c.h.b16 %v5066
        %v8047 = vunpack.c.l.b16 %v5067
        %v8048 = vunpack.c.h.b16 %v5067
        %v8049 = vunpack.c.l.b16 %v5068
        %v8050 = vunpack.c.h.b16 %v5068
        %v8051 = vunpack.c.l.b16 %v5069
        %v8052 = vunpack.c.h.b16 %v5069
        %v8053 = vunpack.c.l.b16 %v5070
        %v8054 = vunpack.c.h.b16 %v5070
        %v8055 = vunpack.c.l.b16 %v5071
        %v8056 = vunpack.c.h.b16 %v5071
        %v8057 = vunpack.c.l.b16 %v5072
        %v8058 = vunpack.c.h.b16 %v5072
        %v8059 = vunpack.c.l.b16 %v5073
        %v8060 = vunpack.c.h.b16 %v5073
        %v8061 = vunpack.c.l.b16 %v5074
        %v8062 = vunpack.c.h.b16 %v5074
        %v8063 = vunpack.c.l.b16 %v5075
        %v8064 = vunpack.c.h.b16 %v5075
        %v8065 = vunpack.c.l.b16 %v5076
        %v8066 = vunpack.c.h.b16 %v5076
        %v8067 = vunpack.c.l.b16 %v5077
        %v8068 = vunpack.c.h.b16 %v5077
        %v8069 = vunpack.c.l.b16 %v5078
        %v8070 = vunpack.c.h.b16 %v5078
        %v8071 = vunpack.c.l.b16 %v5079
        %v8072 = vunpack.c.h.b16 %v5079
        %v8073 = vunpack.c.l.b16 %v5080
        %v8074 = vunpack.c.l.b16 %v5081
        %v8075 = vunpack.c.h.b16 %v5081
        %v8076 = vunpack.c.l.b16 %v5082
        %v8077 = vunpack.c.h.b16 %v5082
        %v8078 = vunpack.c.l.b16 %v5083
        %v8079 = vunpack.c.h.b16 %v5083
        %v8080 = vunpack.c.l.b16 %v5084
        %v8081 = vunpack.c.h.b16 %v5084
        %v8082 = vunpack.c.l.b16 %v5085
        %v8083 = vunpack.c.h.b16 %v5085
        %v8084 = vunpack.c.l.b16 %v5086
        %v8085 = vunpack.c.h.b16 %v5086
        %v8086 = vunpack.c.l.b16 %v5087
        %v8087 = vunpack.c.h.b16 %v5087
        %v8088 = vunpack.c.l.b16 %v5088
        %v8089 = vunpack.c.h.b16 %v5088
        %v8090 = vunpack.c.l.b16 %v5089
        %v8091 = vunpack.c.h.b16 %v5089
        %v8092 = vunpack.c.l.b16 %v5090
        %v8093 = vunpack.c.h.b16 %v5090
        %v8094 = vunpack.c.l.b16 %v5091
        %v8095 = vunpack.c.h.b16 %v5091
        %v8096 = vunpack.c.l.b16 %v5092
        %v8097 = vunpack.c.h.b16 %v5092
        %v8098 = vunpack.c.l.b16 %v5093
        %v8099 = vunpack.c.h.b16 %v5093
        %v8100 = vunpack.c.l.b16 %v5094
        %v8101 = vunpack.c.h.b16 %v5094
        %v8102 = vunpack.c.l.b16 %v5095
        %v8103 = vunpack.c.h.b16 %v5095
        %v8104 = vunpack.c.l.b16 %v5096
        %v8105 = vpack.c.b16 %v6152, %v6121
        %v8106 = vpack.c.b16 %v6153, %v6122
        %v8107 = vpack.c.b16 %v6154, %v6123
        %v8108 = vpack.c.b16 %v6155, %v6124
        %v8109 = vpack.c.b16 %v6156, %v6125
        %v8110 = vpack.c.b16 %v6157, %v6126
        %v8111 = vpack.c.b16 %v6158, %v6127
        %v8112 = vpack.c.b16 %v6159, %v6128
        %v8113 = vpack.c.b16 %v6160, %v6129
        %v8114 = vpack.c.b16 %v6161, %v6130
        %v8115 = vpack.c.b16 %v6162, %v6131
        %v8116 = vpack.c.b16 %v6163, %v6132
        %v8117 = vpack.c.b16 %v6164, %v6133
        %v8118 = vpack.c.b16 %v6165, %v6134
        %v8119 = vpack.c.b16 %v6166, %v6135
        %v8120 = vpack.c.b16 %v6167, %v6136
        %v8121 = vpack.c.b16 %v6168, %v6137
        %v8122 = vpack.c.b16 %v6169, %v6138
        %v8123 = vpack.c.b16 %v6170, %v6139
        %v8124 = vpack.c.b16 %v6171, %v6140
        %v8125 = vpack.c.b16 %v6172, %v6141
        %v8126 = vpack.c.b16 %v6173, %v6142
        %v8127 = vpack.c.b16 %v6174, %v6143
        %v8128 = vpack.c.b16 %v6175, %v6144
        %v8129 = vpack.c.b16 %v6176, %v6145
        %v8130 = vpack.c.b16 %v6177, %v6146
        %v8131 = vpack.c.b16 %v6178, %v6147
        %v8132 = vpack.c.b16 %v6179, %v6148
        %v8133 = vpack.c.b16 %v6180, %v6149
        %v8134 = vpack.c.b16 %v6181, %v6150
        %v8135 = vpack.c.b16 %v6182, %v6151
        %v8136 = vpack.c.b16 %v6214, %v6183
        %v8137 = vpack.c.b16 %v6215, %v6184
        %v8138 = vpack.c.b16 %v6216, %v6185
        %v8139 = vpack.c.b16 %v6217, %v6186
        %v8140 = vpack.c.b16 %v6218, %v6187
        %v8141 = vpack.c.b16 %v6219, %v6188
        %v8142 = vpack.c.b16 %v6220, %v6189
        %v8143 = vpack.c.b16 %v6221, %v6190
        %v8144 = vpack.c.b16 %v6222, %v6191
        %v8145 = vpack.c.b16 %v6223, %v6192
        %v8146 = vpack.c.b16 %v6224, %v6193
        %v8147 = vpack.c.b16 %v6225, %v6194
        %v8148 = vpack.c.b16 %v6226, %v6195
        %v8149 = vpack.c.b16 %v6227, %v6196
        %v8150 = vpack.c.b16 %v6228, %v6197
        %v8151 = vpack.c.b16 %v6229, %v6198
        %v8152 = vpack.c.b16 %v6230, %v6199
        %v8153 = vpack.c.b16 %v6231, %v6200
        %v8154 = vpack.c.b16 %v6232, %v6201
        %v8155 = vpack.c.b16 %v6233, %v6202
        %v8156 = vpack.c.b16 %v6234, %v6203
        %v8157 = vpack.c.b16 %v6235, %v6204
        %v8158 = vpack.c.b16 %v6236, %v6205
        %v8159 = vpack.c.b16 %v6237, %v6206
        %v8160 = vpack.c.b16 %v6238, %v6207
        %v8161 = vpack.c.b16 %v6239, %v6208
        %v8162 = vpack.c.b16 %v6240, %v6209
        %v8163 = vpack.c.b16 %v6241, %v6210
        %v8164 = vpack.c.b16 %v6242, %v6211
        %v8165 = vpack.c.b16 %v6243, %v6212
        %v8166 = vpack.c.b16 %v6244, %v6213
        %v8167 = vpack.c.b16 %v6276, %v6245
        %v8168 = vpack.c.b16 %v6277, %v6246
        %v8169 = vpack.c.b16 %v6278, %v6247
        %v8170 = vpack.c.b16 %v6279, %v6248
        %v8171 = vpack.c.b16 %v6280, %v6249
        %v8172 = vpack.c.b16 %v6281, %v6250
        %v8173 = vpack.c.b16 %v6282, %v6251
        %v8174 = vpack.c.b16 %v6283, %v6252
        %v8175 = vpack.c.b16 %v6284, %v6253
        %v8176 = vpack.c.b16 %v6285, %v6254
        %v8177 = vpack.c.b16 %v6286, %v6255
        %v8178 = vpack.c.b16 %v6287, %v6256
        %v8179 = vpack.c.b16 %v6288, %v6257
        %v8180 = vpack.c.b16 %v6289, %v6258
        %v8181 = vpack.c.b16 %v6290, %v6259
        %v8182 = vpack.c.b16 %v6291, %v6260
        %v8183 = vpack.c.b16 %v6292, %v6261
        %v8184 = vpack.c.b16 %v6293, %v6262
        %v8185 = vpack.c.b16 %v6294, %v6263
        %v8186 = vpack.c.b16 %v6295, %v6264
        %v8187 = vpack.c.b16 %v6296, %v6265
        %v8188 = vpack.c.b16 %v6297, %v6266
        %v8189 = vpack.c.b16 %v6298, %v6267
        %v8190 = vpack.c.b16 %v6299, %v6268
        %v8191 = vpack.c.b16 %v6300, %v6269
        %v8192 = vpack.c.b16 %v6301, %v6270
        %v8193 = vpack.c.b16 %v6302, %v6271
        %v8194 = vpack.c.b16 %v6303, %v6272
        %v8195 = vpack.c.b16 %v6304, %v6273
        %v8196 = vpack.c.b16 %v6305, %v6274
        %v8197 = vpack.c.b16 %v6306, %v6275
        %v8198 = vpack.c.b16 %v6338, %v6307
        %v8199 = vpack.c.b16 %v6339, %v6308
        %v8200 = vpack.c.b16 %v6340, %v6309
        %v8201 = vpack.c.b16 %v6341, %v6310
        %v8202 = vpack.c.b16 %v6342, %v6311
        %v8203 = vpack.c.b16 %v6343, %v6312
        %v8204 = vpack.c.b16 %v6344, %v6313
        %v8205 = vpack.c.b16 %v6345, %v6314
        %v8206 = vpack.c.b16 %v6346, %v6315
        %v8207 = vpack.c.b16 %v6347, %v6316
        %v8208 = vpack.c.b16 %v6348, %v6317
        %v8209 = vpack.c.b16 %v6349, %v6318
        %v8210 = vpack.c.b16 %v6350, %v6319
        %v8211 = vpack.c.b16 %v6351, %v6320
        %v8212 = vpack.c.b16 %v6352, %v6321
        %v8213 = vpack.c.b16 %v6353, %v6322
        %v8214 = vpack.c.b16 %v6354, %v6323
        %v8215 = vpack.c.b16 %v6355, %v6324
        %v8216 = vpack.c.b16 %v6356, %v6325
        %v8217 = vpack.c.b16 %v6357, %v6326
        %v8218 = vpack.c.b16 %v6358, %v6327
        %v8219 = vpack.c.b16 %v6359, %v6328
        %v8220 = vpack.c.b16 %v6360, %v6329
        %v8221 = vpack.c.b16 %v6361, %v6330
        %v8222 = vpack.c.b16 %v6362, %v6331
        %v8223 = vpack.c.b16 %v6363, %v6332
        %v8224 = vpack.c.b16 %v6364, %v6333
        %v8225 = vpack.c.b16 %v6365, %v6334
        %v8226 = vpack.c.b16 %v6366, %v6335
        %v8227 = vpack.c.b16 %v6367, %v6336
        %v8228 = vpack.c.b16 %v6368, %v6337
        %v8229 = vpack.c.b16 %v6400, %v6369
        %v8230 = vpack.c.b16 %v6401, %v6370
        %v8231 = vpack.c.b16 %v6402, %v6371
        %v8232 = vpack.c.b16 %v6403, %v6372
        %v8233 = vpack.c.b16 %v6404, %v6373
        %v8234 = vpack.c.b16 %v6405, %v6374
        %v8235 = vpack.c.b16 %v6406, %v6375
        %v8236 = vpack.c.b16 %v6407, %v6376
        %v8237 = vpack.c.b16 %v6408, %v6377
        %v8238 = vpack.c.b16 %v6409, %v6378
        %v8239 = vpack.c.b16 %v6410, %v6379
        %v8240 = vpack.c.b16 %v6411, %v6380
        %v8241 = vpack.c.b16 %v6412, %v6381
        %v8242 = vpack.c.b16 %v6413, %v6382
        %v8243 = vpack.c.b16 %v6414, %v6383
        %v8244 = vpack.c.b16 %v6415, %v6384
        %v8245 = vpack.c.b16 %v6416, %v6385
        %v8246 = vpack.c.b16 %v6417, %v6386
        %v8247 = vpack.c.b16 %v6418, %v6387
        %v8248 = vpack.c.b16 %v6419, %v6388
        %v8249 = vpack.c.b16 %v6420, %v6389
        %v8250 = vpack.c.b16 %v6421, %v6390
        %v8251 = vpack.c.b16 %v6422, %v6391
        %v8252 = vpack.c.b16 %v6423, %v6392
        %v8253 = vpack.c.b16 %v6424, %v6393
        %v8254 = vpack.c.b16 %v6425, %v6394
        %v8255 = vpack.c.b16 %v6426, %v6395
        %v8256 = vpack.c.b16 %v6427, %v6396
        %v8257 = vpack.c.b16 %v6428, %v6397
        %v8258 = vpack.c.b16 %v6429, %v6398
        %v8259 = vpack.c.b16 %v6430, %v6399
        %v8260 = vpack.c.b16 %v6462, %v6431
        %v8261 = vpack.c.b16 %v6463, %v6432
        %v8262 = vpack.c.b16 %v6464, %v6433
        %v8263 = vpack.c.b16 %v6465, %v6434
        %v8264 = vpack.c.b16 %v6466, %v6435
        %v8265 = vpack.c.b16 %v6467, %v6436
        %v8266 = vpack.c.b16 %v6468, %v6437
        %v8267 = vpack.c.b16 %v6469, %v6438
        %v8268 = vpack.c.b16 %v6470, %v6439
        %v8269 = vpack.c.b16 %v6471, %v6440
        %v8270 = vpack.c.b16 %v6472, %v6441
        %v8271 = vpack.c.b16 %v6473, %v6442
        %v8272 = vpack.c.b16 %v6474, %v6443
        %v8273 = vpack.c.b16 %v6475, %v6444
        %v8274 = vpack.c.b16 %v6476, %v6445
        %v8275 = vpack.c.b16 %v6477, %v6446
        %v8276 = vpack.c.b16 %v6478, %v6447
        %v8277 = vpack.c.b16 %v6479, %v6448
        %v8278 = vpack.c.b16 %v6480, %v6449
        %v8279 = vpack.c.b16 %v6481, %v6450
        %v8280 = vpack.c.b16 %v6482, %v6451
        %v8281 = vpack.c.b16 %v6483, %v6452
        %v8282 = vpack.c.b16 %v6484, %v6453
        %v8283 = vpack.c.b16 %v6485, %v6454
        %v8284 = vpack.c.b16 %v6486, %v6455
        %v8285 = vpack.c.b16 %v6487, %v6456
        %v8286 = vpack.c.b16 %v6488, %v6457
        %v8287 = vpack.c.b16 %v6489, %v6458
        %v8288 = vpack.c.b16 %v6490, %v6459
        %v8289 = vpack.c.b16 %v6491, %v6460
        %v8290 = vpack.c.b16 %v6492, %v6461
        %v8291 = vpack.c.b16 %v6524, %v6493
        %v8292 = vpack.c.b16 %v6525, %v6494
        %v8293 = vpack.c.b16 %v6526, %v6495
        %v8294 = vpack.c.b16 %v6527, %v6496
        %v8295 = vpack.c.b16 %v6528, %v6497
        %v8296 = vpack.c.b16 %v6529, %v6498
        %v8297 = vpack.c.b16 %v6530, %v6499
        %v8298 = vpack.c.b16 %v6531, %v6500
        %v8299 = vpack.c.b16 %v6532, %v6501
        %v8300 = vpack.c.b16 %v6533, %v6502
        %v8301 = vpack.c.b16 %v6534, %v6503
        %v8302 = vpack.c.b16 %v6535, %v6504
        %v8303 = vpack.c.b16 %v6536, %v6505
        %v8304 = vpack.c.b16 %v6537, %v6506
        %v8305 = vpack.c.b16 %v6538, %v6507
        %v8306 = vpack.c.b16 %v6539, %v6508
        %v8307 = vpack.c.b16 %v6540, %v6509
        %v8308 = vpack.c.b16 %v6541, %v6510
        %v8309 = vpack.c.b16 %v6542, %v6511
        %v8310 = vpack.c.b16 %v6543, %v6512
        %v8311 = vpack.c.b16 %v6544, %v6513
        %v8312 = vpack.c.b16 %v6545, %v6514
        %v8313 = vpack.c.b16 %v6546, %v6515
        %v8314 = vpack.c.b16 %v6547, %v6516
        %v8315 = vpack.c.b16 %v6548, %v6517
        %v8316 = vpack.c.b16 %v6549, %v6518
        %v8317 = vpack.c.b16 %v6550, %v6519
        %v8318 = vpack.c.b16 %v6551, %v6520
        %v8319 = vpack.c.b16 %v6552, %v6521
        %v8320 = vpack.c.b16 %v6553, %v6522
        %v8321 = vpack.c.b16 %v6554, %v6523
        %v8322 = vpack.c.b16 %v6586, %v6555
        %v8323 = vpack.c.b16 %v6587, %v6556
        %v8324 = vpack.c.b16 %v6588, %v6557
        %v8325 = vpack.c.b16 %v6589, %v6558
        %v8326 = vpack.c.b16 %v6590, %v6559
        %v8327 = vpack.c.b16 %v6591, %v6560
        %v8328 = vpack.c.b16 %v6592, %v6561
        %v8329 = vpack.c.b16 %v6593, %v6562
        %v8330 = vpack.c.b16 %v6594, %v6563
        %v8331 = vpack.c.b16 %v6595, %v6564
        %v8332 = vpack.c.b16 %v6596, %v6565
        %v8333 = vpack.c.b16 %v6597, %v6566
        %v8334 = vpack.c.b16 %v6598, %v6567
        %v8335 = vpack.c.b16 %v6599, %v6568
        %v8336 = vpack.c.b16 %v6600, %v6569
        %v8337 = vpack.c.b16 %v6601, %v6570
        %v8338 = vpack.c.b16 %v6602, %v6571
        %v8339 = vpack.c.b16 %v6603, %v6572
        %v8340 = vpack.c.b16 %v6604, %v6573
        %v8341 = vpack.c.b16 %v6605, %v6574
        %v8342 = vpack.c.b16 %v6606, %v6575
        %v8343 = vpack.c.b16 %v6607, %v6576
        %v8344 = vpack.c.b16 %v6608, %v6577
        %v8345 = vpack.c.b16 %v6609, %v6578
        %v8346 = vpack.c.b16 %v6610, %v6579
        %v8347 = vpack.c.b16 %v6611, %v6580
        %v8348 = vpack.c.b16 %v6612, %v6581
        %v8349 = vpack.c.b16 %v6613, %v6582
        %v8350 = vpack.c.b16 %v6614, %v6583
        %v8351 = vpack.c.b16 %v6615, %v6584
        %v8352 = vpack.c.b16 %v6616, %v6585
        %v8353 = vpack.c.b16 %v6648, %v6617
        %v8354 = vpack.c.b16 %v6649, %v6618
        %v8355 = vpack.c.b16 %v6650, %v6619
        %v8356 = vpack.c.b16 %v6651, %v6620
        %v8357 = vpack.c.b16 %v6652, %v6621
        %v8358 = vpack.c.b16 %v6653, %v6622
        %v8359 = vpack.c.b16 %v6654, %v6623
        %v8360 = vpack.c.b16 %v6655, %v6624
        %v8361 = vpack.c.b16 %v6656, %v6625
        %v8362 = vpack.c.b16 %v6657, %v6626
        %v8363 = vpack.c.b16 %v6658, %v6627
        %v8364 = vpack.c.b16 %v6659, %v6628
        %v8365 = vpack.c.b16 %v6660, %v6629
        %v8366 = vpack.c.b16 %v6661, %v6630
        %v8367 = vpack.c.b16 %v6662, %v6631
        %v8368 = vpack.c.b16 %v6663, %v6632
        %v8369 = vpack.c.b16 %v6664, %v6633
        %v8370 = vpack.c.b16 %v6665, %v6634
        %v8371 = vpack.c.b16 %v6666, %v6635
        %v8372 = vpack.c.b16 %v6667, %v6636
        %v8373 = vpack.c.b16 %v6668, %v6637
        %v8374 = vpack.c.b16 %v6669, %v6638
        %v8375 = vpack.c.b16 %v6670, %v6639
        %v8376 = vpack.c.b16 %v6671, %v6640
        %v8377 = vpack.c.b16 %v6672, %v6641
        %v8378 = vpack.c.b16 %v6673, %v6642
        %v8379 = vpack.c.b16 %v6674, %v6643
        %v8380 = vpack.c.b16 %v6675, %v6644
        %v8381 = vpack.c.b16 %v6676, %v6645
        %v8382 = vpack.c.b16 %v6677, %v6646
        %v8383 = vpack.c.b16 %v6678, %v6647
        %v8384 = vpack.c.b16 %v6710, %v6679
        %v8385 = vpack.c.b16 %v6711, %v6680
        %v8386 = vpack.c.b16 %v6712, %v6681
        %v8387 = vpack.c.b16 %v6713, %v6682
        %v8388 = vpack.c.b16 %v6714, %v6683
        %v8389 = vpack.c.b16 %v6715, %v6684
        %v8390 = vpack.c.b16 %v6716, %v6685
        %v8391 = vpack.c.b16 %v6717, %v6686
        %v8392 = vpack.c.b16 %v6718, %v6687
        %v8393 = vpack.c.b16 %v6719, %v6688
        %v8394 = vpack.c.b16 %v6720, %v6689
        %v8395 = vpack.c.b16 %v6721, %v6690
        %v8396 = vpack.c.b16 %v6722, %v6691
        %v8397 = vpack.c.b16 %v6723, %v6692
        %v8398 = vpack.c.b16 %v6724, %v6693
        %v8399 = vpack.c.b16 %v6725, %v6694
        %v8400 = vpack.c.b16 %v6726, %v6695
        %v8401 = vpack.c.b16 %v6727, %v6696
        %v8402 = vpack.c.b16 %v6728, %v6697
        %v8403 = vpack.c.b16 %v6729, %v6698
        %v8404 = vpack.c.b16 %v6730, %v6699
        %v8405 = vpack.c.b16 %v6731, %v6700
        %v8406 = vpack.c.b16 %v6732, %v6701
        %v8407 = vpack.c.b16 %v6733, %v6702
        %v8408 = vpack.c.b16 %v6734, %v6703
        %v8409 = vpack.c.b16 %v6735, %v6704
        %v8410 = vpack.c.b16 %v6736, %v6705
        %v8411 = vpack.c.b16 %v6737, %v6706
        %v8412 = vpack.c.b16 %v6738, %v6707
        %v8413 = vpack.c.b16 %v6739, %v6708
        %v8414 = vpack.c.b16 %v6740, %v6709
        %v8415 = vpack.c.b16 %v6772, %v6741
        %v8416 = vpack.c.b16 %v6773, %v6742
        %v8417 = vpack.c.b16 %v6774, %v6743
        %v8418 = vpack.c.b16 %v6775, %v6744
        %v8419 = vpack.c.b16 %v6776, %v6745
        %v8420 = vpack.c.b16 %v6777, %v6746
        %v8421 = vpack.c.b16 %v6778, %v6747
        %v8422 = vpack.c.b16 %v6779, %v6748
        %v8423 = vpack.c.b16 %v6780, %v6749
        %v8424 = vpack.c.b16 %v6781, %v6750
        %v8425 = vpack.c.b16 %v6782, %v6751
        %v8426 = vpack.c.b16 %v6783, %v6752
        %v8427 = vpack.c.b16 %v6784, %v6753
        %v8428 = vpack.c.b16 %v6785, %v6754
        %v8429 = vpack.c.b16 %v6786, %v6755
        %v8430 = vpack.c.b16 %v6787, %v6756
        %v8431 = vpack.c.b16 %v6788, %v6757
        %v8432 = vpack.c.b16 %v6789, %v6758
        %v8433 = vpack.c.b16 %v6790, %v6759
        %v8434 = vpack.c.b16 %v6791, %v6760
        %v8435 = vpack.c.b16 %v6792, %v6761
        %v8436 = vpack.c.b16 %v6793, %v6762
        %v8437 = vpack.c.b16 %v6794, %v6763
        %v8438 = vpack.c.b16 %v6795, %v6764
        %v8439 = vpack.c.b16 %v6796, %v6765
        %v8440 = vpack.c.b16 %v6797, %v6766
        %v8441 = vpack.c.b16 %v6798, %v6767
        %v8442 = vpack.c.b16 %v6799, %v6768
        %v8443 = vpack.c.b16 %v6800, %v6769
        %v8444 = vpack.c.b16 %v6801, %v6770
        %v8445 = vpack.c.b16 %v6802, %v6771
        %v8446 = vpack.c.b16 %v6834, %v6803
        %v8447 = vpack.c.b16 %v6835, %v6804
        %v8448 = vpack.c.b16 %v6836, %v6805
        %v8449 = vpack.c.b16 %v6837, %v6806
        %v8450 = vpack.c.b16 %v6838, %v6807
        %v8451 = vpack.c.b16 %v6839, %v6808
        %v8452 = vpack.c.b16 %v6840, %v6809
        %v8453 = vpack.c.b16 %v6841, %v6810
        %v8454 = vpack.c.b16 %v6842, %v6811
        %v8455 = vpack.c.b16 %v6843, %v6812
        %v8456 = vpack.c.b16 %v6844, %v6813
        %v8457 = vpack.c.b16 %v6845, %v6814
        %v8458 = vpack.c.b16 %v6846, %v6815
        %v8459 = vpack.c.b16 %v6847, %v6816
        %v8460 = vpack.c.b16 %v6848, %v6817
        %v8461 = vpack.c.b16 %v6849, %v6818
        %v8462 = vpack.c.b16 %v6850, %v6819
        %v8463 = vpack.c.b16 %v6851, %v6820
        %v8464 = vpack.c.b16 %v6852, %v6821
        %v8465 = vpack.c.b16 %v6853, %v6822
        %v8466 = vpack.c.b16 %v6854, %v6823
        %v8467 = vpack.c.b16 %v6855, %v6824
        %v8468 = vpack.c.b16 %v6856, %v6825
        %v8469 = vpack.c.b16 %v6857, %v6826
        %v8470 = vpack.c.b16 %v6858, %v6827
        %v8471 = vpack.c.b16 %v6859, %v6828
        %v8472 = vpack.c.b16 %v6860, %v6829
        %v8473 = vpack.c.b16 %v6861, %v6830
        %v8474 = vpack.c.b16 %v6862, %v6831
        %v8475 = vpack.c.b16 %v6863, %v6832
        %v8476 = vpack.c.b16 %v6864, %v6833
        %v8477 = vpack.c.b16 %v6896, %v6865
        %v8478 = vpack.c.b16 %v6897, %v6866
        %v8479 = vpack.c.b16 %v6898, %v6867
        %v8480 = vpack.c.b16 %v6899, %v6868
        %v8481 = vpack.c.b16 %v6900, %v6869
        %v8482 = vpack.c.b16 %v6901, %v6870
        %v8483 = vpack.c.b16 %v6902, %v6871
        %v8484 = vpack.c.b16 %v6903, %v6872
        %v8485 = vpack.c.b16 %v6904, %v6873
        %v8486 = vpack.c.b16 %v6905, %v6874
        %v8487 = vpack.c.b16 %v6906, %v6875
        %v8488 = vpack.c.b16 %v6907, %v6876
        %v8489 = vpack.c.b16 %v6908, %v6877
        %v8490 = vpack.c.b16 %v6909, %v6878
        %v8491 = vpack.c.b16 %v6910, %v6879
        %v8492 = vpack.c.b16 %v6911, %v6880
        %v8493 = vpack.c.b16 %v6912, %v6881
        %v8494 = vpack.c.b16 %v6913, %v6882
        %v8495 = vpack.c.b16 %v6914, %v6883
        %v8496 = vpack.c.b16 %v6915, %v6884
        %v8497 = vpack.c.b16 %v6916, %v6885
        %v8498 = vpack.c.b16 %v6917, %v6886
        %v8499 = vpack.c.b16 %v6918, %v6887
        %v8500 = vpack.c.b16 %v6919, %v6888
        %v8501 = vpack.c.b16 %v6920, %v6889
        %v8502 = vpack.c.b16 %v6921, %v6890
        %v8503 = vpack.c.b16 %v6922, %v6891
        %v8504 = vpack.c.b16 %v6923, %v6892
        %v8505 = vpack.c.b16 %v6924, %v6893
        %v8506 = vpack.c.b16 %v6925, %v6894
        %v8507 = vpack.c.b16 %v6926, %v6895
        %v8508 = vpack.c.b16 %v6958, %v6927
        %v8509 = vpack.c.b16 %v6959, %v6928
        %v8510 = vpack.c.b16 %v6960, %v6929
        %v8511 = vpack.c.b16 %v6961, %v6930
        %v8512 = vpack.c.b16 %v6962, %v6931
        %v8513 = vpack.c.b16 %v6963, %v6932
        %v8514 = vpack.c.b16 %v6964, %v6933
        %v8515 = vpack.c.b16 %v6965, %v6934
        %v8516 = vpack.c.b16 %v6966, %v6935
        %v8517 = vpack.c.b16 %v6967, %v6936
        %v8518 = vpack.c.b16 %v6968, %v6937
        %v8519 = vpack.c.b16 %v6969, %v6938
        %v8520 = vpack.c.b16 %v6970, %v6939
        %v8521 = vpack.c.b16 %v6971, %v6940
        %v8522 = vpack.c.b16 %v6972, %v6941
        %v8523 = vpack.c.b16 %v6973, %v6942
        %v8524 = vpack.c.b16 %v6974, %v6943
        %v8525 = vpack.c.b16 %v6975, %v6944
        %v8526 = vpack.c.b16 %v6976, %v6945
        %v8527 = vpack.c.b16 %v6977, %v6946
        %v8528 = vpack.c.b16 %v6978, %v6947
        %v8529 = vpack.c.b16 %v6979, %v6948
        %v8530 = vpack.c.b16 %v6980, %v6949
        %v8531 = vpack.c.b16 %v6981, %v6950
        %v8532 = vpack.c.b16 %v6982, %v6951
        %v8533 = vpack.c.b16 %v6983, %v6952
        %v8534 = vpack.c.b16 %v6984, %v6953
        %v8535 = vpack.c.b16 %v6985, %v6954
        %v8536 = vpack.c.b16 %v6986, %v6955
        %v8537 = vpack.c.b16 %v6987, %v6956
        %v8538 = vpack.c.b16 %v6988, %v6957
        %v8539 = vpack.c.b16 %v7020, %v6989
        %v8540 = vpack.c.b16 %v7021, %v6990
        %v8541 = vpack.c.b16 %v7022, %v6991
        %v8542 = vpack.c.b16 %v7023, %v6992
        %v8543 = vpack.c.b16 %v7024, %v6993
        %v8544 = vpack.c.b16 %v7025, %v6994
        %v8545 = vpack.c.b16 %v7026, %v6995
        %v8546 = vpack.c.b16 %v7027, %v6996
        %v8547 = vpack.c.b16 %v7028, %v6997
        %v8548 = vpack.c.b16 %v7029, %v6998
        %v8549 = vpack.c.b16 %v7030, %v6999
        %v8550 = vpack.c.b16 %v7031, %v7000
        %v8551 = vpack.c.b16 %v7032, %v7001
        %v8552 = vpack.c.b16 %v7033, %v7002
        %v8553 = vpack.c.b16 %v7034, %v7003
        %v8554 = vpack.c.b16 %v7035, %v7004
        %v8555 = vpack.c.b16 %v7036, %v7005
        %v8556 = vpack.c.b16 %v7037, %v7006
        %v8557 = vpack.c.b16 %v7038, %v7007
        %v8558 = vpack.c.b16 %v7039, %v7008
        %v8559 = vpack.c.b16 %v7040, %v7009
        %v8560 = vpack.c.b16 %v7041, %v7010
        %v8561 = vpack.c.b16 %v7042, %v7011
        %v8562 = vpack.c.b16 %v7043, %v7012
        %v8563 = vpack.c.b16 %v7044, %v7013
        %v8564 = vpack.c.b16 %v7045, %v7014
        %v8565 = vpack.c.b16 %v7046, %v7015
        %v8566 = vpack.c.b16 %v7047, %v7016
        %v8567 = vpack.c.b16 %v7048, %v7017
        %v8568 = vpack.c.b16 %v7049, %v7018
        %v8569 = vpack.c.b16 %v7050, %v7019
        %v8570 = vpack.c.b16 %v7082, %v7051
        %v8571 = vpack.c.b16 %v7083, %v7052
        %v8572 = vpack.c.b16 %v7084, %v7053
        %v8573 = vpack.c.b16 %v7085, %v7054
        %v8574 = vpack.c.b16 %v7086, %v7055
        %v8575 = vpack.c.b16 %v7087, %v7056
        %v8576 = vpack.c.b16 %v7088, %v7057
        %v8577 = vpack.c.b16 %v7089, %v7058
        %v8578 = vpack.c.b16 %v7090, %v7059
        %v8579 = vpack.c.b16 %v7091, %v7060
        %v8580 = vpack.c.b16 %v7092, %v7061
        %v8581 = vpack.c.b16 %v7093, %v7062
        %v8582 = vpack.c.b16 %v7094, %v7063
        %v8583 = vpack.c.b16 %v7095, %v7064
        %v8584 = vpack.c.b16 %v7096, %v7065
        %v8585 = vpack.c.b16 %v7097, %v7066
        %v8586 = vpack.c.b16 %v7098, %v7067
        %v8587 = vpack.c.b16 %v7099, %v7068
        %v8588 = vpack.c.b16 %v7100, %v7069
        %v8589 = vpack.c.b16 %v7101, %v7070
        %v8590 = vpack.c.b16 %v7102, %v7071
        %v8591 = vpack.c.b16 %v7103, %v7072
        %v8592 = vpack.c.b16 %v7104, %v7073
        %v8593 = vpack.c.b16 %v7105, %v7074
        %v8594 = vpack.c.b16 %v7106, %v7075
        %v8595 = vpack.c.b16 %v7107, %v7076
        %v8596 = vpack.c.b16 %v7108, %v7077
        %v8597 = vpack.c.b16 %v7109, %v7078
        %v8598 = vpack.c.b16 %v7110, %v7079
        %v8599 = vpack.c.b16 %v7111, %v7080
        %v8600 = vpack.c.b16 %v7112, %v7081
        %v8601 = vpack.c.b16 %v7144, %v7113
        %v8602 = vpack.c.b16 %v7145, %v7114
        %v8603 = vpack.c.b16 %v7146, %v7115
        %v8604 = vpack.c.b16 %v7147, %v7116
        %v8605 = vpack.c.b16 %v7148, %v7117
        %v8606 = vpack.c.b16 %v7149, %v7118
        %v8607 = vpack.c.b16 %v7150, %v7119
        %v8608 = vpack.c.b16 %v7151, %v7120
        %v8609 = vpack.c.b16 %v7152, %v7121
        %v8610 = vpack.c.b16 %v7153, %v7122
        %v8611 = vpack.c.b16 %v7154, %v7123
        %v8612 = vpack.c.b16 %v7155, %v7124
        %v8613 = vpack.c.b16 %v7156, %v7125
        %v8614 = vpack.c.b16 %v7157, %v7126
        %v8615 = vpack.c.b16 %v7158, %v7127
        %v8616 = vpack.c.b16 %v7159, %v7128
        %v8617 = vpack.c.b16 %v7160, %v7129
        %v8618 = vpack.c.b16 %v7161, %v7130
        %v8619 = vpack.c.b16 %v7162, %v7131
        %v8620 = vpack.c.b16 %v7163, %v7132
        %v8621 = vpack.c.b16 %v7164, %v7133
        %v8622 = vpack.c.b16 %v7165, %v7134
        %v8623 = vpack.c.b16 %v7166, %v7135
        %v8624 = vpack.c.b16 %v7167, %v7136
        %v8625 = vpack.c.b16 %v7168, %v7137
        %v8626 = vpack.c.b16 %v7169, %v7138
        %v8627 = vpack.c.b16 %v7170, %v7139
        %v8628 = vpack.c.b16 %v7171, %v7140
        %v8629 = vpack.c.b16 %v7172, %v7141
        %v8630 = vpack.c.b16 %v7173, %v7142
        %v8631 = vpack.c.b16 %v7174, %v7143
        %v8632 = vpack.c.b16 %v7206, %v7175
        %v8633 = vpack.c.b16 %v7207, %v7176
        %v8634 = vpack.c.b16 %v7208, %v7177
        %v8635 = vpack.c.b16 %v7209, %v7178
        %v8636 = vpack.c.b16 %v7210, %v7179
        %v8637 = vpack.c.b16 %v7211, %v7180
        %v8638 = vpack.c.b16 %v7212, %v7181
        %v8639 = vpack.c.b16 %v7213, %v7182
        %v8640 = vpack.c.b16 %v7214, %v7183
        %v8641 = vpack.c.b16 %v7215, %v7184
        %v8642 = vpack.c.b16 %v7216, %v7185
        %v8643 = vpack.c.b16 %v7217, %v7186
        %v8644 = vpack.c.b16 %v7218, %v7187
        %v8645 = vpack.c.b16 %v7219, %v7188
        %v8646 = vpack.c.b16 %v7220, %v7189
        %v8647 = vpack.c.b16 %v7221, %v7190
        %v8648 = vpack.c.b16 %v7222, %v7191
        %v8649 = vpack.c.b16 %v7223, %v7192
        %v8650 = vpack.c.b16 %v7224, %v7193
        %v8651 = vpack.c.b16 %v7225, %v7194
        %v8652 = vpack.c.b16 %v7226, %v7195
        %v8653 = vpack.c.b16 %v7227, %v7196
        %v8654 = vpack.c.b16 %v7228, %v7197
        %v8655 = vpack.c.b16 %v7229, %v7198
        %v8656 = vpack.c.b16 %v7230, %v7199
        %v8657 = vpack.c.b16 %v7231, %v7200
        %v8658 = vpack.c.b16 %v7232, %v7201
        %v8659 = vpack.c.b16 %v7233, %v7202
        %v8660 = vpack.c.b16 %v7234, %v7203
        %v8661 = vpack.c.b16 %v7235, %v7204
        %v8662 = vpack.c.b16 %v7236, %v7205
        %v8663 = vpack.c.b16 %v7268, %v7237
        %v8664 = vpack.c.b16 %v7269, %v7238
        %v8665 = vpack.c.b16 %v7270, %v7239
        %v8666 = vpack.c.b16 %v7271, %v7240
        %v8667 = vpack.c.b16 %v7272, %v7241
        %v8668 = vpack.c.b16 %v7273, %v7242
        %v8669 = vpack.c.b16 %v7274, %v7243
        %v8670 = vpack.c.b16 %v7275, %v7244
        %v8671 = vpack.c.b16 %v7276, %v7245
        %v8672 = vpack.c.b16 %v7277, %v7246
        %v8673 = vpack.c.b16 %v7278, %v7247
        %v8674 = vpack.c.b16 %v7279, %v7248
        %v8675 = vpack.c.b16 %v7280, %v7249
        %v8676 = vpack.c.b16 %v7281, %v7250
        %v8677 = vpack.c.b16 %v7282, %v7251
        %v8678 = vpack.c.b16 %v7283, %v7252
        %v8679 = vpack.c.b16 %v7284, %v7253
        %v8680 = vpack.c.b16 %v7285, %v7254
        %v8681 = vpack.c.b16 %v7286, %v7255
        %v8682 = vpack.c.b16 %v7287, %v7256
        %v8683 = vpack.c.b16 %v7288, %v7257
        %v8684 = vpack.c.b16 %v7289, %v7258
        %v8685 = vpack.c.b16 %v7290, %v7259
        %v8686 = vpack.c.b16 %v7291, %v7260
        %v8687 = vpack.c.b16 %v7292, %v7261
        %v8688 = vpack.c.b16 %v7293, %v7262
        %v8689 = vpack.c.b16 %v7294, %v7263
        %v8690 = vpack.c.b16 %v7295, %v7264
        %v8691 = vpack.c.b16 %v7296, %v7265
        %v8692 = vpack.c.b16 %v7297, %v7266
        %v8693 = vpack.c.b16 %v7298, %v7267
        %v8694 = vpack.c.b16 %v7330, %v7299
        %v8695 = vpack.c.b16 %v7331, %v7300
        %v8696 = vpack.c.b16 %v7332, %v7301
        %v8697 = vpack.c.b16 %v7333, %v7302
        %v8698 = vpack.c.b16 %v7334, %v7303
        %v8699 = vpack.c.b16 %v7335, %v7304
        %v8700 = vpack.c.b16 %v7336, %v7305
        %v8701 = vpack.c.b16 %v7337, %v7306
        %v8702 = vpack.c.b16 %v7338, %v7307
        %v8703 = vpack.c.b16 %v7339, %v7308
        %v8704 = vpack.c.b16 %v7340, %v7309
        %v8705 = vpack.c.b16 %v7341, %v7310
        %v8706 = vpack.c.b16 %v7342, %v7311
        %v8707 = vpack.c.b16 %v7343, %v7312
        %v8708 = vpack.c.b16 %v7344, %v7313
        %v8709 = vpack.c.b16 %v7345, %v7314
        %v8710 = vpack.c.b16 %v7346, %v7315
        %v8711 = vpack.c.b16 %v7347, %v7316
        %v8712 = vpack.c.b16 %v7348, %v7317
        %v8713 = vpack.c.b16 %v7349, %v7318
        %v8714 = vpack.c.b16 %v7350, %v7319
        %v8715 = vpack.c.b16 %v7351, %v7320
        %v8716 = vpack.c.b16 %v7352, %v7321
        %v8717 = vpack.c.b16 %v7353, %v7322
        %v8718 = vpack.c.b16 %v7354, %v7323
        %v8719 = vpack.c.b16 %v7355, %v7324
        %v8720 = vpack.c.b16 %v7356, %v7325
        %v8721 = vpack.c.b16 %v7357, %v7326
        %v8722 = vpack.c.b16 %v7358, %v7327
        %v8723 = vpack.c.b16 %v7359, %v7328
        %v8724 = vpack.c.b16 %v7360, %v7329
        %v8725 = vpack.c.b16 %v7392, %v7361
        %v8726 = vpack.c.b16 %v7393, %v7362
        %v8727 = vpack.c.b16 %v7394, %v7363
        %v8728 = vpack.c.b16 %v7395, %v7364
        %v8729 = vpack.c.b16 %v7396, %v7365
        %v8730 = vpack.c.b16 %v7397, %v7366
        %v8731 = vpack.c.b16 %v7398, %v7367
        %v8732 = vpack.c.b16 %v7399, %v7368
        %v8733 = vpack.c.b16 %v7400, %v7369
        %v8734 = vpack.c.b16 %v7401, %v7370
        %v8735 = vpack.c.b16 %v7402, %v7371
        %v8736 = vpack.c.b16 %v7403, %v7372
        %v8737 = vpack.c.b16 %v7404, %v7373
        %v8738 = vpack.c.b16 %v7405, %v7374
        %v8739 = vpack.c.b16 %v7406, %v7375
        %v8740 = vpack.c.b16 %v7407, %v7376
        %v8741 = vpack.c.b16 %v7408, %v7377
        %v8742 = vpack.c.b16 %v7409, %v7378
        %v8743 = vpack.c.b16 %v7410, %v7379
        %v8744 = vpack.c.b16 %v7411, %v7380
        %v8745 = vpack.c.b16 %v7412, %v7381
        %v8746 = vpack.c.b16 %v7413, %v7382
        %v8747 = vpack.c.b16 %v7414, %v7383
        %v8748 = vpack.c.b16 %v7415, %v7384
        %v8749 = vpack.c.b16 %v7416, %v7385
        %v8750 = vpack.c.b16 %v7417, %v7386
        %v8751 = vpack.c.b16 %v7418, %v7387
        %v8752 = vpack.c.b16 %v7419, %v7388
        %v8753 = vpack.c.b16 %v7420, %v7389
        %v8754 = vpack.c.b16 %v7421, %v7390
        %v8755 = vpack.c.b16 %v7422, %v7391
        %v8756 = vpack.c.b16 %v7454, %v7423
        %v8757 = vpack.c.b16 %v7455, %v7424
        %v8758 = vpack.c.b16 %v7456, %v7425
        %v8759 = vpack.c.b16 %v7457, %v7426
        %v8760 = vpack.c.b16 %v7458, %v7427
        %v8761 = vpack.c.b16 %v7459, %v7428
        %v8762 = vpack.c.b16 %v7460, %v7429
        %v8763 = vpack.c.b16 %v7461, %v7430
        %v8764 = vpack.c.b16 %v7462, %v7431
        %v8765 = vpack.c.b16 %v7463, %v7432
        %v8766 = vpack.c.b16 %v7464, %v7433
        %v8767 = vpack.c.b16 %v7465, %v7434
        %v8768 = vpack.c.b16 %v7466, %v7435
        %v8769 = vpack.c.b16 %v7467, %v7436
        %v8770 = vpack.c.b16 %v7468, %v7437
        %v8771 = vpack.c.b16 %v7469, %v7438
        %v8772 = vpack.c.b16 %v7470, %v7439
        %v8773 = vpack.c.b16 %v7471, %v7440
        %v8774 = vpack.c.b16 %v7472, %v7441
        %v8775 = vpack.c.b16 %v7473, %v7442
        %v8776 = vpack.c.b16 %v7474, %v7443
        %v8777 = vpack.c.b16 %v7475, %v7444
        %v8778 = vpack.c.b16 %v7476, %v7445
        %v8779 = vpack.c.b16 %v7477, %v7446
        %v8780 = vpack.c.b16 %v7478, %v7447
        %v8781 = vpack.c.b16 %v7479, %v7448
        %v8782 = vpack.c.b16 %v7480, %v7449
        %v8783 = vpack.c.b16 %v7481, %v7450
        %v8784 = vpack.c.b16 %v7482, %v7451
        %v8785 = vpack.c.b16 %v7483, %v7452
        %v8786 = vpack.c.b16 %v7484, %v7453
        %v8787 = vpack.c.b16 %v7516, %v7485
        %v8788 = vpack.c.b16 %v7517, %v7486
        %v8789 = vpack.c.b16 %v7518, %v7487
        %v8790 = vpack.c.b16 %v7519, %v7488
        %v8791 = vpack.c.b16 %v7520, %v7489
        %v8792 = vpack.c.b16 %v7521, %v7490
        %v8793 = vpack.c.b16 %v7522, %v7491
        %v8794 = vpack.c.b16 %v7523, %v7492
        %v8795 = vpack.c.b16 %v7524, %v7493
        %v8796 = vpack.c.b16 %v7525, %v7494
        %v8797 = vpack.c.b16 %v7526, %v7495
        %v8798 = vpack.c.b16 %v7527, %v7496
        %v8799 = vpack.c.b16 %v7528, %v7497
        %v8800 = vpack.c.b16 %v7529, %v7498
        %v8801 = vpack.c.b16 %v7530, %v7499
        %v8802 = vpack.c.b16 %v7531, %v7500
        %v8803 = vpack.c.b16 %v7532, %v7501
        %v8804 = vpack.c.b16 %v7533, %v7502
        %v8805 = vpack.c.b16 %v7534, %v7503
        %v8806 = vpack.c.b16 %v7535, %v7504
        %v8807 = vpack.c.b16 %v7536, %v7505
        %v8808 = vpack.c.b16 %v7537, %v7506
        %v8809 = vpack.c.b16 %v7538, %v7507
        %v8810 = vpack.c.b16 %v7539, %v7508
        %v8811 = vpack.c.b16 %v7540, %v7509
        %v8812 = vpack.c.b16 %v7541, %v7510
        %v8813 = vpack.c.b16 %v7542, %v7511
        %v8814 = vpack.c.b16 %v7543, %v7512
        %v8815 = vpack.c.b16 %v7544, %v7513
        %v8816 = vpack.c.b16 %v7545, %v7514
        %v8817 = vpack.c.b16 %v7546, %v7515
        %v8818 = vpack.c.b16 %v7578, %v7547
        %v8819 = vpack.c.b16 %v7579, %v7548
        %v8820 = vpack.c.b16 %v7580, %v7549
        %v8821 = vpack.c.b16 %v7581, %v7550
        %v8822 = vpack.c.b16 %v7582, %v7551
        %v8823 = vpack.c.b16 %v7583, %v7552
        %v8824 = vpack.c.b16 %v7584, %v7553
        %v8825 = vpack.c.b16 %v7585, %v7554
        %v8826 = vpack.c.b16 %v7586, %v7555
        %v8827 = vpack.c.b16 %v7587, %v7556
        %v8828 = vpack.c.b16 %v7588, %v7557
        %v8829 = vpack.c.b16 %v7589, %v7558
        %v8830 = vpack.c.b16 %v7590, %v7559
        %v8831 = vpack.c.b16 %v7591, %v7560
        %v8832 = vpack.c.b16 %v7592, %v7561
        %v8833 = vpack.c.b16 %v7593, %v7562
        %v8834 = vpack.c.b16 %v7594, %v7563
        %v8835 = vpack.c.b16 %v7595, %v7564
        %v8836 = vpack.c.b16 %v7596, %v7565
        %v8837 = vpack.c.b16 %v7597, %v7566
        %v8838 = vpack.c.b16 %v7598, %v7567
        %v8839 = vpack.c.b16 %v7599, %v7568
        %v8840 = vpack.c.b16 %v7600, %v7569
        %v8841 = vpack.c.b16 %v7601, %v7570
        %v8842 = vpack.c.b16 %v7602, %v7571
        %v8843 = vpack.c.b16 %v7603, %v7572
        %v8844 = vpack.c.b16 %v7604, %v7573
        %v8845 = vpack.c.b16 %v7605, %v7574
        %v8846 = vpack.c.b16 %v7606, %v7575
        %v8847 = vpack.c.b16 %v7607, %v7576
        %v8848 = vpack.c.b16 %v7608, %v7577
        %v8849 = vpack.c.b16 %v7640, %v7609
        %v8850 = vpack.c.b16 %v7641, %v7610
        %v8851 = vpack.c.b16 %v7642, %v7611
        %v8852 = vpack.c.b16 %v7643, %v7612
        %v8853 = vpack.c.b16 %v7644, %v7613
        %v8854 = vpack.c.b16 %v7645, %v7614
        %v8855 = vpack.c.b16 %v7646, %v7615
        %v8856 = vpack.c.b16 %v7647, %v7616
        %v8857 = vpack.c.b16 %v7648, %v7617
        %v8858 = vpack.c.b16 %v7649, %v7618
        %v8859 = vpack.c.b16 %v7650, %v7619
        %v8860 = vpack.c.b16 %v7651, %v7620
        %v8861 = vpack.c.b16 %v7652, %v7621
        %v8862 = vpack.c.b16 %v7653, %v7622
        %v8863 = vpack.c.b16 %v7654, %v7623
        %v8864 = vpack.c.b16 %v7655, %v7624
        %v8865 = vpack.c.b16 %v7656, %v7625
        %v8866 = vpack.c.b16 %v7657, %v7626
        %v8867 = vpack.c.b16 %v7658, %v7627
        %v8868 = vpack.c.b16 %v7659, %v7628
        %v8869 = vpack.c.b16 %v7660, %v7629
        %v8870 = vpack.c.b16 %v7661, %v7630
        %v8871 = vpack.c.b16 %v7662, %v7631
        %v8872 = vpack.c.b16 %v7663, %v7632
        %v8873 = vpack.c.b16 %v7664, %v7633
        %v8874 = vpack.c.b16 %v7665, %v7634
        %v8875 = vpack.c.b16 %v7666, %v7635
        %v8876 = vpack.c.b16 %v7667, %v7636
        %v8877 = vpack.c.b16 %v7668, %v7637
        %v8878 = vpack.c.b16 %v7669, %v7638
        %v8879 = vpack.c.b16 %v7670, %v7639
        %v8880 = vpack.c.b16 %v7702, %v7671
        %v8881 = vpack.c.b16 %v7703, %v7672
        %v8882 = vpack.c.b16 %v7704, %v7673
        %v8883 = vpack.c.b16 %v7705, %v7674
        %v8884 = vpack.c.b16 %v7706, %v7675
        %v8885 = vpack.c.b16 %v7707, %v7676
        %v8886 = vpack.c.b16 %v7708, %v7677
        %v8887 = vpack.c.b16 %v7709, %v7678
        %v8888 = vpack.c.b16 %v7710, %v7679
        %v8889 = vpack.c.b16 %v7711, %v7680
        %v8890 = vpack.c.b16 %v7712, %v7681
        %v8891 = vpack.c.b16 %v7713, %v7682
        %v8892 = vpack.c.b16 %v7714, %v7683
        %v8893 = vpack.c.b16 %v7715, %v7684
        %v8894 = vpack.c.b16 %v7716, %v7685
        %v8895 = vpack.c.b16 %v7717, %v7686
        %v8896 = vpack.c.b16 %v7718, %v7687
        %v8897 = vpack.c.b16 %v7719, %v7688
        %v8898 = vpack.c.b16 %v7720, %v7689
        %v8899 = vpack.c.b16 %v7721, %v7690
        %v8900 = vpack.c.b16 %v7722, %v7691
        %v8901 = vpack.c.b16 %v7723, %v7692
        %v8902 = vpack.c.b16 %v7724, %v7693
        %v8903 = vpack.c.b16 %v7725, %v7694
        %v8904 = vpack.c.b16 %v7726, %v7695
        %v8905 = vpack.c.b16 %v7727, %v7696
        %v8906 = vpack.c.b16 %v7728, %v7697
        %v8907 = vpack.c.b16 %v7729, %v7698
        %v8908 = vpack.c.b16 %v7730, %v7699
        %v8909 = vpack.c.b16 %v7731, %v7700
        %v8910 = vpack.c.b16 %v7732, %v7701
        %v8911 = vpack.c.b16 %v7764, %v7733
        %v8912 = vpack.c.b16 %v7765, %v7734
        %v8913 = vpack.c.b16 %v7766, %v7735
        %v8914 = vpack.c.b16 %v7767, %v7736
        %v8915 = vpack.c.b16 %v7768, %v7737
        %v8916 = vpack.c.b16 %v7769, %v7738
        %v8917 = vpack.c.b16 %v7770, %v7739
        %v8918 = vpack.c.b16 %v7771, %v7740
        %v8919 = vpack.c.b16 %v7772, %v7741
        %v8920 = vpack.c.b16 %v7773, %v7742
        %v8921 = vpack.c.b16 %v7774, %v7743
        %v8922 = vpack.c.b16 %v7775, %v7744
        %v8923 = vpack.c.b16 %v7776, %v7745
        %v8924 = vpack.c.b16 %v7777, %v7746
        %v8925 = vpack.c.b16 %v7778, %v7747
        %v8926 = vpack.c.b16 %v7779, %v7748
        %v8927 = vpack.c.b16 %v7780, %v7749
        %v8928 = vpack.c.b16 %v7781, %v7750
        %v8929 = vpack.c.b16 %v7782, %v7751
        %v8930 = vpack.c.b16 %v7783, %v7752
        %v8931 = vpack.c.b16 %v7784, %v7753
        %v8932 = vpack.c.b16 %v7785, %v7754
        %v8933 = vpack.c.b16 %v7786, %v7755
        %v8934 = vpack.c.b16 %v7787, %v7756
        %v8935 = vpack.c.b16 %v7788, %v7757
        %v8936 = vpack.c.b16 %v7789, %v7758
        %v8937 = vpack.c.b16 %v7790, %v7759
        %v8938 = vpack.c.b16 %v7791, %v7760
        %v8939 = vpack.c.b16 %v7792, %v7761
        %v8940 = vpack.c.b16 %v7793, %v7762
        %v8941 = vpack.c.b16 %v7794, %v7763
        %v8942 = vpack.c.b16 %v7826, %v7795
        %v8943 = vpack.c.b16 %v7827, %v7796
        %v8944 = vpack.c.b16 %v7828, %v7797
        %v8945 = vpack.c.b16 %v7829, %v7798
        %v8946 = vpack.c.b16 %v7830, %v7799
        %v8947 = vpack.c.b16 %v7831, %v7800
        %v8948 = vpack.c.b16 %v7832, %v7801
        %v8949 = vpack.c.b16 %v7833, %v7802
        %v8950 = vpack.c.b16 %v7834, %v7803
        %v8951 = vpack.c.b16 %v7835, %v7804
        %v8952 = vpack.c.b16 %v7836, %v7805
        %v8953 = vpack.c.b16 %v7837, %v7806
        %v8954 = vpack.c.b16 %v7838, %v7807
        %v8955 = vpack.c.b16 %v7839, %v7808
        %v8956 = vpack.c.b16 %v7840, %v7809
        %v8957 = vpack.c.b16 %v7841, %v7810
        %v8958 = vpack.c.b16 %v7842, %v7811
        %v8959 = vpack.c.b16 %v7843, %v7812
        %v8960 = vpack.c.b16 %v7844, %v7813
        %v8961 = vpack.c.b16 %v7845, %v7814
        %v8962 = vpack.c.b16 %v7846, %v7815
        %v8963 = vpack.c.b16 %v7847, %v7816
        %v8964 = vpack.c.b16 %v7848, %v7817
        %v8965 = vpack.c.b16 %v7849, %v7818
        %v8966 = vpack.c.b16 %v7850, %v7819
        %v8967 = vpack.c.b16 %v7851, %v7820
        %v8968 = vpack.c.b16 %v7852, %v7821
        %v8969 = vpack.c.b16 %v7853, %v7822
        %v8970 = vpack.c.b16 %v7854, %v7823
        %v8971 = vpack.c.b16 %v7855, %v7824
        %v8972 = vpack.c.b16 %v7856, %v7825
        %v8973 = vpack.c.b16 %v7888, %v7857
        %v8974 = vpack.c.b16 %v7889, %v7858
        %v8975 = vpack.c.b16 %v7890, %v7859
        %v8976 = vpack.c.b16 %v7891, %v7860
        %v8977 = vpack.c.b16 %v7892, %v7861
        %v8978 = vpack.c.b16 %v7893, %v7862
        %v8979 = vpack.c.b16 %v7894, %v7863
        %v8980 = vpack.c.b16 %v7895, %v7864
        %v8981 = vpack.c.b16 %v7896, %v7865
        %v8982 = vpack.c.b16 %v7897, %v7866
        %v8983 = vpack.c.b16 %v7898, %v7867
        %v8984 = vpack.c.b16 %v7899, %v7868
        %v8985 = vpack.c.b16 %v7900, %v7869
        %v8986 = vpack.c.b16 %v7901, %v7870
        %v8987 = vpack.c.b16 %v7902, %v7871
        %v8988 = vpack.c.b16 %v7903, %v7872
        %v8989 = vpack.c.b16 %v7904, %v7873
        %v8990 = vpack.c.b16 %v7905, %v7874
        %v8991 = vpack.c.b16 %v7906, %v7875
        %v8992 = vpack.c.b16 %v7907, %v7876
        %v8993 = vpack.c.b16 %v7908, %v7877
        %v8994 = vpack.c.b16 %v7909, %v7878
        %v8995 = vpack.c.b16 %v7910, %v7879
        %v8996 = vpack.c.b16 %v7911, %v7880
        %v8997 = vpack.c.b16 %v7912, %v7881
        %v8998 = vpack.c.b16 %v7913, %v7882
        %v8999 = vpack.c.b16 %v7914, %v7883
        %v9000 = vpack.c.b16 %v7915, %v7884
        %v9001 = vpack.c.b16 %v7916, %v7885
        %v9002 = vpack.c.b16 %v7917, %v7886
        %v9003 = vpack.c.b16 %v7918, %v7887
        %v9004 = vpack.c.b16 %v7950, %v7919
        %v9005 = vpack.c.b16 %v7951, %v7920
        %v9006 = vpack.c.b16 %v7952, %v7921
        %v9007 = vpack.c.b16 %v7953, %v7922
        %v9008 = vpack.c.b16 %v7954, %v7923
        %v9009 = vpack.c.b16 %v7955, %v7924
        %v9010 = vpack.c.b16 %v7956, %v7925
        %v9011 = vpack.c.b16 %v7957, %v7926
        %v9012 = vpack.c.b16 %v7958, %v7927
        %v9013 = vpack.c.b16 %v7959, %v7928
        %v9014 = vpack.c.b16 %v7960, %v7929
        %v9015 = vpack.c.b16 %v7961, %v7930
        %v9016 = vpack.c.b16 %v7962, %v7931
        %v9017 = vpack.c.b16 %v7963, %v7932
        %v9018 = vpack.c.b16 %v7964, %v7933
        %v9019 = vpack.c.b16 %v7965, %v7934
        %v9020 = vpack.c.b16 %v7966, %v7935
        %v9021 = vpack.c.b16 %v7967, %v7936
        %v9022 = vpack.c.b16 %v7968, %v7937
        %v9023 = vpack.c.b16 %v7969, %v7938
        %v9024 = vpack.c.b16 %v7970, %v7939
        %v9025 = vpack.c.b16 %v7971, %v7940
        %v9026 = vpack.c.b16 %v7972, %v7941
        %v9027 = vpack.c.b16 %v7973, %v7942
        %v9028 = vpack.c.b16 %v7974, %v7943
        %v9029 = vpack.c.b16 %v7975, %v7944
        %v9030 = vpack.c.b16 %v7976, %v7945
        %v9031 = vpack.c.b16 %v7977, %v7946
        %v9032 = vpack.c.b16 %v7978, %v7947
        %v9033 = vpack.c.b16 %v7979, %v7948
        %v9034 = vpack.c.b16 %v7980, %v7949
        %v9035 = vpack.c.b16 %v8012, %v7981
        %v9036 = vpack.c.b16 %v8013, %v7982
        %v9037 = vpack.c.b16 %v8014, %v7983
        %v9038 = vpack.c.b16 %v8015, %v7984
        %v9039 = vpack.c.b16 %v8016, %v7985
        %v9040 = vpack.c.b16 %v8017, %v7986
        %v9041 = vpack.c.b16 %v8018, %v7987
        %v9042 = vpack.c.b16 %v8019, %v7988
        %v9043 = vpack.c.b16 %v8020, %v7989
        %v9044 = vpack.c.b16 %v8021, %v7990
        %v9045 = vpack.c.b16 %v8022, %v7991
        %v9046 = vpack.c.b16 %v8023, %v7992
        %v9047 = vpack.c.b16 %v8024, %v7993
        %v9048 = vpack.c.b16 %v8025, %v7994
        %v9049 = vpack.c.b16 %v8026, %v7995
        %v9050 = vpack.c.b16 %v8027, %v7996
        %v9051 = vpack.c.b16 %v8028, %v7997
        %v9052 = vpack.c.b16 %v8029, %v7998
        %v9053 = vpack.c.b16 %v8030, %v7999
        %v9054 = vpack.c.b16 %v8031, %v8000
        %v9055 = vpack.c.b16 %v8032, %v8001
        %v9056 = vpack.c.b16 %v8033, %v8002
        %v9057 = vpack.c.b16 %v8034, %v8003
        %v9058 = vpack.c.b16 %v8035, %v8004
        %v9059 = vpack.c.b16 %v8036, %v8005
        %v9060 = vpack.c.b16 %v8037, %v8006
        %v9061 = vpack.c.b16 %v8038, %v8007
        %v9062 = vpack.c.b16 %v8039, %v8008
        %v9063 = vpack.c.b16 %v8040, %v8009
        %v9064 = vpack.c.b16 %v8041, %v8010
        %v9065 = vpack.c.b16 %v8042, %v8011
        %v9066 = vpack.c.b16 %v8074, %v8043
        %v9067 = vpack.c.b16 %v8075, %v8044
        %v9068 = vpack.c.b16 %v8076, %v8045
        %v9069 = vpack.c.b16 %v8077, %v8046
        %v9070 = vpack.c.b16 %v8078, %v8047
        %v9071 = vpack.c.b16 %v8079, %v8048
        %v9072 = vpack.c.b16 %v8080, %v8049
        %v9073 = vpack.c.b16 %v8081, %v8050
        %v9074 = vpack.c.b16 %v8082, %v8051
        %v9075 = vpack.c.b16 %v8083, %v8052
        %v9076 = vpack.c.b16 %v8084, %v8053
        %v9077 = vpack.c.b16 %v8085, %v8054
        %v9078 = vpack.c.b16 %v8086, %v8055
        %v9079 = vpack.c.b16 %v8087, %v8056
        %v9080 = vpack.c.b16 %v8088, %v8057
        %v9081 = vpack.c.b16 %v8089, %v8058
        %v9082 = vpack.c.b16 %v8090, %v8059
        %v9083 = vpack.c.b16 %v8091, %v8060
        %v9084 = vpack.c.b16 %v8092, %v8061
        %v9085 = vpack.c.b16 %v8093, %v8062
        %v9086 = vpack.c.b16 %v8094, %v8063
        %v9087 = vpack.c.b16 %v8095, %v8064
        %v9088 = vpack.c.b16 %v8096, %v8065
        %v9089 = vpack.c.b16 %v8097, %v8066
        %v9090 = vpack.c.b16 %v8098, %v8067
        %v9091 = vpack.c.b16 %v8099, %v8068
        %v9092 = vpack.c.b16 %v8100, %v8069
        %v9093 = vpack.c.b16 %v8101, %v8070
        %v9094 = vpack.c.b16 %v8102, %v8071
        %v9095 = vpack.c.b16 %v8103, %v8072
        %v9096 = vpack.c.b16 %v8104, %v8073
        %10089 = vmatprep.subr.bf16.mxu0 %v8106
        %10090 = vmatpush1.bf16.msra.mxu0 %v8105
        %10091 = vmatprep.subr.bf16.mxu0 %v8137
        %10092 = vmatpush1.bf16.msra.mxu0 %v8136
        %10093 = vmatprep.subr.bf16.mxu0 %v8168
        %10094 = vmatpush1.bf16.msra.mxu0 %v8167
        %10095 = vmatprep.subr.bf16.mxu0 %v8199
        %10096 = vmatpush1.bf16.msra.mxu0 %v8198
        %10097 = vmatprep.subr.bf16.mxu0 %v8230
        %10098 = vmatpush1.bf16.msra.mxu0 %v8229
        %10099 = vmatprep.subr.bf16.mxu0 %v8261
        %10100 = vmatpush1.bf16.msra.mxu0 %v8260
        %10101 = vmatprep.subr.bf16.mxu0 %v8292
        %10102 = vmatpush1.bf16.msra.mxu0 %v8291
        %10103 = vmatprep.subr.bf16.mxu0 %v8323
        %10104 = vmatpush1.bf16.msra.mxu0 %v8322
        %10105 = vmatprep.subr.bf16.mxu0 %v8354
        %10106 = vmatpush1.bf16.msra.mxu0 %v8353
        %10107 = vmatprep.subr.bf16.mxu0 %v8385
        %10108 = vmatpush1.bf16.msra.mxu0 %v8384
        %10109 = vmatprep.subr.bf16.mxu0 %v8416
        %10110 = vmatpush1.bf16.msra.mxu0 %v8415
        %10111 = vmatprep.subr.bf16.mxu0 %v8447
        %10112 = vmatpush1.bf16.msra.mxu0 %v8446
        %10113 = vmatprep.subr.bf16.mxu0 %v8478
        %10114 = vmatpush1.bf16.msra.mxu0 %v8477
        %10115 = vmatprep.subr.bf16.mxu0 %v8509
        %10116 = vmatpush1.bf16.msra.mxu0 %v8508
        %10117 = vmatprep.subr.bf16.mxu0 %v8540
        %10118 = vmatpush1.bf16.msra.mxu0 %v8539
        %10119 = vmatprep.subr.bf16.mxu0 %v8571
        %10120 = vmatpush1.bf16.msra.mxu0 %v8570
        %10121 = vmatprep.mubr.bf16.mxu0 %v4070
        %10122 = vmatmul.mubr.bf16.gmra.mrb[0].mxu0 %v4069
        %v10123 = vpop.f32.mrb[0].mxu0
        %v10124 = vadd.f32 0.0, %v10123
        %v10125 = vpop.f32.mrb[0].mxu0
        %v10126 = vadd.f32 0.0, %v10125
        %v10127 = vpop.f32.mrb[0].mxu0
        %v10128 = vpop.f32.mrb[0].mxu0
        %10129 = vdwg.mxu0
        %10130 = vmatprep.subr.bf16.mxu0 %v8602
        %10131 = vmatpush1.bf16.msra.mxu0 %v8601
        %10132 = vmatprep.subr.bf16.mxu0 %v8633
        %10133 = vmatpush1.bf16.msra.mxu0 %v8632
        %10134 = vmatprep.subr.bf16.mxu0 %v8664
        %10135 = vmatpush1.bf16.msra.mxu0 %v8663
        %10136 = vmatprep.subr.bf16.mxu0 %v8695
        %10137 = vmatpush1.bf16.msra.mxu0 %v8694
        %10138 = vmatprep.subr.bf16.mxu0 %v8726
        %10139 = vmatpush1.bf16.msra.mxu0 %v8725
        %10140 = vmatprep.subr.bf16.mxu0 %v8757
        %10141 = vmatpush1.bf16.msra.mxu0 %v8756
        %10142 = vmatprep.subr.bf16.mxu0 %v8788
        %10143 = vmatpush1.bf16.msra.mxu0 %v8787
        %10144 = vmatprep.subr.bf16.mxu0 %v8819
        %10145 = vmatpush1.bf16.msra.mxu0 %v8818
        %10146 = vmatprep.subr.bf16.mxu0 %v8850
        %10147 = vmatpush1.bf16.msra.mxu0 %v8849
        %10148 = vmatprep.subr.bf16.mxu0 %v8881
        %10149 = vmatpush1.bf16.msra.mxu0 %v8880
        %10150 = vmatprep.subr.bf16.mxu0 %v8912
        %10151 = vmatpush1.bf16.msra.mxu0 %v8911
        %10152 = vmatprep.subr.bf16.mxu0 %v8943
        %10153 = vmatpush1.bf16.msra.mxu0 %v8942
        %10154 = vmatprep.subr.bf16.mxu0 %v8974
        %10155 = vmatpush1.bf16.msra.mxu0 %v8973
        %10156 = vmatprep.subr.bf16.mxu0 %v9005
        %10157 = vmatpush1.bf16.msra.mxu0 %v9004
        %10158 = vmatprep.subr.bf16.mxu0 %v9036
        %10159 = vmatpush1.bf16.msra.mxu0 %v9035
        %10160 = vmatprep.subr.bf16.mxu0 %v9067
        %10161 = vmatpush1.bf16.msra.mxu0 %v9066
        %10162 = vmatprep.mubr.bf16.mxu0 %v4072
        %10163 = vmatmul.mubr.bf16.gmra.mrb[0].mxu0 %v4071
        %v10164 = vpop.f32.mrb[0].mxu0
        %v10165 = vadd.f32 %v10124, %v10164
        %v10166 = vpop.f32.mrb[0].mxu0
        %v10167 = vadd.f32 %v10126, %v10166
        %v10168 = vpop.f32.mrb[0].mxu0
        %v10169 = vpop.f32.mrb[0].mxu0
        %10170 = vdwg.mxu0
        %10171 = vmatprep.subr.bf16.mxu0 %v8108
        %10172 = vmatpush1.bf16.msra.mxu0 %v8107
        %10173 = vmatprep.subr.bf16.mxu0 %v8139
        %10174 = vmatpush1.bf16.msra.mxu0 %v8138
        %10175 = vmatprep.subr.bf16.mxu0 %v8170
        %10176 = vmatpush1.bf16.msra.mxu0 %v8169
        %10177 = vmatprep.subr.bf16.mxu0 %v8201
        %10178 = vmatpush1.bf16.msra.mxu0 %v8200
        %10179 = vmatprep.subr.bf16.mxu0 %v8232
        %10180 = vmatpush1.bf16.msra.mxu0 %v8231
        %10181 = vmatprep.subr.bf16.mxu0 %v8263
        %10182 = vmatpush1.bf16.msra.mxu0 %v8262
        %10183 = vmatprep.subr.bf16.mxu0 %v8294
        %10184 = vmatpush1.bf16.msra.mxu0 %v8293
        %10185 = vmatprep.subr.bf16.mxu0 %v8325
        %10186 = vmatpush1.bf16.msra.mxu0 %v8324
        %10187 = vmatprep.subr.bf16.mxu0 %v8356
        %10188 = vmatpush1.bf16.msra.mxu0 %v8355
        %10189 = vmatprep.subr.bf16.mxu0 %v8387
        %10190 = vmatpush1.bf16.msra.mxu0 %v8386
        %10191 = vmatprep.subr.bf16.mxu0 %v8418
        %10192 = vmatpush1.bf16.msra.mxu0 %v8417
        %10193 = vmatprep.subr.bf16.mxu0 %v8449
        %10194 = vmatpush1.bf16.msra.mxu0 %v8448
        %10195 = vmatprep.subr.bf16.mxu0 %v8480
        %10196 = vmatpush1.bf16.msra.mxu0 %v8479
        %10197 = vmatprep.subr.bf16.mxu0 %v8511
        %10198 = vmatpush1.bf16.msra.mxu0 %v8510
        %10199 = vmatprep.subr.bf16.mxu0 %v8542
        %10200 = vmatpush1.bf16.msra.mxu0 %v8541
        %10201 = vmatprep.subr.bf16.mxu0 %v8573
        %10202 = vmatpush1.bf16.msra.mxu0 %v8572
        %10203 = vmatprep.mubr.bf16.mxu0 %v4070
        %10204 = vmatmul.mubr.bf16.gmra.mrb[0].mxu0 %v4069
        %v10205 = vpop.f32.mrb[0].mxu0
        %v10206 = vadd.f32 0.0, %v10205
        %v10207 = vpop.f32.mrb[0].mxu0
        %v10208 = vadd.f32 0.0, %v10207
        %v10209 = vpop.f32.mrb[0].mxu0
        %v10210 = vpop.f32.mrb[0].mxu0
        %10211 = vdwg.mxu0
        %10212 = vmatprep.subr.bf16.mxu0 %v8604
        %10213 = vmatpush1.bf16.msra.mxu0 %v8603
        %10214 = vmatprep.subr.bf16.mxu0 %v8635
        %10215 = vmatpush1.bf16.msra.mxu0 %v8634
        %10216 = vmatprep.subr.bf16.mxu0 %v8666
        %10217 = vmatpush1.bf16.msra.mxu0 %v8665
        %10218 = vmatprep.subr.bf16.mxu0 %v8697
        %10219 = vmatpush1.bf16.msra.mxu0 %v8696
        %10220 = vmatprep.subr.bf16.mxu0 %v8728
        %10221 = vmatpush1.bf16.msra.mxu0 %v8727
        %10222 = vmatprep.subr.bf16.mxu0 %v8759
        %10223 = vmatpush1.bf16.msra.mxu0 %v8758
        %10224 = vmatprep.subr.bf16.mxu0 %v8790
        %10225 = vmatpush1.bf16.msra.mxu0 %v8789
        %10226 = vmatprep.subr.bf16.mxu0 %v8821
        %10227 = vmatpush1.bf16.msra.mxu0 %v8820
        %10228 = vmatprep.subr.bf16.mxu0 %v8852
        %10229 = vmatpush1.bf16.msra.mxu0 %v8851
        %10230 = vmatprep.subr.bf16.mxu0 %v8883
        %10231 = vmatpush1.bf16.msra.mxu0 %v8882
        %10232 = vmatprep.subr.bf16.mxu0 %v8914
        %10233 = vmatpush1.bf16.msra.mxu0 %v8913
        %10234 = vmatprep.subr.bf16.mxu0 %v8945
        %10235 = vmatpush1.bf16.msra.mxu0 %v8944
        %10236 = vmatprep.subr.bf16.mxu0 %v8976
        %10237 = vmatpush1.bf16.msra.mxu0 %v8975
        %10238 = vmatprep.subr.bf16.mxu0 %v9007
        %10239 = vmatpush1.bf16.msra.mxu0 %v9006
        %10240 = vmatprep.subr.bf16.mxu0 %v9038
        %10241 = vmatpush1.bf16.msra.mxu0 %v9037
        %10242 = vmatprep.subr.bf16.mxu0 %v9069
        %10243 = vmatpush1.bf16.msra.mxu0 %v9068
        %10244 = vmatprep.mubr.bf16.mxu0 %v4072
        %10245 = vmatmul.mubr.bf16.gmra.mrb[0].mxu0 %v4071
        %v10246 = vpop.f32.mrb[0].mxu0
        %v10247 = vadd.f32 %v10206, %v10246
        %v10248 = vpop.f32.mrb[0].mxu0
        %v10249 = vadd.f32 %v10208, %v10248
        %v10250 = vpop.f32.mrb[0].mxu0
        %v10251 = vpop.f32.mrb[0].mxu0
        %10252 = vdwg.mxu0
        %10253 = vmatprep.subr.bf16.mxu0 %v8110
        %10254 = vmatpush1.bf16.msra.mxu0 %v8109
        %10255 = vmatprep.subr.bf16.mxu0 %v8141
        %10256 = vmatpush1.bf16.msra.mxu0 %v8140
        %10257 = vmatprep.subr.bf16.mxu0 %v8172
        %10258 = vmatpush1.bf16.msra.mxu0 %v8171
        %10259 = vmatprep.subr.bf16.mxu0 %v8203
        %10260 = vmatpush1.bf16.msra.mxu0 %v8202
        %10261 = vmatprep.subr.bf16.mxu0 %v8234
        %10262 = vmatpush1.bf16.msra.mxu0 %v8233
        %10263 = vmatprep.subr.bf16.mxu0 %v8265
        %10264 = vmatpush1.bf16.msra.mxu0 %v8264
        %10265 = vmatprep.subr.bf16.mxu0 %v8296
        %10266 = vmatpush1.bf16.msra.mxu0 %v8295
        %10267 = vmatprep.subr.bf16.mxu0 %v8327
        %10268 = vmatpush1.bf16.msra.mxu0 %v8326
        %10269 = vmatprep.subr.bf16.mxu0 %v8358
        %10270 = vmatpush1.bf16.msra.mxu0 %v8357
        %10271 = vmatprep.subr.bf16.mxu0 %v8389
        %10272 = vmatpush1.bf16.msra.mxu0 %v8388
        %10273 = vmatprep.subr.bf16.mxu0 %v8420
        %10274 = vmatpush1.bf16.msra.mxu0 %v8419
        %10275 = vmatprep.subr.bf16.mxu0 %v8451
        %10276 = vmatpush1.bf16.msra.mxu0 %v8450
        %10277 = vmatprep.subr.bf16.mxu0 %v8482
        %10278 = vmatpush1.bf16.msra.mxu0 %v8481
        %10279 = vmatprep.subr.bf16.mxu0 %v8513
        %10280 = vmatpush1.bf16.msra.mxu0 %v8512
        %10281 = vmatprep.subr.bf16.mxu0 %v8544
        %10282 = vmatpush1.bf16.msra.mxu0 %v8543
        %10283 = vmatprep.subr.bf16.mxu0 %v8575
        %10284 = vmatpush1.bf16.msra.mxu0 %v8574
        %10285 = vmatprep.mubr.bf16.mxu0 %v4070
        %10286 = vmatmul.mubr.bf16.gmra.mrb[0].mxu0 %v4069
        %v10287 = vpop.f32.mrb[0].mxu0
        %v10288 = vadd.f32 0.0, %v10287
        %v10289 = vpop.f32.mrb[0].mxu0
        %v10290 = vadd.f32 0.0, %v10289
        %v10291 = vpop.f32.mrb[0].mxu0
        %v10292 = vpop.f32.mrb[0].mxu0
        %10293 = vdwg.mxu0
        %10294 = vmatprep.subr.bf16.mxu0 %v8606
        %10295 = vmatpush1.bf16.msra.mxu0 %v8605
        %10296 = vmatprep.subr.bf16.mxu0 %v8637
        %10297 = vmatpush1.bf16.msra.mxu0 %v8636
        %10298 = vmatprep.subr.bf16.mxu0 %v8668
        %10299 = vmatpush1.bf16.msra.mxu0 %v8667
        %10300 = vmatprep.subr.bf16.mxu0 %v8699
        %10301 = vmatpush1.bf16.msra.mxu0 %v8698
        %10302 = vmatprep.subr.bf16.mxu0 %v8730
        %10303 = vmatpush1.bf16.msra.mxu0 %v8729
        %10304 = vmatprep.subr.bf16.mxu0 %v8761
        %10305 = vmatpush1.bf16.msra.mxu0 %v8760
        %10306 = vmatprep.subr.bf16.mxu0 %v8792
        %10307 = vmatpush1.bf16.msra.mxu0 %v8791
        %10308 = vmatprep.subr.bf16.mxu0 %v8823
        %10309 = vmatpush1.bf16.msra.mxu0 %v8822
        %10310 = vmatprep.subr.bf16.mxu0 %v8854
        %10311 = vmatpush1.bf16.msra.mxu0 %v8853
        %10312 = vmatprep.subr.bf16.mxu0 %v8885
        %10313 = vmatpush1.bf16.msra.mxu0 %v8884
        %10314 = vmatprep.subr.bf16.mxu0 %v8916
        %10315 = vmatpush1.bf16.msra.mxu0 %v8915
        %10316 = vmatprep.subr.bf16.mxu0 %v8947
        %10317 = vmatpush1.bf16.msra.mxu0 %v8946
        %10318 = vmatprep.subr.bf16.mxu0 %v8978
        %10319 = vmatpush1.bf16.msra.mxu0 %v8977
        %10320 = vmatprep.subr.bf16.mxu0 %v9009
        %10321 = vmatpush1.bf16.msra.mxu0 %v9008
        %10322 = vmatprep.subr.bf16.mxu0 %v9040
        %10323 = vmatpush1.bf16.msra.mxu0 %v9039
        %10324 = vmatprep.subr.bf16.mxu0 %v9071
        %10325 = vmatpush1.bf16.msra.mxu0 %v9070
        %10326 = vmatprep.mubr.bf16.mxu0 %v4072
        %10327 = vmatmul.mubr.bf16.gmra.mrb[0].mxu0 %v4071
        %v10328 = vpop.f32.mrb[0].mxu0
        %v10329 = vadd.f32 %v10288, %v10328
        %v10330 = vpop.f32.mrb[0].mxu0
        %v10331 = vadd.f32 %v10290, %v10330
        %v10332 = vpop.f32.mrb[0].mxu0
        %v10333 = vpop.f32.mrb[0].mxu0
        %10334 = vdwg.mxu0
        %10335 = vmatprep.subr.bf16.mxu0 %v8112
        %10336 = vmatpush1.bf16.msra.mxu0 %v8111
        %10337 = vmatprep.subr.bf16.mxu0 %v8143
        %10338 = vmatpush1.bf16.msra.mxu0 %v8142
        %10339 = vmatprep.subr.bf16.mxu0 %v8174
        %10340 = vmatpush1.bf16.msra.mxu0 %v8173
        %10341 = vmatprep.subr.bf16.mxu0 %v8205
        %10342 = vmatpush1.bf16.msra.mxu0 %v8204
        %10343 = vmatprep.subr.bf16.mxu0 %v8236
        %10344 = vmatpush1.bf16.msra.mxu0 %v8235
        %10345 = vmatprep.subr.bf16.mxu0 %v8267
        %10346 = vmatpush1.bf16.msra.mxu0 %v8266
        %10347 = vmatprep.subr.bf16.mxu0 %v8298
        %10348 = vmatpush1.bf16.msra.mxu0 %v8297
        %10349 = vmatprep.subr.bf16.mxu0 %v8329
        %10350 = vmatpush1.bf16.msra.mxu0 %v8328
        %10351 = vmatprep.subr.bf16.mxu0 %v8360
        %10352 = vmatpush1.bf16.msra.mxu0 %v8359
        %10353 = vmatprep.subr.bf16.mxu0 %v8391
        %10354 = vmatpush1.bf16.msra.mxu0 %v8390
        %10355 = vmatprep.subr.bf16.mxu0 %v8422
        %10356 = vmatpush1.bf16.msra.mxu0 %v8421
        %10357 = vmatprep.subr.bf16.mxu0 %v8453
        %10358 = vmatpush1.bf16.msra.mxu0 %v8452
        %10359 = vmatprep.subr.bf16.mxu0 %v8484
        %10360 = vmatpush1.bf16.msra.mxu0 %v8483
        %10361 = vmatprep.subr.bf16.mxu0 %v8515
        %10362 = vmatpush1.bf16.msra.mxu0 %v8514
        %10363 = vmatprep.subr.bf16.mxu0 %v8546
        %10364 = vmatpush1.bf16.msra.mxu0 %v8545
        %10365 = vmatprep.subr.bf16.mxu0 %v8577
        %10366 = vmatpush1.bf16.msra.mxu0 %v8576
        %10367 = vmatprep.mubr.bf16.mxu0 %v4070
        %10368 = vmatmul.mubr.bf16.gmra.mrb[0].mxu0 %v4069
        %v10369 = vpop.f32.mrb[0].mxu0
        %v10370 = vadd.f32 0.0, %v10369
        %v10371 = vpop.f32.mrb[0].mxu0
        %v10372 = vadd.f32 0.0, %v10371
        %v10373 = vpop.f32.mrb[0].mxu0
        %v10374 = vpop.f32.mrb[0].mxu0
        %10375 = vdwg.mxu0
        %10376 = vmatprep.subr.bf16.mxu0 %v8608
        %10377 = vmatpush1.bf16.msra.mxu0 %v8607
        %10378 = vmatprep.subr.bf16.mxu0 %v8639
        %10379 = vmatpush1.bf16.msra.mxu0 %v8638
        %10380 = vmatprep.subr.bf16.mxu0 %v8670
        %10381 = vmatpush1.bf16.msra.mxu0 %v8669
        %10382 = vmatprep.subr.bf16.mxu0 %v8701
        %10383 = vmatpush1.bf16.msra.mxu0 %v8700
        %10384 = vmatprep.subr.bf16.mxu0 %v8732
        %10385 = vmatpush1.bf16.msra.mxu0 %v8731
        %10386 = vmatprep.subr.bf16.mxu0 %v8763
        %10387 = vmatpush1.bf16.msra.mxu0 %v8762
        %10388 = vmatprep.subr.bf16.mxu0 %v8794
        %10389 = vmatpush1.bf16.msra.mxu0 %v8793
        %10390 = vmatprep.subr.bf16.mxu0 %v8825
        %10391 = vmatpush1.bf16.msra.mxu0 %v8824
        %10392 = vmatprep.subr.bf16.mxu0 %v8856
        %10393 = vmatpush1.bf16.msra.mxu0 %v8855
        %10394 = vmatprep.subr.bf16.mxu0 %v8887
        %10395 = vmatpush1.bf16.msra.mxu0 %v8886
        %10396 = vmatprep.subr.bf16.mxu0 %v8918
        %10397 = vmatpush1.bf16.msra.mxu0 %v8917
        %10398 = vmatprep.subr.bf16.mxu0 %v8949
        %10399 = vmatpush1.bf16.msra.mxu0 %v8948
        %10400 = vmatprep.subr.bf16.mxu0 %v8980
        %10401 = vmatpush1.bf16.msra.mxu0 %v8979
        %10402 = vmatprep.subr.bf16.mxu0 %v9011
        %10403 = vmatpush1.bf16.msra.mxu0 %v9010
        %10404 = vmatprep.subr.bf16.mxu0 %v9042
        %10405 = vmatpush1.bf16.msra.mxu0 %v9041
        %10406 = vmatprep.subr.bf16.mxu0 %v9073
        %10407 = vmatpush1.bf16.msra.mxu0 %v9072
        %10408 = vmatprep.mubr.bf16.mxu0 %v4072
        %10409 = vmatmul.mubr.bf16.gmra.mrb[0].mxu0 %v4071
        %v10410 = vpop.f32.mrb[0].mxu0
        %v10411 = vadd.f32 %v10370, %v10410
        %v10412 = vpop.f32.mrb[0].mxu0
        %v10413 = vadd.f32 %v10372, %v10412
        %v10414 = vpop.f32.mrb[0].mxu0
        %v10415 = vpop.f32.mrb[0].mxu0
        %10416 = vdwg.mxu0
        %10417 = vmatprep.subr.bf16.mxu0 %v8114
        %10418 = vmatpush1.bf16.msra.mxu0 %v8113
        %10419 = vmatprep.subr.bf16.mxu0 %v8145
        %10420 = vmatpush1.bf16.msra.mxu0 %v8144
        %10421 = vmatprep.subr.bf16.mxu0 %v8176
        %10422 = vmatpush1.bf16.msra.mxu0 %v8175
        %10423 = vmatprep.subr.bf16.mxu0 %v8207
        %10424 = vmatpush1.bf16.msra.mxu0 %v8206
        %10425 = vmatprep.subr.bf16.mxu0 %v8238
        %10426 = vmatpush1.bf16.msra.mxu0 %v8237
        %10427 = vmatprep.subr.bf16.mxu0 %v8269
        %10428 = vmatpush1.bf16.msra.mxu0 %v8268
        %10429 = vmatprep.subr.bf16.mxu0 %v8300
        %10430 = vmatpush1.bf16.msra.mxu0 %v8299
        %10431 = vmatprep.subr.bf16.mxu0 %v8331
        %10432 = vmatpush1.bf16.msra.mxu0 %v8330
        %10433 = vmatprep.subr.bf16.mxu0 %v8362
        %10434 = vmatpush1.bf16.msra.mxu0 %v8361
        %10435 = vmatprep.subr.bf16.mxu0 %v8393
        %10436 = vmatpush1.bf16.msra.mxu0 %v8392
        %10437 = vmatprep.subr.bf16.mxu0 %v8424
        %10438 = vmatpush1.bf16.msra.mxu0 %v8423
        %10439 = vmatprep.subr.bf16.mxu0 %v8455
        %10440 = vmatpush1.bf16.msra.mxu0 %v8454
        %10441 = vmatprep.subr.bf16.mxu0 %v8486
        %10442 = vmatpush1.bf16.msra.mxu0 %v8485
        %10443 = vmatprep.subr.bf16.mxu0 %v8517
        %10444 = vmatpush1.bf16.msra.mxu0 %v8516
        %10445 = vmatprep.subr.bf16.mxu0 %v8548
        %10446 = vmatpush1.bf16.msra.mxu0 %v8547
        %10447 = vmatprep.subr.bf16.mxu0 %v8579
        %10448 = vmatpush1.bf16.msra.mxu0 %v8578
        %10449 = vmatprep.mubr.bf16.mxu0 %v4070
        %10450 = vmatmul.mubr.bf16.gmra.mrb[0].mxu0 %v4069
        %v10451 = vpop.f32.mrb[0].mxu0
        %v10452 = vadd.f32 0.0, %v10451
        %v10453 = vpop.f32.mrb[0].mxu0
        %v10454 = vadd.f32 0.0, %v10453
        %v10455 = vpop.f32.mrb[0].mxu0
        %v10456 = vpop.f32.mrb[0].mxu0
        %10457 = vdwg.mxu0
        %10458 = vmatprep.subr.bf16.mxu0 %v8610
        %10459 = vmatpush1.bf16.msra.mxu0 %v8609
        %10460 = vmatprep.subr.bf16.mxu0 %v8641
        %10461 = vmatpush1.bf16.msra.mxu0 %v8640
        %10462 = vmatprep.subr.bf16.mxu0 %v8672
        %10463 = vmatpush1.bf16.msra.mxu0 %v8671
        %10464 = vmatprep.subr.bf16.mxu0 %v8703
        %10465 = vmatpush1.bf16.msra.mxu0 %v8702
        %10466 = vmatprep.subr.bf16.mxu0 %v8734
        %10467 = vmatpush1.bf16.msra.mxu0 %v8733
        %10468 = vmatprep.subr.bf16.mxu0 %v8765
        %10469 = vmatpush1.bf16.msra.mxu0 %v8764
        %10470 = vmatprep.subr.bf16.mxu0 %v8796
        %10471 = vmatpush1.bf16.msra.mxu0 %v8795
        %10472 = vmatprep.subr.bf16.mxu0 %v8827
        %10473 = vmatpush1.bf16.msra.mxu0 %v8826
        %10474 = vmatprep.subr.bf16.mxu0 %v8858
        %10475 = vmatpush1.bf16.msra.mxu0 %v8857
        %10476 = vmatprep.subr.bf16.mxu0 %v8889
        %10477 = vmatpush1.bf16.msra.mxu0 %v8888
        %10478 = vmatprep.subr.bf16.mxu0 %v8920
        %10479 = vmatpush1.bf16.msra.mxu0 %v8919
        %10480 = vmatprep.subr.bf16.mxu0 %v8951
        %10481 = vmatpush1.bf16.msra.mxu0 %v8950
        %10482 = vmatprep.subr.bf16.mxu0 %v8982
        %10483 = vmatpush1.bf16.msra.mxu0 %v8981
        %10484 = vmatprep.subr.bf16.mxu0 %v9013
        %10485 = vmatpush1.bf16.msra.mxu0 %v9012
        %10486 = vmatprep.subr.bf16.mxu0 %v9044
        %10487 = vmatpush1.bf16.msra.mxu0 %v9043
        %10488 = vmatprep.subr.bf16.mxu0 %v9075
        %10489 = vmatpush1.bf16.msra.mxu0 %v9074
        %10490 = vmatprep.mubr.bf16.mxu0 %v4072
        %10491 = vmatmul.mubr.bf16.gmra.mrb[0].mxu0 %v4071
        %v10492 = vpop.f32.mrb[0].mxu0
        %v10493 = vadd.f32 %v10452, %v10492
        %v10494 = vpop.f32.mrb[0].mxu0
        %v10495 = vadd.f32 %v10454, %v10494
        %v10496 = vpop.f32.mrb[0].mxu0
        %v10497 = vpop.f32.mrb[0].mxu0
        %10498 = vdwg.mxu0
        %10499 = vmatprep.subr.bf16.mxu0 %v8116
        %10500 = vmatpush1.bf16.msra.mxu0 %v8115
        %10501 = vmatprep.subr.bf16.mxu0 %v8147
        %10502 = vmatpush1.bf16.msra.mxu0 %v8146
        %10503 = vmatprep.subr.bf16.mxu0 %v8178
        %10504 = vmatpush1.bf16.msra.mxu0 %v8177
        %10505 = vmatprep.subr.bf16.mxu0 %v8209
        %10506 = vmatpush1.bf16.msra.mxu0 %v8208
        %10507 = vmatprep.subr.bf16.mxu0 %v8240
        %10508 = vmatpush1.bf16.msra.mxu0 %v8239
        %10509 = vmatprep.subr.bf16.mxu0 %v8271
        %10510 = vmatpush1.bf16.msra.mxu0 %v8270
        %10511 = vmatprep.subr.bf16.mxu0 %v8302
        %10512 = vmatpush1.bf16.msra.mxu0 %v8301
        %10513 = vmatprep.subr.bf16.mxu0 %v8333
        %10514 = vmatpush1.bf16.msra.mxu0 %v8332
        %10515 = vmatprep.subr.bf16.mxu0 %v8364
        %10516 = vmatpush1.bf16.msra.mxu0 %v8363
        %10517 = vmatprep.subr.bf16.mxu0 %v8395
        %10518 = vmatpush1.bf16.msra.mxu0 %v8394
        %10519 = vmatprep.subr.bf16.mxu0 %v8426
        %10520 = vmatpush1.bf16.msra.mxu0 %v8425
        %10521 = vmatprep.subr.bf16.mxu0 %v8457
        %10522 = vmatpush1.bf16.msra.mxu0 %v8456
        %10523 = vmatprep.subr.bf16.mxu0 %v8488
        %10524 = vmatpush1.bf16.msra.mxu0 %v8487
        %10525 = vmatprep.subr.bf16.mxu0 %v8519
        %10526 = vmatpush1.bf16.msra.mxu0 %v8518
        %10527 = vmatprep.subr.bf16.mxu0 %v8550
        %10528 = vmatpush1.bf16.msra.mxu0 %v8549
        %10529 = vmatprep.subr.bf16.mxu0 %v8581
        %10530 = vmatpush1.bf16.msra.mxu0 %v8580
        %10531 = vmatprep.mubr.bf16.mxu0 %v4070
        %10532 = vmatmul.mubr.bf16.gmra.mrb[0].mxu0 %v4069
        %v10533 = vpop.f32.mrb[0].mxu0
        %v10534 = vadd.f32 0.0, %v10533
        %v10535 = vpop.f32.mrb[0].mxu0
        %v10536 = vadd.f32 0.0, %v10535
        %v10537 = vpop.f32.mrb[0].mxu0
        %v10538 = vpop.f32.mrb[0].mxu0
        %10539 = vdwg.mxu0
        %10540 = vmatprep.subr.bf16.mxu0 %v8612
        %10541 = vmatpush1.bf16.msra.mxu0 %v8611
        %10542 = vmatprep.subr.bf16.mxu0 %v8643
        %10543 = vmatpush1.bf16.msra.mxu0 %v8642
        %10544 = vmatprep.subr.bf16.mxu0 %v8674
        %10545 = vmatpush1.bf16.msra.mxu0 %v8673
        %10546 = vmatprep.subr.bf16.mxu0 %v8705
        %10547 = vmatpush1.bf16.msra.mxu0 %v8704
        %10548 = vmatprep.subr.bf16.mxu0 %v8736
        %10549 = vmatpush1.bf16.msra.mxu0 %v8735
        %10550 = vmatprep.subr.bf16.mxu0 %v8767
        %10551 = vmatpush1.bf16.msra.mxu0 %v8766
        %10552 = vmatprep.subr.bf16.mxu0 %v8798
        %10553 = vmatpush1.bf16.msra.mxu0 %v8797
        %10554 = vmatprep.subr.bf16.mxu0 %v8829
        %10555 = vmatpush1.bf16.msra.mxu0 %v8828
        %10556 = vmatprep.subr.bf16.mxu0 %v8860
        %10557 = vmatpush1.bf16.msra.mxu0 %v8859
        %10558 = vmatprep.subr.bf16.mxu0 %v8891
        %10559 = vmatpush1.bf16.msra.mxu0 %v8890
        %10560 = vmatprep.subr.bf16.mxu0 %v8922
        %10561 = vmatpush1.bf16.msra.mxu0 %v8921
        %10562 = vmatprep.subr.bf16.mxu0 %v8953
        %10563 = vmatpush1.bf16.msra.mxu0 %v8952
        %10564 = vmatprep.subr.bf16.mxu0 %v8984
        %10565 = vmatpush1.bf16.msra.mxu0 %v8983
        %10566 = vmatprep.subr.bf16.mxu0 %v9015
        %10567 = vmatpush1.bf16.msra.mxu0 %v9014
        %10568 = vmatprep.subr.bf16.mxu0 %v9046
        %10569 = vmatpush1.bf16.msra.mxu0 %v9045
        %10570 = vmatprep.subr.bf16.mxu0 %v9077
        %10571 = vmatpush1.bf16.msra.mxu0 %v9076
        %10572 = vmatprep.mubr.bf16.mxu0 %v4072
        %10573 = vmatmul.mubr.bf16.gmra.mrb[0].mxu0 %v4071
        %v10574 = vpop.f32.mrb[0].mxu0
        %v10575 = vadd.f32 %v10534, %v10574
        %v10576 = vpop.f32.mrb[0].mxu0
        %v10577 = vadd.f32 %v10536, %v10576
        %v10578 = vpop.f32.mrb[0].mxu0
        %v10579 = vpop.f32.mrb[0].mxu0
        %10580 = vdwg.mxu0
        %10581 = vmatprep.subr.bf16.mxu0 %v8118
        %10582 = vmatpush1.bf16.msra.mxu0 %v8117
        %10583 = vmatprep.subr.bf16.mxu0 %v8149
        %10584 = vmatpush1.bf16.msra.mxu0 %v8148
        %10585 = vmatprep.subr.bf16.mxu0 %v8180
        %10586 = vmatpush1.bf16.msra.mxu0 %v8179
        %10587 = vmatprep.subr.bf16.mxu0 %v8211
        %10588 = vmatpush1.bf16.msra.mxu0 %v8210
        %10589 = vmatprep.subr.bf16.mxu0 %v8242
        %10590 = vmatpush1.bf16.msra.mxu0 %v8241
        %10591 = vmatprep.subr.bf16.mxu0 %v8273
        %10592 = vmatpush1.bf16.msra.mxu0 %v8272
        %10593 = vmatprep.subr.bf16.mxu0 %v8304
        %10594 = vmatpush1.bf16.msra.mxu0 %v8303
        %10595 = vmatprep.subr.bf16.mxu0 %v8335
        %10596 = vmatpush1.bf16.msra.mxu0 %v8334
        %10597 = vmatprep.subr.bf16.mxu0 %v8366
        %10598 = vmatpush1.bf16.msra.mxu0 %v8365
        %10599 = vmatprep.subr.bf16.mxu0 %v8397
        %10600 = vmatpush1.bf16.msra.mxu0 %v8396
        %10601 = vmatprep.subr.bf16.mxu0 %v8428
        %10602 = vmatpush1.bf16.msra.mxu0 %v8427
        %10603 = vmatprep.subr.bf16.mxu0 %v8459
        %10604 = vmatpush1.bf16.msra.mxu0 %v8458
        %10605 = vmatprep.subr.bf16.mxu0 %v8490
        %10606 = vmatpush1.bf16.msra.mxu0 %v8489
        %10607 = vmatprep.subr.bf16.mxu0 %v8521
        %10608 = vmatpush1.bf16.msra.mxu0 %v8520
        %10609 = vmatprep.subr.bf16.mxu0 %v8552
        %10610 = vmatpush1.bf16.msra.mxu0 %v8551
        %10611 = vmatprep.subr.bf16.mxu0 %v8583
        %10612 = vmatpush1.bf16.msra.mxu0 %v8582
        %10613 = vmatprep.mubr.bf16.mxu0 %v4070
        %10614 = vmatmul.mubr.bf16.gmra.mrb[0].mxu0 %v4069
        %v10615 = vpop.f32.mrb[0].mxu0
        %v10616 = vadd.f32 0.0, %v10615
        %v10617 = vpop.f32.mrb[0].mxu0
        %v10618 = vadd.f32 0.0, %v10617
        %v10619 = vpop.f32.mrb[0].mxu0
        %v10620 = vpop.f32.mrb[0].mxu0
        %10621 = vdwg.mxu0
        %10622 = vmatprep.subr.bf16.mxu0 %v8614
        %10623 = vmatpush1.bf16.msra.mxu0 %v8613
        %10624 = vmatprep.subr.bf16.mxu0 %v8645
        %10625 = vmatpush1.bf16.msra.mxu0 %v8644
        %10626 = vmatprep.subr.bf16.mxu0 %v8676
        %10627 = vmatpush1.bf16.msra.mxu0 %v8675
        %10628 = vmatprep.subr.bf16.mxu0 %v8707
        %10629 = vmatpush1.bf16.msra.mxu0 %v8706
        %10630 = vmatprep.subr.bf16.mxu0 %v8738
        %10631 = vmatpush1.bf16.msra.mxu0 %v8737
        %10632 = vmatprep.subr.bf16.mxu0 %v8769
        %10633 = vmatpush1.bf16.msra.mxu0 %v8768
        %10634 = vmatprep.subr.bf16.mxu0 %v8800
        %10635 = vmatpush1.bf16.msra.mxu0 %v8799
        %10636 = vmatprep.subr.bf16.mxu0 %v8831
        %10637 = vmatpush1.bf16.msra.mxu0 %v8830
        %10638 = vmatprep.subr.bf16.mxu0 %v8862
        %10639 = vmatpush1.bf16.msra.mxu0 %v8861
        %10640 = vmatprep.subr.bf16.mxu0 %v8893
        %10641 = vmatpush1.bf16.msra.mxu0 %v8892
        %10642 = vmatprep.subr.bf16.mxu0 %v8924
        %10643 = vmatpush1.bf16.msra.mxu0 %v8923
        %10644 = vmatprep.subr.bf16.mxu0 %v8955
        %10645 = vmatpush1.bf16.msra.mxu0 %v8954
        %10646 = vmatprep.subr.bf16.mxu0 %v8986
        %10647 = vmatpush1.bf16.msra.mxu0 %v8985
        %10648 = vmatprep.subr.bf16.mxu0 %v9017
        %10649 = vmatpush1.bf16.msra.mxu0 %v9016
        %10650 = vmatprep.subr.bf16.mxu0 %v9048
        %10651 = vmatpush1.bf16.msra.mxu0 %v9047
        %10652 = vmatprep.subr.bf16.mxu0 %v9079
        %10653 = vmatpush1.bf16.msra.mxu0 %v9078
        %10654 = vmatprep.mubr.bf16.mxu0 %v4072
        %10655 = vmatmul.mubr.bf16.gmra.mrb[0].mxu0 %v4071
        %v10656 = vpop.f32.mrb[0].mxu0
        %v10657 = vadd.f32 %v10616, %v10656
        %v10658 = vpop.f32.mrb[0].mxu0
        %v10659 = vadd.f32 %v10618, %v10658
        %v10660 = vpop.f32.mrb[0].mxu0
        %v10661 = vpop.f32.mrb[0].mxu0
        %10662 = vdwg.mxu0
        %10663 = vmatprep.subr.bf16.mxu0 %v8120
        %10664 = vmatpush1.bf16.msra.mxu0 %v8119
        %10665 = vmatprep.subr.bf16.mxu0 %v8151
        %10666 = vmatpush1.bf16.msra.mxu0 %v8150
        %10667 = vmatprep.subr.bf16.mxu0 %v8182
        %10668 = vmatpush1.bf16.msra.mxu0 %v8181
        %10669 = vmatprep.subr.bf16.mxu0 %v8213
        %10670 = vmatpush1.bf16.msra.mxu0 %v8212
        %10671 = vmatprep.subr.bf16.mxu0 %v8244
        %10672 = vmatpush1.bf16.msra.mxu0 %v8243
        %10673 = vmatprep.subr.bf16.mxu0 %v8275
        %10674 = vmatpush1.bf16.msra.mxu0 %v8274
        %10675 = vmatprep.subr.bf16.mxu0 %v8306
        %10676 = vmatpush1.bf16.msra.mxu0 %v8305
        %10677 = vmatprep.subr.bf16.mxu0 %v8337
        %10678 = vmatpush1.bf16.msra.mxu0 %v8336
        %10679 = vmatprep.subr.bf16.mxu0 %v8368
        %10680 = vmatpush1.bf16.msra.mxu0 %v8367
        %10681 = vmatprep.subr.bf16.mxu0 %v8399
        %10682 = vmatpush1.bf16.msra.mxu0 %v8398
        %10683 = vmatprep.subr.bf16.mxu0 %v8430
        %10684 = vmatpush1.bf16.msra.mxu0 %v8429
        %10685 = vmatprep.subr.bf16.mxu0 %v8461
        %10686 = vmatpush1.bf16.msra.mxu0 %v8460
        %10687 = vmatprep.subr.bf16.mxu0 %v8492
        %10688 = vmatpush1.bf16.msra.mxu0 %v8491
        %10689 = vmatprep.subr.bf16.mxu0 %v8523
        %10690 = vmatpush1.bf16.msra.mxu0 %v8522
        %10691 = vmatprep.subr.bf16.mxu0 %v8554
        %10692 = vmatpush1.bf16.msra.mxu0 %v8553
        %10693 = vmatprep.subr.bf16.mxu0 %v8585
        %10694 = vmatpush1.bf16.msra.mxu0 %v8584
        %10695 = vmatprep.mubr.bf16.mxu0 %v4070
        %10696 = vmatmul.mubr.bf16.gmra.mrb[0].mxu0 %v4069
        %v10697 = vpop.f32.mrb[0].mxu0
        %v10698 = vadd.f32 0.0, %v10697
        %v10699 = vpop.f32.mrb[0].mxu0
        %v10700 = vadd.f32 0.0, %v10699
        %v10701 = vpop.f32.mrb[0].mxu0
        %v10702 = vpop.f32.mrb[0].mxu0
        %10703 = vdwg.mxu0
        %10704 = vmatprep.subr.bf16.mxu0 %v8616
        %10705 = vmatpush1.bf16.msra.mxu0 %v8615
        %10706 = vmatprep.subr.bf16.mxu0 %v8647
        %10707 = vmatpush1.bf16.msra.mxu0 %v8646
        %10708 = vmatprep.subr.bf16.mxu0 %v8678
        %10709 = vmatpush1.bf16.msra.mxu0 %v8677
        %10710 = vmatprep.subr.bf16.mxu0 %v8709
        %10711 = vmatpush1.bf16.msra.mxu0 %v8708
        %10712 = vmatprep.subr.bf16.mxu0 %v8740
        %10713 = vmatpush1.bf16.msra.mxu0 %v8739
        %10714 = vmatprep.subr.bf16.mxu0 %v8771
        %10715 = vmatpush1.bf16.msra.mxu0 %v8770
        %10716 = vmatprep.subr.bf16.mxu0 %v8802
        %10717 = vmatpush1.bf16.msra.mxu0 %v8801
        %10718 = vmatprep.subr.bf16.mxu0 %v8833
        %10719 = vmatpush1.bf16.msra.mxu0 %v8832
        %10720 = vmatprep.subr.bf16.mxu0 %v8864
        %10721 = vmatpush1.bf16.msra.mxu0 %v8863
        %10722 = vmatprep.subr.bf16.mxu0 %v8895
        %10723 = vmatpush1.bf16.msra.mxu0 %v8894
        %10724 = vmatprep.subr.bf16.mxu0 %v8926
        %10725 = vmatpush1.bf16.msra.mxu0 %v8925
        %10726 = vmatprep.subr.bf16.mxu0 %v8957
        %10727 = vmatpush1.bf16.msra.mxu0 %v8956
        %10728 = vmatprep.subr.bf16.mxu0 %v8988
        %10729 = vmatpush1.bf16.msra.mxu0 %v8987
        %10730 = vmatprep.subr.bf16.mxu0 %v9019
        %10731 = vmatpush1.bf16.msra.mxu0 %v9018
        %10732 = vmatprep.subr.bf16.mxu0 %v9050
        %10733 = vmatpush1.bf16.msra.mxu0 %v9049
        %10734 = vmatprep.subr.bf16.mxu0 %v9081
        %10735 = vmatpush1.bf16.msra.mxu0 %v9080
        %10736 = vmatprep.mubr.bf16.mxu0 %v4072
        %10737 = vmatmul.mubr.bf16.gmra.mrb[0].mxu0 %v4071
        %v10738 = vpop.f32.mrb[0].mxu0
        %v10739 = vadd.f32 %v10698, %v10738
        %v10740 = vpop.f32.mrb[0].mxu0
        %v10741 = vadd.f32 %v10700, %v10740
        %v10742 = vpop.f32.mrb[0].mxu0
        %v10743 = vpop.f32.mrb[0].mxu0
        %10744 = vdwg.mxu0
        %10745 = vmatprep.subr.bf16.mxu0 %v8122
        %10746 = vmatpush1.bf16.msra.mxu0 %v8121
        %10747 = vmatprep.subr.bf16.mxu0 %v8153
        %10748 = vmatpush1.bf16.msra.mxu0 %v8152
        %10749 = vmatprep.subr.bf16.mxu0 %v8184
        %10750 = vmatpush1.bf16.msra.mxu0 %v8183
        %10751 = vmatprep.subr.bf16.mxu0 %v8215
        %10752 = vmatpush1.bf16.msra.mxu0 %v8214
        %10753 = vmatprep.subr.bf16.mxu0 %v8246
        %10754 = vmatpush1.bf16.msra.mxu0 %v8245
        %10755 = vmatprep.subr.bf16.mxu0 %v8277
        %10756 = vmatpush1.bf16.msra.mxu0 %v8276
        %10757 = vmatprep.subr.bf16.mxu0 %v8308
        %10758 = vmatpush1.bf16.msra.mxu0 %v8307
        %10759 = vmatprep.subr.bf16.mxu0 %v8339
        %10760 = vmatpush1.bf16.msra.mxu0 %v8338
        %10761 = vmatprep.subr.bf16.mxu0 %v8370
        %10762 = vmatpush1.bf16.msra.mxu0 %v8369
        %10763 = vmatprep.subr.bf16.mxu0 %v8401
        %10764 = vmatpush1.bf16.msra.mxu0 %v8400
        %10765 = vmatprep.subr.bf16.mxu0 %v8432
        %10766 = vmatpush1.bf16.msra.mxu0 %v8431
        %10767 = vmatprep.subr.bf16.mxu0 %v8463
        %10768 = vmatpush1.bf16.msra.mxu0 %v8462
        %10769 = vmatprep.subr.bf16.mxu0 %v8494
        %10770 = vmatpush1.bf16.msra.mxu0 %v8493
        %10771 = vmatprep.subr.bf16.mxu0 %v8525
        %10772 = vmatpush1.bf16.msra.mxu0 %v8524
        %10773 = vmatprep.subr.bf16.mxu0 %v8556
        %10774 = vmatpush1.bf16.msra.mxu0 %v8555
        %10775 = vmatprep.subr.bf16.mxu0 %v8587
        %10776 = vmatpush1.bf16.msra.mxu0 %v8586
        %10777 = vmatprep.mubr.bf16.mxu0 %v4070
        %10778 = vmatmul.mubr.bf16.gmra.mrb[0].mxu0 %v4069
        %v10779 = vpop.f32.mrb[0].mxu0
        %v10780 = vadd.f32 0.0, %v10779
        %v10781 = vpop.f32.mrb[0].mxu0
        %v10782 = vadd.f32 0.0, %v10781
        %v10783 = vpop.f32.mrb[0].mxu0
        %v10784 = vpop.f32.mrb[0].mxu0
        %10785 = vdwg.mxu0
        %10786 = vmatprep.subr.bf16.mxu0 %v8618
        %10787 = vmatpush1.bf16.msra.mxu0 %v8617
        %10788 = vmatprep.subr.bf16.mxu0 %v8649
        %10789 = vmatpush1.bf16.msra.mxu0 %v8648
        %10790 = vmatprep.subr.bf16.mxu0 %v8680
        %10791 = vmatpush1.bf16.msra.mxu0 %v8679
        %10792 = vmatprep.subr.bf16.mxu0 %v8711
        %10793 = vmatpush1.bf16.msra.mxu0 %v8710
        %10794 = vmatprep.subr.bf16.mxu0 %v8742
        %10795 = vmatpush1.bf16.msra.mxu0 %v8741
        %10796 = vmatprep.subr.bf16.mxu0 %v8773
        %10797 = vmatpush1.bf16.msra.mxu0 %v8772
        %10798 = vmatprep.subr.bf16.mxu0 %v8804
        %10799 = vmatpush1.bf16.msra.mxu0 %v8803
        %10800 = vmatprep.subr.bf16.mxu0 %v8835
        %10801 = vmatpush1.bf16.msra.mxu0 %v8834
        %10802 = vmatprep.subr.bf16.mxu0 %v8866
        %10803 = vmatpush1.bf16.msra.mxu0 %v8865
        %10804 = vmatprep.subr.bf16.mxu0 %v8897
        %10805 = vmatpush1.bf16.msra.mxu0 %v8896
        %10806 = vmatprep.subr.bf16.mxu0 %v8928
        %10807 = vmatpush1.bf16.msra.mxu0 %v8927
        %10808 = vmatprep.subr.bf16.mxu0 %v8959
        %10809 = vmatpush1.bf16.msra.mxu0 %v8958
        %10810 = vmatprep.subr.bf16.mxu0 %v8990
        %10811 = vmatpush1.bf16.msra.mxu0 %v8989
        %10812 = vmatprep.subr.bf16.mxu0 %v9021
        %10813 = vmatpush1.bf16.msra.mxu0 %v9020
        %10814 = vmatprep.subr.bf16.mxu0 %v9052
        %10815 = vmatpush1.bf16.msra.mxu0 %v9051
        %10816 = vmatprep.subr.bf16.mxu0 %v9083
        %10817 = vmatpush1.bf16.msra.mxu0 %v9082
        %10818 = vmatprep.mubr.bf16.mxu0 %v4072
        %10819 = vmatmul.mubr.bf16.gmra.mrb[0].mxu0 %v4071
        %v10820 = vpop.f32.mrb[0].mxu0
        %v10821 = vadd.f32 %v10780, %v10820
        %v10822 = vpop.f32.mrb[0].mxu0
        %v10823 = vadd.f32 %v10782, %v10822
        %v10824 = vpop.f32.mrb[0].mxu0
        %v10825 = vpop.f32.mrb[0].mxu0
        %10826 = vdwg.mxu0
        %10827 = vmatprep.subr.bf16.mxu0 %v8124
        %10828 = vmatpush1.bf16.msra.mxu0 %v8123
        %10829 = vmatprep.subr.bf16.mxu0 %v8155
        %10830 = vmatpush1.bf16.msra.mxu0 %v8154
        %10831 = vmatprep.subr.bf16.mxu0 %v8186
        %10832 = vmatpush1.bf16.msra.mxu0 %v8185
        %10833 = vmatprep.subr.bf16.mxu0 %v8217
        %10834 = vmatpush1.bf16.msra.mxu0 %v8216
        %10835 = vmatprep.subr.bf16.mxu0 %v8248
        %10836 = vmatpush1.bf16.msra.mxu0 %v8247
        %10837 = vmatprep.subr.bf16.mxu0 %v8279
        %10838 = vmatpush1.bf16.msra.mxu0 %v8278
        %10839 = vmatprep.subr.bf16.mxu0 %v8310
        %10840 = vmatpush1.bf16.msra.mxu0 %v8309
        %10841 = vmatprep.subr.bf16.mxu0 %v8341
        %10842 = vmatpush1.bf16.msra.mxu0 %v8340
        %10843 = vmatprep.subr.bf16.mxu0 %v8372
        %10844 = vmatpush1.bf16.msra.mxu0 %v8371
        %10845 = vmatprep.subr.bf16.mxu0 %v8403
        %10846 = vmatpush1.bf16.msra.mxu0 %v8402
        %10847 = vmatprep.subr.bf16.mxu0 %v8434
        %10848 = vmatpush1.bf16.msra.mxu0 %v8433
        %10849 = vmatprep.subr.bf16.mxu0 %v8465
        %10850 = vmatpush1.bf16.msra.mxu0 %v8464
        %10851 = vmatprep.subr.bf16.mxu0 %v8496
        %10852 = vmatpush1.bf16.msra.mxu0 %v8495
        %10853 = vmatprep.subr.bf16.mxu0 %v8527
        %10854 = vmatpush1.bf16.msra.mxu0 %v8526
        %10855 = vmatprep.subr.bf16.mxu0 %v8558
        %10856 = vmatpush1.bf16.msra.mxu0 %v8557
        %10857 = vmatprep.subr.bf16.mxu0 %v8589
        %10858 = vmatpush1.bf16.msra.mxu0 %v8588
        %10859 = vmatprep.mubr.bf16.mxu0 %v4070
        %10860 = vmatmul.mubr.bf16.gmra.mrb[0].mxu0 %v4069
        %v10861 = vpop.f32.mrb[0].mxu0
        %v10862 = vadd.f32 0.0, %v10861
        %v10863 = vpop.f32.mrb[0].mxu0
        %v10864 = vadd.f32 0.0, %v10863
        %v10865 = vpop.f32.mrb[0].mxu0
        %v10866 = vpop.f32.mrb[0].mxu0
        %10867 = vdwg.mxu0
        %10868 = vmatprep.subr.bf16.mxu0 %v8620
        %10869 = vmatpush1.bf16.msra.mxu0 %v8619
        %10870 = vmatprep.subr.bf16.mxu0 %v8651
        %10871 = vmatpush1.bf16.msra.mxu0 %v8650
        %10872 = vmatprep.subr.bf16.mxu0 %v8682
        %10873 = vmatpush1.bf16.msra.mxu0 %v8681
        %10874 = vmatprep.subr.bf16.mxu0 %v8713
        %10875 = vmatpush1.bf16.msra.mxu0 %v8712
        %10876 = vmatprep.subr.bf16.mxu0 %v8744
        %10877 = vmatpush1.bf16.msra.mxu0 %v8743
        %10878 = vmatprep.subr.bf16.mxu0 %v8775
        %10879 = vmatpush1.bf16.msra.mxu0 %v8774
        %10880 = vmatprep.subr.bf16.mxu0 %v8806
        %10881 = vmatpush1.bf16.msra.mxu0 %v8805
        %10882 = vmatprep.subr.bf16.mxu0 %v8837
        %10883 = vmatpush1.bf16.msra.mxu0 %v8836
        %10884 = vmatprep.subr.bf16.mxu0 %v8868
        %10885 = vmatpush1.bf16.msra.mxu0 %v8867
        %10886 = vmatprep.subr.bf16.mxu0 %v8899
        %10887 = vmatpush1.bf16.msra.mxu0 %v8898
        %10888 = vmatprep.subr.bf16.mxu0 %v8930
        %10889 = vmatpush1.bf16.msra.mxu0 %v8929
        %10890 = vmatprep.subr.bf16.mxu0 %v8961
        %10891 = vmatpush1.bf16.msra.mxu0 %v8960
        %10892 = vmatprep.subr.bf16.mxu0 %v8992
        %10893 = vmatpush1.bf16.msra.mxu0 %v8991
        %10894 = vmatprep.subr.bf16.mxu0 %v9023
        %10895 = vmatpush1.bf16.msra.mxu0 %v9022
        %10896 = vmatprep.subr.bf16.mxu0 %v9054
        %10897 = vmatpush1.bf16.msra.mxu0 %v9053
        %10898 = vmatprep.subr.bf16.mxu0 %v9085
        %10899 = vmatpush1.bf16.msra.mxu0 %v9084
        %10900 = vmatprep.mubr.bf16.mxu0 %v4072
        %10901 = vmatmul.mubr.bf16.gmra.mrb[0].mxu0 %v4071
        %v10902 = vpop.f32.mrb[0].mxu0
        %v10903 = vadd.f32 %v10862, %v10902
        %v10904 = vpop.f32.mrb[0].mxu0
        %v10905 = vadd.f32 %v10864, %v10904
        %v10906 = vpop.f32.mrb[0].mxu0
        %v10907 = vpop.f32.mrb[0].mxu0
        %10908 = vdwg.mxu0
        %10909 = vmatprep.subr.bf16.mxu0 %v8126
        %10910 = vmatpush1.bf16.msra.mxu0 %v8125
        %10911 = vmatprep.subr.bf16.mxu0 %v8157
        %10912 = vmatpush1.bf16.msra.mxu0 %v8156
        %10913 = vmatprep.subr.bf16.mxu0 %v8188
        %10914 = vmatpush1.bf16.msra.mxu0 %v8187
        %10915 = vmatprep.subr.bf16.mxu0 %v8219
        %10916 = vmatpush1.bf16.msra.mxu0 %v8218
        %10917 = vmatprep.subr.bf16.mxu0 %v8250
        %10918 = vmatpush1.bf16.msra.mxu0 %v8249
        %10919 = vmatprep.subr.bf16.mxu0 %v8281
        %10920 = vmatpush1.bf16.msra.mxu0 %v8280
        %10921 = vmatprep.subr.bf16.mxu0 %v8312
        %10922 = vmatpush1.bf16.msra.mxu0 %v8311
        %10923 = vmatprep.subr.bf16.mxu0 %v8343
        %10924 = vmatpush1.bf16.msra.mxu0 %v8342
        %10925 = vmatprep.subr.bf16.mxu0 %v8374
        %10926 = vmatpush1.bf16.msra.mxu0 %v8373
        %10927 = vmatprep.subr.bf16.mxu0 %v8405
        %10928 = vmatpush1.bf16.msra.mxu0 %v8404
        %10929 = vmatprep.subr.bf16.mxu0 %v8436
        %10930 = vmatpush1.bf16.msra.mxu0 %v8435
        %10931 = vmatprep.subr.bf16.mxu0 %v8467
        %10932 = vmatpush1.bf16.msra.mxu0 %v8466
        %10933 = vmatprep.subr.bf16.mxu0 %v8498
        %10934 = vmatpush1.bf16.msra.mxu0 %v8497
        %10935 = vmatprep.subr.bf16.mxu0 %v8529
        %10936 = vmatpush1.bf16.msra.mxu0 %v8528
        %10937 = vmatprep.subr.bf16.mxu0 %v8560
        %10938 = vmatpush1.bf16.msra.mxu0 %v8559
        %10939 = vmatprep.subr.bf16.mxu0 %v8591
        %10940 = vmatpush1.bf16.msra.mxu0 %v8590
        %10941 = vmatprep.mubr.bf16.mxu0 %v4070
        %10942 = vmatmul.mubr.bf16.gmra.mrb[0].mxu0 %v4069
        %v10943 = vpop.f32.mrb[0].mxu0
        %v10944 = vadd.f32 0.0, %v10943
        %v10945 = vpop.f32.mrb[0].mxu0
        %v10946 = vadd.f32 0.0, %v10945
        %v10947 = vpop.f32.mrb[0].mxu0
        %v10948 = vpop.f32.mrb[0].mxu0
        %10949 = vdwg.mxu0
        %10950 = vmatprep.subr.bf16.mxu0 %v8622
        %10951 = vmatpush1.bf16.msra.mxu0 %v8621
        %10952 = vmatprep.subr.bf16.mxu0 %v8653
        %10953 = vmatpush1.bf16.msra.mxu0 %v8652
        %10954 = vmatprep.subr.bf16.mxu0 %v8684
        %10955 = vmatpush1.bf16.msra.mxu0 %v8683
        %10956 = vmatprep.subr.bf16.mxu0 %v8715
        %10957 = vmatpush1.bf16.msra.mxu0 %v8714
        %10958 = vmatprep.subr.bf16.mxu0 %v8746
        %10959 = vmatpush1.bf16.msra.mxu0 %v8745
        %10960 = vmatprep.subr.bf16.mxu0 %v8777
        %10961 = vmatpush1.bf16.msra.mxu0 %v8776
        %10962 = vmatprep.subr.bf16.mxu0 %v8808
        %10963 = vmatpush1.bf16.msra.mxu0 %v8807
        %10964 = vmatprep.subr.bf16.mxu0 %v8839
        %10965 = vmatpush1.bf16.msra.mxu0 %v8838
        %10966 = vmatprep.subr.bf16.mxu0 %v8870
        %10967 = vmatpush1.bf16.msra.mxu0 %v8869
        %10968 = vmatprep.subr.bf16.mxu0 %v8901
        %10969 = vmatpush1.bf16.msra.mxu0 %v8900
        %10970 = vmatprep.subr.bf16.mxu0 %v8932
        %10971 = vmatpush1.bf16.msra.mxu0 %v8931
        %10972 = vmatprep.subr.bf16.mxu0 %v8963
        %10973 = vmatpush1.bf16.msra.mxu0 %v8962
        %10974 = vmatprep.subr.bf16.mxu0 %v8994
        %10975 = vmatpush1.bf16.msra.mxu0 %v8993
        %10976 = vmatprep.subr.bf16.mxu0 %v9025
        %10977 = vmatpush1.bf16.msra.mxu0 %v9024
        %10978 = vmatprep.subr.bf16.mxu0 %v9056
        %10979 = vmatpush1.bf16.msra.mxu0 %v9055
        %10980 = vmatprep.subr.bf16.mxu0 %v9087
        %10981 = vmatpush1.bf16.msra.mxu0 %v9086
        %10982 = vmatprep.mubr.bf16.mxu0 %v4072
        %10983 = vmatmul.mubr.bf16.gmra.mrb[0].mxu0 %v4071
        %v10984 = vpop.f32.mrb[0].mxu0
        %v10985 = vadd.f32 %v10944, %v10984
        %v10986 = vpop.f32.mrb[0].mxu0
        %v10987 = vadd.f32 %v10946, %v10986
        %v10988 = vpop.f32.mrb[0].mxu0
        %v10989 = vpop.f32.mrb[0].mxu0
        %10990 = vdwg.mxu0
        %10991 = vmatprep.subr.bf16.mxu0 %v8128
        %10992 = vmatpush1.bf16.msra.mxu0 %v8127
        %10993 = vmatprep.subr.bf16.mxu0 %v8159
        %10994 = vmatpush1.bf16.msra.mxu0 %v8158
        %10995 = vmatprep.subr.bf16.mxu0 %v8190
        %10996 = vmatpush1.bf16.msra.mxu0 %v8189
        %10997 = vmatprep.subr.bf16.mxu0 %v8221
        %10998 = vmatpush1.bf16.msra.mxu0 %v8220
        %10999 = vmatprep.subr.bf16.mxu0 %v8252
        %11000 = vmatpush1.bf16.msra.mxu0 %v8251
        %11001 = vmatprep.subr.bf16.mxu0 %v8283
        %11002 = vmatpush1.bf16.msra.mxu0 %v8282
        %11003 = vmatprep.subr.bf16.mxu0 %v8314
        %11004 = vmatpush1.bf16.msra.mxu0 %v8313
        %11005 = vmatprep.subr.bf16.mxu0 %v8345
        %11006 = vmatpush1.bf16.msra.mxu0 %v8344
        %11007 = vmatprep.subr.bf16.mxu0 %v8376
        %11008 = vmatpush1.bf16.msra.mxu0 %v8375
        %11009 = vmatprep.subr.bf16.mxu0 %v8407
        %11010 = vmatpush1.bf16.msra.mxu0 %v8406
        %11011 = vmatprep.subr.bf16.mxu0 %v8438
        %11012 = vmatpush1.bf16.msra.mxu0 %v8437
        %11013 = vmatprep.subr.bf16.mxu0 %v8469
        %11014 = vmatpush1.bf16.msra.mxu0 %v8468
        %11015 = vmatprep.subr.bf16.mxu0 %v8500
        %11016 = vmatpush1.bf16.msra.mxu0 %v8499
        %11017 = vmatprep.subr.bf16.mxu0 %v8531
        %11018 = vmatpush1.bf16.msra.mxu0 %v8530
        %11019 = vmatprep.subr.bf16.mxu0 %v8562
        %11020 = vmatpush1.bf16.msra.mxu0 %v8561
        %11021 = vmatprep.subr.bf16.mxu0 %v8593
        %11022 = vmatpush1.bf16.msra.mxu0 %v8592
        %11023 = vmatprep.mubr.bf16.mxu0 %v4070
        %11024 = vmatmul.mubr.bf16.gmra.mrb[0].mxu0 %v4069
        %v11025 = vpop.f32.mrb[0].mxu0
        %v11026 = vadd.f32 0.0, %v11025
        %v11027 = vpop.f32.mrb[0].mxu0
        %v11028 = vadd.f32 0.0, %v11027
        %v11029 = vpop.f32.mrb[0].mxu0
        %v11030 = vpop.f32.mrb[0].mxu0
        %11031 = vdwg.mxu0
        %11032 = vmatprep.subr.bf16.mxu0 %v8624
        %11033 = vmatpush1.bf16.msra.mxu0 %v8623
        %11034 = vmatprep.subr.bf16.mxu0 %v8655
        %11035 = vmatpush1.bf16.msra.mxu0 %v8654
        %11036 = vmatprep.subr.bf16.mxu0 %v8686
        %11037 = vmatpush1.bf16.msra.mxu0 %v8685
        %11038 = vmatprep.subr.bf16.mxu0 %v8717
        %11039 = vmatpush1.bf16.msra.mxu0 %v8716
        %11040 = vmatprep.subr.bf16.mxu0 %v8748
        %11041 = vmatpush1.bf16.msra.mxu0 %v8747
        %11042 = vmatprep.subr.bf16.mxu0 %v8779
        %11043 = vmatpush1.bf16.msra.mxu0 %v8778
        %11044 = vmatprep.subr.bf16.mxu0 %v8810
        %11045 = vmatpush1.bf16.msra.mxu0 %v8809
        %11046 = vmatprep.subr.bf16.mxu0 %v8841
        %11047 = vmatpush1.bf16.msra.mxu0 %v8840
        %11048 = vmatprep.subr.bf16.mxu0 %v8872
        %11049 = vmatpush1.bf16.msra.mxu0 %v8871
        %11050 = vmatprep.subr.bf16.mxu0 %v8903
        %11051 = vmatpush1.bf16.msra.mxu0 %v8902
        %11052 = vmatprep.subr.bf16.mxu0 %v8934
        %11053 = vmatpush1.bf16.msra.mxu0 %v8933
        %11054 = vmatprep.subr.bf16.mxu0 %v8965
        %11055 = vmatpush1.bf16.msra.mxu0 %v8964
        %11056 = vmatprep.subr.bf16.mxu0 %v8996
        %11057 = vmatpush1.bf16.msra.mxu0 %v8995
        %11058 = vmatprep.subr.bf16.mxu0 %v9027
        %11059 = vmatpush1.bf16.msra.mxu0 %v9026
        %11060 = vmatprep.subr.bf16.mxu0 %v9058
        %11061 = vmatpush1.bf16.msra.mxu0 %v9057
        %11062 = vmatprep.subr.bf16.mxu0 %v9089
        %11063 = vmatpush1.bf16.msra.mxu0 %v9088
        %11064 = vmatprep.mubr.bf16.mxu0 %v4072
        %11065 = vmatmul.mubr.bf16.gmra.mrb[0].mxu0 %v4071
        %v11066 = vpop.f32.mrb[0].mxu0
        %v11067 = vadd.f32 %v11026, %v11066
        %v11068 = vpop.f32.mrb[0].mxu0
        %v11069 = vadd.f32 %v11028, %v11068
        %v11070 = vpop.f32.mrb[0].mxu0
        %v11071 = vpop.f32.mrb[0].mxu0
        %11072 = vdwg.mxu0
        %11073 = vmatprep.subr.bf16.mxu0 %v8130
        %11074 = vmatpush1.bf16.msra.mxu0 %v8129
        %11075 = vmatprep.subr.bf16.mxu0 %v8161
        %11076 = vmatpush1.bf16.msra.mxu0 %v8160
        %11077 = vmatprep.subr.bf16.mxu0 %v8192
        %11078 = vmatpush1.bf16.msra.mxu0 %v8191
        %11079 = vmatprep.subr.bf16.mxu0 %v8223
        %11080 = vmatpush1.bf16.msra.mxu0 %v8222
        %11081 = vmatprep.subr.bf16.mxu0 %v8254
        %11082 = vmatpush1.bf16.msra.mxu0 %v8253
        %11083 = vmatprep.subr.bf16.mxu0 %v8285
        %11084 = vmatpush1.bf16.msra.mxu0 %v8284
        %11085 = vmatprep.subr.bf16.mxu0 %v8316
        %11086 = vmatpush1.bf16.msra.mxu0 %v8315
        %11087 = vmatprep.subr.bf16.mxu0 %v8347
        %11088 = vmatpush1.bf16.msra.mxu0 %v8346
        %11089 = vmatprep.subr.bf16.mxu0 %v8378
        %11090 = vmatpush1.bf16.msra.mxu0 %v8377
        %11091 = vmatprep.subr.bf16.mxu0 %v8409
        %11092 = vmatpush1.bf16.msra.mxu0 %v8408
        %11093 = vmatprep.subr.bf16.mxu0 %v8440
        %11094 = vmatpush1.bf16.msra.mxu0 %v8439
        %11095 = vmatprep.subr.bf16.mxu0 %v8471
        %11096 = vmatpush1.bf16.msra.mxu0 %v8470
        %11097 = vmatprep.subr.bf16.mxu0 %v8502
        %11098 = vmatpush1.bf16.msra.mxu0 %v8501
        %11099 = vmatprep.subr.bf16.mxu0 %v8533
        %11100 = vmatpush1.bf16.msra.mxu0 %v8532
        %11101 = vmatprep.subr.bf16.mxu0 %v8564
        %11102 = vmatpush1.bf16.msra.mxu0 %v8563
        %11103 = vmatprep.subr.bf16.mxu0 %v8595
        %11104 = vmatpush1.bf16.msra.mxu0 %v8594
        %11105 = vmatprep.mubr.bf16.mxu0 %v4070
        %11106 = vmatmul.mubr.bf16.gmra.mrb[0].mxu0 %v4069
        %v11107 = vpop.f32.mrb[0].mxu0
        %v11108 = vadd.f32 0.0, %v11107
        %v11109 = vpop.f32.mrb[0].mxu0
        %v11110 = vadd.f32 0.0, %v11109
        %v11111 = vpop.f32.mrb[0].mxu0
        %v11112 = vpop.f32.mrb[0].mxu0
        %11113 = vdwg.mxu0
        %11114 = vmatprep.subr.bf16.mxu0 %v8626
        %11115 = vmatpush1.bf16.msra.mxu0 %v8625
        %11116 = vmatprep.subr.bf16.mxu0 %v8657
        %11117 = vmatpush1.bf16.msra.mxu0 %v8656
        %11118 = vmatprep.subr.bf16.mxu0 %v8688
        %11119 = vmatpush1.bf16.msra.mxu0 %v8687
        %11120 = vmatprep.subr.bf16.mxu0 %v8719
        %11121 = vmatpush1.bf16.msra.mxu0 %v8718
        %11122 = vmatprep.subr.bf16.mxu0 %v8750
        %11123 = vmatpush1.bf16.msra.mxu0 %v8749
        %11124 = vmatprep.subr.bf16.mxu0 %v8781
        %11125 = vmatpush1.bf16.msra.mxu0 %v8780
        %11126 = vmatprep.subr.bf16.mxu0 %v8812
        %11127 = vmatpush1.bf16.msra.mxu0 %v8811
        %11128 = vmatprep.subr.bf16.mxu0 %v8843
        %11129 = vmatpush1.bf16.msra.mxu0 %v8842
        %11130 = vmatprep.subr.bf16.mxu0 %v8874
        %11131 = vmatpush1.bf16.msra.mxu0 %v8873
        %11132 = vmatprep.subr.bf16.mxu0 %v8905
        %11133 = vmatpush1.bf16.msra.mxu0 %v8904
        %11134 = vmatprep.subr.bf16.mxu0 %v8936
        %11135 = vmatpush1.bf16.msra.mxu0 %v8935
        %11136 = vmatprep.subr.bf16.mxu0 %v8967
        %11137 = vmatpush1.bf16.msra.mxu0 %v8966
        %11138 = vmatprep.subr.bf16.mxu0 %v8998
        %11139 = vmatpush1.bf16.msra.mxu0 %v8997
        %11140 = vmatprep.subr.bf16.mxu0 %v9029
        %11141 = vmatpush1.bf16.msra.mxu0 %v9028
        %11142 = vmatprep.subr.bf16.mxu0 %v9060
        %11143 = vmatpush1.bf16.msra.mxu0 %v9059
        %11144 = vmatprep.subr.bf16.mxu0 %v9091
        %11145 = vmatpush1.bf16.msra.mxu0 %v9090
        %11146 = vmatprep.mubr.bf16.mxu0 %v4072
        %11147 = vmatmul.mubr.bf16.gmra.mrb[0].mxu0 %v4071
        %v11148 = vpop.f32.mrb[0].mxu0
        %v11149 = vadd.f32 %v11108, %v11148
        %v11150 = vpop.f32.mrb[0].mxu0
        %v11151 = vadd.f32 %v11110, %v11150
        %v11152 = vpop.f32.mrb[0].mxu0
        %v11153 = vpop.f32.mrb[0].mxu0
        %11154 = vdwg.mxu0
        %11155 = vmatprep.subr.bf16.mxu0 %v8132
        %11156 = vmatpush1.bf16.msra.mxu0 %v8131
        %11157 = vmatprep.subr.bf16.mxu0 %v8163
        %11158 = vmatpush1.bf16.msra.mxu0 %v8162
        %11159 = vmatprep.subr.bf16.mxu0 %v8194
        %11160 = vmatpush1.bf16.msra.mxu0 %v8193
        %11161 = vmatprep.subr.bf16.mxu0 %v8225
        %11162 = vmatpush1.bf16.msra.mxu0 %v8224
        %11163 = vmatprep.subr.bf16.mxu0 %v8256
        %11164 = vmatpush1.bf16.msra.mxu0 %v8255
        %11165 = vmatprep.subr.bf16.mxu0 %v8287
        %11166 = vmatpush1.bf16.msra.mxu0 %v8286
        %11167 = vmatprep.subr.bf16.mxu0 %v8318
        %11168 = vmatpush1.bf16.msra.mxu0 %v8317
        %11169 = vmatprep.subr.bf16.mxu0 %v8349
        %11170 = vmatpush1.bf16.msra.mxu0 %v8348
        %11171 = vmatprep.subr.bf16.mxu0 %v8380
        %11172 = vmatpush1.bf16.msra.mxu0 %v8379
        %11173 = vmatprep.subr.bf16.mxu0 %v8411
        %11174 = vmatpush1.bf16.msra.mxu0 %v8410
        %11175 = vmatprep.subr.bf16.mxu0 %v8442
        %11176 = vmatpush1.bf16.msra.mxu0 %v8441
        %11177 = vmatprep.subr.bf16.mxu0 %v8473
        %11178 = vmatpush1.bf16.msra.mxu0 %v8472
        %11179 = vmatprep.subr.bf16.mxu0 %v8504
        %11180 = vmatpush1.bf16.msra.mxu0 %v8503
        %11181 = vmatprep.subr.bf16.mxu0 %v8535
        %11182 = vmatpush1.bf16.msra.mxu0 %v8534
        %11183 = vmatprep.subr.bf16.mxu0 %v8566
        %11184 = vmatpush1.bf16.msra.mxu0 %v8565
        %11185 = vmatprep.subr.bf16.mxu0 %v8597
        %11186 = vmatpush1.bf16.msra.mxu0 %v8596
        %11187 = vmatprep.mubr.bf16.mxu0 %v4070
        %11188 = vmatmul.mubr.bf16.gmra.mrb[0].mxu0 %v4069
        %v11189 = vpop.f32.mrb[0].mxu0
        %v11190 = vadd.f32 0.0, %v11189
        %v11191 = vpop.f32.mrb[0].mxu0
        %v11192 = vadd.f32 0.0, %v11191
        %v11193 = vpop.f32.mrb[0].mxu0
        %v11194 = vpop.f32.mrb[0].mxu0
        %11195 = vdwg.mxu0
        %11196 = vmatprep.subr.bf16.mxu0 %v8628
        %11197 = vmatpush1.bf16.msra.mxu0 %v8627
        %11198 = vmatprep.subr.bf16.mxu0 %v8659
        %11199 = vmatpush1.bf16.msra.mxu0 %v8658
        %11200 = vmatprep.subr.bf16.mxu0 %v8690
        %11201 = vmatpush1.bf16.msra.mxu0 %v8689
        %11202 = vmatprep.subr.bf16.mxu0 %v8721
        %11203 = vmatpush1.bf16.msra.mxu0 %v8720
        %11204 = vmatprep.subr.bf16.mxu0 %v8752
        %11205 = vmatpush1.bf16.msra.mxu0 %v8751
        %11206 = vmatprep.subr.bf16.mxu0 %v8783
        %11207 = vmatpush1.bf16.msra.mxu0 %v8782
        %11208 = vmatprep.subr.bf16.mxu0 %v8814
        %11209 = vmatpush1.bf16.msra.mxu0 %v8813
        %11210 = vmatprep.subr.bf16.mxu0 %v8845
        %11211 = vmatpush1.bf16.msra.mxu0 %v8844
        %11212 = vmatprep.subr.bf16.mxu0 %v8876
        %11213 = vmatpush1.bf16.msra.mxu0 %v8875
        %11214 = vmatprep.subr.bf16.mxu0 %v8907
        %11215 = vmatpush1.bf16.msra.mxu0 %v8906
        %11216 = vmatprep.subr.bf16.mxu0 %v8938
        %11217 = vmatpush1.bf16.msra.mxu0 %v8937
        %11218 = vmatprep.subr.bf16.mxu0 %v8969
        %11219 = vmatpush1.bf16.msra.mxu0 %v8968
        %11220 = vmatprep.subr.bf16.mxu0 %v9000
        %11221 = vmatpush1.bf16.msra.mxu0 %v8999
        %11222 = vmatprep.subr.bf16.mxu0 %v9031
        %11223 = vmatpush1.bf16.msra.mxu0 %v9030
        %11224 = vmatprep.subr.bf16.mxu0 %v9062
        %11225 = vmatpush1.bf16.msra.mxu0 %v9061
        %11226 = vmatprep.subr.bf16.mxu0 %v9093
        %11227 = vmatpush1.bf16.msra.mxu0 %v9092
        %11228 = vmatprep.mubr.bf16.mxu0 %v4072
        %11229 = vmatmul.mubr.bf16.gmra.mrb[0].mxu0 %v4071
        %v11230 = vpop.f32.mrb[0].mxu0
        %v11231 = vadd.f32 %v11190, %v11230
        %v11232 = vpop.f32.mrb[0].mxu0
        %v11233 = vadd.f32 %v11192, %v11232
        %v11234 = vpop.f32.mrb[0].mxu0
        %v11235 = vpop.f32.mrb[0].mxu0
        %11236 = vdwg.mxu0
        %11237 = vmatprep.subr.bf16.mxu0 %v8134
        %11238 = vmatpush1.bf16.msra.mxu0 %v8133
        %11239 = vmatprep.subr.bf16.mxu0 %v8165
        %11240 = vmatpush1.bf16.msra.mxu0 %v8164
        %11241 = vmatprep.subr.bf16.mxu0 %v8196
        %11242 = vmatpush1.bf16.msra.mxu0 %v8195
        %11243 = vmatprep.subr.bf16.mxu0 %v8227
        %11244 = vmatpush1.bf16.msra.mxu0 %v8226
        %11245 = vmatprep.subr.bf16.mxu0 %v8258
        %11246 = vmatpush1.bf16.msra.mxu0 %v8257
        %11247 = vmatprep.subr.bf16.mxu0 %v8289
        %11248 = vmatpush1.bf16.msra.mxu0 %v8288
        %11249 = vmatprep.subr.bf16.mxu0 %v8320
        %11250 = vmatpush1.bf16.msra.mxu0 %v8319
        %11251 = vmatprep.subr.bf16.mxu0 %v8351
        %11252 = vmatpush1.bf16.msra.mxu0 %v8350
        %11253 = vmatprep.subr.bf16.mxu0 %v8382
        %11254 = vmatpush1.bf16.msra.mxu0 %v8381
        %11255 = vmatprep.subr.bf16.mxu0 %v8413
        %11256 = vmatpush1.bf16.msra.mxu0 %v8412
        %11257 = vmatprep.subr.bf16.mxu0 %v8444
        %11258 = vmatpush1.bf16.msra.mxu0 %v8443
        %11259 = vmatprep.subr.bf16.mxu0 %v8475
        %11260 = vmatpush1.bf16.msra.mxu0 %v8474
        %11261 = vmatprep.subr.bf16.mxu0 %v8506
        %11262 = vmatpush1.bf16.msra.mxu0 %v8505
        %11263 = vmatprep.subr.bf16.mxu0 %v8537
        %11264 = vmatpush1.bf16.msra.mxu0 %v8536
        %11265 = vmatprep.subr.bf16.mxu0 %v8568
        %11266 = vmatpush1.bf16.msra.mxu0 %v8567
        %11267 = vmatprep.subr.bf16.mxu0 %v8599
        %11268 = vmatpush1.bf16.msra.mxu0 %v8598
        %11269 = vmatprep.mubr.bf16.mxu0 %v4070
        %11270 = vmatmul.mubr.bf16.gmra.mrb[0].mxu0 %v4069
        %v11271 = vpop.f32.mrb[0].mxu0
        %v11272 = vadd.f32 0.0, %v11271
        %v11273 = vpop.f32.mrb[0].mxu0
        %v11274 = vadd.f32 0.0, %v11273
        %v11275 = vpop.f32.mrb[0].mxu0
        %v11276 = vpop.f32.mrb[0].mxu0
        %11277 = vdwg.mxu0
        %11278 = vmatprep.subr.bf16.mxu0 %v8630
        %11279 = vmatpush1.bf16.msra.mxu0 %v8629
        %11280 = vmatprep.subr.bf16.mxu0 %v8661
        %11281 = vmatpush1.bf16.msra.mxu0 %v8660
        %11282 = vmatprep.subr.bf16.mxu0 %v8692
        %11283 = vmatpush1.bf16.msra.mxu0 %v8691
        %11284 = vmatprep.subr.bf16.mxu0 %v8723
        %11285 = vmatpush1.bf16.msra.mxu0 %v8722
        %11286 = vmatprep.subr.bf16.mxu0 %v8754
        %11287 = vmatpush1.bf16.msra.mxu0 %v8753
        %11288 = vmatprep.subr.bf16.mxu0 %v8785
        %11289 = vmatpush1.bf16.msra.mxu0 %v8784
        %11290 = vmatprep.subr.bf16.mxu0 %v8816
        %11291 = vmatpush1.bf16.msra.mxu0 %v8815
        %11292 = vmatprep.subr.bf16.mxu0 %v8847
        %11293 = vmatpush1.bf16.msra.mxu0 %v8846
        %11294 = vmatprep.subr.bf16.mxu0 %v8878
        %11295 = vmatpush1.bf16.msra.mxu0 %v8877
        %11296 = vmatprep.subr.bf16.mxu0 %v8909
        %11297 = vmatpush1.bf16.msra.mxu0 %v8908
        %11298 = vmatprep.subr.bf16.mxu0 %v8940
        %11299 = vmatpush1.bf16.msra.mxu0 %v8939
        %11300 = vmatprep.subr.bf16.mxu0 %v8971
        %11301 = vmatpush1.bf16.msra.mxu0 %v8970
        %11302 = vmatprep.subr.bf16.mxu0 %v9002
        %11303 = vmatpush1.bf16.msra.mxu0 %v9001
        %11304 = vmatprep.subr.bf16.mxu0 %v9033
        %11305 = vmatpush1.bf16.msra.mxu0 %v9032
        %11306 = vmatprep.subr.bf16.mxu0 %v9064
        %11307 = vmatpush1.bf16.msra.mxu0 %v9063
        %11308 = vmatprep.subr.bf16.mxu0 %v9095
        %11309 = vmatpush1.bf16.msra.mxu0 %v9094
        %11310 = vmatprep.mubr.bf16.mxu0 %v4072
        %11311 = vmatmul.mubr.bf16.gmra.mrb[0].mxu0 %v4071
        %v11312 = vpop.f32.mrb[0].mxu0
        %v11313 = vadd.f32 %v11272, %v11312
        %v11314 = vpop.f32.mrb[0].mxu0
        %v11315 = vadd.f32 %v11274, %v11314
        %v11316 = vpop.f32.mrb[0].mxu0
        %v11317 = vpop.f32.mrb[0].mxu0
        %11318 = vdwg.mxu0
        %11319 = vmatprep.subr.bf16.mxu0 0
        %11320 = vmatpush1.bf16.msra.mxu0 %v8135
        %11321 = vmatprep.subr.bf16.mxu0 0
        %11322 = vmatpush1.bf16.msra.mxu0 %v8166
        %11323 = vmatprep.subr.bf16.mxu0 0
        %11324 = vmatpush1.bf16.msra.mxu0 %v8197
        %11325 = vmatprep.subr.bf16.mxu0 0
        %11326 = vmatpush1.bf16.msra.mxu0 %v8228
        %11327 = vmatprep.subr.bf16.mxu0 0
        %11328 = vmatpush1.bf16.msra.mxu0 %v8259
        %11329 = vmatprep.subr.bf16.mxu0 0
        %11330 = vmatpush1.bf16.msra.mxu0 %v8290
        %11331 = vmatprep.subr.bf16.mxu0 0
        %11332 = vmatpush1.bf16.msra.mxu0 %v8321
        %11333 = vmatprep.subr.bf16.mxu0 0
        %11334 = vmatpush1.bf16.msra.mxu0 %v8352
        %11335 = vmatprep.subr.bf16.mxu0 0
        %11336 = vmatpush1.bf16.msra.mxu0 %v8383
        %11337 = vmatprep.subr.bf16.mxu0 0
        %11338 = vmatpush1.bf16.msra.mxu0 %v8414
        %11339 = vmatprep.subr.bf16.mxu0 0
        %11340 = vmatpush1.bf16.msra.mxu0 %v8445
        %11341 = vmatprep.subr.bf16.mxu0 0
        %11342 = vmatpush1.bf16.msra.mxu0 %v8476
        %11343 = vmatprep.subr.bf16.mxu0 0
        %11344 = vmatpush1.bf16.msra.mxu0 %v8507
        %11345 = vmatprep.subr.bf16.mxu0 0
        %11346 = vmatpush1.bf16.msra.mxu0 %v8538
        %11347 = vmatprep.subr.bf16.mxu0 0
        %11348 = vmatpush1.bf16.msra.mxu0 %v8569
        %11349 = vmatprep.subr.bf16.mxu0 0
        %11350 = vmatpush1.bf16.msra.mxu0 %v8600
        %11351 = vmatprep.mubr.bf16.mxu0 %v4070
        %11352 = vmatmul.mubr.bf16.gmra.mrb[0].mxu0 %v4069
        %v11353 = vpop.f32.mrb[0].mxu0
        %v11354 = vadd.f32 0.0, %v11353
        %v11355 = vpop.f32.mrb[0].mxu0
        %v11356 = vpop.f32.mrb[0].mxu0
        %v11357 = vpop.f32.mrb[0].mxu0
        %11358 = vdwg.mxu0
        %11359 = vmatprep.subr.bf16.mxu0 0
        %11360 = vmatpush1.bf16.msra.mxu0 %v8631
        %11361 = vmatprep.subr.bf16.mxu0 0
        %11362 = vmatpush1.bf16.msra.mxu0 %v8662
        %11363 = vmatprep.subr.bf16.mxu0 0
        %11364 = vmatpush1.bf16.msra.mxu0 %v8693
        %11365 = vmatprep.subr.bf16.mxu0 0
        %11366 = vmatpush1.bf16.msra.mxu0 %v8724
        %11367 = vmatprep.subr.bf16.mxu0 0
        %11368 = vmatpush1.bf16.msra.mxu0 %v8755
        %11369 = vmatprep.subr.bf16.mxu0 0
        %11370 = vmatpush1.bf16.msra.mxu0 %v8786
        %11371 = vmatprep.subr.bf16.mxu0 0
        %11372 = vmatpush1.bf16.msra.mxu0 %v8817
        %11373 = vmatprep.subr.bf16.mxu0 0
        %11374 = vmatpush1.bf16.msra.mxu0 %v8848
        %11375 = vmatprep.subr.bf16.mxu0 0
        %11376 = vmatpush1.bf16.msra.mxu0 %v8879
        %11377 = vmatprep.subr.bf16.mxu0 0
        %11378 = vmatpush1.bf16.msra.mxu0 %v8910
        %11379 = vmatprep.subr.bf16.mxu0 0
        %11380 = vmatpush1.bf16.msra.mxu0 %v8941
        %11381 = vmatprep.subr.bf16.mxu0 0
        %11382 = vmatpush1.bf16.msra.mxu0 %v8972
        %11383 = vmatprep.subr.bf16.mxu0 0
        %11384 = vmatpush1.bf16.msra.mxu0 %v9003
        %11385 = vmatprep.subr.bf16.mxu0 0
        %11386 = vmatpush1.bf16.msra.mxu0 %v9034
        %11387 = vmatprep.subr.bf16.mxu0 0
        %11388 = vmatpush1.bf16.msra.mxu0 %v9065
        %11389 = vmatprep.subr.bf16.mxu0 0
        %11390 = vmatpush1.bf16.msra.mxu0 %v9096
        %11391 = vmatprep.mubr.bf16.mxu0 %v4072
        %11392 = vmatmul.mubr.bf16.gmra.mrb[0].mxu0 %v4071
        %v11393 = vpop.f32.mrb[0].mxu0
        %v11394 = vadd.f32 %v11354, %v11393
        %v11395 = vpop.f32.mrb[0].mxu0
        %v11396 = vpop.f32.mrb[0].mxu0
        %v11397 = vpop.f32.mrb[0].mxu0
        %11398 = vdwg.mxu0
        %v11399 = vmul.f32 %v10165, %v10165
        %v11400 = vmul.f32 %v10167, %v10167
        %v11401 = vmul.f32 %v10247, %v10247
        %v11402 = vmul.f32 %v10249, %v10249
        %v11403 = vmul.f32 %v10329, %v10329
        %v11404 = vmul.f32 %v10331, %v10331
        %v11405 = vmul.f32 %v10411, %v10411
        %v11406 = vmul.f32 %v10413, %v10413
        %v11407 = vmul.f32 %v10493, %v10493
        %v11408 = vmul.f32 %v10495, %v10495
        %v11409 = vmul.f32 %v10575, %v10575
        %v11410 = vmul.f32 %v10577, %v10577
        %v11411 = vmul.f32 %v10657, %v10657
        %v11412 = vmul.f32 %v10659, %v10659
        %v11413 = vmul.f32 %v10739, %v10739
        %v11414 = vmul.f32 %v10741, %v10741
        %v11415 = vmul.f32 %v10821, %v10821
        %v11416 = vmul.f32 %v10823, %v10823
        %v11417 = vmul.f32 %v10903, %v10903
        %v11418 = vmul.f32 %v10905, %v10905
        %v11419 = vmul.f32 %v10985, %v10985
        %v11420 = vmul.f32 %v10987, %v10987
        %v11421 = vmul.f32 %v11067, %v11067
        %v11422 = vmul.f32 %v11069, %v11069
        %v11423 = vmul.f32 %v11149, %v11149
        %v11424 = vmul.f32 %v11151, %v11151
        %v11425 = vmul.f32 %v11231, %v11231
        %v11426 = vmul.f32 %v11233, %v11233
        %v11427 = vmul.f32 %v11313, %v11313
        %v11428 = vmul.f32 %v11315, %v11315
        %v11429 = vmul.f32 %v11394, %v11394
        %v11430 = vsub.f32 1.0, %v11399
        %v11431 = vsub.f32 1.0, %v11400
        %v11432 = vsub.f32 1.0, %v11401
        %v11433 = vsub.f32 1.0, %v11402
        %v11434 = vsub.f32 1.0, %v11403
        %v11435 = vsub.f32 1.0, %v11404
        %v11436 = vsub.f32 1.0, %v11405
        %v11437 = vsub.f32 1.0, %v11406
        %v11438 = vsub.f32 1.0, %v11407
        %v11439 = vsub.f32 1.0, %v11408
        %v11440 = vsub.f32 1.0, %v11409
        %v11441 = vsub.f32 1.0, %v11410
        %v11442 = vsub.f32 1.0, %v11411
        %v11443 = vsub.f32 1.0, %v11412
        %v11444 = vsub.f32 1.0, %v11413
        %v11445 = vsub.f32 1.0, %v11414
        %v11446 = vsub.f32 1.0, %v11415
        %v11447 = vsub.f32 1.0, %v11416
        %v11448 = vsub.f32 1.0, %v11417
        %v11449 = vsub.f32 1.0, %v11418
        %v11450 = vsub.f32 1.0, %v11419
        %v11451 = vsub.f32 1.0, %v11420
        %v11452 = vsub.f32 1.0, %v11421
        %v11453 = vsub.f32 1.0, %v11422
        %v11454 = vsub.f32 1.0, %v11423
        %v11455 = vsub.f32 1.0, %v11424
        %v11456 = vsub.f32 1.0, %v11425
        %v11457 = vsub.f32 1.0, %v11426
        %v11458 = vsub.f32 1.0, %v11427
        %v11459 = vsub.f32 1.0, %v11428
        %v11460 = vsub.f32 1.0, %v11429
        %v11461 = vmax.f32 %v11430, 0.0
        %v11462 = vmax.f32 %v11431, 0.0
        %v11463 = vmax.f32 %v11432, 0.0
        %v11464 = vmax.f32 %v11433, 0.0
        %v11465 = vmax.f32 %v11434, 0.0
        %v11466 = vmax.f32 %v11435, 0.0
        %v11467 = vmax.f32 %v11436, 0.0
        %v11468 = vmax.f32 %v11437, 0.0
        %v11469 = vmax.f32 %v11438, 0.0
        %v11470 = vmax.f32 %v11439, 0.0
        %v11471 = vmax.f32 %v11440, 0.0
        %v11472 = vmax.f32 %v11441, 0.0
        %v11473 = vmax.f32 %v11442, 0.0
        %v11474 = vmax.f32 %v11443, 0.0
        %v11475 = vmax.f32 %v11444, 0.0
        %v11476 = vmax.f32 %v11445, 0.0
        %v11477 = vmax.f32 %v11446, 0.0
        %v11478 = vmax.f32 %v11447, 0.0
        %v11479 = vmax.f32 %v11448, 0.0
        %v11480 = vmax.f32 %v11449, 0.0
        %v11481 = vmax.f32 %v11450, 0.0
        %v11482 = vmax.f32 %v11451, 0.0
        %v11483 = vmax.f32 %v11452, 0.0
        %v11484 = vmax.f32 %v11453, 0.0
        %v11485 = vmax.f32 %v11454, 0.0
        %v11486 = vmax.f32 %v11455, 0.0
        %v11487 = vmax.f32 %v11456, 0.0
        %v11488 = vmax.f32 %v11457, 0.0
        %v11489 = vmax.f32 %v11458, 0.0
        %v11490 = vmax.f32 %v11459, 0.0
        %v11491 = vmax.f32 %v11460, 0.0
        %v11492 = vmin.f32 %v11461, 1.0
        %v11493 = vmin.f32 %v11462, 1.0
        %v11494 = vmin.f32 %v11463, 1.0
        %v11495 = vmin.f32 %v11464, 1.0
        %v11496 = vmin.f32 %v11465, 1.0
        %v11497 = vmin.f32 %v11466, 1.0
        %v11498 = vmin.f32 %v11467, 1.0
        %v11499 = vmin.f32 %v11468, 1.0
        %v11500 = vmin.f32 %v11469, 1.0
        %v11501 = vmin.f32 %v11470, 1.0
        %v11502 = vmin.f32 %v11471, 1.0
        %v11503 = vmin.f32 %v11472, 1.0
        %v11504 = vmin.f32 %v11473, 1.0
        %v11505 = vmin.f32 %v11474, 1.0
        %v11506 = vmin.f32 %v11475, 1.0
        %v11507 = vmin.f32 %v11476, 1.0
        %v11508 = vmin.f32 %v11477, 1.0
        %v11509 = vmin.f32 %v11478, 1.0
        %v11510 = vmin.f32 %v11479, 1.0
        %v11511 = vmin.f32 %v11480, 1.0
        %v11512 = vmin.f32 %v11481, 1.0
        %v11513 = vmin.f32 %v11482, 1.0
        %v11514 = vmin.f32 %v11483, 1.0
        %v11515 = vmin.f32 %v11484, 1.0
        %v11516 = vmin.f32 %v11485, 1.0
        %v11517 = vmin.f32 %v11486, 1.0
        %v11518 = vmin.f32 %v11487, 1.0
        %v11519 = vmin.f32 %v11488, 1.0
        %v11520 = vmin.f32 %v11489, 1.0
        %v11521 = vmin.f32 %v11490, 1.0
        %v11522 = vmin.f32 %v11491, 1.0
        %v11523 = vrsqrt.pop %v11492
        %v11524 = vmul.f32 %v11492, %v11523
        %vm11525 = vcmp.eq.f32.partialorder %v11492, inf
        %v11526 = vsel %vm11525, %v11492, %v11524
        %vm11527 = vcmp.eq.f32.partialorder %v11492, 0.0
        %v11528 = vand.u32 %v11492, 2147483648
        %v11529 = vsel %vm11527, %v11528, %v11526
        %v11530 = vrsqrt.pop %v11493
        %v11531 = vmul.f32 %v11493, %v11530
        %vm11532 = vcmp.eq.f32.partialorder %v11493, inf
        %v11533 = vsel %vm11532, %v11493, %v11531
        %vm11534 = vcmp.eq.f32.partialorder %v11493, 0.0
        %v11535 = vand.u32 %v11493, 2147483648
        %v11536 = vsel %vm11534, %v11535, %v11533
        %v11537 = vrsqrt.pop %v11494
        %v11538 = vmul.f32 %v11494, %v11537
        %vm11539 = vcmp.eq.f32.partialorder %v11494, inf
        %v11540 = vsel %vm11539, %v11494, %v11538
        %vm11541 = vcmp.eq.f32.partialorder %v11494, 0.0
        %v11542 = vand.u32 %v11494, 2147483648
        %v11543 = vsel %vm11541, %v11542, %v11540
        %v11544 = vrsqrt.pop %v11495
        %v11545 = vmul.f32 %v11495, %v11544
        %vm11546 = vcmp.eq.f32.partialorder %v11495, inf
        %v11547 = vsel %vm11546, %v11495, %v11545
        %vm11548 = vcmp.eq.f32.partialorder %v11495, 0.0
        %v11549 = vand.u32 %v11495, 2147483648
        %v11550 = vsel %vm11548, %v11549, %v11547
        %v11551 = vrsqrt.pop %v11496
        %v11552 = vmul.f32 %v11496, %v11551
        %vm11553 = vcmp.eq.f32.partialorder %v11496, inf
        %v11554 = vsel %vm11553, %v11496, %v11552
        %vm11555 = vcmp.eq.f32.partialorder %v11496, 0.0
        %v11556 = vand.u32 %v11496, 2147483648
        %v11557 = vsel %vm11555, %v11556, %v11554
        %v11558 = vrsqrt.pop %v11497
        %v11559 = vmul.f32 %v11497, %v11558
        %vm11560 = vcmp.eq.f32.partialorder %v11497, inf
        %v11561 = vsel %vm11560, %v11497, %v11559
        %vm11562 = vcmp.eq.f32.partialorder %v11497, 0.0
        %v11563 = vand.u32 %v11497, 2147483648
        %v11564 = vsel %vm11562, %v11563, %v11561
        %v11565 = vrsqrt.pop %v11498
        %v11566 = vmul.f32 %v11498, %v11565
        %vm11567 = vcmp.eq.f32.partialorder %v11498, inf
        %v11568 = vsel %vm11567, %v11498, %v11566
        %vm11569 = vcmp.eq.f32.partialorder %v11498, 0.0
        %v11570 = vand.u32 %v11498, 2147483648
        %v11571 = vsel %vm11569, %v11570, %v11568
        %v11572 = vrsqrt.pop %v11499
        %v11573 = vmul.f32 %v11499, %v11572
        %vm11574 = vcmp.eq.f32.partialorder %v11499, inf
        %v11575 = vsel %vm11574, %v11499, %v11573
        %vm11576 = vcmp.eq.f32.partialorder %v11499, 0.0
        %v11577 = vand.u32 %v11499, 2147483648
        %v11578 = vsel %vm11576, %v11577, %v11575
        %v11579 = vrsqrt.pop %v11500
        %v11580 = vmul.f32 %v11500, %v11579
        %vm11581 = vcmp.eq.f32.partialorder %v11500, inf
        %v11582 = vsel %vm11581, %v11500, %v11580
        %vm11583 = vcmp.eq.f32.partialorder %v11500, 0.0
        %v11584 = vand.u32 %v11500, 2147483648
        %v11585 = vsel %vm11583, %v11584, %v11582
        %v11586 = vrsqrt.pop %v11501
        %v11587 = vmul.f32 %v11501, %v11586
        %vm11588 = vcmp.eq.f32.partialorder %v11501, inf
        %v11589 = vsel %vm11588, %v11501, %v11587
        %vm11590 = vcmp.eq.f32.partialorder %v11501, 0.0
        %v11591 = vand.u32 %v11501, 2147483648
        %v11592 = vsel %vm11590, %v11591, %v11589
        %v11593 = vrsqrt.pop %v11502
        %v11594 = vmul.f32 %v11502, %v11593
        %vm11595 = vcmp.eq.f32.partialorder %v11502, inf
        %v11596 = vsel %vm11595, %v11502, %v11594
        %vm11597 = vcmp.eq.f32.partialorder %v11502, 0.0
        %v11598 = vand.u32 %v11502, 2147483648
        %v11599 = vsel %vm11597, %v11598, %v11596
        %v11600 = vrsqrt.pop %v11503
        %v11601 = vmul.f32 %v11503, %v11600
        %vm11602 = vcmp.eq.f32.partialorder %v11503, inf
        %v11603 = vsel %vm11602, %v11503, %v11601
        %vm11604 = vcmp.eq.f32.partialorder %v11503, 0.0
        %v11605 = vand.u32 %v11503, 2147483648
        %v11606 = vsel %vm11604, %v11605, %v11603
        %v11607 = vrsqrt.pop %v11504
        %v11608 = vmul.f32 %v11504, %v11607
        %vm11609 = vcmp.eq.f32.partialorder %v11504, inf
        %v11610 = vsel %vm11609, %v11504, %v11608
        %vm11611 = vcmp.eq.f32.partialorder %v11504, 0.0
        %v11612 = vand.u32 %v11504, 2147483648
        %v11613 = vsel %vm11611, %v11612, %v11610
        %v11614 = vrsqrt.pop %v11505
        %v11615 = vmul.f32 %v11505, %v11614
        %vm11616 = vcmp.eq.f32.partialorder %v11505, inf
        %v11617 = vsel %vm11616, %v11505, %v11615
        %vm11618 = vcmp.eq.f32.partialorder %v11505, 0.0
        %v11619 = vand.u32 %v11505, 2147483648
        %v11620 = vsel %vm11618, %v11619, %v11617
        %v11621 = vrsqrt.pop %v11506
        %v11622 = vmul.f32 %v11506, %v11621
        %vm11623 = vcmp.eq.f32.partialorder %v11506, inf
        %v11624 = vsel %vm11623, %v11506, %v11622
        %vm11625 = vcmp.eq.f32.partialorder %v11506, 0.0
        %v11626 = vand.u32 %v11506, 2147483648
        %v11627 = vsel %vm11625, %v11626, %v11624
        %v11628 = vrsqrt.pop %v11507
        %v11629 = vmul.f32 %v11507, %v11628
        %vm11630 = vcmp.eq.f32.partialorder %v11507, inf
        %v11631 = vsel %vm11630, %v11507, %v11629
        %vm11632 = vcmp.eq.f32.partialorder %v11507, 0.0
        %v11633 = vand.u32 %v11507, 2147483648
        %v11634 = vsel %vm11632, %v11633, %v11631
        %v11635 = vrsqrt.pop %v11508
        %v11636 = vmul.f32 %v11508, %v11635
        %vm11637 = vcmp.eq.f32.partialorder %v11508, inf
        %v11638 = vsel %vm11637, %v11508, %v11636
        %vm11639 = vcmp.eq.f32.partialorder %v11508, 0.0
        %v11640 = vand.u32 %v11508, 2147483648
        %v11641 = vsel %vm11639, %v11640, %v11638
        %v11642 = vrsqrt.pop %v11509
        %v11643 = vmul.f32 %v11509, %v11642
        %vm11644 = vcmp.eq.f32.partialorder %v11509, inf
        %v11645 = vsel %vm11644, %v11509, %v11643
        %vm11646 = vcmp.eq.f32.partialorder %v11509, 0.0
        %v11647 = vand.u32 %v11509, 2147483648
        %v11648 = vsel %vm11646, %v11647, %v11645
        %v11649 = vrsqrt.pop %v11510
        %v11650 = vmul.f32 %v11510, %v11649
        %vm11651 = vcmp.eq.f32.partialorder %v11510, inf
        %v11652 = vsel %vm11651, %v11510, %v11650
        %vm11653 = vcmp.eq.f32.partialorder %v11510, 0.0
        %v11654 = vand.u32 %v11510, 2147483648
        %v11655 = vsel %vm11653, %v11654, %v11652
        %v11656 = vrsqrt.pop %v11511
        %v11657 = vmul.f32 %v11511, %v11656
        %vm11658 = vcmp.eq.f32.partialorder %v11511, inf
        %v11659 = vsel %vm11658, %v11511, %v11657
        %vm11660 = vcmp.eq.f32.partialorder %v11511, 0.0
        %v11661 = vand.u32 %v11511, 2147483648
        %v11662 = vsel %vm11660, %v11661, %v11659
        %v11663 = vrsqrt.pop %v11512
        %v11664 = vmul.f32 %v11512, %v11663
        %vm11665 = vcmp.eq.f32.partialorder %v11512, inf
        %v11666 = vsel %vm11665, %v11512, %v11664
        %vm11667 = vcmp.eq.f32.partialorder %v11512, 0.0
        %v11668 = vand.u32 %v11512, 2147483648
        %v11669 = vsel %vm11667, %v11668, %v11666
        %v11670 = vrsqrt.pop %v11513
        %v11671 = vmul.f32 %v11513, %v11670
        %vm11672 = vcmp.eq.f32.partialorder %v11513, inf
        %v11673 = vsel %vm11672, %v11513, %v11671
        %vm11674 = vcmp.eq.f32.partialorder %v11513, 0.0
        %v11675 = vand.u32 %v11513, 2147483648
        %v11676 = vsel %vm11674, %v11675, %v11673
        %v11677 = vrsqrt.pop %v11514
        %v11678 = vmul.f32 %v11514, %v11677
        %vm11679 = vcmp.eq.f32.partialorder %v11514, inf
        %v11680 = vsel %vm11679, %v11514, %v11678
        %vm11681 = vcmp.eq.f32.partialorder %v11514, 0.0
        %v11682 = vand.u32 %v11514, 2147483648
        %v11683 = vsel %vm11681, %v11682, %v11680
        %v11684 = vrsqrt.pop %v11515
        %v11685 = vmul.f32 %v11515, %v11684
        %vm11686 = vcmp.eq.f32.partialorder %v11515, inf
        %v11687 = vsel %vm11686, %v11515, %v11685
        %vm11688 = vcmp.eq.f32.partialorder %v11515, 0.0
        %v11689 = vand.u32 %v11515, 2147483648
        %v11690 = vsel %vm11688, %v11689, %v11687
        %v11691 = vrsqrt.pop %v11516
        %v11692 = vmul.f32 %v11516, %v11691
        %vm11693 = vcmp.eq.f32.partialorder %v11516, inf
        %v11694 = vsel %vm11693, %v11516, %v11692
        %vm11695 = vcmp.eq.f32.partialorder %v11516, 0.0
        %v11696 = vand.u32 %v11516, 2147483648
        %v11697 = vsel %vm11695, %v11696, %v11694
        %v11698 = vrsqrt.pop %v11517
        %v11699 = vmul.f32 %v11517, %v11698
        %vm11700 = vcmp.eq.f32.partialorder %v11517, inf
        %v11701 = vsel %vm11700, %v11517, %v11699
        %vm11702 = vcmp.eq.f32.partialorder %v11517, 0.0
        %v11703 = vand.u32 %v11517, 2147483648
        %v11704 = vsel %vm11702, %v11703, %v11701
        %v11705 = vrsqrt.pop %v11518
        %v11706 = vmul.f32 %v11518, %v11705
        %vm11707 = vcmp.eq.f32.partialorder %v11518, inf
        %v11708 = vsel %vm11707, %v11518, %v11706
        %vm11709 = vcmp.eq.f32.partialorder %v11518, 0.0
        %v11710 = vand.u32 %v11518, 2147483648
        %v11711 = vsel %vm11709, %v11710, %v11708
        %v11712 = vrsqrt.pop %v11519
        %v11713 = vmul.f32 %v11519, %v11712
        %vm11714 = vcmp.eq.f32.partialorder %v11519, inf
        %v11715 = vsel %vm11714, %v11519, %v11713
        %vm11716 = vcmp.eq.f32.partialorder %v11519, 0.0
        %v11717 = vand.u32 %v11519, 2147483648
        %v11718 = vsel %vm11716, %v11717, %v11715
        %v11719 = vrsqrt.pop %v11520
        %v11720 = vmul.f32 %v11520, %v11719
        %vm11721 = vcmp.eq.f32.partialorder %v11520, inf
        %v11722 = vsel %vm11721, %v11520, %v11720
        %vm11723 = vcmp.eq.f32.partialorder %v11520, 0.0
        %v11724 = vand.u32 %v11520, 2147483648
        %v11725 = vsel %vm11723, %v11724, %v11722
        %v11726 = vrsqrt.pop %v11521
        %v11727 = vmul.f32 %v11521, %v11726
        %vm11728 = vcmp.eq.f32.partialorder %v11521, inf
        %v11729 = vsel %vm11728, %v11521, %v11727
        %vm11730 = vcmp.eq.f32.partialorder %v11521, 0.0
        %v11731 = vand.u32 %v11521, 2147483648
        %v11732 = vsel %vm11730, %v11731, %v11729
        %v11733 = vrsqrt.pop %v11522
        %v11734 = vmul.f32 %v11522, %v11733
        %vm11735 = vcmp.eq.f32.partialorder %v11522, inf
        %v11736 = vsel %vm11735, %v11522, %v11734
        %vm11737 = vcmp.eq.f32.partialorder %v11522, 0.0
        %v11738 = vand.u32 %v11522, 2147483648
        %v11739 = vsel %vm11737, %v11738, %v11736
        %v11740 = vmul.f32 %v10165, 0.9553365
        %v11741 = vmul.f32 %v10167, 0.9553365
        %v11742 = vmul.f32 %v10247, 0.9553365
        %v11743 = vmul.f32 %v10249, 0.9553365
        %v11744 = vmul.f32 %v10329, 0.9553365
        %v11745 = vmul.f32 %v10331, 0.9553365
        %v11746 = vmul.f32 %v10411, 0.9553365
        %v11747 = vmul.f32 %v10413, 0.9553365
        %v11748 = vmul.f32 %v10493, 0.9553365
        %v11749 = vmul.f32 %v10495, 0.9553365
        %v11750 = vmul.f32 %v10575, 0.9553365
        %v11751 = vmul.f32 %v10577, 0.9553365
        %v11752 = vmul.f32 %v10657, 0.9553365
        %v11753 = vmul.f32 %v10659, 0.9553365
        %v11754 = vmul.f32 %v10739, 0.9553365
        %v11755 = vmul.f32 %v10741, 0.9553365
        %v11756 = vmul.f32 %v10821, 0.9553365
        %v11757 = vmul.f32 %v10823, 0.9553365
        %v11758 = vmul.f32 %v10903, 0.9553365
        %v11759 = vmul.f32 %v10905, 0.9553365
        %v11760 = vmul.f32 %v10985, 0.9553365
        %v11761 = vmul.f32 %v10987, 0.9553365
        %v11762 = vmul.f32 %v11067, 0.9553365
        %v11763 = vmul.f32 %v11069, 0.9553365
        %v11764 = vmul.f32 %v11149, 0.9553365
        %v11765 = vmul.f32 %v11151, 0.9553365
        %v11766 = vmul.f32 %v11231, 0.9553365
        %v11767 = vmul.f32 %v11233, 0.9553365
        %v11768 = vmul.f32 %v11313, 0.9553365
        %v11769 = vmul.f32 %v11315, 0.9553365
        %v11770 = vmul.f32 %v11394, 0.9553365
        %v11771 = vmul.f32 %v11529, 0.29552022
        %v11772 = vmul.f32 %v11536, 0.29552022
        %v11773 = vmul.f32 %v11543, 0.29552022
        %v11774 = vmul.f32 %v11550, 0.29552022
        %v11775 = vmul.f32 %v11557, 0.29552022
        %v11776 = vmul.f32 %v11564, 0.29552022
        %v11777 = vmul.f32 %v11571, 0.29552022
        %v11778 = vmul.f32 %v11578, 0.29552022
        %v11779 = vmul.f32 %v11585, 0.29552022
        %v11780 = vmul.f32 %v11592, 0.29552022
        %v11781 = vmul.f32 %v11599, 0.29552022
        %v11782 = vmul.f32 %v11606, 0.29552022
        %v11783 = vmul.f32 %v11613, 0.29552022
        %v11784 = vmul.f32 %v11620, 0.29552022
        %v11785 = vmul.f32 %v11627, 0.29552022
        %v11786 = vmul.f32 %v11634, 0.29552022
        %v11787 = vmul.f32 %v11641, 0.29552022
        %v11788 = vmul.f32 %v11648, 0.29552022
        %v11789 = vmul.f32 %v11655, 0.29552022
        %v11790 = vmul.f32 %v11662, 0.29552022
        %v11791 = vmul.f32 %v11669, 0.29552022
        %v11792 = vmul.f32 %v11676, 0.29552022
        %v11793 = vmul.f32 %v11683, 0.29552022
        %v11794 = vmul.f32 %v11690, 0.29552022
        %v11795 = vmul.f32 %v11697, 0.29552022
        %v11796 = vmul.f32 %v11704, 0.29552022
        %v11797 = vmul.f32 %v11711, 0.29552022
        %v11798 = vmul.f32 %v11718, 0.29552022
        %v11799 = vmul.f32 %v11725, 0.29552022
        %v11800 = vmul.f32 %v11732, 0.29552022
        %v11801 = vmul.f32 %v11739, 0.29552022
        %v11802 = vsub.f32 %v11740, %v11771
        %v11803 = vsub.f32 %v11741, %v11772
        %v11804 = vsub.f32 %v11742, %v11773
        %v11805 = vsub.f32 %v11743, %v11774
        %v11806 = vsub.f32 %v11744, %v11775
        %v11807 = vsub.f32 %v11745, %v11776
        %v11808 = vsub.f32 %v11746, %v11777
        %v11809 = vsub.f32 %v11747, %v11778
        %v11810 = vsub.f32 %v11748, %v11779
        %v11811 = vsub.f32 %v11749, %v11780
        %v11812 = vsub.f32 %v11750, %v11781
        %v11813 = vsub.f32 %v11751, %v11782
        %v11814 = vsub.f32 %v11752, %v11783
        %v11815 = vsub.f32 %v11753, %v11784
        %v11816 = vsub.f32 %v11754, %v11785
        %v11817 = vsub.f32 %v11755, %v11786
        %v11818 = vsub.f32 %v11756, %v11787
        %v11819 = vsub.f32 %v11757, %v11788
        %v11820 = vsub.f32 %v11758, %v11789
        %v11821 = vsub.f32 %v11759, %v11790
        %v11822 = vsub.f32 %v11760, %v11791
        %v11823 = vsub.f32 %v11761, %v11792
        %v11824 = vsub.f32 %v11762, %v11793
        %v11825 = vsub.f32 %v11763, %v11794
        %v11826 = vsub.f32 %v11764, %v11795
        %v11827 = vsub.f32 %v11765, %v11796
        %v11828 = vsub.f32 %v11766, %v11797
        %v11829 = vsub.f32 %v11767, %v11798
        %v11830 = vsub.f32 %v11768, %v11799
        %v11831 = vsub.f32 %v11769, %v11800
        %v11832 = vsub.f32 %v11770, %v11801
        %vm11833 = vcmp.gt.f32.partialorder %v10165, -0.9553365
        %vm11834 = vcmp.gt.f32.partialorder %v10167, -0.9553365
        %vm11835 = vcmp.gt.f32.partialorder %v10247, -0.9553365
        %vm11836 = vcmp.gt.f32.partialorder %v10249, -0.9553365
        %vm11837 = vcmp.gt.f32.partialorder %v10329, -0.9553365
        %vm11838 = vcmp.gt.f32.partialorder %v10331, -0.9553365
        %vm11839 = vcmp.gt.f32.partialorder %v10411, -0.9553365
        %vm11840 = vcmp.gt.f32.partialorder %v10413, -0.9553365
        %vm11841 = vcmp.gt.f32.partialorder %v10493, -0.9553365
        %vm11842 = vcmp.gt.f32.partialorder %v10495, -0.9553365
        %vm11843 = vcmp.gt.f32.partialorder %v10575, -0.9553365
        %vm11844 = vcmp.gt.f32.partialorder %v10577, -0.9553365
        %vm11845 = vcmp.gt.f32.partialorder %v10657, -0.9553365
        %vm11846 = vcmp.gt.f32.partialorder %v10659, -0.9553365
        %vm11847 = vcmp.gt.f32.partialorder %v10739, -0.9553365
        %vm11848 = vcmp.gt.f32.partialorder %v10741, -0.9553365
        %vm11849 = vcmp.gt.f32.partialorder %v10821, -0.9553365
        %vm11850 = vcmp.gt.f32.partialorder %v10823, -0.9553365
        %vm11851 = vcmp.gt.f32.partialorder %v10903, -0.9553365
        %vm11852 = vcmp.gt.f32.partialorder %v10905, -0.9553365
        %vm11853 = vcmp.gt.f32.partialorder %v10985, -0.9553365
        %vm11854 = vcmp.gt.f32.partialorder %v10987, -0.9553365
        %vm11855 = vcmp.gt.f32.partialorder %v11067, -0.9553365
        %vm11856 = vcmp.gt.f32.partialorder %v11069, -0.9553365
        %vm11857 = vcmp.gt.f32.partialorder %v11149, -0.9553365
        %vm11858 = vcmp.gt.f32.partialorder %v11151, -0.9553365
        %vm11859 = vcmp.gt.f32.partialorder %v11231, -0.9553365
        %vm11860 = vcmp.gt.f32.partialorder %v11233, -0.9553365
        %vm11861 = vcmp.gt.f32.partialorder %v11313, -0.9553365
        %vm11862 = vcmp.gt.f32.partialorder %v11315, -0.9553365
        %vm11863 = vcmp.gt.f32.partialorder %v11394, -0.9553365
        %v11864 = vsub.f32 %v10165, 0.08865606
        %v11865 = vsub.f32 %v10167, 0.08865606
        %v11866 = vsub.f32 %v10247, 0.08865606
        %v11867 = vsub.f32 %v10249, 0.08865606
        %v11868 = vsub.f32 %v10329, 0.08865606
        %v11869 = vsub.f32 %v10331, 0.08865606
        %v11870 = vsub.f32 %v10411, 0.08865606
        %v11871 = vsub.f32 %v10413, 0.08865606
        %v11872 = vsub.f32 %v10493, 0.08865606
        %v11873 = vsub.f32 %v10495, 0.08865606
        %v11874 = vsub.f32 %v10575, 0.08865606
        %v11875 = vsub.f32 %v10577, 0.08865606
        %v11876 = vsub.f32 %v10657, 0.08865606
        %v11877 = vsub.f32 %v10659, 0.08865606
        %v11878 = vsub.f32 %v10739, 0.08865606
        %v11879 = vsub.f32 %v10741, 0.08865606
        %v11880 = vsub.f32 %v10821, 0.08865606
        %v11881 = vsub.f32 %v10823, 0.08865606
        %v11882 = vsub.f32 %v10903, 0.08865606
        %v11883 = vsub.f32 %v10905, 0.08865606
        %v11884 = vsub.f32 %v10985, 0.08865606
        %v11885 = vsub.f32 %v10987, 0.08865606
        %v11886 = vsub.f32 %v11067, 0.08865606
        %v11887 = vsub.f32 %v11069, 0.08865606
        %v11888 = vsub.f32 %v11149, 0.08865606
        %v11889 = vsub.f32 %v11151, 0.08865606
        %v11890 = vsub.f32 %v11231, 0.08865606
        %v11891 = vsub.f32 %v11233, 0.08865606
        %v11892 = vsub.f32 %v11313, 0.08865606
        %v11893 = vsub.f32 %v11315, 0.08865606
        %v11894 = vsub.f32 %v11394, 0.08865606
        %v11895 = vsel %vm11833, %v11802, %v11864
        %v11896 = vsel %vm11834, %v11803, %v11865
        %v11897 = vsel %vm11835, %v11804, %v11866
        %v11898 = vsel %vm11836, %v11805, %v11867
        %v11899 = vsel %vm11837, %v11806, %v11868
        %v11900 = vsel %vm11838, %v11807, %v11869
        %v11901 = vsel %vm11839, %v11808, %v11870
        %v11902 = vsel %vm11840, %v11809, %v11871
        %v11903 = vsel %vm11841, %v11810, %v11872
        %v11904 = vsel %vm11842, %v11811, %v11873
        %v11905 = vsel %vm11843, %v11812, %v11874
        %v11906 = vsel %vm11844, %v11813, %v11875
        %v11907 = vsel %vm11845, %v11814, %v11876
        %v11908 = vsel %vm11846, %v11815, %v11877
        %v11909 = vsel %vm11847, %v11816, %v11878
        %v11910 = vsel %vm11848, %v11817, %v11879
        %v11911 = vsel %vm11849, %v11818, %v11880
        %v11912 = vsel %vm11850, %v11819, %v11881
        %v11913 = vsel %vm11851, %v11820, %v11882
        %v11914 = vsel %vm11852, %v11821, %v11883
        %v11915 = vsel %vm11853, %v11822, %v11884
        %v11916 = vsel %vm11854, %v11823, %v11885
        %v11917 = vsel %vm11855, %v11824, %v11886
        %v11918 = vsel %vm11856, %v11825, %v11887
        %v11919 = vsel %vm11857, %v11826, %v11888
        %v11920 = vsel %vm11858, %v11827, %v11889
        %v11921 = vsel %vm11859, %v11828, %v11890
        %v11922 = vsel %vm11860, %v11829, %v11891
        %v11923 = vsel %vm11861, %v11830, %v11892
        %v11924 = vsel %vm11862, %v11831, %v11893
        %v11925 = vsel %vm11863, %v11832, %v11894
        %s11926 = smul.u32 %s21, 3968
        %v11927 = vadd.s32 %v2425, 128
        %v11928 = vadd.s32 %v2425, 256
        %v11929 = vadd.s32 %v2425, 384
        %v11930 = vadd.s32 %v2425, 512
        %v11931 = vadd.s32 %v2425, 640
        %v11932 = vadd.s32 %v2425, 768
        %v11933 = vadd.s32 %v2425, 896
        %v11934 = vadd.s32 %v2425, 1024
        %v11935 = vadd.s32 %v2425, 1152
        %v11936 = vadd.s32 %v2425, 1280
        %v11937 = vadd.s32 %v2425, 1408
        %v11938 = vadd.s32 %v2425, 1536
        %v11939 = vadd.s32 %v2425, 1664
        %v11940 = vadd.s32 %v2425, 1792
        %v11941 = vadd.s32 %v2425, 1920
        %v11942 = vadd.s32 %v2425, 2048
        %v11943 = vadd.s32 %v2425, 2176
        %v11944 = vadd.s32 %v2425, 2304
        %v11945 = vadd.s32 %v2425, 2432
        %v11946 = vadd.s32 %v2425, 2560
        %v11947 = vadd.s32 %v2425, 2688
        %v11948 = vadd.s32 %v2425, 2816
        %v11949 = vadd.s32 %v2425, 2944
        %v11950 = vadd.s32 %v2425, 3072
        %v11951 = vadd.s32 %v2425, 3200
        %v11952 = vadd.s32 %v2425, 3328
        %v11953 = vadd.s32 %v2425, 3456
        %v11954 = vadd.s32 %v2425, 3584
        %v11955 = vadd.s32 %v2425, 3712
        %v11956 = vadd.s32 %v2425, 3840
        %v11957 = vstv %s11926
        %v11958 = vadd.s32 %v11957, %v2425
        %v11959 = vadd.s32 %v11957, %v11927
        %v11960 = vadd.s32 %v11957, %v11928
        %v11961 = vadd.s32 %v11957, %v11929
        %v11962 = vadd.s32 %v11957, %v11930
        %v11963 = vadd.s32 %v11957, %v11931
        %v11964 = vadd.s32 %v11957, %v11932
        %v11965 = vadd.s32 %v11957, %v11933
        %v11966 = vadd.s32 %v11957, %v11934
        %v11967 = vadd.s32 %v11957, %v11935
        %v11968 = vadd.s32 %v11957, %v11936
        %v11969 = vadd.s32 %v11957, %v11937
        %v11970 = vadd.s32 %v11957, %v11938
        %v11971 = vadd.s32 %v11957, %v11939
        %v11972 = vadd.s32 %v11957, %v11940
        %v11973 = vadd.s32 %v11957, %v11941
        %v11974 = vadd.s32 %v11957, %v11942
        %v11975 = vadd.s32 %v11957, %v11943
        %v11976 = vadd.s32 %v11957, %v11944
        %v11977 = vadd.s32 %v11957, %v11945
        %v11978 = vadd.s32 %v11957, %v11946
        %v11979 = vadd.s32 %v11957, %v11947
        %v11980 = vadd.s32 %v11957, %v11948
        %v11981 = vadd.s32 %v11957, %v11949
        %v11982 = vadd.s32 %v11957, %v11950
        %v11983 = vadd.s32 %v11957, %v11951
        %v11984 = vadd.s32 %v11957, %v11952
        %v11985 = vadd.s32 %v11957, %v11953
        %v11986 = vadd.s32 %v11957, %v11954
        %v11987 = vadd.s32 %v11957, %v11955
        %v11988 = vadd.s32 %v11957, %v11956
        %v11989 = vld [vmem:[%s6] sm:$0x3]
        %11990 = vset.pattern.permute.xlu0 0
        %11991 = vperm.xlu0 %11990, %v11989
        %v11992 = vpop.permute.xlu0 %11991
        %vm11993 = vcmp.eq.s32.totalorder %v11958, %v11992
        %vm11994 = vcmp.eq.s32.totalorder %v11959, %v11992
        %vm11995 = vcmp.eq.s32.totalorder %v11960, %v11992
        %vm11996 = vcmp.eq.s32.totalorder %v11961, %v11992
        %vm11997 = vcmp.eq.s32.totalorder %v11962, %v11992
        %vm11998 = vcmp.eq.s32.totalorder %v11963, %v11992
        %vm11999 = vcmp.eq.s32.totalorder %v11964, %v11992
        %vm12000 = vcmp.eq.s32.totalorder %v11965, %v11992
        %vm12001 = vcmp.eq.s32.totalorder %v11966, %v11992
        %vm12002 = vcmp.eq.s32.totalorder %v11967, %v11992
        %vm12003 = vcmp.eq.s32.totalorder %v11968, %v11992
        %vm12004 = vcmp.eq.s32.totalorder %v11969, %v11992
        %vm12005 = vcmp.eq.s32.totalorder %v11970, %v11992
        %vm12006 = vcmp.eq.s32.totalorder %v11971, %v11992
        %vm12007 = vcmp.eq.s32.totalorder %v11972, %v11992
        %vm12008 = vcmp.eq.s32.totalorder %v11973, %v11992
        %vm12009 = vcmp.eq.s32.totalorder %v11974, %v11992
        %vm12010 = vcmp.eq.s32.totalorder %v11975, %v11992
        %vm12011 = vcmp.eq.s32.totalorder %v11976, %v11992
        %vm12012 = vcmp.eq.s32.totalorder %v11977, %v11992
        %vm12013 = vcmp.eq.s32.totalorder %v11978, %v11992
        %vm12014 = vcmp.eq.s32.totalorder %v11979, %v11992
        %vm12015 = vcmp.eq.s32.totalorder %v11980, %v11992
        %vm12016 = vcmp.eq.s32.totalorder %v11981, %v11992
        %vm12017 = vcmp.eq.s32.totalorder %v11982, %v11992
        %vm12018 = vcmp.eq.s32.totalorder %v11983, %v11992
        %vm12019 = vcmp.eq.s32.totalorder %v11984, %v11992
        %vm12020 = vcmp.eq.s32.totalorder %v11985, %v11992
        %vm12021 = vcmp.eq.s32.totalorder %v11986, %v11992
        %vm12022 = vcmp.eq.s32.totalorder %v11987, %v11992
        %vm12023 = vcmp.eq.s32.totalorder %v11988, %v11992
        %v12024 = vsel %vm11993, 1, 0
        %v12025 = vsel %vm11994, 1, 0
        %v12026 = vsel %vm11995, 1, 0
        %v12027 = vsel %vm11996, 1, 0
        %v12028 = vsel %vm11997, 1, 0
        %v12029 = vsel %vm11998, 1, 0
        %v12030 = vsel %vm11999, 1, 0
        %v12031 = vsel %vm12000, 1, 0
        %v12032 = vsel %vm12001, 1, 0
        %v12033 = vsel %vm12002, 1, 0
        %v12034 = vsel %vm12003, 1, 0
        %v12035 = vsel %vm12004, 1, 0
        %v12036 = vsel %vm12005, 1, 0
        %v12037 = vsel %vm12006, 1, 0
        %v12038 = vsel %vm12007, 1, 0
        %v12039 = vsel %vm12008, 1, 0
        %v12040 = vsel %vm12009, 1, 0
        %v12041 = vsel %vm12010, 1, 0
        %v12042 = vsel %vm12011, 1, 0
        %v12043 = vsel %vm12012, 1, 0
        %v12044 = vsel %vm12013, 1, 0
        %v12045 = vsel %vm12014, 1, 0
        %v12046 = vsel %vm12015, 1, 0
        %v12047 = vsel %vm12016, 1, 0
        %v12048 = vsel %vm12017, 1, 0
        %v12049 = vsel %vm12018, 1, 0
        %v12050 = vsel %vm12019, 1, 0
        %v12051 = vsel %vm12020, 1, 0
        %v12052 = vsel %vm12021, 1, 0
        %v12053 = vsel %vm12022, 1, 0
        %v12054 = vsel %vm12023, 1, 0
        %v12055 = vcvt.s32.f32 %v12024
        %v12056 = vcvt.s32.f32 %v12025
        %v12057 = vcvt.s32.f32 %v12026
        %v12058 = vcvt.s32.f32 %v12027
        %v12059 = vcvt.s32.f32 %v12028
        %v12060 = vcvt.s32.f32 %v12029
        %v12061 = vcvt.s32.f32 %v12030
        %v12062 = vcvt.s32.f32 %v12031
        %v12063 = vcvt.s32.f32 %v12032
        %v12064 = vcvt.s32.f32 %v12033
        %v12065 = vcvt.s32.f32 %v12034
        %v12066 = vcvt.s32.f32 %v12035
        %v12067 = vcvt.s32.f32 %v12036
        %v12068 = vcvt.s32.f32 %v12037
        %v12069 = vcvt.s32.f32 %v12038
        %v12070 = vcvt.s32.f32 %v12039
        %v12071 = vcvt.s32.f32 %v12040
        %v12072 = vcvt.s32.f32 %v12041
        %v12073 = vcvt.s32.f32 %v12042
        %v12074 = vcvt.s32.f32 %v12043
        %v12075 = vcvt.s32.f32 %v12044
        %v12076 = vcvt.s32.f32 %v12045
        %v12077 = vcvt.s32.f32 %v12046
        %v12078 = vcvt.s32.f32 %v12047
        %v12079 = vcvt.s32.f32 %v12048
        %v12080 = vcvt.s32.f32 %v12049
        %v12081 = vcvt.s32.f32 %v12050
        %v12082 = vcvt.s32.f32 %v12051
        %v12083 = vcvt.s32.f32 %v12052
        %v12084 = vcvt.s32.f32 %v12053
        %v12085 = vcvt.s32.f32 %v12054
        %v12086 = vmul.f32 %v12055, %v11895
        %v12087 = vmul.f32 %v12056, %v11896
        %v12088 = vmul.f32 %v12057, %v11897
        %v12089 = vmul.f32 %v12058, %v11898
        %v12090 = vmul.f32 %v12059, %v11899
        %v12091 = vmul.f32 %v12060, %v11900
        %v12092 = vmul.f32 %v12061, %v11901
        %v12093 = vmul.f32 %v12062, %v11902
        %v12094 = vmul.f32 %v12063, %v11903
        %v12095 = vmul.f32 %v12064, %v11904
        %v12096 = vmul.f32 %v12065, %v11905
        %v12097 = vmul.f32 %v12066, %v11906
        %v12098 = vmul.f32 %v12067, %v11907
        %v12099 = vmul.f32 %v12068, %v11908
        %v12100 = vmul.f32 %v12069, %v11909
        %v12101 = vmul.f32 %v12070, %v11910
        %v12102 = vmul.f32 %v12071, %v11911
        %v12103 = vmul.f32 %v12072, %v11912
        %v12104 = vmul.f32 %v12073, %v11913
        %v12105 = vmul.f32 %v12074, %v11914
        %v12106 = vmul.f32 %v12075, %v11915
        %v12107 = vmul.f32 %v12076, %v11916
        %v12108 = vmul.f32 %v12077, %v11917
        %v12109 = vmul.f32 %v12078, %v11918
        %v12110 = vmul.f32 %v12079, %v11919
        %v12111 = vmul.f32 %v12080, %v11920
        %v12112 = vmul.f32 %v12081, %v11921
        %v12113 = vmul.f32 %v12082, %v11922
        %v12114 = vmul.f32 %v12083, %v11923
        %v12115 = vmul.f32 %v12084, %v11924
        %v12116 = vmul.f32 %v12085, %v11925
        %v12117 = vsub.f32 1.0, %v12055
        %v12118 = vsub.f32 1.0, %v12056
        %v12119 = vsub.f32 1.0, %v12057
        %v12120 = vsub.f32 1.0, %v12058
        %v12121 = vsub.f32 1.0, %v12059
        %v12122 = vsub.f32 1.0, %v12060
        %v12123 = vsub.f32 1.0, %v12061
        %v12124 = vsub.f32 1.0, %v12062
        %v12125 = vsub.f32 1.0, %v12063
        %v12126 = vsub.f32 1.0, %v12064
        %v12127 = vsub.f32 1.0, %v12065
        %v12128 = vsub.f32 1.0, %v12066
        %v12129 = vsub.f32 1.0, %v12067
        %v12130 = vsub.f32 1.0, %v12068
        %v12131 = vsub.f32 1.0, %v12069
        %v12132 = vsub.f32 1.0, %v12070
        %v12133 = vsub.f32 1.0, %v12071
        %v12134 = vsub.f32 1.0, %v12072
        %v12135 = vsub.f32 1.0, %v12073
        %v12136 = vsub.f32 1.0, %v12074
        %v12137 = vsub.f32 1.0, %v12075
        %v12138 = vsub.f32 1.0, %v12076
        %v12139 = vsub.f32 1.0, %v12077
        %v12140 = vsub.f32 1.0, %v12078
        %v12141 = vsub.f32 1.0, %v12079
        %v12142 = vsub.f32 1.0, %v12080
        %v12143 = vsub.f32 1.0, %v12081
        %v12144 = vsub.f32 1.0, %v12082
        %v12145 = vsub.f32 1.0, %v12083
        %v12146 = vsub.f32 1.0, %v12084
        %v12147 = vsub.f32 1.0, %v12085
        %v12148 = vmul.f32 %v12117, %v10165
        %v12149 = vmul.f32 %v12118, %v10167
        %v12150 = vmul.f32 %v12119, %v10247
        %v12151 = vmul.f32 %v12120, %v10249
        %v12152 = vmul.f32 %v12121, %v10329
        %v12153 = vmul.f32 %v12122, %v10331
        %v12154 = vmul.f32 %v12123, %v10411
        %v12155 = vmul.f32 %v12124, %v10413
        %v12156 = vmul.f32 %v12125, %v10493
        %v12157 = vmul.f32 %v12126, %v10495
        %v12158 = vmul.f32 %v12127, %v10575
        %v12159 = vmul.f32 %v12128, %v10577
        %v12160 = vmul.f32 %v12129, %v10657
        %v12161 = vmul.f32 %v12130, %v10659
        %v12162 = vmul.f32 %v12131, %v10739
        %v12163 = vmul.f32 %v12132, %v10741
        %v12164 = vmul.f32 %v12133, %v10821
        %v12165 = vmul.f32 %v12134, %v10823
        %v12166 = vmul.f32 %v12135, %v10903
        %v12167 = vmul.f32 %v12136, %v10905
        %v12168 = vmul.f32 %v12137, %v10985
        %v12169 = vmul.f32 %v12138, %v10987
        %v12170 = vmul.f32 %v12139, %v11067
        %v12171 = vmul.f32 %v12140, %v11069
        %v12172 = vmul.f32 %v12141, %v11149
        %v12173 = vmul.f32 %v12142, %v11151
        %v12174 = vmul.f32 %v12143, %v11231
        %v12175 = vmul.f32 %v12144, %v11233
        %v12176 = vmul.f32 %v12145, %v11313
        %v12177 = vmul.f32 %v12146, %v11315
        %v12178 = vmul.f32 %v12147, %v11394
        %v12179 = vadd.f32 %v12086, %v12148
        %v12180 = vadd.f32 %v12087, %v12149
        %v12181 = vadd.f32 %v12088, %v12150
        %v12182 = vadd.f32 %v12089, %v12151
        %v12183 = vadd.f32 %v12090, %v12152
        %v12184 = vadd.f32 %v12091, %v12153
        %v12185 = vadd.f32 %v12092, %v12154
        %v12186 = vadd.f32 %v12093, %v12155
        %v12187 = vadd.f32 %v12094, %v12156
        %v12188 = vadd.f32 %v12095, %v12157
        %v12189 = vadd.f32 %v12096, %v12158
        %v12190 = vadd.f32 %v12097, %v12159
        %v12191 = vadd.f32 %v12098, %v12160
        %v12192 = vadd.f32 %v12099, %v12161
        %v12193 = vadd.f32 %v12100, %v12162
        %v12194 = vadd.f32 %v12101, %v12163
        %v12195 = vadd.f32 %v12102, %v12164
        %v12196 = vadd.f32 %v12103, %v12165
        %v12197 = vadd.f32 %v12104, %v12166
        %v12198 = vadd.f32 %v12105, %v12167
        %v12199 = vadd.f32 %v12106, %v12168
        %v12200 = vadd.f32 %v12107, %v12169
        %v12201 = vadd.f32 %v12108, %v12170
        %v12202 = vadd.f32 %v12109, %v12171
        %v12203 = vadd.f32 %v12110, %v12172
        %v12204 = vadd.f32 %v12111, %v12173
        %v12205 = vadd.f32 %v12112, %v12174
        %v12206 = vadd.f32 %v12113, %v12175
        %v12207 = vadd.f32 %v12114, %v12176
        %v12208 = vadd.f32 %v12115, %v12177
        %v12209 = vadd.f32 %v12116, %v12178
        %v12210 = vmul.f32 %v12179, 30.0
        %v12211 = vmul.f32 %v12180, 30.0
        %v12212 = vmul.f32 %v12181, 30.0
        %v12213 = vmul.f32 %v12182, 30.0
        %v12214 = vmul.f32 %v12183, 30.0
        %v12215 = vmul.f32 %v12184, 30.0
        %v12216 = vmul.f32 %v12185, 30.0
        %v12217 = vmul.f32 %v12186, 30.0
        %v12218 = vmul.f32 %v12187, 30.0
        %v12219 = vmul.f32 %v12188, 30.0
        %v12220 = vmul.f32 %v12189, 30.0
        %v12221 = vmul.f32 %v12190, 30.0
        %v12222 = vmul.f32 %v12191, 30.0
        %v12223 = vmul.f32 %v12192, 30.0
        %v12224 = vmul.f32 %v12193, 30.0
        %v12225 = vmul.f32 %v12194, 30.0
        %v12226 = vmul.f32 %v12195, 30.0
        %v12227 = vmul.f32 %v12196, 30.0
        %v12228 = vmul.f32 %v12197, 30.0
        %v12229 = vmul.f32 %v12198, 30.0
        %v12230 = vmul.f32 %v12199, 30.0
        %v12231 = vmul.f32 %v12200, 30.0
        %v12232 = vmul.f32 %v12201, 30.0
        %v12233 = vmul.f32 %v12202, 30.0
        %v12234 = vmul.f32 %v12203, 30.0
        %v12235 = vmul.f32 %v12204, 30.0
        %v12236 = vmul.f32 %v12205, 30.0
        %v12237 = vmul.f32 %v12206, 30.0
        %v12238 = vmul.f32 %v12207, 30.0
        %v12239 = vmul.f32 %v12208, 30.0
        %v12240 = vmul.f32 %v12209, 30.0
        %v12272 = vcombine.low %v12210, %v12211
        %v12273 = vcombine.low %v12212, %v12213
        %v12275 = vunpack.c.l.s4 1983009808
        %v12276 = vunpack.c.0.s8 %v12275
        %v12277 = vlaneseq
        %v12278 = vshrl.u32 %v12277, 7
        %v12279 = vsub.s32 %v12276, %v12278
        %v12280 = vrot.slane %v12272, %v12279
        %v12282 = vunpack.c.l.s4 1983009808
        %v12283 = vunpack.c.0.s8 %v12282
        %v12284 = vlaneseq
        %v12285 = vshrl.u32 %v12284, 7
        %v12286 = vsub.s32 %v12283, %v12285
        %v12287 = vrot.slane %v12273, %v12286
        %v12288 = vcombine.low %v12280, %v12287
        %v12289 = vcombine.low %v12214, %v12215
        %v12290 = vcombine.low %v12216, %v12217
        %v12292 = vunpack.c.l.s4 1983009808
        %v12293 = vunpack.c.0.s8 %v12292
        %v12294 = vlaneseq
        %v12295 = vshrl.u32 %v12294, 7
        %v12296 = vsub.s32 %v12293, %v12295
        %v12297 = vrot.slane %v12289, %v12296
        %v12299 = vunpack.c.l.s4 1983009808
        %v12300 = vunpack.c.0.s8 %v12299
        %v12301 = vlaneseq
        %v12302 = vshrl.u32 %v12301, 7
        %v12303 = vsub.s32 %v12300, %v12302
        %v12304 = vrot.slane %v12290, %v12303
        %v12305 = vcombine.low %v12297, %v12304
        %v12306 = vcombine.low %v12218, %v12219
        %v12307 = vcombine.low %v12220, %v12221
        %v12309 = vunpack.c.l.s4 1983009808
        %v12310 = vunpack.c.0.s8 %v12309
        %v12311 = vlaneseq
        %v12312 = vshrl.u32 %v12311, 7
        %v12313 = vsub.s32 %v12310, %v12312
        %v12314 = vrot.slane %v12306, %v12313
        %v12316 = vunpack.c.l.s4 1983009808
        %v12317 = vunpack.c.0.s8 %v12316
        %v12318 = vlaneseq
        %v12319 = vshrl.u32 %v12318, 7
        %v12320 = vsub.s32 %v12317, %v12319
        %v12321 = vrot.slane %v12307, %v12320
        %v12322 = vcombine.low %v12314, %v12321
        %v12323 = vcombine.low %v12222, %v12223
        %v12324 = vcombine.low %v12224, %v12225
        %v12326 = vunpack.c.l.s4 1983009808
        %v12327 = vunpack.c.0.s8 %v12326
        %v12328 = vlaneseq
        %v12329 = vshrl.u32 %v12328, 7
        %v12330 = vsub.s32 %v12327, %v12329
        %v12331 = vrot.slane %v12323, %v12330
        %v12333 = vunpack.c.l.s4 1983009808
        %v12334 = vunpack.c.0.s8 %v12333
        %v12335 = vlaneseq
        %v12336 = vshrl.u32 %v12335, 7
        %v12337 = vsub.s32 %v12334, %v12336
        %v12338 = vrot.slane %v12324, %v12337
        %v12339 = vcombine.low %v12331, %v12338
        %v12340 = vcombine.low %v12226, %v12227
        %v12341 = vcombine.low %v12228, %v12229
        %v12343 = vunpack.c.l.s4 1983009808
        %v12344 = vunpack.c.0.s8 %v12343
        %v12345 = vlaneseq
        %v12346 = vshrl.u32 %v12345, 7
        %v12347 = vsub.s32 %v12344, %v12346
        %v12348 = vrot.slane %v12340, %v12347
        %v12350 = vunpack.c.l.s4 1983009808
        %v12351 = vunpack.c.0.s8 %v12350
        %v12352 = vlaneseq
        %v12353 = vshrl.u32 %v12352, 7
        %v12354 = vsub.s32 %v12351, %v12353
        %v12355 = vrot.slane %v12341, %v12354
        %v12356 = vcombine.low %v12348, %v12355
        %v12357 = vcombine.low %v12230, %v12231
        %v12358 = vcombine.low %v12232, %v12233
        %v12360 = vunpack.c.l.s4 1983009808
        %v12361 = vunpack.c.0.s8 %v12360
        %v12362 = vlaneseq
        %v12363 = vshrl.u32 %v12362, 7
        %v12364 = vsub.s32 %v12361, %v12363
        %v12365 = vrot.slane %v12357, %v12364
        %v12367 = vunpack.c.l.s4 1983009808
        %v12368 = vunpack.c.0.s8 %v12367
        %v12369 = vlaneseq
        %v12370 = vshrl.u32 %v12369, 7
        %v12371 = vsub.s32 %v12368, %v12370
        %v12372 = vrot.slane %v12358, %v12371
        %v12373 = vcombine.low %v12365, %v12372
        %v12374 = vcombine.low %v12234, %v12235
        %v12375 = vcombine.low %v12236, %v12237
        %v12377 = vunpack.c.l.s4 1983009808
        %v12378 = vunpack.c.0.s8 %v12377
        %v12379 = vlaneseq
        %v12380 = vshrl.u32 %v12379, 7
        %v12381 = vsub.s32 %v12378, %v12380
        %v12382 = vrot.slane %v12374, %v12381
        %v12384 = vunpack.c.l.s4 1983009808
        %v12385 = vunpack.c.0.s8 %v12384
        %v12386 = vlaneseq
        %v12387 = vshrl.u32 %v12386, 7
        %v12388 = vsub.s32 %v12385, %v12387
        %v12389 = vrot.slane %v12375, %v12388
        %v12390 = vcombine.low %v12382, %v12389
        %v12391 = vcombine.low %v12238, %v12239
        %v12393 = vunpack.c.l.s4 1983009808
        %v12394 = vunpack.c.0.s8 %v12393
        %v12395 = vlaneseq
        %v12396 = vshrl.u32 %v12395, 7
        %v12397 = vsub.s32 %v12394, %v12396
        %v12398 = vrot.slane %v12391, %v12397
        %v12400 = vunpack.c.l.s4 1983009808
        %v12401 = vunpack.c.0.s8 %v12400
        %v12402 = vlaneseq
        %v12403 = vshrl.u32 %v12402, 7
        %v12404 = vsub.s32 %v12401, %v12403
        %v12405 = vrot.slane %v12240, %v12404
        %v12406 = vcombine.low %v12398, %v12405
        %12415 = vst [vmem:[%s349] sm:$0xff] %v12288
        %12416 = vst [vmem:[%s349 + $0x8] sm:$0xff] %v12305
        %12417 = vst [vmem:[%s349 + $0x10] sm:$0xff] %v12322
        %12418 = vst [vmem:[%s349 + $0x18] sm:$0xff] %v12339
        %12419 = vst [vmem:[%s349 + $0x20] sm:$0xff] %v12356
        %12420 = vst [vmem:[%s349 + $0x28] sm:$0xff] %v12373
        %12421 = vst [vmem:[%s349 + $0x30] sm:$0xff] %v12390
        %12422 = vst [vmem:[%s349 + $0x38] sm:$0x3f] %v12406
        %s12423 = smul.u32 31, %s21
        %p12424 = scmp.lt.s32.totalorder %s12423, 61
        %s12425 = scalar_select %p12424, %s12423, 61
        %s12426 = smul.addr %s12425, 2
        %s12427 = scalar_lea.vmem %s7, %s12426
        // Predicated region
        $region69: #{forward.1} parent=47 // pred_check
          %p12428 = pneg %p191
        $region70: #{forward.1} parent=47 // pred_check_branch
          %12430 = sbr.rel (%p12428) target = $region72
        $region71: #{forward.1} parent=47 // pred_region
          %s12431 = smul.u32 31, %s21
        $region72: #{forward.1} parent=47 // pred_fallthru
          _
      $region48: #{forward.1} parent=5 // pred_fallthru
        _
      %p12432 = scmp.le.s32.totalorder 2, %s16
      // Predicated region
      $region73: #{forward.1} parent=5 // pred_check
        %p12433 = pneg %p12432
      $region74: #{forward.1} parent=5 // pred_check_branch
        %12435 = sbr.rel (%p12433) target = $region76
      $region75: #{forward.1} parent=5 // pred_region
        %s12436 = ssub.s32 %s16, 2
        // Predicated region
        $region77: #{forward.1} parent=75 // pred_check
          %p12437 = pneg %p197
        $region78: #{forward.1} parent=75 // pred_check_branch
          %12439 = sbr.rel (%p12437) target = $region80
        $region79: #{forward.1} parent=75 // pred_region
          %s12440 = smul.u32 31, %s22
          %p12441 = scmp.lt.s32.totalorder %s12440, 61
          %s12442 = scalar_select %p12441, %s12440, 61
          %s12443 = smul.addr %s12442, 2
          %s12444 = scalar_lea.vmem %s7, %s12443
        $region80: #{forward.1} parent=75 // pred_fallthru
          _
      $region76: #{forward.1} parent=5 // pred_fallthru
        _
    $region6: #{forward.1} parent=1 // loop_footer
      %s20 = sadd.s32 1, %s16
    $region7: #{forward.1} parent=1 // loop_footer_branch
      %15 = sbr.rel target = $region3
    $region8: #{forward.1} parent=1 // loop_exit
      _
    %12445 = vsyncpa [#allocation3], 1
    %s12446 = scalar_lea.sflag [#allocation3], 1
    %12447 = vsyncpa %s12446, 1
    %12448 = vsyncpa [#allocation5], 1
    %12449 = vsyncpa [#allocation8], 1

</llo_original>
